<compile_context>
chip_gen: v6e
topology: v6e:2x2x1
jax: 0.10.0
libtpu: 0.0.40
codegen_flags: <defaults>
</compile_context>

<pallas_src>
import functools

import jax
import jax.numpy as jnp
from jax.experimental import pallas as pl
from jax.experimental.pallas import tpu as pltpu

NEG_SLOPE_OUT = 0.01   # F.leaky_relu default negative slope
NEG_SLOPE_GAT = 0.2    # GATConv internal negative slope
OUT_PAD = 128          # output last dim padded to a full 128-lane register


def _leaky(v, slope):
    return jnp.where(v >= 0, v, slope * v)


def nas_pubmed_cell_kernel(
    hw_src_ref,   # [N, C]   bf16, resident: (h W_h + b_h) @ W_arma (ARMA propagated features)
    g_src_ref,    # [N, H*C] bf16, resident: (x W_x + b_x) @ W_gat  (GAT source features)
    a_src_ref,    # [H, N]   f32,  resident: per-head source attention logits (pre-transposed)
    bg_ref,       # [1, H*C] f32,  resident: GAT bias
    root_ref,     # [T, C]   f32,  dst tile: (h W_h + b_h) @ V_arma + b_arma
    a_dst_ref,    # [T, H]   f32,  dst tile: per-head destination attention logits
    a_arma_ref,   # [T, N]   bf16, dst tile: gcn-normalized adjacency row block
    adj_ref,      # [T, N]   bf16, dst tile: GAT edge-multiplicity row block (self loops = 1)
    o_ref,        # [T, OUT_PAD] f32
    *, heads, out_dim,
):
    f32 = jnp.float32
    bf16 = jnp.bfloat16
    C = out_dim
    T = o_ref.shape[0]

    # --- ARMAConv (num_stacks=1, num_layers=1): ReLU(A_norm @ (h W) + h V + b).
    #     The module's leaky_relu on top of this ReLU output is the identity -> omitted.
    prop = jnp.dot(a_arma_ref[...], hw_src_ref[...], preferred_element_type=f32)   # [T, C]
    o3 = jnp.tanh(jnp.maximum(prop + root_ref[...], 0.0))

    # --- GATConv (heads=H, concat=True, self loops forced exactly once) ---
    adj = adj_ref[...]                       # bf16 [T, N] edge multiplicities
    edge_mask = adj > 0
    neg_big = jnp.float32(-1e30)
    a_dst = a_dst_ref[...]                   # [T, H]
    a_src_t = a_src_ref[...]                 # [H, N]
    g_bf = g_src_ref[...]                    # [N, H*C] bf16
    bg = bg_ref[...]                         # [1, H*C]

    pieces = [o3]
    # TODO(synk): at real Pubmed scale (N~20k), convert this unrolled head loop to
    # lax.fori_loop / chunk the source axis so at most one [T, N] temp is live, and skip
    # all-zero source column blocks via scalar-prefetched block lists (graph is ~0.03% dense).
    for hd in range(heads):
        # e[t, s] = leaky_relu(a_dst[t] + a_src[s]) on existing edges s -> t
        e = a_dst[:, hd:hd + 1] + a_src_t[hd:hd + 1, :]                             # [T, N]
        e = _leaky(e, NEG_SLOPE_GAT)
        e = jnp.where(edge_mask, e, neg_big)
        e = e - jnp.max(e, axis=1, keepdims=True)
        # multiply by edge multiplicity: zeros masked entries AND handles duplicate edges
        p = adj * jnp.exp(e)                                                         # f32 [T, N]
        denom = jnp.sum(p, axis=1, keepdims=True)                                    # [T, 1]
        acc = jnp.dot(p.astype(bf16), g_bf[:, hd * C:(hd + 1) * C],
                      preferred_element_type=f32)                                    # [T, C]
        # deferred softmax normalization: scale the [T, C] result, not the [T, N] probs
        acc = acc * pl.reciprocal(denom, approx=True)
        o4h = _leaky(acc + bg[:, hd * C:(hd + 1) * C], NEG_SLOPE_OUT)
        pieces.append(jnp.tanh(o4h))

    used = (1 + heads) * C
    if used < OUT_PAD:
        pieces.append(jnp.zeros((T, OUT_PAD - used), f32))
    # single full-width store per grid step (two unmasked vst per 16 rows)
    o_ref[...] = jnp.concatenate(pieces, axis=1)


def nas_pubmed_cell(h, x, edge_index, edge_weight, params, *, heads, out_dim, tile=128):
    """Returns (his, o5) like NasPubmedCell.forward.

    tile=128 fits comfortably under v7x's 64 MiB VMEM; on v5e/v6e (128 MiB) tile=256 with a
    ~96 MiB vmem_limit_bytes amortizes per-step overhead further.
    """
    N = x.shape[0]
    H, C = heads, out_dim
    assert N % tile == 0, "dst-row tile must divide N (pad the graph otherwise)"
    assert (1 + H) * C <= OUT_PAD
    src, dst = edge_index[0], edge_index[1]

    # ---------------- source-side precompute: done ONCE, outside the grid ----------------
    xh = x @ params["wx"] + params["bx"]                       # [N, hidden]
    hh = h @ params["wh"] + params["bh"]                       # [N, hidden]
    hw_src = (hh @ params["w_arma"]).astype(jnp.bfloat16)      # [N, C]   ARMA propagated feats
    root = hh @ params["v_arma"] + params["b_arma"]            # [N, C]   ARMA root term
    g = xh @ params["w_gat"]                                   # [N, H*C] GAT features
    g_bf = g.astype(jnp.bfloat16)
    g_h = g.reshape(N, H, C)
    a_src_t = jnp.einsum("nhc,hc->hn", g_h, params["att_src"])  # [H, N] source logits
    a_dst = jnp.einsum("nhc,hc->nh", g_h, params["att_dst"])    # [N, H] destination logits

    # gcn_norm (add_self_loops=False) for ARMAConv, dense A[dst, src], bf16.
    deg = jnp.zeros((N,), jnp.float32).at[dst].add(edge_weight)
    dinv = jnp.where(deg > 0, jax.lax.rsqrt(deg), 0.0)
    norm = dinv[src] * edge_weight * dinv[dst]
    a_arma = jnp.zeros((N, N), jnp.float32).at[dst, src].add(norm).astype(jnp.bfloat16)

    # GAT adjacency as edge multiplicities (handles duplicate edges), self loops removed then
    # re-added exactly once (PyG GATConv semantics), dense [dst, src], bf16.
    eye = jnp.eye(N, dtype=jnp.float32)
    counts = jnp.zeros((N, N), jnp.float32).at[dst, src].add(1.0)
    adj = (counts * (1.0 - eye) + eye).astype(jnp.bfloat16)
    # TODO(synk): at real Pubmed scale (~19.7k nodes, ~0.03% density) the dense N x N matrices
    # should be built and streamed as block-sparse column tiles (scalar-prefetched nonzero block
    # lists + pl.when skipping) instead of fully materialized in HBM.

    operands = (hw_src, g_bf, a_src_t, params["b_gat"], root, a_dst, a_arma, adj)

    in_specs = [
        pl.BlockSpec((N, C), lambda i: (0, 0)),          # hw_src   (resident)
        pl.BlockSpec((N, H * C), lambda i: (0, 0)),      # g_bf     (resident)
        pl.BlockSpec((H, N), lambda i: (0, 0)),          # a_src_t  (resident)
        pl.BlockSpec((1, H * C), lambda i: (0, 0)),      # b_gat    (resident)
        pl.BlockSpec((tile, C), lambda i: (i, 0)),       # root       dst tile
        pl.BlockSpec((tile, H), lambda i: (i, 0)),       # a_dst      dst tile
        pl.BlockSpec((tile, N), lambda i: (i, 0)),       # a_arma row block (bf16)
        pl.BlockSpec((tile, N), lambda i: (i, 0)),       # adj    row block (bf16)
    ]
    out_spec = pl.BlockSpec((tile, OUT_PAD), lambda i: (i, 0))

    # matmuls on the streamed adjacency dominate; elementwise/exp work counted roughly
    flops = 2 * N * N * C * (1 + H) + 10 * N * N * H
    transcendentals = N * N * H + N * (1 + H) * C
    bytes_accessed = (2 * N * N * 2                       # two bf16 adjacency streams
                      + N * (C + H * C) * 2               # resident bf16 features
                      + (H * N + N * C + N * H) * 4       # f32 logits / root
                      + N * OUT_PAD * 4)                  # output

    kernel = functools.partial(nas_pubmed_cell_kernel, heads=H, out_dim=C)
    o_padded = pl.pallas_call(
        kernel,
        out_shape=jax.ShapeDtypeStruct((N, OUT_PAD), jnp.float32),
        grid=(N // tile,),
        in_specs=in_specs,
        out_specs=out_spec,
        compiler_params=pltpu.CompilerParams(
            # "parallel" lets megacore / multi-TC parts split dst tiles; harmless elsewhere.
            dimension_semantics=("parallel",),
            # 56 MiB is safe on all of v5e/v6e (128 MiB physical) and v7x (64 MiB physical);
            # raise towards ~96 MiB on v5e/v6e if tile is grown to 256.
            vmem_limit_bytes=56 * 1024 * 1024,
        ),
        cost_estimate=pl.CostEstimate(
            flops=int(flops),
            transcendentals=int(transcendentals),
            bytes_accessed=int(bytes_accessed),
        ),
    )(*operands)

    o5 = o_padded[:, : (1 + H) * C]
    his = x  # passthrough, exactly as in the PyTorch module
    return his, o5


if __name__ == "__main__":
    # Small shapes consistent with the module: N nodes, his/cur feature dims,
    # hidden_dim, output_dim, multi_head=True -> 8 heads.
    N, his_dim, cur_dim, hidden_dim, output_dim = 256, 12, 10, 16, 8
    heads = 8
    tile = 128   # grid of N // tile = 2 dst-row tiles (demonstrates pipelining)

    key = jax.random.PRNGKey(0)
    ks = jax.random.split(key, 16)

    def rnd(k, shape, scale=0.1):
        return (scale * jax.random.normal(k, shape)).astype(jnp.float32)

    params = dict(
        wx=rnd(ks[0], (cur_dim, hidden_dim)), bx=rnd(ks[1], (1, hidden_dim)),
        wh=rnd(ks[2], (his_dim, hidden_dim)), bh=rnd(ks[3], (1, hidden_dim)),
        w_arma=rnd(ks[4], (hidden_dim, output_dim)),       # ARMA init_weight (K=1)
        v_arma=rnd(ks[5], (hidden_dim, output_dim)),       # ARMA root_weight (T=1, K=1)
        b_arma=rnd(ks[6], (1, output_dim)),                # ARMA bias
        w_gat=rnd(ks[7], (hidden_dim, heads * output_dim)),
        att_src=rnd(ks[8], (heads, output_dim)),
        att_dst=rnd(ks[9], (heads, output_dim)),
        b_gat=rnd(ks[10], (1, heads * output_dim)),
    )

    x = rnd(ks[11], (N, cur_dim), scale=1.0)
    h = rnd(ks[12], (N, his_dim), scale=1.0)

    # Deterministic small graph: directed ring + a few long-range edges (no duplicates).
    ring_src = jnp.arange(N, dtype=jnp.int32)
    ring_dst = (ring_src + 1) % N
    extra_src = jnp.arange(0, N, 2, dtype=jnp.int32)
    extra_dst = (extra_src + 5) % N
    edge_index = jnp.stack(
        [jnp.concatenate([ring_src, extra_src]), jnp.concatenate([ring_dst, extra_dst])], axis=0
    )
    E = edge_index.shape[1]
    edge_weight = jax.random.uniform(ks[13], (E,), minval=0.5, maxval=1.5).astype(jnp.float32)

    his, o5 = nas_pubmed_cell(h, x, edge_index, edge_weight, params,
                              heads=heads, out_dim=output_dim, tile=tile)
    jax.block_until_ready(o5)

    assert his.shape == (N, cur_dim)
    assert o5.shape == (N, (1 + heads) * output_dim)   # matches module.output_dim property
    assert bool(jnp.all(jnp.isfinite(o5)))
    print("KERNEL_OK")
</pallas_src>

<mosaic_0001>
module attributes {stable_mosaic.version = 11 : i64} {
  func.func @nas_pubmed_cell_kernel(%arg0: i32, %arg1: memref<256x8xbf16, #tpu.memory_space<vmem>>, %arg2: memref<256x64xbf16, #tpu.memory_space<vmem>>, %arg3: memref<8x256xf32, #tpu.memory_space<vmem>>, %arg4: memref<1x64xf32, #tpu.memory_space<vmem>>, %arg5: memref<128x8xf32, #tpu.memory_space<vmem>>, %arg6: memref<128x8xf32, #tpu.memory_space<vmem>>, %arg7: memref<128x256xbf16, #tpu.memory_space<vmem>>, %arg8: memref<128x256xbf16, #tpu.memory_space<vmem>>, %arg9: memref<128x128xf32, #tpu.memory_space<vmem>>) attributes {dimension_semantics = [#tpu.dimension_semantics<parallel>], iteration_bounds = array<i64: 2>, scalar_prefetch = 0 : i64, scratch_operands = 0 : i64, tpu.core_type = #tpu.core_type<tc>, window_params = [{pipeline_mode = #tpu.pipeline_mode<synchronous>, transform_indices = @transform_0, window_bounds = array<i64: 256, 8>}, {pipeline_mode = #tpu.pipeline_mode<synchronous>, transform_indices = @transform_1, window_bounds = array<i64: 256, 64>}, {pipeline_mode = #tpu.pipeline_mode<synchronous>, transform_indices = @transform_2, window_bounds = array<i64: 8, 256>}, {pipeline_mode = #tpu.pipeline_mode<synchronous>, transform_indices = @transform_3, window_bounds = array<i64: 1, 64>}, {transform_indices = @transform_4, window_bounds = array<i64: 128, 8>}, {transform_indices = @transform_5, window_bounds = array<i64: 128, 8>}, {transform_indices = @transform_6, window_bounds = array<i64: 128, 256>}, {transform_indices = @transform_7, window_bounds = array<i64: 128, 256>}, {transform_indices = @transform_8, window_bounds = array<i64: 128, 128>}]} {
    %c0 = arith.constant 0 : index
    %c0_0 = arith.constant 0 : index
    %0 = vector.load %arg7[%c0, %c0_0] : memref<128x256xbf16, #tpu.memory_space<vmem>>, vector<128x256xbf16>
    %c0_1 = arith.constant 0 : index
    %c0_2 = arith.constant 0 : index
    %1 = vector.load %arg1[%c0_1, %c0_2] : memref<256x8xbf16, #tpu.memory_space<vmem>>, vector<256x8xbf16>
    %cst = arith.constant dense<0.000000e+00> : vector<128x8xf32>
    %2 = tpu.matmul %0, %1, %cst {dimension_numbers = #tpu.dot_dimension_numbers<[1], [0], [0], [1], [0, 0, 1, 1], [], []>} : vector<128x256xbf16>, vector<256x8xbf16>, vector<128x8xf32> -> vector<128x8xf32>
    %c0_3 = arith.constant 0 : index
    %c0_4 = arith.constant 0 : index
    %3 = vector.load %arg5[%c0_3, %c0_4] : memref<128x8xf32, #tpu.memory_space<vmem>>, vector<128x8xf32>
    %4 = arith.addf %2, %3 : vector<128x8xf32>
    %cst_5 = arith.constant 0.000000e+00 : f32
    %5 = vector.broadcast %cst_5 : f32 to vector<128x8xf32>
    %6 = arith.maximumf %4, %5 : vector<128x8xf32>
    %7 = math.tanh %6 : vector<128x8xf32>
    %c0_6 = arith.constant 0 : index
    %c0_7 = arith.constant 0 : index
    %8 = vector.load %arg8[%c0_6, %c0_7] : memref<128x256xbf16, #tpu.memory_space<vmem>>, vector<128x256xbf16>
    %cst_8 = arith.constant 0.000000e+00 : bf16
    %9 = vector.broadcast %cst_8 : bf16 to vector<128x256xbf16>
    %10 = arith.cmpf ogt, %8, %9 : vector<128x256xbf16>
    %c0_9 = arith.constant 0 : index
    %c0_10 = arith.constant 0 : index
    %11 = vector.load %arg6[%c0_9, %c0_10] : memref<128x8xf32, #tpu.memory_space<vmem>>, vector<128x8xf32>
    %c0_11 = arith.constant 0 : index
    %c0_12 = arith.constant 0 : index
    %12 = vector.load %arg3[%c0_11, %c0_12] : memref<8x256xf32, #tpu.memory_space<vmem>>, vector<8x256xf32>
    %c0_13 = arith.constant 0 : index
    %c0_14 = arith.constant 0 : index
    %13 = vector.load %arg2[%c0_13, %c0_14] : memref<256x64xbf16, #tpu.memory_space<vmem>>, vector<256x64xbf16>
    %c0_15 = arith.constant 0 : index
    %c0_16 = arith.constant 0 : index
    %14 = vector.load %arg4[%c0_15, %c0_16] : memref<1x64xf32, #tpu.memory_space<vmem>>, vector<1x64xf32>
    %15 = vector.extract_strided_slice %11 {offsets = [0, 0], sizes = [128, 1], strides = [1, 1]} : vector<128x8xf32> to vector<128x1xf32>
    %16 = vector.extract_strided_slice %12 {offsets = [0, 0], sizes = [1, 256], strides = [1, 1]} : vector<8x256xf32> to vector<1x256xf32>
    %17 = vector.broadcast %15 : vector<128x1xf32> to vector<128x256xf32>
    %18 = vector.broadcast %16 : vector<1x256xf32> to vector<128x256xf32>
    %19 = arith.addf %17, %18 : vector<128x256xf32>
    %cst_17 = arith.constant 0.000000e+00 : f32
    %20 = vector.broadcast %cst_17 : f32 to vector<128x256xf32>
    %21 = arith.cmpf oge, %19, %20 : vector<128x256xf32>
    %cst_18 = arith.constant 2.000000e-01 : f32
    %22 = vector.broadcast %cst_18 : f32 to vector<128x256xf32>
    %23 = arith.mulf %22, %19 : vector<128x256xf32>
    %24 = arith.select %21, %19, %23 : vector<128x256xi1>, vector<128x256xf32>
    %cst_19 = arith.constant -1.000000e+30 : f32
    %25 = vector.broadcast %cst_19 : f32 to vector<128x256xf32>
    %26 = arith.select %10, %24, %25 : vector<128x256xi1>, vector<128x256xf32>
    %cst_20 = arith.constant dense<0xFF800000> : vector<128xf32>
    %27 = vector.multi_reduction <maximumf>, %26, %cst_20 [1] : vector<128x256xf32> to vector<128xf32>
    %28 = vector.shape_cast %27 : vector<128xf32> to vector<128x1xf32>
    %29 = vector.broadcast %28 : vector<128x1xf32> to vector<128x256xf32>
    %30 = arith.subf %26, %29 : vector<128x256xf32>
    %31 = math.exp %30 : vector<128x256xf32>
    %32 = arith.extf %8 : vector<128x256xbf16> to vector<128x256xf32>
    %33 = arith.mulf %32, %31 : vector<128x256xf32>
    %cst_21 = arith.constant dense<0.000000e+00> : vector<128xf32>
    %34 = vector.multi_reduction <add>, %33, %cst_21 [1] : vector<128x256xf32> to vector<128xf32>
    %35 = vector.shape_cast %34 : vector<128xf32> to vector<128x1xf32>
    %36 = arith.truncf %33 : vector<128x256xf32> to vector<128x256xbf16>
    %37 = vector.extract_strided_slice %13 {offsets = [0, 0], sizes = [256, 8], strides = [1, 1]} : vector<256x64xbf16> to vector<256x8xbf16>
    %cst_22 = arith.constant dense<0.000000e+00> : vector<128x8xf32>
    %38 = tpu.matmul %36, %37, %cst_22 {dimension_numbers = #tpu.dot_dimension_numbers<[1], [0], [0], [1], [0, 0, 1, 1], [], []>} : vector<128x256xbf16>, vector<256x8xbf16>, vector<128x8xf32> -> vector<128x8xf32>
    %39 = tpu.reciprocal %35 {approx = true} : vector<128x1xf32> -> vector<128x1xf32>
    %40 = vector.broadcast %39 : vector<128x1xf32> to vector<128x8xf32>
    %41 = arith.mulf %38, %40 : vector<128x8xf32>
    %42 = vector.extract_strided_slice %14 {offsets = [0, 0], sizes = [1, 8], strides = [1, 1]} : vector<1x64xf32> to vector<1x8xf32>
    %43 = vector.broadcast %42 : vector<1x8xf32> to vector<128x8xf32>
    %44 = arith.addf %41, %43 : vector<128x8xf32>
    %cst_23 = arith.constant 0.000000e+00 : f32
    %45 = vector.broadcast %cst_23 : f32 to vector<128x8xf32>
    %46 = arith.cmpf oge, %44, %45 : vector<128x8xf32>
    %cst_24 = arith.constant 0.00999999977 : f32
    %47 = vector.broadcast %cst_24 : f32 to vector<128x8xf32>
    %48 = arith.mulf %47, %44 : vector<128x8xf32>
    %49 = arith.select %46, %44, %48 : vector<128x8xi1>, vector<128x8xf32>
    %50 = math.tanh %49 : vector<128x8xf32>
    %51 = vector.extract_strided_slice %11 {offsets = [0, 1], sizes = [128, 1], strides = [1, 1]} : vector<128x8xf32> to vector<128x1xf32>
    %52 = vector.extract_strided_slice %12 {offsets = [1, 0], sizes = [1, 256], strides = [1, 1]} : vector<8x256xf32> to vector<1x256xf32>
    %53 = vector.broadcast %51 : vector<128x1xf32> to vector<128x256xf32>
    %54 = vector.broadcast %52 : vector<1x256xf32> to vector<128x256xf32>
    %55 = arith.addf %53, %54 : vector<128x256xf32>
    %cst_25 = arith.constant 0.000000e+00 : f32
    %56 = vector.broadcast %cst_25 : f32 to vector<128x256xf32>
    %57 = arith.cmpf oge, %55, %56 : vector<128x256xf32>
    %cst_26 = arith.constant 2.000000e-01 : f32
    %58 = vector.broadcast %cst_26 : f32 to vector<128x256xf32>
    %59 = arith.mulf %58, %55 : vector<128x256xf32>
    %60 = arith.select %57, %55, %59 : vector<128x256xi1>, vector<128x256xf32>
    %cst_27 = arith.constant -1.000000e+30 : f32
    %61 = vector.broadcast %cst_27 : f32 to vector<128x256xf32>
    %62 = arith.select %10, %60, %61 : vector<128x256xi1>, vector<128x256xf32>
    %cst_28 = arith.constant dense<0xFF800000> : vector<128xf32>
    %63 = vector.multi_reduction <maximumf>, %62, %cst_28 [1] : vector<128x256xf32> to vector<128xf32>
    %64 = vector.shape_cast %63 : vector<128xf32> to vector<128x1xf32>
    %65 = vector.broadcast %64 : vector<128x1xf32> to vector<128x256xf32>
    %66 = arith.subf %62, %65 : vector<128x256xf32>
    %67 = math.exp %66 : vector<128x256xf32>
    %68 = arith.extf %8 : vector<128x256xbf16> to vector<128x256xf32>
    %69 = arith.mulf %68, %67 : vector<128x256xf32>
    %cst_29 = arith.constant dense<0.000000e+00> : vector<128xf32>
    %70 = vector.multi_reduction <add>, %69, %cst_29 [1] : vector<128x256xf32> to vector<128xf32>
    %71 = vector.shape_cast %70 : vector<128xf32> to vector<128x1xf32>
    %72 = arith.truncf %69 : vector<128x256xf32> to vector<128x256xbf16>
    %73 = vector.extract_strided_slice %13 {offsets = [0, 8], sizes = [256, 8], strides = [1, 1]} : vector<256x64xbf16> to vector<256x8xbf16>
    %cst_30 = arith.constant dense<0.000000e+00> : vector<128x8xf32>
    %74 = tpu.matmul %72, %73, %cst_30 {dimension_numbers = #tpu.dot_dimension_numbers<[1], [0], [0], [1], [0, 0, 1, 1], [], []>} : vector<128x256xbf16>, vector<256x8xbf16>, vector<128x8xf32> -> vector<128x8xf32>
    %75 = tpu.reciprocal %71 {approx = true} : vector<128x1xf32> -> vector<128x1xf32>
    %76 = vector.broadcast %75 : vector<128x1xf32> to vector<128x8xf32>
    %77 = arith.mulf %74, %76 : vector<128x8xf32>
    %78 = vector.extract_strided_slice %14 {offsets = [0, 8], sizes = [1, 8], strides = [1, 1]} : vector<1x64xf32> to vector<1x8xf32>
    %79 = vector.broadcast %78 : vector<1x8xf32> to vector<128x8xf32>
    %80 = arith.addf %77, %79 : vector<128x8xf32>
    %cst_31 = arith.constant 0.000000e+00 : f32
    %81 = vector.broadcast %cst_31 : f32 to vector<128x8xf32>
    %82 = arith.cmpf oge, %80, %81 : vector<128x8xf32>
    %cst_32 = arith.constant 0.00999999977 : f32
    %83 = vector.broadcast %cst_32 : f32 to vector<128x8xf32>
    %84 = arith.mulf %83, %80 : vector<128x8xf32>
    %85 = arith.select %82, %80, %84 : vector<128x8xi1>, vector<128x8xf32>
    %86 = math.tanh %85 : vector<128x8xf32>
    %87 = vector.extract_strided_slice %11 {offsets = [0, 2], sizes = [128, 1], strides = [1, 1]} : vector<128x8xf32> to vector<128x1xf32>
    %88 = vector.extract_strided_slice %12 {offsets = [2, 0], sizes = [1, 256], strides = [1, 1]} : vector<8x256xf32> to vector<1x256xf32>
    %89 = vector.broadcast %87 : vector<128x1xf32> to vector<128x256xf32>
    %90 = vector.broadcast %88 : vector<1x256xf32> to vector<128x256xf32>
    %91 = arith.addf %89, %90 : vector<128x256xf32>
    %cst_33 = arith.constant 0.000000e+00 : f32
    %92 = vector.broadcast %cst_33 : f32 to vector<128x256xf32>
    %93 = arith.cmpf oge, %91, %92 : vector<128x256xf32>
    %cst_34 = arith.constant 2.000000e-01 : f32
    %94 = vector.broadcast %cst_34 : f32 to vector<128x256xf32>
    %95 = arith.mulf %94, %91 : vector<128x256xf32>
    %96 = arith.select %93, %91, %95 : vector<128x256xi1>, vector<128x256xf32>
    %cst_35 = arith.constant -1.000000e+30 : f32
    %97 = vector.broadcast %cst_35 : f32 to vector<128x256xf32>
    %98 = arith.select %10, %96, %97 : vector<128x256xi1>, vector<128x256xf32>
    %cst_36 = arith.constant dense<0xFF800000> : vector<128xf32>
    %99 = vector.multi_reduction <maximumf>, %98, %cst_36 [1] : vector<128x256xf32> to vector<128xf32>
    %100 = vector.shape_cast %99 : vector<128xf32> to vector<128x1xf32>
    %101 = vector.broadcast %100 : vector<128x1xf32> to vector<128x256xf32>
    %102 = arith.subf %98, %101 : vector<128x256xf32>
    %103 = math.exp %102 : vector<128x256xf32>
    %104 = arith.extf %8 : vector<128x256xbf16> to vector<128x256xf32>
    %105 = arith.mulf %104, %103 : vector<128x256xf32>
    %cst_37 = arith.constant dense<0.000000e+00> : vector<128xf32>
    %106 = vector.multi_reduction <add>, %105, %cst_37 [1] : vector<128x256xf32> to vector<128xf32>
    %107 = vector.shape_cast %106 : vector<128xf32> to vector<128x1xf32>
    %108 = arith.truncf %105 : vector<128x256xf32> to vector<128x256xbf16>
    %109 = vector.extract_strided_slice %13 {offsets = [0, 16], sizes = [256, 8], strides = [1, 1]} : vector<256x64xbf16> to vector<256x8xbf16>
    %cst_38 = arith.constant dense<0.000000e+00> : vector<128x8xf32>
    %110 = tpu.matmul %108, %109, %cst_38 {dimension_numbers = #tpu.dot_dimension_numbers<[1], [0], [0], [1], [0, 0, 1, 1], [], []>} : vector<128x256xbf16>, vector<256x8xbf16>, vector<128x8xf32> -> vector<128x8xf32>
    %111 = tpu.reciprocal %107 {approx = true} : vector<128x1xf32> -> vector<128x1xf32>
    %112 = vector.broadcast %111 : vector<128x1xf32> to vector<128x8xf32>
    %113 = arith.mulf %110, %112 : vector<128x8xf32>
    %114 = vector.extract_strided_slice %14 {offsets = [0, 16], sizes = [1, 8], strides = [1, 1]} : vector<1x64xf32> to vector<1x8xf32>
    %115 = vector.broadcast %114 : vector<1x8xf32> to vector<128x8xf32>
    %116 = arith.addf %113, %115 : vector<128x8xf32>
    %cst_39 = arith.constant 0.000000e+00 : f32
    %117 = vector.broadcast %cst_39 : f32 to vector<128x8xf32>
    %118 = arith.cmpf oge, %116, %117 : vector<128x8xf32>
    %cst_40 = arith.constant 0.00999999977 : f32
    %119 = vector.broadcast %cst_40 : f32 to vector<128x8xf32>
    %120 = arith.mulf %119, %116 : vector<128x8xf32>
    %121 = arith.select %118, %116, %120 : vector<128x8xi1>, vector<128x8xf32>
    %122 = math.tanh %121 : vector<128x8xf32>
    %123 = vector.extract_strided_slice %11 {offsets = [0, 3], sizes = [128, 1], strides = [1, 1]} : vector<128x8xf32> to vector<128x1xf32>
    %124 = vector.extract_strided_slice %12 {offsets = [3, 0], sizes = [1, 256], strides = [1, 1]} : vector<8x256xf32> to vector<1x256xf32>
    %125 = vector.broadcast %123 : vector<128x1xf32> to vector<128x256xf32>
    %126 = vector.broadcast %124 : vector<1x256xf32> to vector<128x256xf32>
    %127 = arith.addf %125, %126 : vector<128x256xf32>
    %cst_41 = arith.constant 0.000000e+00 : f32
    %128 = vector.broadcast %cst_41 : f32 to vector<128x256xf32>
    %129 = arith.cmpf oge, %127, %128 : vector<128x256xf32>
    %cst_42 = arith.constant 2.000000e-01 : f32
    %130 = vector.broadcast %cst_42 : f32 to vector<128x256xf32>
    %131 = arith.mulf %130, %127 : vector<128x256xf32>
    %132 = arith.select %129, %127, %131 : vector<128x256xi1>, vector<128x256xf32>
    %cst_43 = arith.constant -1.000000e+30 : f32
    %133 = vector.broadcast %cst_43 : f32 to vector<128x256xf32>
    %134 = arith.select %10, %132, %133 : vector<128x256xi1>, vector<128x256xf32>
    %cst_44 = arith.constant dense<0xFF800000> : vector<128xf32>
    %135 = vector.multi_reduction <maximumf>, %134, %cst_44 [1] : vector<128x256xf32> to vector<128xf32>
    %136 = vector.shape_cast %135 : vector<128xf32> to vector<128x1xf32>
    %137 = vector.broadcast %136 : vector<128x1xf32> to vector<128x256xf32>
    %138 = arith.subf %134, %137 : vector<128x256xf32>
    %139 = math.exp %138 : vector<128x256xf32>
    %140 = arith.extf %8 : vector<128x256xbf16> to vector<128x256xf32>
    %141 = arith.mulf %140, %139 : vector<128x256xf32>
    %cst_45 = arith.constant dense<0.000000e+00> : vector<128xf32>
    %142 = vector.multi_reduction <add>, %141, %cst_45 [1] : vector<128x256xf32> to vector<128xf32>
    %143 = vector.shape_cast %142 : vector<128xf32> to vector<128x1xf32>
    %144 = arith.truncf %141 : vector<128x256xf32> to vector<128x256xbf16>
    %145 = vector.extract_strided_slice %13 {offsets = [0, 24], sizes = [256, 8], strides = [1, 1]} : vector<256x64xbf16> to vector<256x8xbf16>
    %cst_46 = arith.constant dense<0.000000e+00> : vector<128x8xf32>
    %146 = tpu.matmul %144, %145, %cst_46 {dimension_numbers = #tpu.dot_dimension_numbers<[1], [0], [0], [1], [0, 0, 1, 1], [], []>} : vector<128x256xbf16>, vector<256x8xbf16>, vector<128x8xf32> -> vector<128x8xf32>
    %147 = tpu.reciprocal %143 {approx = true} : vector<128x1xf32> -> vector<128x1xf32>
    %148 = vector.broadcast %147 : vector<128x1xf32> to vector<128x8xf32>
    %149 = arith.mulf %146, %148 : vector<128x8xf32>
    %150 = vector.extract_strided_slice %14 {offsets = [0, 24], sizes = [1, 8], strides = [1, 1]} : vector<1x64xf32> to vector<1x8xf32>
    %151 = vector.broadcast %150 : vector<1x8xf32> to vector<128x8xf32>
    %152 = arith.addf %149, %151 : vector<128x8xf32>
    %cst_47 = arith.constant 0.000000e+00 : f32
    %153 = vector.broadcast %cst_47 : f32 to vector<128x8xf32>
    %154 = arith.cmpf oge, %152, %153 : vector<128x8xf32>
    %cst_48 = arith.constant 0.00999999977 : f32
    %155 = vector.broadcast %cst_48 : f32 to vector<128x8xf32>
    %156 = arith.mulf %155, %152 : vector<128x8xf32>
    %157 = arith.select %154, %152, %156 : vector<128x8xi1>, vector<128x8xf32>
    %158 = math.tanh %157 : vector<128x8xf32>
    %159 = vector.extract_strided_slice %11 {offsets = [0, 4], sizes = [128, 1], strides = [1, 1]} : vector<128x8xf32> to vector<128x1xf32>
    %160 = vector.extract_strided_slice %12 {offsets = [4, 0], sizes = [1, 256], strides = [1, 1]} : vector<8x256xf32> to vector<1x256xf32>
    %161 = vector.broadcast %159 : vector<128x1xf32> to vector<128x256xf32>
    %162 = vector.broadcast %160 : vector<1x256xf32> to vector<128x256xf32>
    %163 = arith.addf %161, %162 : vector<128x256xf32>
    %cst_49 = arith.constant 0.000000e+00 : f32
    %164 = vector.broadcast %cst_49 : f32 to vector<128x256xf32>
    %165 = arith.cmpf oge, %163, %164 : vector<128x256xf32>
    %cst_50 = arith.constant 2.000000e-01 : f32
    %166 = vector.broadcast %cst_50 : f32 to vector<128x256xf32>
    %167 = arith.mulf %166, %163 : vector<128x256xf32>
    %168 = arith.select %165, %163, %167 : vector<128x256xi1>, vector<128x256xf32>
    %cst_51 = arith.constant -1.000000e+30 : f32
    %169 = vector.broadcast %cst_51 : f32 to vector<128x256xf32>
    %170 = arith.select %10, %168, %169 : vector<128x256xi1>, vector<128x256xf32>
    %cst_52 = arith.constant dense<0xFF800000> : vector<128xf32>
    %171 = vector.multi_reduction <maximumf>, %170, %cst_52 [1] : vector<128x256xf32> to vector<128xf32>
    %172 = vector.shape_cast %171 : vector<128xf32> to vector<128x1xf32>
    %173 = vector.broadcast %172 : vector<128x1xf32> to vector<128x256xf32>
    %174 = arith.subf %170, %173 : vector<128x256xf32>
    %175 = math.exp %174 : vector<128x256xf32>
    %176 = arith.extf %8 : vector<128x256xbf16> to vector<128x256xf32>
    %177 = arith.mulf %176, %175 : vector<128x256xf32>
    %cst_53 = arith.constant dense<0.000000e+00> : vector<128xf32>
    %178 = vector.multi_reduction <add>, %177, %cst_53 [1] : vector<128x256xf32> to vector<128xf32>
    %179 = vector.shape_cast %178 : vector<128xf32> to vector<128x1xf32>
    %180 = arith.truncf %177 : vector<128x256xf32> to vector<128x256xbf16>
    %181 = vector.extract_strided_slice %13 {offsets = [0, 32], sizes = [256, 8], strides = [1, 1]} : vector<256x64xbf16> to vector<256x8xbf16>
    %cst_54 = arith.constant dense<0.000000e+00> : vector<128x8xf32>
    %182 = tpu.matmul %180, %181, %cst_54 {dimension_numbers = #tpu.dot_dimension_numbers<[1], [0], [0], [1], [0, 0, 1, 1], [], []>} : vector<128x256xbf16>, vector<256x8xbf16>, vector<128x8xf32> -> vector<128x8xf32>
    %183 = tpu.reciprocal %179 {approx = true} : vector<128x1xf32> -> vector<128x1xf32>
    %184 = vector.broadcast %183 : vector<128x1xf32> to vector<128x8xf32>
    %185 = arith.mulf %182, %184 : vector<128x8xf32>
    %186 = vector.extract_strided_slice %14 {offsets = [0, 32], sizes = [1, 8], strides = [1, 1]} : vector<1x64xf32> to vector<1x8xf32>
    %187 = vector.broadcast %186 : vector<1x8xf32> to vector<128x8xf32>
    %188 = arith.addf %185, %187 : vector<128x8xf32>
    %cst_55 = arith.constant 0.000000e+00 : f32
    %189 = vector.broadcast %cst_55 : f32 to vector<128x8xf32>
    %190 = arith.cmpf oge, %188, %189 : vector<128x8xf32>
    %cst_56 = arith.constant 0.00999999977 : f32
    %191 = vector.broadcast %cst_56 : f32 to vector<128x8xf32>
    %192 = arith.mulf %191, %188 : vector<128x8xf32>
    %193 = arith.select %190, %188, %192 : vector<128x8xi1>, vector<128x8xf32>
    %194 = math.tanh %193 : vector<128x8xf32>
    %195 = vector.extract_strided_slice %11 {offsets = [0, 5], sizes = [128, 1], strides = [1, 1]} : vector<128x8xf32> to vector<128x1xf32>
    %196 = vector.extract_strided_slice %12 {offsets = [5, 0], sizes = [1, 256], strides = [1, 1]} : vector<8x256xf32> to vector<1x256xf32>
    %197 = vector.broadcast %195 : vector<128x1xf32> to vector<128x256xf32>
    %198 = vector.broadcast %196 : vector<1x256xf32> to vector<128x256xf32>
    %199 = arith.addf %197, %198 : vector<128x256xf32>
    %cst_57 = arith.constant 0.000000e+00 : f32
    %200 = vector.broadcast %cst_57 : f32 to vector<128x256xf32>
    %201 = arith.cmpf oge, %199, %200 : vector<128x256xf32>
    %cst_58 = arith.constant 2.000000e-01 : f32
    %202 = vector.broadcast %cst_58 : f32 to vector<128x256xf32>
    %203 = arith.mulf %202, %199 : vector<128x256xf32>
    %204 = arith.select %201, %199, %203 : vector<128x256xi1>, vector<128x256xf32>
    %cst_59 = arith.constant -1.000000e+30 : f32
    %205 = vector.broadcast %cst_59 : f32 to vector<128x256xf32>
    %206 = arith.select %10, %204, %205 : vector<128x256xi1>, vector<128x256xf32>
    %cst_60 = arith.constant dense<0xFF800000> : vector<128xf32>
    %207 = vector.multi_reduction <maximumf>, %206, %cst_60 [1] : vector<128x256xf32> to vector<128xf32>
    %208 = vector.shape_cast %207 : vector<128xf32> to vector<128x1xf32>
    %209 = vector.broadcast %208 : vector<128x1xf32> to vector<128x256xf32>
    %210 = arith.subf %206, %209 : vector<128x256xf32>
    %211 = math.exp %210 : vector<128x256xf32>
    %212 = arith.extf %8 : vector<128x256xbf16> to vector<128x256xf32>
    %213 = arith.mulf %212, %211 : vector<128x256xf32>
    %cst_61 = arith.constant dense<0.000000e+00> : vector<128xf32>
    %214 = vector.multi_reduction <add>, %213, %cst_61 [1] : vector<128x256xf32> to vector<128xf32>
    %215 = vector.shape_cast %214 : vector<128xf32> to vector<128x1xf32>
    %216 = arith.truncf %213 : vector<128x256xf32> to vector<128x256xbf16>
    %217 = vector.extract_strided_slice %13 {offsets = [0, 40], sizes = [256, 8], strides = [1, 1]} : vector<256x64xbf16> to vector<256x8xbf16>
    %cst_62 = arith.constant dense<0.000000e+00> : vector<128x8xf32>
    %218 = tpu.matmul %216, %217, %cst_62 {dimension_numbers = #tpu.dot_dimension_numbers<[1], [0], [0], [1], [0, 0, 1, 1], [], []>} : vector<128x256xbf16>, vector<256x8xbf16>, vector<128x8xf32> -> vector<128x8xf32>
    %219 = tpu.reciprocal %215 {approx = true} : vector<128x1xf32> -> vector<128x1xf32>
    %220 = vector.broadcast %219 : vector<128x1xf32> to vector<128x8xf32>
    %221 = arith.mulf %218, %220 : vector<128x8xf32>
    %222 = vector.extract_strided_slice %14 {offsets = [0, 40], sizes = [1, 8], strides = [1, 1]} : vector<1x64xf32> to vector<1x8xf32>
    %223 = vector.broadcast %222 : vector<1x8xf32> to vector<128x8xf32>
    %224 = arith.addf %221, %223 : vector<128x8xf32>
    %cst_63 = arith.constant 0.000000e+00 : f32
    %225 = vector.broadcast %cst_63 : f32 to vector<128x8xf32>
    %226 = arith.cmpf oge, %224, %225 : vector<128x8xf32>
    %cst_64 = arith.constant 0.00999999977 : f32
    %227 = vector.broadcast %cst_64 : f32 to vector<128x8xf32>
    %228 = arith.mulf %227, %224 : vector<128x8xf32>
    %229 = arith.select %226, %224, %228 : vector<128x8xi1>, vector<128x8xf32>
    %230 = math.tanh %229 : vector<128x8xf32>
    %231 = vector.extract_strided_slice %11 {offsets = [0, 6], sizes = [128, 1], strides = [1, 1]} : vector<128x8xf32> to vector<128x1xf32>
    %232 = vector.extract_strided_slice %12 {offsets = [6, 0], sizes = [1, 256], strides = [1, 1]} : vector<8x256xf32> to vector<1x256xf32>
    %233 = vector.broadcast %231 : vector<128x1xf32> to vector<128x256xf32>
    %234 = vector.broadcast %232 : vector<1x256xf32> to vector<128x256xf32>
    %235 = arith.addf %233, %234 : vector<128x256xf32>
    %cst_65 = arith.constant 0.000000e+00 : f32
    %236 = vector.broadcast %cst_65 : f32 to vector<128x256xf32>
    %237 = arith.cmpf oge, %235, %236 : vector<128x256xf32>
    %cst_66 = arith.constant 2.000000e-01 : f32
    %238 = vector.broadcast %cst_66 : f32 to vector<128x256xf32>
    %239 = arith.mulf %238, %235 : vector<128x256xf32>
    %240 = arith.select %237, %235, %239 : vector<128x256xi1>, vector<128x256xf32>
    %cst_67 = arith.constant -1.000000e+30 : f32
    %241 = vector.broadcast %cst_67 : f32 to vector<128x256xf32>
    %242 = arith.select %10, %240, %241 : vector<128x256xi1>, vector<128x256xf32>
    %cst_68 = arith.constant dense<0xFF800000> : vector<128xf32>
    %243 = vector.multi_reduction <maximumf>, %242, %cst_68 [1] : vector<128x256xf32> to vector<128xf32>
    %244 = vector.shape_cast %243 : vector<128xf32> to vector<128x1xf32>
    %245 = vector.broadcast %244 : vector<128x1xf32> to vector<128x256xf32>
    %246 = arith.subf %242, %245 : vector<128x256xf32>
    %247 = math.exp %246 : vector<128x256xf32>
    %248 = arith.extf %8 : vector<128x256xbf16> to vector<128x256xf32>
    %249 = arith.mulf %248, %247 : vector<128x256xf32>
    %cst_69 = arith.constant dense<0.000000e+00> : vector<128xf32>
    %250 = vector.multi_reduction <add>, %249, %cst_69 [1] : vector<128x256xf32> to vector<128xf32>
    %251 = vector.shape_cast %250 : vector<128xf32> to vector<128x1xf32>
    %252 = arith.truncf %249 : vector<128x256xf32> to vector<128x256xbf16>
    %253 = vector.extract_strided_slice %13 {offsets = [0, 48], sizes = [256, 8], strides = [1, 1]} : vector<256x64xbf16> to vector<256x8xbf16>
    %cst_70 = arith.constant dense<0.000000e+00> : vector<128x8xf32>
    %254 = tpu.matmul %252, %253, %cst_70 {dimension_numbers = #tpu.dot_dimension_numbers<[1], [0], [0], [1], [0, 0, 1, 1], [], []>} : vector<128x256xbf16>, vector<256x8xbf16>, vector<128x8xf32> -> vector<128x8xf32>
    %255 = tpu.reciprocal %251 {approx = true} : vector<128x1xf32> -> vector<128x1xf32>
    %256 = vector.broadcast %255 : vector<128x1xf32> to vector<128x8xf32>
    %257 = arith.mulf %254, %256 : vector<128x8xf32>
    %258 = vector.extract_strided_slice %14 {offsets = [0, 48], sizes = [1, 8], strides = [1, 1]} : vector<1x64xf32> to vector<1x8xf32>
    %259 = vector.broadcast %258 : vector<1x8xf32> to vector<128x8xf32>
    %260 = arith.addf %257, %259 : vector<128x8xf32>
    %cst_71 = arith.constant 0.000000e+00 : f32
    %261 = vector.broadcast %cst_71 : f32 to vector<128x8xf32>
    %262 = arith.cmpf oge, %260, %261 : vector<128x8xf32>
    %cst_72 = arith.constant 0.00999999977 : f32
    %263 = vector.broadcast %cst_72 : f32 to vector<128x8xf32>
    %264 = arith.mulf %263, %260 : vector<128x8xf32>
    %265 = arith.select %262, %260, %264 : vector<128x8xi1>, vector<128x8xf32>
    %266 = math.tanh %265 : vector<128x8xf32>
    %267 = vector.extract_strided_slice %11 {offsets = [0, 7], sizes = [128, 1], strides = [1, 1]} : vector<128x8xf32> to vector<128x1xf32>
    %268 = vector.extract_strided_slice %12 {offsets = [7, 0], sizes = [1, 256], strides = [1, 1]} : vector<8x256xf32> to vector<1x256xf32>
    %269 = vector.broadcast %267 : vector<128x1xf32> to vector<128x256xf32>
    %270 = vector.broadcast %268 : vector<1x256xf32> to vector<128x256xf32>
    %271 = arith.addf %269, %270 : vector<128x256xf32>
    %cst_73 = arith.constant 0.000000e+00 : f32
    %272 = vector.broadcast %cst_73 : f32 to vector<128x256xf32>
    %273 = arith.cmpf oge, %271, %272 : vector<128x256xf32>
    %cst_74 = arith.constant 2.000000e-01 : f32
    %274 = vector.broadcast %cst_74 : f32 to vector<128x256xf32>
    %275 = arith.mulf %274, %271 : vector<128x256xf32>
    %276 = arith.select %273, %271, %275 : vector<128x256xi1>, vector<128x256xf32>
    %cst_75 = arith.constant -1.000000e+30 : f32
    %277 = vector.broadcast %cst_75 : f32 to vector<128x256xf32>
    %278 = arith.select %10, %276, %277 : vector<128x256xi1>, vector<128x256xf32>
    %cst_76 = arith.constant dense<0xFF800000> : vector<128xf32>
    %279 = vector.multi_reduction <maximumf>, %278, %cst_76 [1] : vector<128x256xf32> to vector<128xf32>
    %280 = vector.shape_cast %279 : vector<128xf32> to vector<128x1xf32>
    %281 = vector.broadcast %280 : vector<128x1xf32> to vector<128x256xf32>
    %282 = arith.subf %278, %281 : vector<128x256xf32>
    %283 = math.exp %282 : vector<128x256xf32>
    %284 = arith.extf %8 : vector<128x256xbf16> to vector<128x256xf32>
    %285 = arith.mulf %284, %283 : vector<128x256xf32>
    %cst_77 = arith.constant dense<0.000000e+00> : vector<128xf32>
    %286 = vector.multi_reduction <add>, %285, %cst_77 [1] : vector<128x256xf32> to vector<128xf32>
    %287 = vector.shape_cast %286 : vector<128xf32> to vector<128x1xf32>
    %288 = arith.truncf %285 : vector<128x256xf32> to vector<128x256xbf16>
    %289 = vector.extract_strided_slice %13 {offsets = [0, 56], sizes = [256, 8], strides = [1, 1]} : vector<256x64xbf16> to vector<256x8xbf16>
    %cst_78 = arith.constant dense<0.000000e+00> : vector<128x8xf32>
    %290 = tpu.matmul %288, %289, %cst_78 {dimension_numbers = #tpu.dot_dimension_numbers<[1], [0], [0], [1], [0, 0, 1, 1], [], []>} : vector<128x256xbf16>, vector<256x8xbf16>, vector<128x8xf32> -> vector<128x8xf32>
    %291 = tpu.reciprocal %287 {approx = true} : vector<128x1xf32> -> vector<128x1xf32>
    %292 = vector.broadcast %291 : vector<128x1xf32> to vector<128x8xf32>
    %293 = arith.mulf %290, %292 : vector<128x8xf32>
    %294 = vector.extract_strided_slice %14 {offsets = [0, 56], sizes = [1, 8], strides = [1, 1]} : vector<1x64xf32> to vector<1x8xf32>
    %295 = vector.broadcast %294 : vector<1x8xf32> to vector<128x8xf32>
    %296 = arith.addf %293, %295 : vector<128x8xf32>
    %cst_79 = arith.constant 0.000000e+00 : f32
    %297 = vector.broadcast %cst_79 : f32 to vector<128x8xf32>
    %298 = arith.cmpf oge, %296, %297 : vector<128x8xf32>
    %cst_80 = arith.constant 0.00999999977 : f32
    %299 = vector.broadcast %cst_80 : f32 to vector<128x8xf32>
    %300 = arith.mulf %299, %296 : vector<128x8xf32>
    %301 = arith.select %298, %296, %300 : vector<128x8xi1>, vector<128x8xf32>
    %302 = math.tanh %301 : vector<128x8xf32>
    %cst_81 = arith.constant 0.000000e+00 : f32
    %303 = vector.broadcast %cst_81 : f32 to vector<128x56xf32>
    %304 = tpu.concatenate %7, %50, %86, %122, %158, %194, %230, %266, %302, %303 in 1 : vector<128x8xf32>, vector<128x8xf32>, vector<128x8xf32>, vector<128x8xf32>, vector<128x8xf32>, vector<128x8xf32>, vector<128x8xf32>, vector<128x8xf32>, vector<128x8xf32>, vector<128x56xf32> -> vector<128x128xf32>
    %c0_82 = arith.constant 0 : index
    %c0_83 = arith.constant 0 : index
    %305 = vector.load %arg9[%c0_82, %c0_83] : memref<128x128xf32, #tpu.memory_space<vmem>>, vector<128x128xf32>
    tpu.vector_store %arg9[%c0_82, %c0_83], %304 {strides = array<i32>} : memref<128x128xf32, #tpu.memory_space<vmem>>, vector<128x128xf32>,
    return
  }
  func.func @transform_0(%arg0: i32) -> (i32, i32) {
    %c0_i32 = arith.constant 0 : i32
    %c0_i32_0 = arith.constant 0 : i32
    %c0_i32_1 = arith.constant 0 : i32
    return %c0_i32, %c0_i32_0 : i32, i32
  }
  func.func @transform_1(%arg0: i32) -> (i32, i32) {
    %c0_i32 = arith.constant 0 : i32
    %c0_i32_0 = arith.constant 0 : i32
    %c0_i32_1 = arith.constant 0 : i32
    return %c0_i32, %c0_i32_0 : i32, i32
  }
  func.func @transform_2(%arg0: i32) -> (i32, i32) {
    %c0_i32 = arith.constant 0 : i32
    %c0_i32_0 = arith.constant 0 : i32
    %c0_i32_1 = arith.constant 0 : i32
    return %c0_i32, %c0_i32_0 : i32, i32
  }
  func.func @transform_3(%arg0: i32) -> (i32, i32) {
    %c0_i32 = arith.constant 0 : i32
    %c0_i32_0 = arith.constant 0 : i32
    %c0_i32_1 = arith.constant 0 : i32
    return %c0_i32, %c0_i32_0 : i32, i32
  }
  func.func @transform_4(%arg0: i32) -> (i32, i32) {
    %c0_i32 = arith.constant 0 : i32
    %c0_i32_0 = arith.constant 0 : i32
    return %arg0, %c0_i32 : i32, i32
  }
  func.func @transform_5(%arg0: i32) -> (i32, i32) {
    %c0_i32 = arith.constant 0 : i32
    %c0_i32_0 = arith.constant 0 : i32
    return %arg0, %c0_i32 : i32, i32
  }
  func.func @transform_6(%arg0: i32) -> (i32, i32) {
    %c0_i32 = arith.constant 0 : i32
    %c0_i32_0 = arith.constant 0 : i32
    return %arg0, %c0_i32 : i32, i32
  }
  func.func @transform_7(%arg0: i32) -> (i32, i32) {
    %c0_i32 = arith.constant 0 : i32
    %c0_i32_0 = arith.constant 0 : i32
    return %arg0, %c0_i32 : i32, i32
  }
  func.func @transform_8(%arg0: i32) -> (i32, i32) {
    %c0_i32 = arith.constant 0 : i32
    %c0_i32_0 = arith.constant 0 : i32
    return %arg0, %c0_i32 : i32, i32
  }
}

</mosaic_0001>

<llo_original>
// kernel: tpu_custom_call.1
$region0: #{tpu_custom_call.1}
  #allocation0 [shape = 'u32[]', space=smem, size = 0x4, offset = 0x4, fixed_abs, tag = 'smem constant byte address 0x4 - core index']
  #allocation1 [shape = 'u32[144,128]{1,0:T(1,128)}', space=vmem, size = 0x12000, scoped, tag = 'internal scratch']
  %s0 = inlined_call_operand.vmem [shape: bf16[256,8], index: 0, kind: input, shape index: {}]
  %s1 = inlined_call_operand.vmem [shape: bf16[256,64], index: 1, kind: input, shape index: {}]
  %s2 = inlined_call_operand.vmem [shape: f32[8,256], index: 2, kind: input, shape index: {}]
  %s3 = inlined_call_operand.vmem [shape: f32[1,64], index: 3, kind: input, shape index: {}]
  %s4 = inlined_call_operand.vmem [shape: f32[256,8], index: 4, kind: input, shape index: {}]
  %s5 = inlined_call_operand.vmem [shape: f32[256,8], index: 5, kind: input, shape index: {}]
  %s6 = inlined_call_operand.vmem [shape: bf16[256,256], index: 6, kind: input, shape index: {}]
  %s7 = inlined_call_operand.vmem [shape: bf16[256,256], index: 7, kind: input, shape index: {}]
  %s8 = inlined_call_operand.hbm [shape: f32[256,128], index: 8, kind: output, shape index: {}]
  %s9 = sld [smem:[#allocation0]]
  $region65: #{tpu_custom_call.1} parent=0
    _
  %s11 = ssub.s32 1, %s9
  %s12 = scalar_select 0, %s11, %s9
  $region1: #{tpu_custom_call.1} parent=0
    #allocation2 [shape = 'u8[131072]{0}', space=vmem, size = 0x20000, scoped, tag = 'output window, operand 0']
    #allocation3 [shape = 's32[2]{0}', space=sflag, size = 0x8, scoped, tag = 'scoped memory for tpu_custom_call.1']
    %13 = vsyncpa [#allocation3], 0
    %s14 = scalar_lea.sflag [#allocation3], 1
    %15 = vsyncpa %s14, 0
    loop: start=0, step=1, limit=4
    $region2: #{tpu_custom_call.1} parent=1 // loop_pre_header
      _
    $region3: #{tpu_custom_call.1} parent=1 // loop_header
      %s17 = sphi 0, %s21
      %p18 = scmp.ge.s32.totalorder %s17, 4
      %s25 = sphi 0, %s25
      %s27 = sphi 0, %s25
      %s28 = sphi 0, %s27
      %s42 = sphi 0, %s28
      %s46 = sphi 0, %s46
      %s48 = sphi 0, %s46
      %s49 = sphi 0, %s48
      %s63 = sphi 0, %s49
      %s67 = sphi 0, %s67
      %s69 = sphi 0, %s67
      %s70 = sphi 0, %s69
      %s84 = sphi 0, %s70
      %s88 = sphi 0, %s88
      %s90 = sphi 0, %s88
      %s91 = sphi 0, %s90
      %s105 = sphi 0, %s91
      %s111 = sphi 0, %s113
      %s114 = sphi 0, %s111
      %s115 = sphi 0, %s114
      %s131 = sphi 0, %s115
      %s137 = sphi 0, %s139
      %s140 = sphi 0, %s137
      %s141 = sphi 0, %s140
      %s157 = sphi 0, %s141
      %s163 = sphi 0, %s165
      %s166 = sphi 0, %s163
      %s167 = sphi 0, %s166
      %s183 = sphi 0, %s167
      %s189 = sphi 0, %s191
      %s192 = sphi 0, %s189
      %s193 = sphi 0, %s192
      %s209 = sphi 0, %s193
      %s215 = sphi 0, %s217
      %s218 = sphi 0, %s215
      %s219 = sphi 0, %s218
      %s235 = sphi 0, %s219
    $region4: #{tpu_custom_call.1} parent=1 // loop_header_branch
      %20 = sbr.rel (%p18) target = $region8
    $region5: #{tpu_custom_call.1} parent=1 // loop_body
      %s22 = ssub.s32 %s17, 1
      %s23 = ssub.s32 %s17, 2
      %s24 = sadd.s32 %s17, 1
      %s26 = sadd.s32 %s25, 1
      %p29 = scmp.eq.s32.totalorder %s17, 1
      %p30 = scmp.ne.s32.totalorder %s25, %s27
      %p31 = scmp.eq.s32.totalorder %s17, 0
      %p32 = por %p30, %p31
      %p33 = scmp.ne.s32.totalorder %s25, %s27
      %p34 = scmp.eq.s32.totalorder %s22, 1
      %p35 = por %p33, %p34
      %p36 = scmp.ne.s32.totalorder %s27, %s28
      %p37 = scmp.eq.s32.totalorder %s22, 0
      %p38 = por %p36, %p37
      %p39 = scmp.ne.s32.totalorder %s27, %s28
      %p40 = scmp.eq.s32.totalorder %s23, 1
      %p41 = por %p39, %p40
      %p43 = scmp.ne.s32.totalorder %s28, %s42
      %p44 = scmp.eq.s32.totalorder %s23, 0
      %p45 = por %p43, %p44
      %s47 = sadd.s32 %s46, 1
      %p50 = scmp.eq.s32.totalorder %s17, 1
      %p51 = scmp.ne.s32.totalorder %s46, %s48
      %p52 = scmp.eq.s32.totalorder %s17, 0
      %p53 = por %p51, %p52
      %p54 = scmp.ne.s32.totalorder %s46, %s48
      %p55 = scmp.eq.s32.totalorder %s22, 1
      %p56 = por %p54, %p55
      %p57 = scmp.ne.s32.totalorder %s48, %s49
      %p58 = scmp.eq.s32.totalorder %s22, 0
      %p59 = por %p57, %p58
      %p60 = scmp.ne.s32.totalorder %s48, %s49
      %p61 = scmp.eq.s32.totalorder %s23, 1
      %p62 = por %p60, %p61
      %p64 = scmp.ne.s32.totalorder %s49, %s63
      %p65 = scmp.eq.s32.totalorder %s23, 0
      %p66 = por %p64, %p65
      %s68 = sadd.s32 %s67, 1
      %p71 = scmp.eq.s32.totalorder %s17, 1
      %p72 = scmp.ne.s32.totalorder %s67, %s69
      %p73 = scmp.eq.s32.totalorder %s17, 0
      %p74 = por %p72, %p73
      %p75 = scmp.ne.s32.totalorder %s67, %s69
      %p76 = scmp.eq.s32.totalorder %s22, 1
      %p77 = por %p75, %p76
      %p78 = scmp.ne.s32.totalorder %s69, %s70
      %p79 = scmp.eq.s32.totalorder %s22, 0
      %p80 = por %p78, %p79
      %p81 = scmp.ne.s32.totalorder %s69, %s70
      %p82 = scmp.eq.s32.totalorder %s23, 1
      %p83 = por %p81, %p82
      %p85 = scmp.ne.s32.totalorder %s70, %s84
      %p86 = scmp.eq.s32.totalorder %s23, 0
      %p87 = por %p85, %p86
      %s89 = sadd.s32 %s88, 1
      %p92 = scmp.eq.s32.totalorder %s17, 1
      %p93 = scmp.ne.s32.totalorder %s88, %s90
      %p94 = scmp.eq.s32.totalorder %s17, 0
      %p95 = por %p93, %p94
      %p96 = scmp.ne.s32.totalorder %s88, %s90
      %p97 = scmp.eq.s32.totalorder %s22, 1
      %p98 = por %p96, %p97
      %p99 = scmp.ne.s32.totalorder %s90, %s91
      %p100 = scmp.eq.s32.totalorder %s22, 0
      %p101 = por %p99, %p100
      %p102 = scmp.ne.s32.totalorder %s90, %s91
      %p103 = scmp.eq.s32.totalorder %s23, 1
      %p104 = por %p102, %p103
      %p106 = scmp.ne.s32.totalorder %s91, %s105
      %p107 = scmp.eq.s32.totalorder %s23, 0
      %p108 = por %p106, %p107
      %s109 = ssub.s32 %s17, %s24
      %p110 = scmp.eq.s32.totalorder %s109, 0
      %s112 = sadd.s32 %s111, 1
      %s113 = scalar_select %p110, %s111, %s112
      %p116 = pneg %p110
      %p117 = scmp.eq.s32.totalorder %s17, 1
      %p118 = por %p116, %p117
      %p119 = scmp.ne.s32.totalorder %s111, %s114
      %p120 = scmp.eq.s32.totalorder %s17, 0
      %p121 = por %p119, %p120
      %p122 = scmp.ne.s32.totalorder %s111, %s114
      %p123 = scmp.eq.s32.totalorder %s22, 1
      %p124 = por %p122, %p123
      %p125 = scmp.ne.s32.totalorder %s114, %s115
      %p126 = scmp.eq.s32.totalorder %s22, 0
      %p127 = por %p125, %p126
      %p128 = scmp.ne.s32.totalorder %s114, %s115
      %p129 = scmp.eq.s32.totalorder %s23, 1
      %p130 = por %p128, %p129
      %p132 = scmp.ne.s32.totalorder %s115, %s131
      %p133 = scmp.eq.s32.totalorder %s23, 0
      %p134 = por %p132, %p133
      %s135 = ssub.s32 %s17, %s24
      %p136 = scmp.eq.s32.totalorder %s135, 0
      %s138 = sadd.s32 %s137, 1
      %s139 = scalar_select %p136, %s137, %s138
      %p142 = pneg %p136
      %p143 = scmp.eq.s32.totalorder %s17, 1
      %p144 = por %p142, %p143
      %p145 = scmp.ne.s32.totalorder %s137, %s140
      %p146 = scmp.eq.s32.totalorder %s17, 0
      %p147 = por %p145, %p146
      %p148 = scmp.ne.s32.totalorder %s137, %s140
      %p149 = scmp.eq.s32.totalorder %s22, 1
      %p150 = por %p148, %p149
      %p151 = scmp.ne.s32.totalorder %s140, %s141
      %p152 = scmp.eq.s32.totalorder %s22, 0
      %p153 = por %p151, %p152
      %p154 = scmp.ne.s32.totalorder %s140, %s141
      %p155 = scmp.eq.s32.totalorder %s23, 1
      %p156 = por %p154, %p155
      %p158 = scmp.ne.s32.totalorder %s141, %s157
      %p159 = scmp.eq.s32.totalorder %s23, 0
      %p160 = por %p158, %p159
      %s161 = ssub.s32 %s17, %s24
      %p162 = scmp.eq.s32.totalorder %s161, 0
      %s164 = sadd.s32 %s163, 1
      %s165 = scalar_select %p162, %s163, %s164
      %p168 = pneg %p162
      %p169 = scmp.eq.s32.totalorder %s17, 1
      %p170 = por %p168, %p169
      %p171 = scmp.ne.s32.totalorder %s163, %s166
      %p172 = scmp.eq.s32.totalorder %s17, 0
      %p173 = por %p171, %p172
      %p174 = scmp.ne.s32.totalorder %s163, %s166
      %p175 = scmp.eq.s32.totalorder %s22, 1
      %p176 = por %p174, %p175
      %p177 = scmp.ne.s32.totalorder %s166, %s167
      %p178 = scmp.eq.s32.totalorder %s22, 0
      %p179 = por %p177, %p178
      %p180 = scmp.ne.s32.totalorder %s166, %s167
      %p181 = scmp.eq.s32.totalorder %s23, 1
      %p182 = por %p180, %p181
      %p184 = scmp.ne.s32.totalorder %s167, %s183
      %p185 = scmp.eq.s32.totalorder %s23, 0
      %p186 = por %p184, %p185
      %s187 = ssub.s32 %s17, %s24
      %p188 = scmp.eq.s32.totalorder %s187, 0
      %s190 = sadd.s32 %s189, 1
      %s191 = scalar_select %p188, %s189, %s190
      %p194 = pneg %p188
      %p195 = scmp.eq.s32.totalorder %s17, 1
      %p196 = por %p194, %p195
      %p197 = scmp.ne.s32.totalorder %s189, %s192
      %p198 = scmp.eq.s32.totalorder %s17, 0
      %p199 = por %p197, %p198
      %p200 = scmp.ne.s32.totalorder %s189, %s192
      %p201 = scmp.eq.s32.totalorder %s22, 1
      %p202 = por %p200, %p201
      %p203 = scmp.ne.s32.totalorder %s192, %s193
      %p204 = scmp.eq.s32.totalorder %s22, 0
      %p205 = por %p203, %p204
      %p206 = scmp.ne.s32.totalorder %s192, %s193
      %p207 = scmp.eq.s32.totalorder %s23, 1
      %p208 = por %p206, %p207
      %p210 = scmp.ne.s32.totalorder %s193, %s209
      %p211 = scmp.eq.s32.totalorder %s23, 0
      %p212 = por %p210, %p211
      %s213 = ssub.s32 %s17, %s24
      %p214 = scmp.eq.s32.totalorder %s213, 0
      %s216 = sadd.s32 %s215, 1
      %s217 = scalar_select %p214, %s215, %s216
      %p220 = pneg %p214
      %p221 = scmp.eq.s32.totalorder %s17, 1
      %p222 = por %p220, %p221
      %p223 = scmp.ne.s32.totalorder %s215, %s218
      %p224 = scmp.eq.s32.totalorder %s17, 0
      %p225 = por %p223, %p224
      %p226 = scmp.ne.s32.totalorder %s215, %s218
      %p227 = scmp.eq.s32.totalorder %s22, 1
      %p228 = por %p226, %p227
      %p229 = scmp.ne.s32.totalorder %s218, %s219
      %p230 = scmp.eq.s32.totalorder %s22, 0
      %p231 = por %p229, %p230
      %p232 = scmp.ne.s32.totalorder %s218, %s219
      %p233 = scmp.eq.s32.totalorder %s23, 1
      %p234 = por %p232, %p233
      %p236 = scmp.ne.s32.totalorder %s219, %s235
      %p237 = scmp.eq.s32.totalorder %s23, 0
      %p238 = por %p236, %p237
      %p239 = scmp.le.s32.totalorder 1, %s17
      %p240 = scmp.lt.s32.totalorder %s17, 3
      %p241 = pnand %p239, %p240
      %p242 = pneg %p241
      // Predicated region
      $region9: #{tpu_custom_call.1} parent=5 // pred_check
        _
      $region10: #{tpu_custom_call.1} parent=5 // pred_check_branch
        %244 = sbr.rel (%p241) target = $region12
      $region11: #{tpu_custom_call.1} parent=5 // pred_region
        %s245 = ssub.s32 %s17, 1
        // Predicated region
        $region13: #{tpu_custom_call.1} parent=11 // pred_check
          %p246 = pneg %p38
        $region14: #{tpu_custom_call.1} parent=11 // pred_check_branch
          %248 = sbr.rel (%p246) target = $region16
        $region15: #{tpu_custom_call.1} parent=11 // pred_region
          _
        $region16: #{tpu_custom_call.1} parent=11 // pred_fallthru
          _
        // Predicated region
        $region17: #{tpu_custom_call.1} parent=11 // pred_check
          %p249 = pneg %p59
        $region18: #{tpu_custom_call.1} parent=11 // pred_check_branch
          %251 = sbr.rel (%p249) target = $region20
        $region19: #{tpu_custom_call.1} parent=11 // pred_region
          _
        $region20: #{tpu_custom_call.1} parent=11 // pred_fallthru
          _
        // Predicated region
        $region21: #{tpu_custom_call.1} parent=11 // pred_check
          %p252 = pneg %p80
        $region22: #{tpu_custom_call.1} parent=11 // pred_check_branch
          %254 = sbr.rel (%p252) target = $region24
        $region23: #{tpu_custom_call.1} parent=11 // pred_region
          _
        $region24: #{tpu_custom_call.1} parent=11 // pred_fallthru
          _
        // Predicated region
        $region25: #{tpu_custom_call.1} parent=11 // pred_check
          %p255 = pneg %p101
        $region26: #{tpu_custom_call.1} parent=11 // pred_check_branch
          %257 = sbr.rel (%p255) target = $region28
        $region27: #{tpu_custom_call.1} parent=11 // pred_region
          _
        $region28: #{tpu_custom_call.1} parent=11 // pred_fallthru
          _
      $region12: #{tpu_custom_call.1} parent=5 // pred_fallthru
        _
      %p258 = scmp.lt.s32.totalorder %s17, 2
      // Predicated region
      $region29: #{tpu_custom_call.1} parent=5 // pred_check
        %p259 = pneg %p258
      $region30: #{tpu_custom_call.1} parent=5 // pred_check_branch
        %261 = sbr.rel (%p259) target = $region32
      $region31: #{tpu_custom_call.1} parent=5 // pred_region
        // Predicated region
        $region33: #{tpu_custom_call.1} parent=31 // pred_check
          %p262 = pneg %p121
        $region34: #{tpu_custom_call.1} parent=31 // pred_check_branch
          %264 = sbr.rel (%p262) target = $region36
        $region35: #{tpu_custom_call.1} parent=31 // pred_region
          %s265 = smul.u32 16, %s17
          %p266 = scmp.lt.s32.totalorder %s265, 31
          %s267 = scalar_select %p266, %s265, 31
          %s268 = smul.addr %s267, 8
          %s269 = scalar_lea.vmem %s4, %s268
          %s270 = smul.u32 16, %s17
        $region36: #{tpu_custom_call.1} parent=31 // pred_fallthru
          _
        // Predicated region
        $region37: #{tpu_custom_call.1} parent=31 // pred_check
          %p271 = pneg %p147
        $region38: #{tpu_custom_call.1} parent=31 // pred_check_branch
          %273 = sbr.rel (%p271) target = $region40
        $region39: #{tpu_custom_call.1} parent=31 // pred_region
          %s274 = smul.u32 16, %s17
          %p275 = scmp.lt.s32.totalorder %s274, 31
          %s276 = scalar_select %p275, %s274, 31
          %s277 = smul.addr %s276, 8
          %s278 = scalar_lea.vmem %s5, %s277
          %s279 = smul.u32 16, %s17
        $region40: #{tpu_custom_call.1} parent=31 // pred_fallthru
          _
        // Predicated region
        $region41: #{tpu_custom_call.1} parent=31 // pred_check
          %p280 = pneg %p173
        $region42: #{tpu_custom_call.1} parent=31 // pred_check_branch
          %282 = sbr.rel (%p280) target = $region44
        $region43: #{tpu_custom_call.1} parent=31 // pred_region
          %s283 = smul.u32 16, %s17
          %p284 = scmp.lt.s32.totalorder %s283, 31
          %s285 = scalar_select %p284, %s283, 31
          %s286 = smul.addr %s285, 2
          %s287 = smul.addr %s286, 4
          %s288 = scalar_lea.vmem %s6, %s287
          %s289 = smul.u32 16, %s17
        $region44: #{tpu_custom_call.1} parent=31 // pred_fallthru
          _
        // Predicated region
        $region45: #{tpu_custom_call.1} parent=31 // pred_check
          %p290 = pneg %p199
        $region46: #{tpu_custom_call.1} parent=31 // pred_check_branch
          %292 = sbr.rel (%p290) target = $region48
        $region47: #{tpu_custom_call.1} parent=31 // pred_region
          %s293 = smul.u32 16, %s17
          %p294 = scmp.lt.s32.totalorder %s293, 31
          %s295 = scalar_select %p294, %s293, 31
          %s296 = smul.addr %s295, 2
          %s297 = smul.addr %s296, 4
          %s298 = scalar_lea.vmem %s7, %s297
          %s299 = smul.u32 16, %s17
        $region48: #{tpu_custom_call.1} parent=31 // pred_fallthru
          _
      $region32: #{tpu_custom_call.1} parent=5 // pred_fallthru
        _
      %p300 = scmp.le.s32.totalorder 1, %s17
      %p301 = scmp.lt.s32.totalorder %s17, 3
      %p302 = pnand %p300, %p301
      %p303 = pneg %p302
      // Predicated region
      $region49: #{tpu_custom_call.1} parent=5 // pred_check
        _
      $region50: #{tpu_custom_call.1} parent=5 // pred_check_branch
        %305 = sbr.rel (%p302) target = $region52
      $region51: #{tpu_custom_call.1} parent=5 // pred_region
        %s306 = ssub.s32 %s17, 1
        %p307 = pneg %p38
        %p308 = pneg %p35
        %p309 = pneg %p59
        %p310 = pneg %p56
        %p311 = pneg %p80
        %p312 = pneg %p77
        %p313 = pneg %p101
        %p314 = pneg %p98
        %s315 = smul.u32 16, %s22
        %p316 = scmp.lt.s32.totalorder %s315, 31
        %s317 = scalar_select %p316, %s315, 31
        %s318 = smul.addr %s317, 8
        %s319 = scalar_lea.vmem %s4, %s318
        %p320 = pneg %p127
        %p321 = pneg %p124
        %s322 = smul.u32 16, %s22
        %p323 = scmp.lt.s32.totalorder %s322, 31
        %s324 = scalar_select %p323, %s322, 31
        %s325 = smul.addr %s324, 8
        %s326 = scalar_lea.vmem %s5, %s325
        %p327 = pneg %p153
        %p328 = pneg %p150
        %s329 = smul.u32 16, %s22
        %p330 = scmp.lt.s32.totalorder %s329, 31
        %s331 = scalar_select %p330, %s329, 31
        %s332 = smul.addr %s331, 2
        %s333 = smul.addr %s332, 4
        %s334 = scalar_lea.vmem %s6, %s333
        %p335 = pneg %p179
        %p336 = pneg %p176
        %s337 = smul.u32 16, %s22
        %p338 = scmp.lt.s32.totalorder %s337, 31
        %s339 = scalar_select %p338, %s337, 31
        %s340 = smul.addr %s339, 2
        %s341 = smul.addr %s340, 4
        %s342 = scalar_lea.vmem %s7, %s341
        %p343 = pneg %p205
        %p344 = pneg %p202
        %p345 = pneg %p231
        %p346 = pneg %p228
        %s347 = sand.u32 %s218, 1
        %s348 = scalar_lea.sflag [#allocation3], %s347
        %s349 = sand.u32 %s218, 1
        %s350 = smul.addr %s349, 128
        %s351 = scalar_lea.vmem [#allocation2], %s350
        %s352 = smul.u32 16, %s22
        %p353 = scmp.lt.s32.totalorder %s352, 31
        %s354 = scalar_select %p353, %s352, 31
        %s355 = smul.addr %s354, 8
        %s356 = scalar_lea.vmem %s4, %s355
        %s357 = smul.u32 16, %s22
        %s358 = smul.u32 16, %s22
        %p359 = scmp.lt.s32.totalorder %s358, 31
        %s360 = scalar_select %p359, %s358, 31
        %s361 = smul.addr %s360, 8
        %s362 = scalar_lea.vmem %s5, %s361
        %s363 = smul.u32 16, %s22
        %s364 = smul.u32 16, %s22
        %p365 = scmp.lt.s32.totalorder %s364, 31
        %s366 = scalar_select %p365, %s364, 31
        %s367 = smul.addr %s366, 2
        %s368 = smul.addr %s367, 4
        %s369 = scalar_lea.vmem %s6, %s368
        %s370 = smul.u32 16, %s22
        %s371 = smul.u32 16, %s22
        %p372 = scmp.lt.s32.totalorder %s371, 31
        %s373 = scalar_select %p372, %s371, 31
        %s374 = smul.addr %s373, 2
        %s375 = smul.addr %s374, 4
        %s376 = scalar_lea.vmem %s7, %s375
        %s377 = smul.u32 16, %s22
        %s378 = smul.u32 16, %s22
        %v382 = vld [vmem:[%s369] sm:$0xff]
        %v383 = vld [vmem:[%s369 + $0x8] sm:$0xff]
        %v384 = vld [vmem:[%s369 + $0x10] sm:$0xff]
        %v385 = vld [vmem:[%s369 + $0x18] sm:$0xff]
        %v386 = vld [vmem:[%s369 + $0x20] sm:$0xff]
        %v387 = vld [vmem:[%s369 + $0x28] sm:$0xff]
        %v388 = vld [vmem:[%s369 + $0x30] sm:$0xff]
        %v389 = vld [vmem:[%s369 + $0x38] sm:$0xff]
        %v390 = vld [vmem:[%s369 + $0x40] sm:$0xff]
        %v391 = vld [vmem:[%s369 + $0x48] sm:$0xff]
        %v392 = vld [vmem:[%s369 + $0x50] sm:$0xff]
        %v393 = vld [vmem:[%s369 + $0x58] sm:$0xff]
        %v394 = vld [vmem:[%s369 + $0x60] sm:$0xff]
        %v395 = vld [vmem:[%s369 + $0x68] sm:$0xff]
        %v396 = vld [vmem:[%s369 + $0x70] sm:$0xff]
        %v397 = vld [vmem:[%s369 + $0x78] sm:$0xff]
        %v398 = vld [vmem:[%s0] sm:$0xf]
        %v399 = vld [vmem:[%s0 + $0x4] sm:$0xf]
        %v400 = vld [vmem:[%s0 + $0x8] sm:$0xf]
        %v401 = vld [vmem:[%s0 + $0xc] sm:$0xf]
        %v402 = vld [vmem:[%s0 + $0x10] sm:$0xf]
        %v403 = vld [vmem:[%s0 + $0x14] sm:$0xf]
        %v404 = vld [vmem:[%s0 + $0x18] sm:$0xf]
        %v405 = vld [vmem:[%s0 + $0x1c] sm:$0xf]
        %v406 = vld [vmem:[%s0 + $0x20] sm:$0xf]
        %v407 = vld [vmem:[%s0 + $0x24] sm:$0xf]
        %v408 = vld [vmem:[%s0 + $0x28] sm:$0xf]
        %v409 = vld [vmem:[%s0 + $0x2c] sm:$0xf]
        %v410 = vld [vmem:[%s0 + $0x30] sm:$0xf]
        %v411 = vld [vmem:[%s0 + $0x34] sm:$0xf]
        %v412 = vld [vmem:[%s0 + $0x38] sm:$0xf]
        %v413 = vld [vmem:[%s0 + $0x3c] sm:$0xf]
        %v414 = vld [vmem:[%s0 + $0x40] sm:$0xf]
        %v415 = vld [vmem:[%s0 + $0x44] sm:$0xf]
        %v416 = vld [vmem:[%s0 + $0x48] sm:$0xf]
        %v417 = vld [vmem:[%s0 + $0x4c] sm:$0xf]
        %v418 = vld [vmem:[%s0 + $0x50] sm:$0xf]
        %v419 = vld [vmem:[%s0 + $0x54] sm:$0xf]
        %v420 = vld [vmem:[%s0 + $0x58] sm:$0xf]
        %v421 = vld [vmem:[%s0 + $0x5c] sm:$0xf]
        %v422 = vld [vmem:[%s0 + $0x60] sm:$0xf]
        %v423 = vld [vmem:[%s0 + $0x64] sm:$0xf]
        %v424 = vld [vmem:[%s0 + $0x68] sm:$0xf]
        %v425 = vld [vmem:[%s0 + $0x6c] sm:$0xf]
        %v426 = vld [vmem:[%s0 + $0x70] sm:$0xf]
        %v427 = vld [vmem:[%s0 + $0x74] sm:$0xf]
        %v428 = vld [vmem:[%s0 + $0x78] sm:$0xf]
        %v429 = vld [vmem:[%s0 + $0x7c] sm:$0xf]
        %v430 = vld [vmem:[%s356] sm:$0xff]
        %v431 = vld [vmem:[%s356 + $0x8] sm:$0xff]
        %v432 = vld [vmem:[%s356 + $0x10] sm:$0xff]
        %v433 = vld [vmem:[%s356 + $0x18] sm:$0xff]
        %v434 = vld [vmem:[%s356 + $0x20] sm:$0xff]
        %v435 = vld [vmem:[%s356 + $0x28] sm:$0xff]
        %v436 = vld [vmem:[%s356 + $0x30] sm:$0xff]
        %v437 = vld [vmem:[%s356 + $0x38] sm:$0xff]
        %v438 = vld [vmem:[%s356 + $0x40] sm:$0xff]
        %v439 = vld [vmem:[%s356 + $0x48] sm:$0xff]
        %v440 = vld [vmem:[%s356 + $0x50] sm:$0xff]
        %v441 = vld [vmem:[%s356 + $0x58] sm:$0xff]
        %v442 = vld [vmem:[%s356 + $0x60] sm:$0xff]
        %v443 = vld [vmem:[%s356 + $0x68] sm:$0xff]
        %v444 = vld [vmem:[%s356 + $0x70] sm:$0xff]
        %v445 = vld [vmem:[%s356 + $0x78] sm:$0xff]
        %v462 = vunpack.c.l.b16 %v382
        %v463 = vunpack.c.h.b16 %v382
        %v464 = vunpack.c.l.b16 %v383
        %v465 = vunpack.c.h.b16 %v383
        %v466 = vunpack.c.l.b16 %v384
        %v467 = vunpack.c.h.b16 %v384
        %v468 = vunpack.c.l.b16 %v385
        %v469 = vunpack.c.h.b16 %v385
        %v470 = vunpack.c.l.b16 %v386
        %v471 = vunpack.c.h.b16 %v386
        %v472 = vunpack.c.l.b16 %v387
        %v473 = vunpack.c.h.b16 %v387
        %v474 = vunpack.c.l.b16 %v388
        %v475 = vunpack.c.h.b16 %v388
        %v476 = vunpack.c.l.b16 %v389
        %v477 = vunpack.c.h.b16 %v389
        %v478 = vunpack.c.l.b16 %v390
        %v479 = vunpack.c.h.b16 %v390
        %v480 = vunpack.c.l.b16 %v391
        %v481 = vunpack.c.h.b16 %v391
        %v482 = vunpack.c.l.b16 %v392
        %v483 = vunpack.c.h.b16 %v392
        %v484 = vunpack.c.l.b16 %v393
        %v485 = vunpack.c.h.b16 %v393
        %v486 = vunpack.c.l.b16 %v394
        %v487 = vunpack.c.h.b16 %v394
        %v488 = vunpack.c.l.b16 %v395
        %v489 = vunpack.c.h.b16 %v395
        %v490 = vunpack.c.l.b16 %v396
        %v491 = vunpack.c.h.b16 %v396
        %v492 = vunpack.c.l.b16 %v397
        %v493 = vunpack.c.h.b16 %v397
        %v494 = vpack.c.b16 %v464, %v462
        %v495 = vpack.c.b16 %v465, %v463
        %v496 = vpack.c.b16 %v468, %v466
        %v497 = vpack.c.b16 %v469, %v467
        %v498 = vpack.c.b16 %v472, %v470
        %v499 = vpack.c.b16 %v473, %v471
        %v500 = vpack.c.b16 %v476, %v474
        %v501 = vpack.c.b16 %v477, %v475
        %v502 = vpack.c.b16 %v480, %v478
        %v503 = vpack.c.b16 %v481, %v479
        %v504 = vpack.c.b16 %v484, %v482
        %v505 = vpack.c.b16 %v485, %v483
        %v506 = vpack.c.b16 %v488, %v486
        %v507 = vpack.c.b16 %v489, %v487
        %v508 = vpack.c.b16 %v492, %v490
        %v509 = vpack.c.b16 %v493, %v491
        %v558 = vunpack.c.l.b16 %v398
        %v559 = vunpack.c.l.b16 %v399
        %v560 = vunpack.c.l.b16 %v400
        %v561 = vunpack.c.l.b16 %v401
        %v562 = vunpack.c.l.b16 %v402
        %v563 = vunpack.c.l.b16 %v403
        %v564 = vunpack.c.l.b16 %v404
        %v565 = vunpack.c.l.b16 %v405
        %v566 = vunpack.c.l.b16 %v406
        %v567 = vunpack.c.l.b16 %v407
        %v568 = vunpack.c.l.b16 %v408
        %v569 = vunpack.c.l.b16 %v409
        %v570 = vunpack.c.l.b16 %v410
        %v571 = vunpack.c.l.b16 %v411
        %v572 = vunpack.c.l.b16 %v412
        %v573 = vunpack.c.l.b16 %v413
        %v574 = vunpack.c.l.b16 %v414
        %v575 = vunpack.c.l.b16 %v415
        %v576 = vunpack.c.l.b16 %v416
        %v577 = vunpack.c.l.b16 %v417
        %v578 = vunpack.c.l.b16 %v418
        %v579 = vunpack.c.l.b16 %v419
        %v580 = vunpack.c.l.b16 %v420
        %v581 = vunpack.c.l.b16 %v421
        %v582 = vunpack.c.l.b16 %v422
        %v583 = vunpack.c.l.b16 %v423
        %v584 = vunpack.c.l.b16 %v424
        %v585 = vunpack.c.l.b16 %v425
        %v586 = vunpack.c.l.b16 %v426
        %v587 = vunpack.c.l.b16 %v427
        %v588 = vunpack.c.l.b16 %v428
        %v589 = vunpack.c.l.b16 %v429
        %v590 = vpack.c.b16 %v559, %v558
        %v591 = vpack.c.b16 %v561, %v560
        %v592 = vpack.c.b16 %v563, %v562
        %v593 = vpack.c.b16 %v565, %v564
        %v594 = vpack.c.b16 %v567, %v566
        %v595 = vpack.c.b16 %v569, %v568
        %v596 = vpack.c.b16 %v571, %v570
        %v597 = vpack.c.b16 %v573, %v572
        %v598 = vpack.c.b16 %v575, %v574
        %v599 = vpack.c.b16 %v577, %v576
        %v600 = vpack.c.b16 %v579, %v578
        %v601 = vpack.c.b16 %v581, %v580
        %v602 = vpack.c.b16 %v583, %v582
        %v603 = vpack.c.b16 %v585, %v584
        %v604 = vpack.c.b16 %v587, %v586
        %v605 = vpack.c.b16 %v589, %v588
        %622 = vmatprep.subr.bf16.mxu0 0
        %623 = vmatpush1.bf16.msra.mxu0 %v597
        %624 = vmatprep.subr.bf16.mxu0 0
        %625 = vmatpush1.bf16.msra.mxu0 %v596
        %626 = vmatprep.subr.bf16.mxu0 0
        %627 = vmatpush1.bf16.msra.mxu0 %v595
        %628 = vmatprep.subr.bf16.mxu0 0
        %629 = vmatpush1.bf16.msra.mxu0 %v594
        %630 = vmatprep.subr.bf16.mxu0 0
        %631 = vmatpush1.bf16.msra.mxu0 %v593
        %632 = vmatprep.subr.bf16.mxu0 0
        %633 = vmatpush1.bf16.msra.mxu0 %v592
        %634 = vmatprep.subr.bf16.mxu0 0
        %635 = vmatpush1.bf16.msra.mxu0 %v591
        %636 = vmatprep.subr.bf16.mxu0 0
        %637 = vmatpush1.bf16.msra.mxu0 %v590
        %638 = vmatprep.subr.bf16.mxu0 0
        %639 = vmatpush2.bf16.msra.mxu0 %v605
        %640 = vmatprep.subr.bf16.mxu0 0
        %641 = vmatpush2.bf16.msra.mxu0 %v604
        %642 = vmatprep.subr.bf16.mxu0 0
        %643 = vmatpush2.bf16.msra.mxu0 %v603
        %644 = vmatprep.subr.bf16.mxu0 0
        %645 = vmatpush2.bf16.msra.mxu0 %v602
        %646 = vmatprep.subr.bf16.mxu0 0
        %647 = vmatpush2.bf16.msra.mxu0 %v601
        %648 = vmatprep.subr.bf16.mxu0 0
        %649 = vmatpush2.bf16.msra.mxu0 %v600
        %650 = vmatprep.subr.bf16.mxu0 0
        %651 = vmatpush2.bf16.msra.mxu0 %v599
        %652 = vmatprep.subr.bf16.mxu0 0
        %653 = vmatpush2.bf16.msra.mxu0 %v598
        %654 = vmatprep.mubr.bf16.mxu0 %v495
        %655 = vmatmul.mubr.bf16.gmra.mxu0 %v494
        %v656 = vpop.f32.mrf.mxu0
        %v657 = vadd.f32 %v430, %v656
        %v658 = vpop.f32.mrf.mxu0
        %v659 = vpop.f32.mrf.mxu0
        %v660 = vadd.f32 %v431, %v659
        %v661 = vpop.f32.mrf.mxu0
        %662 = vmatprep.mubr.bf16.mxu0 %v497
        %663 = vmatmul.mubr.bf16.gmra.mxu0 %v496
        %v664 = vpop.f32.mrf.mxu0
        %v665 = vadd.f32 %v432, %v664
        %v666 = vpop.f32.mrf.mxu0
        %v667 = vpop.f32.mrf.mxu0
        %v668 = vadd.f32 %v433, %v667
        %v669 = vpop.f32.mrf.mxu0
        %670 = vmatprep.mubr.bf16.mxu0 %v499
        %671 = vmatmul.mubr.bf16.gmra.mxu0 %v498
        %v672 = vpop.f32.mrf.mxu0
        %v673 = vadd.f32 %v434, %v672
        %v674 = vpop.f32.mrf.mxu0
        %v675 = vpop.f32.mrf.mxu0
        %v676 = vadd.f32 %v435, %v675
        %v677 = vpop.f32.mrf.mxu0
        %678 = vmatprep.mubr.bf16.mxu0 %v501
        %679 = vmatmul.mubr.bf16.gmra.mxu0 %v500
        %v680 = vpop.f32.mrf.mxu0
        %v681 = vadd.f32 %v436, %v680
        %v682 = vpop.f32.mrf.mxu0
        %v683 = vpop.f32.mrf.mxu0
        %v684 = vadd.f32 %v437, %v683
        %v685 = vpop.f32.mrf.mxu0
        %686 = vmatprep.mubr.bf16.mxu0 %v503
        %687 = vmatmul.mubr.bf16.gmra.mxu0 %v502
        %v688 = vpop.f32.mrf.mxu0
        %v689 = vadd.f32 %v438, %v688
        %v690 = vpop.f32.mrf.mxu0
        %v691 = vpop.f32.mrf.mxu0
        %v692 = vadd.f32 %v439, %v691
        %v693 = vpop.f32.mrf.mxu0
        %694 = vmatprep.mubr.bf16.mxu0 %v505
        %695 = vmatmul.mubr.bf16.gmra.mxu0 %v504
        %v696 = vpop.f32.mrf.mxu0
        %v697 = vadd.f32 %v440, %v696
        %v698 = vpop.f32.mrf.mxu0
        %v699 = vpop.f32.mrf.mxu0
        %v700 = vadd.f32 %v441, %v699
        %v701 = vpop.f32.mrf.mxu0
        %702 = vmatprep.mubr.bf16.mxu0 %v507
        %703 = vmatmul.mubr.bf16.gmra.mxu0 %v506
        %v704 = vpop.f32.mrf.mxu0
        %v705 = vadd.f32 %v442, %v704
        %v706 = vpop.f32.mrf.mxu0
        %v707 = vpop.f32.mrf.mxu0
        %v708 = vadd.f32 %v443, %v707
        %v709 = vpop.f32.mrf.mxu0
        %710 = vmatprep.mubr.bf16.mxu0 %v509
        %711 = vmatmul.mubr.bf16.gmra.mxu0 %v508
        %v712 = vpop.f32.mrf.mxu0
        %v713 = vadd.f32 %v444, %v712
        %v714 = vpop.f32.mrf.mxu0
        %v715 = vpop.f32.mrf.mxu0
        %v716 = vadd.f32 %v445, %v715
        %v717 = vpop.f32.mrf.mxu0
        %718 = vdwg.mxu0
        %v719 = vmax.f32 %v657, 0.0
        %v720 = vmax.f32 %v660, 0.0
        %v721 = vmax.f32 %v665, 0.0
        %v722 = vmax.f32 %v668, 0.0
        %v723 = vmax.f32 %v673, 0.0
        %v724 = vmax.f32 %v676, 0.0
        %v725 = vmax.f32 %v681, 0.0
        %v726 = vmax.f32 %v684, 0.0
        %v727 = vmax.f32 %v689, 0.0
        %v728 = vmax.f32 %v692, 0.0
        %v729 = vmax.f32 %v697, 0.0
        %v730 = vmax.f32 %v700, 0.0
        %v731 = vmax.f32 %v705, 0.0
        %v732 = vmax.f32 %v708, 0.0
        %v733 = vmax.f32 %v713, 0.0
        %v734 = vmax.f32 %v716, 0.0
        %v735 = vtanh.pop %v719
        %v736 = vtanh.pop %v720
        %v737 = vtanh.pop %v721
        %v738 = vtanh.pop %v722
        %v739 = vtanh.pop %v723
        %v740 = vtanh.pop %v724
        %v741 = vtanh.pop %v725
        %v742 = vtanh.pop %v726
        %v743 = vtanh.pop %v727
        %v744 = vtanh.pop %v728
        %v745 = vtanh.pop %v729
        %v746 = vtanh.pop %v730
        %v747 = vtanh.pop %v731
        %v748 = vtanh.pop %v732
        %v749 = vtanh.pop %v733
        %v750 = vtanh.pop %v734
        %v751 = vld [vmem:[%s376] sm:$0xff]
        %v752 = vld [vmem:[%s376 + $0x8] sm:$0xff]
        %v753 = vld [vmem:[%s376 + $0x10] sm:$0xff]
        %v754 = vld [vmem:[%s376 + $0x18] sm:$0xff]
        %v755 = vld [vmem:[%s376 + $0x20] sm:$0xff]
        %v756 = vld [vmem:[%s376 + $0x28] sm:$0xff]
        %v757 = vld [vmem:[%s376 + $0x30] sm:$0xff]
        %v758 = vld [vmem:[%s376 + $0x38] sm:$0xff]
        %v759 = vld [vmem:[%s376 + $0x40] sm:$0xff]
        %v760 = vld [vmem:[%s376 + $0x48] sm:$0xff]
        %v761 = vld [vmem:[%s376 + $0x50] sm:$0xff]
        %v762 = vld [vmem:[%s376 + $0x58] sm:$0xff]
        %v763 = vld [vmem:[%s376 + $0x60] sm:$0xff]
        %v764 = vld [vmem:[%s376 + $0x68] sm:$0xff]
        %v765 = vld [vmem:[%s376 + $0x70] sm:$0xff]
        %v766 = vld [vmem:[%s376 + $0x78] sm:$0xff]
        %vm767 = vcmp.gt.bf16.partialorder %v751, 0
        %vm768 = vcmp.gt.bf16.partialorder %v752, 0
        %vm769 = vcmp.gt.bf16.partialorder %v753, 0
        %vm770 = vcmp.gt.bf16.partialorder %v754, 0
        %vm771 = vcmp.gt.bf16.partialorder %v755, 0
        %vm772 = vcmp.gt.bf16.partialorder %v756, 0
        %vm773 = vcmp.gt.bf16.partialorder %v757, 0
        %vm774 = vcmp.gt.bf16.partialorder %v758, 0
        %vm775 = vcmp.gt.bf16.partialorder %v759, 0
        %vm776 = vcmp.gt.bf16.partialorder %v760, 0
        %vm777 = vcmp.gt.bf16.partialorder %v761, 0
        %vm778 = vcmp.gt.bf16.partialorder %v762, 0
        %vm779 = vcmp.gt.bf16.partialorder %v763, 0
        %vm780 = vcmp.gt.bf16.partialorder %v764, 0
        %vm781 = vcmp.gt.bf16.partialorder %v765, 0
        %vm782 = vcmp.gt.bf16.partialorder %v766, 0
        %v783 = vld [vmem:[%s362] sm:$0xff]
        %v784 = vld [vmem:[%s362 + $0x8] sm:$0xff]
        %v785 = vld [vmem:[%s362 + $0x10] sm:$0xff]
        %v786 = vld [vmem:[%s362 + $0x18] sm:$0xff]
        %v787 = vld [vmem:[%s362 + $0x20] sm:$0xff]
        %v788 = vld [vmem:[%s362 + $0x28] sm:$0xff]
        %v789 = vld [vmem:[%s362 + $0x30] sm:$0xff]
        %v790 = vld [vmem:[%s362 + $0x38] sm:$0xff]
        %v791 = vld [vmem:[%s362 + $0x40] sm:$0xff]
        %v792 = vld [vmem:[%s362 + $0x48] sm:$0xff]
        %v793 = vld [vmem:[%s362 + $0x50] sm:$0xff]
        %v794 = vld [vmem:[%s362 + $0x58] sm:$0xff]
        %v795 = vld [vmem:[%s362 + $0x60] sm:$0xff]
        %v796 = vld [vmem:[%s362 + $0x68] sm:$0xff]
        %v797 = vld [vmem:[%s362 + $0x70] sm:$0xff]
        %v798 = vld [vmem:[%s362 + $0x78] sm:$0xff]
        %v799 = vld [vmem:[%s2] sm:$0xff]
        %v800 = vld [vmem:[%s2 + $0x8] sm:$0xff]
        %v801 = vld [vmem:[%s1] sm:$0xf]
        %v802 = vld [vmem:[%s1 + $0x4] sm:$0xf]
        %v803 = vld [vmem:[%s1 + $0x8] sm:$0xf]
        %v804 = vld [vmem:[%s1 + $0xc] sm:$0xf]
        %v805 = vld [vmem:[%s1 + $0x10] sm:$0xf]
        %v806 = vld [vmem:[%s1 + $0x14] sm:$0xf]
        %v807 = vld [vmem:[%s1 + $0x18] sm:$0xf]
        %v808 = vld [vmem:[%s1 + $0x1c] sm:$0xf]
        %v809 = vld [vmem:[%s1 + $0x20] sm:$0xf]
        %v810 = vld [vmem:[%s1 + $0x24] sm:$0xf]
        %v811 = vld [vmem:[%s1 + $0x28] sm:$0xf]
        %v812 = vld [vmem:[%s1 + $0x2c] sm:$0xf]
        %v813 = vld [vmem:[%s1 + $0x30] sm:$0xf]
        %v814 = vld [vmem:[%s1 + $0x34] sm:$0xf]
        %v815 = vld [vmem:[%s1 + $0x38] sm:$0xf]
        %v816 = vld [vmem:[%s1 + $0x3c] sm:$0xf]
        %v817 = vld [vmem:[%s1 + $0x40] sm:$0xf]
        %v818 = vld [vmem:[%s1 + $0x44] sm:$0xf]
        %v819 = vld [vmem:[%s1 + $0x48] sm:$0xf]
        %v820 = vld [vmem:[%s1 + $0x4c] sm:$0xf]
        %v821 = vld [vmem:[%s1 + $0x50] sm:$0xf]
        %v822 = vld [vmem:[%s1 + $0x54] sm:$0xf]
        %v823 = vld [vmem:[%s1 + $0x58] sm:$0xf]
        %v824 = vld [vmem:[%s1 + $0x5c] sm:$0xf]
        %v825 = vld [vmem:[%s1 + $0x60] sm:$0xf]
        %v826 = vld [vmem:[%s1 + $0x64] sm:$0xf]
        %v827 = vld [vmem:[%s1 + $0x68] sm:$0xf]
        %v828 = vld [vmem:[%s1 + $0x6c] sm:$0xf]
        %v829 = vld [vmem:[%s1 + $0x70] sm:$0xf]
        %v830 = vld [vmem:[%s1 + $0x74] sm:$0xf]
        %v831 = vld [vmem:[%s1 + $0x78] sm:$0xf]
        %v832 = vld [vmem:[%s1 + $0x7c] sm:$0xf]
        %v833 = vld [vmem:[%s3] sm:$0x1]
        %835 = vset.pattern.permute.xlu0 0
        %836 = vperm.xlu0 %835, %v783
        %v837 = vpop.permute.xlu0 %836
        %840 = vset.pattern.permute.xlu0 0
        %841 = vperm.xlu0 %840, %v784
        %v842 = vpop.permute.xlu0 %841
        %845 = vset.pattern.permute.xlu0 0
        %846 = vperm.xlu0 %845, %v785
        %v847 = vpop.permute.xlu0 %846
        %850 = vset.pattern.permute.xlu0 0
        %851 = vperm.xlu0 %850, %v786
        %v852 = vpop.permute.xlu0 %851
        %855 = vset.pattern.permute.xlu0 0
        %856 = vperm.xlu0 %855, %v787
        %v857 = vpop.permute.xlu0 %856
        %860 = vset.pattern.permute.xlu0 0
        %861 = vperm.xlu0 %860, %v788
        %v862 = vpop.permute.xlu0 %861
        %865 = vset.pattern.permute.xlu0 0
        %866 = vperm.xlu0 %865, %v789
        %v867 = vpop.permute.xlu0 %866
        %870 = vset.pattern.permute.xlu0 0
        %871 = vperm.xlu0 %870, %v790
        %v872 = vpop.permute.xlu0 %871
        %875 = vset.pattern.permute.xlu0 0
        %876 = vperm.xlu0 %875, %v791
        %v877 = vpop.permute.xlu0 %876
        %880 = vset.pattern.permute.xlu0 0
        %881 = vperm.xlu0 %880, %v792
        %v882 = vpop.permute.xlu0 %881
        %885 = vset.pattern.permute.xlu0 0
        %886 = vperm.xlu0 %885, %v793
        %v887 = vpop.permute.xlu0 %886
        %890 = vset.pattern.permute.xlu0 0
        %891 = vperm.xlu0 %890, %v794
        %v892 = vpop.permute.xlu0 %891
        %895 = vset.pattern.permute.xlu0 0
        %896 = vperm.xlu0 %895, %v795
        %v897 = vpop.permute.xlu0 %896
        %900 = vset.pattern.permute.xlu0 0
        %901 = vperm.xlu0 %900, %v796
        %v902 = vpop.permute.xlu0 %901
        %905 = vset.pattern.permute.xlu0 0
        %906 = vperm.xlu0 %905, %v797
        %v907 = vpop.permute.xlu0 %906
        %910 = vset.pattern.permute.xlu0 0
        %911 = vperm.xlu0 %910, %v798
        %v912 = vpop.permute.xlu0 %911
        %v914 = vlaneseq
        %v915 = vshrl.u32 %v914, 7
        %v916 = vsub.s32 0, %v915
        %v917 = vrot.slane %v799, %v916
        %v918 = vlaneseq
        %v919 = vshrl.u32 %v918, 7
        %v920 = vsub.s32 0, %v919
        %v921 = vrot.slane %v800, %v920
        %v922 = vadd.f32 %v837, %v917
        %v923 = vadd.f32 %v837, %v921
        %v924 = vadd.f32 %v842, %v917
        %v925 = vadd.f32 %v842, %v921
        %v926 = vadd.f32 %v847, %v917
        %v927 = vadd.f32 %v847, %v921
        %v928 = vadd.f32 %v852, %v917
        %v929 = vadd.f32 %v852, %v921
        %v930 = vadd.f32 %v857, %v917
        %v931 = vadd.f32 %v857, %v921
        %v932 = vadd.f32 %v862, %v917
        %v933 = vadd.f32 %v862, %v921
        %v934 = vadd.f32 %v867, %v917
        %v935 = vadd.f32 %v867, %v921
        %v936 = vadd.f32 %v872, %v917
        %v937 = vadd.f32 %v872, %v921
        %v938 = vadd.f32 %v877, %v917
        %v939 = vadd.f32 %v877, %v921
        %v940 = vadd.f32 %v882, %v917
        %v941 = vadd.f32 %v882, %v921
        %v942 = vadd.f32 %v887, %v917
        %v943 = vadd.f32 %v887, %v921
        %v944 = vadd.f32 %v892, %v917
        %v945 = vadd.f32 %v892, %v921
        %v946 = vadd.f32 %v897, %v917
        %v947 = vadd.f32 %v897, %v921
        %v948 = vadd.f32 %v902, %v917
        %v949 = vadd.f32 %v902, %v921
        %v950 = vadd.f32 %v907, %v917
        %v951 = vadd.f32 %v907, %v921
        %v952 = vadd.f32 %v912, %v917
        %v953 = vadd.f32 %v912, %v921
        %vm954 = vcmp.ge.f32.partialorder %v922, 0.0
        %vm955 = vcmp.ge.f32.partialorder %v923, 0.0
        %vm956 = vcmp.ge.f32.partialorder %v924, 0.0
        %vm957 = vcmp.ge.f32.partialorder %v925, 0.0
        %vm958 = vcmp.ge.f32.partialorder %v926, 0.0
        %vm959 = vcmp.ge.f32.partialorder %v927, 0.0
        %vm960 = vcmp.ge.f32.partialorder %v928, 0.0
        %vm961 = vcmp.ge.f32.partialorder %v929, 0.0
        %vm962 = vcmp.ge.f32.partialorder %v930, 0.0
        %vm963 = vcmp.ge.f32.partialorder %v931, 0.0
        %vm964 = vcmp.ge.f32.partialorder %v932, 0.0
        %vm965 = vcmp.ge.f32.partialorder %v933, 0.0
        %vm966 = vcmp.ge.f32.partialorder %v934, 0.0
        %vm967 = vcmp.ge.f32.partialorder %v935, 0.0
        %vm968 = vcmp.ge.f32.partialorder %v936, 0.0
        %vm969 = vcmp.ge.f32.partialorder %v937, 0.0
        %vm970 = vcmp.ge.f32.partialorder %v938, 0.0
        %vm971 = vcmp.ge.f32.partialorder %v939, 0.0
        %vm972 = vcmp.ge.f32.partialorder %v940, 0.0
        %vm973 = vcmp.ge.f32.partialorder %v941, 0.0
        %vm974 = vcmp.ge.f32.partialorder %v942, 0.0
        %vm975 = vcmp.ge.f32.partialorder %v943, 0.0
        %vm976 = vcmp.ge.f32.partialorder %v944, 0.0
        %vm977 = vcmp.ge.f32.partialorder %v945, 0.0
        %vm978 = vcmp.ge.f32.partialorder %v946, 0.0
        %vm979 = vcmp.ge.f32.partialorder %v947, 0.0
        %vm980 = vcmp.ge.f32.partialorder %v948, 0.0
        %vm981 = vcmp.ge.f32.partialorder %v949, 0.0
        %vm982 = vcmp.ge.f32.partialorder %v950, 0.0
        %vm983 = vcmp.ge.f32.partialorder %v951, 0.0
        %vm984 = vcmp.ge.f32.partialorder %v952, 0.0
        %vm985 = vcmp.ge.f32.partialorder %v953, 0.0
        %v986 = vmul.f32 %v922, 0.2
        %v987 = vmul.f32 %v923, 0.2
        %v988 = vmul.f32 %v924, 0.2
        %v989 = vmul.f32 %v925, 0.2
        %v990 = vmul.f32 %v926, 0.2
        %v991 = vmul.f32 %v927, 0.2
        %v992 = vmul.f32 %v928, 0.2
        %v993 = vmul.f32 %v929, 0.2
        %v994 = vmul.f32 %v930, 0.2
        %v995 = vmul.f32 %v931, 0.2
        %v996 = vmul.f32 %v932, 0.2
        %v997 = vmul.f32 %v933, 0.2
        %v998 = vmul.f32 %v934, 0.2
        %v999 = vmul.f32 %v935, 0.2
        %v1000 = vmul.f32 %v936, 0.2
        %v1001 = vmul.f32 %v937, 0.2
        %v1002 = vmul.f32 %v938, 0.2
        %v1003 = vmul.f32 %v939, 0.2
        %v1004 = vmul.f32 %v940, 0.2
        %v1005 = vmul.f32 %v941, 0.2
        %v1006 = vmul.f32 %v942, 0.2
        %v1007 = vmul.f32 %v943, 0.2
        %v1008 = vmul.f32 %v944, 0.2
        %v1009 = vmul.f32 %v945, 0.2
        %v1010 = vmul.f32 %v946, 0.2
        %v1011 = vmul.f32 %v947, 0.2
        %v1012 = vmul.f32 %v948, 0.2
        %v1013 = vmul.f32 %v949, 0.2
        %v1014 = vmul.f32 %v950, 0.2
        %v1015 = vmul.f32 %v951, 0.2
        %v1016 = vmul.f32 %v952, 0.2
        %v1017 = vmul.f32 %v953, 0.2
        %v1018 = vsel %vm954, %v922, %v986
        %v1019 = vsel %vm955, %v923, %v987
        %v1020 = vsel %vm956, %v924, %v988
        %v1021 = vsel %vm957, %v925, %v989
        %v1022 = vsel %vm958, %v926, %v990
        %v1023 = vsel %vm959, %v927, %v991
        %v1024 = vsel %vm960, %v928, %v992
        %v1025 = vsel %vm961, %v929, %v993
        %v1026 = vsel %vm962, %v930, %v994
        %v1027 = vsel %vm963, %v931, %v995
        %v1028 = vsel %vm964, %v932, %v996
        %v1029 = vsel %vm965, %v933, %v997
        %v1030 = vsel %vm966, %v934, %v998
        %v1031 = vsel %vm967, %v935, %v999
        %v1032 = vsel %vm968, %v936, %v1000
        %v1033 = vsel %vm969, %v937, %v1001
        %v1034 = vsel %vm970, %v938, %v1002
        %v1035 = vsel %vm971, %v939, %v1003
        %v1036 = vsel %vm972, %v940, %v1004
        %v1037 = vsel %vm973, %v941, %v1005
        %v1038 = vsel %vm974, %v942, %v1006
        %v1039 = vsel %vm975, %v943, %v1007
        %v1040 = vsel %vm976, %v944, %v1008
        %v1041 = vsel %vm977, %v945, %v1009
        %v1042 = vsel %vm978, %v946, %v1010
        %v1043 = vsel %vm979, %v947, %v1011
        %v1044 = vsel %vm980, %v948, %v1012
        %v1045 = vsel %vm981, %v949, %v1013
        %v1046 = vsel %vm982, %v950, %v1014
        %v1047 = vsel %vm983, %v951, %v1015
        %v1048 = vsel %vm984, %v952, %v1016
        %v1049 = vsel %vm985, %v953, %v1017
        %v1050 = vsel %vm767, 65537, 0
        %v1051 = vsel %vm768, 65537, 0
        %v1052 = vsel %vm769, 65537, 0
        %v1053 = vsel %vm770, 65537, 0
        %v1054 = vsel %vm771, 65537, 0
        %v1055 = vsel %vm772, 65537, 0
        %v1056 = vsel %vm773, 65537, 0
        %v1057 = vsel %vm774, 65537, 0
        %v1058 = vsel %vm775, 65537, 0
        %v1059 = vsel %vm776, 65537, 0
        %v1060 = vsel %vm777, 65537, 0
        %v1061 = vsel %vm778, 65537, 0
        %v1062 = vsel %vm779, 65537, 0
        %v1063 = vsel %vm780, 65537, 0
        %v1064 = vsel %vm781, 65537, 0
        %v1065 = vsel %vm782, 65537, 0
        %v1066 = vunpack.c.l.b16 %v1050
        %v1067 = vunpack.c.h.b16 %v1050
        %v1068 = vunpack.c.l.b16 %v1051
        %v1069 = vunpack.c.h.b16 %v1051
        %v1070 = vunpack.c.l.b16 %v1052
        %v1071 = vunpack.c.h.b16 %v1052
        %v1072 = vunpack.c.l.b16 %v1053
        %v1073 = vunpack.c.h.b16 %v1053
        %v1074 = vunpack.c.l.b16 %v1054
        %v1075 = vunpack.c.h.b16 %v1054
        %v1076 = vunpack.c.l.b16 %v1055
        %v1077 = vunpack.c.h.b16 %v1055
        %v1078 = vunpack.c.l.b16 %v1056
        %v1079 = vunpack.c.h.b16 %v1056
        %v1080 = vunpack.c.l.b16 %v1057
        %v1081 = vunpack.c.h.b16 %v1057
        %v1082 = vunpack.c.l.b16 %v1058
        %v1083 = vunpack.c.h.b16 %v1058
        %v1084 = vunpack.c.l.b16 %v1059
        %v1085 = vunpack.c.h.b16 %v1059
        %v1086 = vunpack.c.l.b16 %v1060
        %v1087 = vunpack.c.h.b16 %v1060
        %v1088 = vunpack.c.l.b16 %v1061
        %v1089 = vunpack.c.h.b16 %v1061
        %v1090 = vunpack.c.l.b16 %v1062
        %v1091 = vunpack.c.h.b16 %v1062
        %v1092 = vunpack.c.l.b16 %v1063
        %v1093 = vunpack.c.h.b16 %v1063
        %v1094 = vunpack.c.l.b16 %v1064
        %v1095 = vunpack.c.h.b16 %v1064
        %v1096 = vunpack.c.l.b16 %v1065
        %v1097 = vunpack.c.h.b16 %v1065
        %vm1098 = vcmp.ne.s32.totalorder %v1066, 0
        %vm1099 = vcmp.ne.s32.totalorder %v1067, 0
        %vm1100 = vcmp.ne.s32.totalorder %v1068, 0
        %vm1101 = vcmp.ne.s32.totalorder %v1069, 0
        %vm1102 = vcmp.ne.s32.totalorder %v1070, 0
        %vm1103 = vcmp.ne.s32.totalorder %v1071, 0
        %vm1104 = vcmp.ne.s32.totalorder %v1072, 0
        %vm1105 = vcmp.ne.s32.totalorder %v1073, 0
        %vm1106 = vcmp.ne.s32.totalorder %v1074, 0
        %vm1107 = vcmp.ne.s32.totalorder %v1075, 0
        %vm1108 = vcmp.ne.s32.totalorder %v1076, 0
        %vm1109 = vcmp.ne.s32.totalorder %v1077, 0
        %vm1110 = vcmp.ne.s32.totalorder %v1078, 0
        %vm1111 = vcmp.ne.s32.totalorder %v1079, 0
        %vm1112 = vcmp.ne.s32.totalorder %v1080, 0
        %vm1113 = vcmp.ne.s32.totalorder %v1081, 0
        %vm1114 = vcmp.ne.s32.totalorder %v1082, 0
        %vm1115 = vcmp.ne.s32.totalorder %v1083, 0
        %vm1116 = vcmp.ne.s32.totalorder %v1084, 0
        %vm1117 = vcmp.ne.s32.totalorder %v1085, 0
        %vm1118 = vcmp.ne.s32.totalorder %v1086, 0
        %vm1119 = vcmp.ne.s32.totalorder %v1087, 0
        %vm1120 = vcmp.ne.s32.totalorder %v1088, 0
        %vm1121 = vcmp.ne.s32.totalorder %v1089, 0
        %vm1122 = vcmp.ne.s32.totalorder %v1090, 0
        %vm1123 = vcmp.ne.s32.totalorder %v1091, 0
        %vm1124 = vcmp.ne.s32.totalorder %v1092, 0
        %vm1125 = vcmp.ne.s32.totalorder %v1093, 0
        %vm1126 = vcmp.ne.s32.totalorder %v1094, 0
        %vm1127 = vcmp.ne.s32.totalorder %v1095, 0
        %vm1128 = vcmp.ne.s32.totalorder %v1096, 0
        %vm1129 = vcmp.ne.s32.totalorder %v1097, 0
        %v1130 = vsel %vm1098, %v1018, -1e+30
        %v1131 = vsel %vm1099, %v1019, -1e+30
        %v1132 = vsel %vm1100, %v1020, -1e+30
        %v1133 = vsel %vm1101, %v1021, -1e+30
        %v1134 = vsel %vm1102, %v1022, -1e+30
        %v1135 = vsel %vm1103, %v1023, -1e+30
        %v1136 = vsel %vm1104, %v1024, -1e+30
        %v1137 = vsel %vm1105, %v1025, -1e+30
        %v1138 = vsel %vm1106, %v1026, -1e+30
        %v1139 = vsel %vm1107, %v1027, -1e+30
        %v1140 = vsel %vm1108, %v1028, -1e+30
        %v1141 = vsel %vm1109, %v1029, -1e+30
        %v1142 = vsel %vm1110, %v1030, -1e+30
        %v1143 = vsel %vm1111, %v1031, -1e+30
        %v1144 = vsel %vm1112, %v1032, -1e+30
        %v1145 = vsel %vm1113, %v1033, -1e+30
        %v1146 = vsel %vm1114, %v1034, -1e+30
        %v1147 = vsel %vm1115, %v1035, -1e+30
        %v1148 = vsel %vm1116, %v1036, -1e+30
        %v1149 = vsel %vm1117, %v1037, -1e+30
        %v1150 = vsel %vm1118, %v1038, -1e+30
        %v1151 = vsel %vm1119, %v1039, -1e+30
        %v1152 = vsel %vm1120, %v1040, -1e+30
        %v1153 = vsel %vm1121, %v1041, -1e+30
        %v1154 = vsel %vm1122, %v1042, -1e+30
        %v1155 = vsel %vm1123, %v1043, -1e+30
        %v1156 = vsel %vm1124, %v1044, -1e+30
        %v1157 = vsel %vm1125, %v1045, -1e+30
        %v1158 = vsel %vm1126, %v1046, -1e+30
        %v1159 = vsel %vm1127, %v1047, -1e+30
        %v1160 = vsel %vm1128, %v1048, -1e+30
        %v1161 = vsel %vm1129, %v1049, -1e+30
        %v1162 = vmax.f32 %v1130, %v1131
        %1163 = vmax.xlane.f32.xlu0 %v1162
        %v1164 = vpop.xlane.xlu0 %1163
        %v1165 = vmax.f32 %v1132, %v1133
        %1166 = vmax.xlane.f32.xlu0 %v1165
        %v1167 = vpop.xlane.xlu0 %1166
        %v1168 = vmax.f32 %v1134, %v1135
        %1169 = vmax.xlane.f32.xlu0 %v1168
        %v1170 = vpop.xlane.xlu0 %1169
        %v1171 = vmax.f32 %v1136, %v1137
        %1172 = vmax.xlane.f32.xlu0 %v1171
        %v1173 = vpop.xlane.xlu0 %1172
        %v1174 = vmax.f32 %v1138, %v1139
        %1175 = vmax.xlane.f32.xlu0 %v1174
        %v1176 = vpop.xlane.xlu0 %1175
        %v1177 = vmax.f32 %v1140, %v1141
        %1178 = vmax.xlane.f32.xlu0 %v1177
        %v1179 = vpop.xlane.xlu0 %1178
        %v1180 = vmax.f32 %v1142, %v1143
        %1181 = vmax.xlane.f32.xlu0 %v1180
        %v1182 = vpop.xlane.xlu0 %1181
        %v1183 = vmax.f32 %v1144, %v1145
        %1184 = vmax.xlane.f32.xlu0 %v1183
        %v1185 = vpop.xlane.xlu0 %1184
        %v1186 = vmax.f32 %v1146, %v1147
        %1187 = vmax.xlane.f32.xlu0 %v1186
        %v1188 = vpop.xlane.xlu0 %1187
        %v1189 = vmax.f32 %v1148, %v1149
        %1190 = vmax.xlane.f32.xlu0 %v1189
        %v1191 = vpop.xlane.xlu0 %1190
        %v1192 = vmax.f32 %v1150, %v1151
        %1193 = vmax.xlane.f32.xlu0 %v1192
        %v1194 = vpop.xlane.xlu0 %1193
        %v1195 = vmax.f32 %v1152, %v1153
        %1196 = vmax.xlane.f32.xlu0 %v1195
        %v1197 = vpop.xlane.xlu0 %1196
        %v1198 = vmax.f32 %v1154, %v1155
        %1199 = vmax.xlane.f32.xlu0 %v1198
        %v1200 = vpop.xlane.xlu0 %1199
        %v1201 = vmax.f32 %v1156, %v1157
        %1202 = vmax.xlane.f32.xlu0 %v1201
        %v1203 = vpop.xlane.xlu0 %1202
        %v1204 = vmax.f32 %v1158, %v1159
        %1205 = vmax.xlane.f32.xlu0 %v1204
        %v1206 = vpop.xlane.xlu0 %1205
        %v1207 = vmax.f32 %v1160, %v1161
        %1208 = vmax.xlane.f32.xlu0 %v1207
        %v1209 = vpop.xlane.xlu0 %1208
        %v1210 = vsub.f32 %v1130, %v1164
        %v1211 = vsub.f32 %v1131, %v1164
        %v1212 = vsub.f32 %v1132, %v1167
        %v1213 = vsub.f32 %v1133, %v1167
        %v1214 = vsub.f32 %v1134, %v1170
        %v1215 = vsub.f32 %v1135, %v1170
        %v1216 = vsub.f32 %v1136, %v1173
        %v1217 = vsub.f32 %v1137, %v1173
        %v1218 = vsub.f32 %v1138, %v1176
        %v1219 = vsub.f32 %v1139, %v1176
        %v1220 = vsub.f32 %v1140, %v1179
        %v1221 = vsub.f32 %v1141, %v1179
        %v1222 = vsub.f32 %v1142, %v1182
        %v1223 = vsub.f32 %v1143, %v1182
        %v1224 = vsub.f32 %v1144, %v1185
        %v1225 = vsub.f32 %v1145, %v1185
        %v1226 = vsub.f32 %v1146, %v1188
        %v1227 = vsub.f32 %v1147, %v1188
        %v1228 = vsub.f32 %v1148, %v1191
        %v1229 = vsub.f32 %v1149, %v1191
        %v1230 = vsub.f32 %v1150, %v1194
        %v1231 = vsub.f32 %v1151, %v1194
        %v1232 = vsub.f32 %v1152, %v1197
        %v1233 = vsub.f32 %v1153, %v1197
        %v1234 = vsub.f32 %v1154, %v1200
        %v1235 = vsub.f32 %v1155, %v1200
        %v1236 = vsub.f32 %v1156, %v1203
        %v1237 = vsub.f32 %v1157, %v1203
        %v1238 = vsub.f32 %v1158, %v1206
        %v1239 = vsub.f32 %v1159, %v1206
        %v1240 = vsub.f32 %v1160, %v1209
        %v1241 = vsub.f32 %v1161, %v1209
        %v1242 = vmul.f32 %v1210, 1.442695
        %v1243 = vpow.pop %v1242
        %v1244 = vmul.f32 %v1211, 1.442695
        %v1245 = vpow.pop %v1244
        %v1246 = vmul.f32 %v1212, 1.442695
        %v1247 = vpow.pop %v1246
        %v1248 = vmul.f32 %v1213, 1.442695
        %v1249 = vpow.pop %v1248
        %v1250 = vmul.f32 %v1214, 1.442695
        %v1251 = vpow.pop %v1250
        %v1252 = vmul.f32 %v1215, 1.442695
        %v1253 = vpow.pop %v1252
        %v1254 = vmul.f32 %v1216, 1.442695
        %v1255 = vpow.pop %v1254
        %v1256 = vmul.f32 %v1217, 1.442695
        %v1257 = vpow.pop %v1256
        %v1258 = vmul.f32 %v1218, 1.442695
        %v1259 = vpow.pop %v1258
        %v1260 = vmul.f32 %v1219, 1.442695
        %v1261 = vpow.pop %v1260
        %v1262 = vmul.f32 %v1220, 1.442695
        %v1263 = vpow.pop %v1262
        %v1264 = vmul.f32 %v1221, 1.442695
        %v1265 = vpow.pop %v1264
        %v1266 = vmul.f32 %v1222, 1.442695
        %v1267 = vpow.pop %v1266
        %v1268 = vmul.f32 %v1223, 1.442695
        %v1269 = vpow.pop %v1268
        %v1270 = vmul.f32 %v1224, 1.442695
        %v1271 = vpow.pop %v1270
        %v1272 = vmul.f32 %v1225, 1.442695
        %v1273 = vpow.pop %v1272
        %v1274 = vmul.f32 %v1226, 1.442695
        %v1275 = vpow.pop %v1274
        %v1276 = vmul.f32 %v1227, 1.442695
        %v1277 = vpow.pop %v1276
        %v1278 = vmul.f32 %v1228, 1.442695
        %v1279 = vpow.pop %v1278
        %v1280 = vmul.f32 %v1229, 1.442695
        %v1281 = vpow.pop %v1280
        %v1282 = vmul.f32 %v1230, 1.442695
        %v1283 = vpow.pop %v1282
        %v1284 = vmul.f32 %v1231, 1.442695
        %v1285 = vpow.pop %v1284
        %v1286 = vmul.f32 %v1232, 1.442695
        %v1287 = vpow.pop %v1286
        %v1288 = vmul.f32 %v1233, 1.442695
        %v1289 = vpow.pop %v1288
        %v1290 = vmul.f32 %v1234, 1.442695
        %v1291 = vpow.pop %v1290
        %v1292 = vmul.f32 %v1235, 1.442695
        %v1293 = vpow.pop %v1292
        %v1294 = vmul.f32 %v1236, 1.442695
        %v1295 = vpow.pop %v1294
        %v1296 = vmul.f32 %v1237, 1.442695
        %v1297 = vpow.pop %v1296
        %v1298 = vmul.f32 %v1238, 1.442695
        %v1299 = vpow.pop %v1298
        %v1300 = vmul.f32 %v1239, 1.442695
        %v1301 = vpow.pop %v1300
        %v1302 = vmul.f32 %v1240, 1.442695
        %v1303 = vpow.pop %v1302
        %v1304 = vmul.f32 %v1241, 1.442695
        %v1305 = vpow.pop %v1304
        %v1306 = vunpack.c.l.bf16 %v751
        %v1307 = vunpack.c.h.bf16 %v751
        %v1308 = vunpack.c.l.bf16 %v752
        %v1309 = vunpack.c.h.bf16 %v752
        %v1310 = vunpack.c.l.bf16 %v753
        %v1311 = vunpack.c.h.bf16 %v753
        %v1312 = vunpack.c.l.bf16 %v754
        %v1313 = vunpack.c.h.bf16 %v754
        %v1314 = vunpack.c.l.bf16 %v755
        %v1315 = vunpack.c.h.bf16 %v755
        %v1316 = vunpack.c.l.bf16 %v756
        %v1317 = vunpack.c.h.bf16 %v756
        %v1318 = vunpack.c.l.bf16 %v757
        %v1319 = vunpack.c.h.bf16 %v757
        %v1320 = vunpack.c.l.bf16 %v758
        %v1321 = vunpack.c.h.bf16 %v758
        %v1322 = vunpack.c.l.bf16 %v759
        %v1323 = vunpack.c.h.bf16 %v759
        %v1324 = vunpack.c.l.bf16 %v760
        %v1325 = vunpack.c.h.bf16 %v760
        %v1326 = vunpack.c.l.bf16 %v761
        %v1327 = vunpack.c.h.bf16 %v761
        %v1328 = vunpack.c.l.bf16 %v762
        %v1329 = vunpack.c.h.bf16 %v762
        %v1330 = vunpack.c.l.bf16 %v763
        %v1331 = vunpack.c.h.bf16 %v763
        %v1332 = vunpack.c.l.bf16 %v764
        %v1333 = vunpack.c.h.bf16 %v764
        %v1334 = vunpack.c.l.bf16 %v765
        %v1335 = vunpack.c.h.bf16 %v765
        %v1336 = vunpack.c.l.bf16 %v766
        %v1337 = vunpack.c.h.bf16 %v766
        %v1338 = vmul.f32 %v1306, %v1243
        %v1339 = vmul.f32 %v1307, %v1245
        %v1340 = vmul.f32 %v1308, %v1247
        %v1341 = vmul.f32 %v1309, %v1249
        %v1342 = vmul.f32 %v1310, %v1251
        %v1343 = vmul.f32 %v1311, %v1253
        %v1344 = vmul.f32 %v1312, %v1255
        %v1345 = vmul.f32 %v1313, %v1257
        %v1346 = vmul.f32 %v1314, %v1259
        %v1347 = vmul.f32 %v1315, %v1261
        %v1348 = vmul.f32 %v1316, %v1263
        %v1349 = vmul.f32 %v1317, %v1265
        %v1350 = vmul.f32 %v1318, %v1267
        %v1351 = vmul.f32 %v1319, %v1269
        %v1352 = vmul.f32 %v1320, %v1271
        %v1353 = vmul.f32 %v1321, %v1273
        %v1354 = vmul.f32 %v1322, %v1275
        %v1355 = vmul.f32 %v1323, %v1277
        %v1356 = vmul.f32 %v1324, %v1279
        %v1357 = vmul.f32 %v1325, %v1281
        %v1358 = vmul.f32 %v1326, %v1283
        %v1359 = vmul.f32 %v1327, %v1285
        %v1360 = vmul.f32 %v1328, %v1287
        %v1361 = vmul.f32 %v1329, %v1289
        %v1362 = vmul.f32 %v1330, %v1291
        %v1363 = vmul.f32 %v1331, %v1293
        %v1364 = vmul.f32 %v1332, %v1295
        %v1365 = vmul.f32 %v1333, %v1297
        %v1366 = vmul.f32 %v1334, %v1299
        %v1367 = vmul.f32 %v1335, %v1301
        %v1368 = vmul.f32 %v1336, %v1303
        %v1369 = vmul.f32 %v1337, %v1305
        %v1370 = vadd.f32 %v1338, %v1339
        %1371 = vadd.xlane.f32.xlu0 %v1370
        %v1372 = vpop.xlane.xlu0 %1371
        %v1373 = vadd.f32 %v1340, %v1341
        %1374 = vadd.xlane.f32.xlu0 %v1373
        %v1375 = vpop.xlane.xlu0 %1374
        %v1376 = vadd.f32 %v1342, %v1343
        %1377 = vadd.xlane.f32.xlu0 %v1376
        %v1378 = vpop.xlane.xlu0 %1377
        %v1379 = vadd.f32 %v1344, %v1345
        %1380 = vadd.xlane.f32.xlu0 %v1379
        %v1381 = vpop.xlane.xlu0 %1380
        %v1382 = vadd.f32 %v1346, %v1347
        %1383 = vadd.xlane.f32.xlu0 %v1382
        %v1384 = vpop.xlane.xlu0 %1383
        %v1385 = vadd.f32 %v1348, %v1349
        %1386 = vadd.xlane.f32.xlu0 %v1385
        %v1387 = vpop.xlane.xlu0 %1386
        %v1388 = vadd.f32 %v1350, %v1351
        %1389 = vadd.xlane.f32.xlu0 %v1388
        %v1390 = vpop.xlane.xlu0 %1389
        %v1391 = vadd.f32 %v1352, %v1353
        %1392 = vadd.xlane.f32.xlu0 %v1391
        %v1393 = vpop.xlane.xlu0 %1392
        %v1394 = vadd.f32 %v1354, %v1355
        %1395 = vadd.xlane.f32.xlu0 %v1394
        %v1396 = vpop.xlane.xlu0 %1395
        %v1397 = vadd.f32 %v1356, %v1357
        %1398 = vadd.xlane.f32.xlu0 %v1397
        %v1399 = vpop.xlane.xlu0 %1398
        %v1400 = vadd.f32 %v1358, %v1359
        %1401 = vadd.xlane.f32.xlu0 %v1400
        %v1402 = vpop.xlane.xlu0 %1401
        %v1403 = vadd.f32 %v1360, %v1361
        %1404 = vadd.xlane.f32.xlu0 %v1403
        %v1405 = vpop.xlane.xlu0 %1404
        %v1406 = vadd.f32 %v1362, %v1363
        %1407 = vadd.xlane.f32.xlu0 %v1406
        %v1408 = vpop.xlane.xlu0 %1407
        %v1409 = vadd.f32 %v1364, %v1365
        %1410 = vadd.xlane.f32.xlu0 %v1409
        %v1411 = vpop.xlane.xlu0 %1410
        %v1412 = vadd.f32 %v1366, %v1367
        %1413 = vadd.xlane.f32.xlu0 %v1412
        %v1414 = vpop.xlane.xlu0 %1413
        %v1415 = vadd.f32 %v1368, %v1369
        %1416 = vadd.xlane.f32.xlu0 %v1415
        %v1417 = vpop.xlane.xlu0 %1416
        %v1418 = vpack.c.bf16 %v1340, %v1338
        %v1419 = vpack.c.bf16 %v1341, %v1339
        %v1420 = vpack.c.bf16 %v1344, %v1342
        %v1421 = vpack.c.bf16 %v1345, %v1343
        %v1422 = vpack.c.bf16 %v1348, %v1346
        %v1423 = vpack.c.bf16 %v1349, %v1347
        %v1424 = vpack.c.bf16 %v1352, %v1350
        %v1425 = vpack.c.bf16 %v1353, %v1351
        %v1426 = vpack.c.bf16 %v1356, %v1354
        %v1427 = vpack.c.bf16 %v1357, %v1355
        %v1428 = vpack.c.bf16 %v1360, %v1358
        %v1429 = vpack.c.bf16 %v1361, %v1359
        %v1430 = vpack.c.bf16 %v1364, %v1362
        %v1431 = vpack.c.bf16 %v1365, %v1363
        %v1432 = vpack.c.bf16 %v1368, %v1366
        %v1433 = vpack.c.bf16 %v1369, %v1367
        %v1466 = vunpack.c.l.b16 %v801
        %v1467 = vunpack.c.l.b16 %v802
        %v1468 = vunpack.c.l.b16 %v803
        %v1469 = vunpack.c.l.b16 %v804
        %v1470 = vunpack.c.l.b16 %v805
        %v1471 = vunpack.c.l.b16 %v806
        %v1472 = vunpack.c.l.b16 %v807
        %v1473 = vunpack.c.l.b16 %v808
        %v1474 = vunpack.c.l.b16 %v809
        %v1475 = vunpack.c.l.b16 %v810
        %v1476 = vunpack.c.l.b16 %v811
        %v1477 = vunpack.c.l.b16 %v812
        %v1478 = vunpack.c.l.b16 %v813
        %v1479 = vunpack.c.l.b16 %v814
        %v1480 = vunpack.c.l.b16 %v815
        %v1481 = vunpack.c.l.b16 %v816
        %v1482 = vunpack.c.l.b16 %v817
        %v1483 = vunpack.c.l.b16 %v818
        %v1484 = vunpack.c.l.b16 %v819
        %v1485 = vunpack.c.l.b16 %v820
        %v1486 = vunpack.c.l.b16 %v821
        %v1487 = vunpack.c.l.b16 %v822
        %v1488 = vunpack.c.l.b16 %v823
        %v1489 = vunpack.c.l.b16 %v824
        %v1490 = vunpack.c.l.b16 %v825
        %v1491 = vunpack.c.l.b16 %v826
        %v1492 = vunpack.c.l.b16 %v827
        %v1493 = vunpack.c.l.b16 %v828
        %v1494 = vunpack.c.l.b16 %v829
        %v1495 = vunpack.c.l.b16 %v830
        %v1496 = vunpack.c.l.b16 %v831
        %v1497 = vunpack.c.l.b16 %v832
        %v1498 = vpack.c.b16 %v1467, %v1466
        %v1499 = vpack.c.b16 %v1469, %v1468
        %v1500 = vpack.c.b16 %v1471, %v1470
        %v1501 = vpack.c.b16 %v1473, %v1472
        %v1502 = vpack.c.b16 %v1475, %v1474
        %v1503 = vpack.c.b16 %v1477, %v1476
        %v1504 = vpack.c.b16 %v1479, %v1478
        %v1505 = vpack.c.b16 %v1481, %v1480
        %v1506 = vpack.c.b16 %v1483, %v1482
        %v1507 = vpack.c.b16 %v1485, %v1484
        %v1508 = vpack.c.b16 %v1487, %v1486
        %v1509 = vpack.c.b16 %v1489, %v1488
        %v1510 = vpack.c.b16 %v1491, %v1490
        %v1511 = vpack.c.b16 %v1493, %v1492
        %v1512 = vpack.c.b16 %v1495, %v1494
        %v1513 = vpack.c.b16 %v1497, %v1496
        %1530 = vmatprep.subr.bf16.mxu0 0
        %1531 = vmatpush1.bf16.msra.mxu0 %v1505
        %1532 = vmatprep.subr.bf16.mxu0 0
        %1533 = vmatpush1.bf16.msra.mxu0 %v1504
        %1534 = vmatprep.subr.bf16.mxu0 0
        %1535 = vmatpush1.bf16.msra.mxu0 %v1503
        %1536 = vmatprep.subr.bf16.mxu0 0
        %1537 = vmatpush1.bf16.msra.mxu0 %v1502
        %1538 = vmatprep.subr.bf16.mxu0 0
        %1539 = vmatpush1.bf16.msra.mxu0 %v1501
        %1540 = vmatprep.subr.bf16.mxu0 0
        %1541 = vmatpush1.bf16.msra.mxu0 %v1500
        %1542 = vmatprep.subr.bf16.mxu0 0
        %1543 = vmatpush1.bf16.msra.mxu0 %v1499
        %1544 = vmatprep.subr.bf16.mxu0 0
        %1545 = vmatpush1.bf16.msra.mxu0 %v1498
        %1546 = vmatprep.subr.bf16.mxu0 0
        %1547 = vmatpush2.bf16.msra.mxu0 %v1513
        %1548 = vmatprep.subr.bf16.mxu0 0
        %1549 = vmatpush2.bf16.msra.mxu0 %v1512
        %1550 = vmatprep.subr.bf16.mxu0 0
        %1551 = vmatpush2.bf16.msra.mxu0 %v1511
        %1552 = vmatprep.subr.bf16.mxu0 0
        %1553 = vmatpush2.bf16.msra.mxu0 %v1510
        %1554 = vmatprep.subr.bf16.mxu0 0
        %1555 = vmatpush2.bf16.msra.mxu0 %v1509
        %1556 = vmatprep.subr.bf16.mxu0 0
        %1557 = vmatpush2.bf16.msra.mxu0 %v1508
        %1558 = vmatprep.subr.bf16.mxu0 0
        %1559 = vmatpush2.bf16.msra.mxu0 %v1507
        %1560 = vmatprep.subr.bf16.mxu0 0
        %1561 = vmatpush2.bf16.msra.mxu0 %v1506
        %1562 = vmatprep.mubr.bf16.mxu0 %v1419
        %1563 = vmatmul.mubr.bf16.gmra.mxu0 %v1418
        %v1564 = vpop.f32.mrf.mxu0
        %v1565 = vadd.f32 0.0, %v1564
        %v1566 = vpop.f32.mrf.mxu0
        %v1567 = vpop.f32.mrf.mxu0
        %v1568 = vadd.f32 0.0, %v1567
        %v1569 = vpop.f32.mrf.mxu0
        %1570 = vmatprep.mubr.bf16.mxu0 %v1421
        %1571 = vmatmul.mubr.bf16.gmra.mxu0 %v1420
        %v1572 = vpop.f32.mrf.mxu0
        %v1573 = vadd.f32 0.0, %v1572
        %v1574 = vpop.f32.mrf.mxu0
        %v1575 = vpop.f32.mrf.mxu0
        %v1576 = vadd.f32 0.0, %v1575
        %v1577 = vpop.f32.mrf.mxu0
        %1578 = vmatprep.mubr.bf16.mxu0 %v1423
        %1579 = vmatmul.mubr.bf16.gmra.mxu0 %v1422
        %v1580 = vpop.f32.mrf.mxu0
        %v1581 = vadd.f32 0.0, %v1580
        %v1582 = vpop.f32.mrf.mxu0
        %v1583 = vpop.f32.mrf.mxu0
        %v1584 = vadd.f32 0.0, %v1583
        %v1585 = vpop.f32.mrf.mxu0
        %1586 = vmatprep.mubr.bf16.mxu0 %v1425
        %1587 = vmatmul.mubr.bf16.gmra.mxu0 %v1424
        %v1588 = vpop.f32.mrf.mxu0
        %v1589 = vadd.f32 0.0, %v1588
        %v1590 = vpop.f32.mrf.mxu0
        %v1591 = vpop.f32.mrf.mxu0
        %v1592 = vadd.f32 0.0, %v1591
        %v1593 = vpop.f32.mrf.mxu0
        %1594 = vmatprep.mubr.bf16.mxu0 %v1427
        %1595 = vmatmul.mubr.bf16.gmra.mxu0 %v1426
        %v1596 = vpop.f32.mrf.mxu0
        %v1597 = vadd.f32 0.0, %v1596
        %v1598 = vpop.f32.mrf.mxu0
        %v1599 = vpop.f32.mrf.mxu0
        %v1600 = vadd.f32 0.0, %v1599
        %v1601 = vpop.f32.mrf.mxu0
        %1602 = vmatprep.mubr.bf16.mxu0 %v1429
        %1603 = vmatmul.mubr.bf16.gmra.mxu0 %v1428
        %v1604 = vpop.f32.mrf.mxu0
        %v1605 = vadd.f32 0.0, %v1604
        %v1606 = vpop.f32.mrf.mxu0
        %v1607 = vpop.f32.mrf.mxu0
        %v1608 = vadd.f32 0.0, %v1607
        %v1609 = vpop.f32.mrf.mxu0
        %1610 = vmatprep.mubr.bf16.mxu0 %v1431
        %1611 = vmatmul.mubr.bf16.gmra.mxu0 %v1430
        %v1612 = vpop.f32.mrf.mxu0
        %v1613 = vadd.f32 0.0, %v1612
        %v1614 = vpop.f32.mrf.mxu0
        %v1615 = vpop.f32.mrf.mxu0
        %v1616 = vadd.f32 0.0, %v1615
        %v1617 = vpop.f32.mrf.mxu0
        %1618 = vmatprep.mubr.bf16.mxu0 %v1433
        %1619 = vmatmul.mubr.bf16.gmra.mxu0 %v1432
        %v1620 = vpop.f32.mrf.mxu0
        %v1621 = vadd.f32 0.0, %v1620
        %v1622 = vpop.f32.mrf.mxu0
        %v1623 = vpop.f32.mrf.mxu0
        %v1624 = vadd.f32 0.0, %v1623
        %v1625 = vpop.f32.mrf.mxu0
        %1626 = vdwg.mxu0
        %v1627 = vrcp.pop %v1372
        %v1628 = vrcp.pop %v1375
        %v1629 = vrcp.pop %v1378
        %v1630 = vrcp.pop %v1381
        %v1631 = vrcp.pop %v1384
        %v1632 = vrcp.pop %v1387
        %v1633 = vrcp.pop %v1390
        %v1634 = vrcp.pop %v1393
        %v1635 = vrcp.pop %v1396
        %v1636 = vrcp.pop %v1399
        %v1637 = vrcp.pop %v1402
        %v1638 = vrcp.pop %v1405
        %v1639 = vrcp.pop %v1408
        %v1640 = vrcp.pop %v1411
        %v1641 = vrcp.pop %v1414
        %v1642 = vrcp.pop %v1417
        %v1643 = vmul.f32 %v1565, %v1627
        %v1644 = vmul.f32 %v1568, %v1628
        %v1645 = vmul.f32 %v1573, %v1629
        %v1646 = vmul.f32 %v1576, %v1630
        %v1647 = vmul.f32 %v1581, %v1631
        %v1648 = vmul.f32 %v1584, %v1632
        %v1649 = vmul.f32 %v1589, %v1633
        %v1650 = vmul.f32 %v1592, %v1634
        %v1651 = vmul.f32 %v1597, %v1635
        %v1652 = vmul.f32 %v1600, %v1636
        %v1653 = vmul.f32 %v1605, %v1637
        %v1654 = vmul.f32 %v1608, %v1638
        %v1655 = vmul.f32 %v1613, %v1639
        %v1656 = vmul.f32 %v1616, %v1640
        %v1657 = vmul.f32 %v1621, %v1641
        %v1658 = vmul.f32 %v1624, %v1642
        %v1660 = vlaneseq
        %v1661 = vshrl.u32 %v1660, 7
        %v1662 = vsub.s32 0, %v1661
        %v1663 = vrot.slane %v833, %v1662
        %v1665 = vadd.f32 %v1643, %v1663
        %v1666 = vadd.f32 %v1644, %v1663
        %v1667 = vadd.f32 %v1645, %v1663
        %v1668 = vadd.f32 %v1646, %v1663
        %v1669 = vadd.f32 %v1647, %v1663
        %v1670 = vadd.f32 %v1648, %v1663
        %v1671 = vadd.f32 %v1649, %v1663
        %v1672 = vadd.f32 %v1650, %v1663
        %v1673 = vadd.f32 %v1651, %v1663
        %v1674 = vadd.f32 %v1652, %v1663
        %v1675 = vadd.f32 %v1653, %v1663
        %v1676 = vadd.f32 %v1654, %v1663
        %v1677 = vadd.f32 %v1655, %v1663
        %v1678 = vadd.f32 %v1656, %v1663
        %v1679 = vadd.f32 %v1657, %v1663
        %v1680 = vadd.f32 %v1658, %v1663
        %vm1681 = vcmp.ge.f32.partialorder %v1665, 0.0
        %vm1682 = vcmp.ge.f32.partialorder %v1666, 0.0
        %vm1683 = vcmp.ge.f32.partialorder %v1667, 0.0
        %vm1684 = vcmp.ge.f32.partialorder %v1668, 0.0
        %vm1685 = vcmp.ge.f32.partialorder %v1669, 0.0
        %vm1686 = vcmp.ge.f32.partialorder %v1670, 0.0
        %vm1687 = vcmp.ge.f32.partialorder %v1671, 0.0
        %vm1688 = vcmp.ge.f32.partialorder %v1672, 0.0
        %vm1689 = vcmp.ge.f32.partialorder %v1673, 0.0
        %vm1690 = vcmp.ge.f32.partialorder %v1674, 0.0
        %vm1691 = vcmp.ge.f32.partialorder %v1675, 0.0
        %vm1692 = vcmp.ge.f32.partialorder %v1676, 0.0
        %vm1693 = vcmp.ge.f32.partialorder %v1677, 0.0
        %vm1694 = vcmp.ge.f32.partialorder %v1678, 0.0
        %vm1695 = vcmp.ge.f32.partialorder %v1679, 0.0
        %vm1696 = vcmp.ge.f32.partialorder %v1680, 0.0
        %v1697 = vmul.f32 %v1665, 0.01
        %v1698 = vmul.f32 %v1666, 0.01
        %v1699 = vmul.f32 %v1667, 0.01
        %v1700 = vmul.f32 %v1668, 0.01
        %v1701 = vmul.f32 %v1669, 0.01
        %v1702 = vmul.f32 %v1670, 0.01
        %v1703 = vmul.f32 %v1671, 0.01
        %v1704 = vmul.f32 %v1672, 0.01
        %v1705 = vmul.f32 %v1673, 0.01
        %v1706 = vmul.f32 %v1674, 0.01
        %v1707 = vmul.f32 %v1675, 0.01
        %v1708 = vmul.f32 %v1676, 0.01
        %v1709 = vmul.f32 %v1677, 0.01
        %v1710 = vmul.f32 %v1678, 0.01
        %v1711 = vmul.f32 %v1679, 0.01
        %v1712 = vmul.f32 %v1680, 0.01
        %v1713 = vsel %vm1681, %v1665, %v1697
        %v1714 = vsel %vm1682, %v1666, %v1698
        %v1715 = vsel %vm1683, %v1667, %v1699
        %v1716 = vsel %vm1684, %v1668, %v1700
        %v1717 = vsel %vm1685, %v1669, %v1701
        %v1718 = vsel %vm1686, %v1670, %v1702
        %v1719 = vsel %vm1687, %v1671, %v1703
        %v1720 = vsel %vm1688, %v1672, %v1704
        %v1721 = vsel %vm1689, %v1673, %v1705
        %v1722 = vsel %vm1690, %v1674, %v1706
        %v1723 = vsel %vm1691, %v1675, %v1707
        %v1724 = vsel %vm1692, %v1676, %v1708
        %v1725 = vsel %vm1693, %v1677, %v1709
        %v1726 = vsel %vm1694, %v1678, %v1710
        %v1727 = vsel %vm1695, %v1679, %v1711
        %v1728 = vsel %vm1696, %v1680, %v1712
        %v1729 = vtanh.pop %v1713
        %v1730 = vtanh.pop %v1714
        %v1731 = vtanh.pop %v1715
        %v1732 = vtanh.pop %v1716
        %v1733 = vtanh.pop %v1717
        %v1734 = vtanh.pop %v1718
        %v1735 = vtanh.pop %v1719
        %v1736 = vtanh.pop %v1720
        %v1737 = vtanh.pop %v1721
        %v1738 = vtanh.pop %v1722
        %v1739 = vtanh.pop %v1723
        %v1740 = vtanh.pop %v1724
        %v1741 = vtanh.pop %v1725
        %v1742 = vtanh.pop %v1726
        %v1743 = vtanh.pop %v1727
        %v1744 = vtanh.pop %v1728
        %1745 = vset.pattern.permute.xlu0 1
        %1746 = vperm.xlu0 %1745, %v783
        %v1747 = vpop.permute.xlu0 %1746
        %1749 = vset.pattern.permute.xlu0 1
        %1750 = vperm.xlu0 %1749, %v784
        %v1751 = vpop.permute.xlu0 %1750
        %1753 = vset.pattern.permute.xlu0 1
        %1754 = vperm.xlu0 %1753, %v785
        %v1755 = vpop.permute.xlu0 %1754
        %1757 = vset.pattern.permute.xlu0 1
        %1758 = vperm.xlu0 %1757, %v786
        %v1759 = vpop.permute.xlu0 %1758
        %1761 = vset.pattern.permute.xlu0 1
        %1762 = vperm.xlu0 %1761, %v787
        %v1763 = vpop.permute.xlu0 %1762
        %1765 = vset.pattern.permute.xlu0 1
        %1766 = vperm.xlu0 %1765, %v788
        %v1767 = vpop.permute.xlu0 %1766
        %1769 = vset.pattern.permute.xlu0 1
        %1770 = vperm.xlu0 %1769, %v789
        %v1771 = vpop.permute.xlu0 %1770
        %1773 = vset.pattern.permute.xlu0 1
        %1774 = vperm.xlu0 %1773, %v790
        %v1775 = vpop.permute.xlu0 %1774
        %1777 = vset.pattern.permute.xlu0 1
        %1778 = vperm.xlu0 %1777, %v791
        %v1779 = vpop.permute.xlu0 %1778
        %1781 = vset.pattern.permute.xlu0 1
        %1782 = vperm.xlu0 %1781, %v792
        %v1783 = vpop.permute.xlu0 %1782
        %1785 = vset.pattern.permute.xlu0 1
        %1786 = vperm.xlu0 %1785, %v793
        %v1787 = vpop.permute.xlu0 %1786
        %1789 = vset.pattern.permute.xlu0 1
        %1790 = vperm.xlu0 %1789, %v794
        %v1791 = vpop.permute.xlu0 %1790
        %1793 = vset.pattern.permute.xlu0 1
        %1794 = vperm.xlu0 %1793, %v795
        %v1795 = vpop.permute.xlu0 %1794
        %1797 = vset.pattern.permute.xlu0 1
        %1798 = vperm.xlu0 %1797, %v796
        %v1799 = vpop.permute.xlu0 %1798
        %1801 = vset.pattern.permute.xlu0 1
        %1802 = vperm.xlu0 %1801, %v797
        %v1803 = vpop.permute.xlu0 %1802
        %1805 = vset.pattern.permute.xlu0 1
        %1806 = vperm.xlu0 %1805, %v798
        %v1807 = vpop.permute.xlu0 %1806
        %v1809 = vlaneseq
        %v1810 = vshrl.u32 %v1809, 7
        %v1811 = vsub.s32 1, %v1810
        %v1812 = vrot.slane %v799, %v1811
        %v1813 = vlaneseq
        %v1814 = vshrl.u32 %v1813, 7
        %v1815 = vsub.s32 1, %v1814
        %v1816 = vrot.slane %v800, %v1815
        %v1817 = vadd.f32 %v1747, %v1812
        %v1818 = vadd.f32 %v1747, %v1816
        %v1819 = vadd.f32 %v1751, %v1812
        %v1820 = vadd.f32 %v1751, %v1816
        %v1821 = vadd.f32 %v1755, %v1812
        %v1822 = vadd.f32 %v1755, %v1816
        %v1823 = vadd.f32 %v1759, %v1812
        %v1824 = vadd.f32 %v1759, %v1816
        %v1825 = vadd.f32 %v1763, %v1812
        %v1826 = vadd.f32 %v1763, %v1816
        %v1827 = vadd.f32 %v1767, %v1812
        %v1828 = vadd.f32 %v1767, %v1816
        %v1829 = vadd.f32 %v1771, %v1812
        %v1830 = vadd.f32 %v1771, %v1816
        %v1831 = vadd.f32 %v1775, %v1812
        %v1832 = vadd.f32 %v1775, %v1816
        %v1833 = vadd.f32 %v1779, %v1812
        %v1834 = vadd.f32 %v1779, %v1816
        %v1835 = vadd.f32 %v1783, %v1812
        %v1836 = vadd.f32 %v1783, %v1816
        %v1837 = vadd.f32 %v1787, %v1812
        %v1838 = vadd.f32 %v1787, %v1816
        %v1839 = vadd.f32 %v1791, %v1812
        %v1840 = vadd.f32 %v1791, %v1816
        %v1841 = vadd.f32 %v1795, %v1812
        %v1842 = vadd.f32 %v1795, %v1816
        %v1843 = vadd.f32 %v1799, %v1812
        %v1844 = vadd.f32 %v1799, %v1816
        %v1845 = vadd.f32 %v1803, %v1812
        %v1846 = vadd.f32 %v1803, %v1816
        %v1847 = vadd.f32 %v1807, %v1812
        %v1848 = vadd.f32 %v1807, %v1816
        %vm1849 = vcmp.ge.f32.partialorder %v1817, 0.0
        %vm1850 = vcmp.ge.f32.partialorder %v1818, 0.0
        %vm1851 = vcmp.ge.f32.partialorder %v1819, 0.0
        %vm1852 = vcmp.ge.f32.partialorder %v1820, 0.0
        %vm1853 = vcmp.ge.f32.partialorder %v1821, 0.0
        %vm1854 = vcmp.ge.f32.partialorder %v1822, 0.0
        %vm1855 = vcmp.ge.f32.partialorder %v1823, 0.0
        %vm1856 = vcmp.ge.f32.partialorder %v1824, 0.0
        %vm1857 = vcmp.ge.f32.partialorder %v1825, 0.0
        %vm1858 = vcmp.ge.f32.partialorder %v1826, 0.0
        %vm1859 = vcmp.ge.f32.partialorder %v1827, 0.0
        %vm1860 = vcmp.ge.f32.partialorder %v1828, 0.0
        %vm1861 = vcmp.ge.f32.partialorder %v1829, 0.0
        %vm1862 = vcmp.ge.f32.partialorder %v1830, 0.0
        %vm1863 = vcmp.ge.f32.partialorder %v1831, 0.0
        %vm1864 = vcmp.ge.f32.partialorder %v1832, 0.0
        %vm1865 = vcmp.ge.f32.partialorder %v1833, 0.0
        %vm1866 = vcmp.ge.f32.partialorder %v1834, 0.0
        %vm1867 = vcmp.ge.f32.partialorder %v1835, 0.0
        %vm1868 = vcmp.ge.f32.partialorder %v1836, 0.0
        %vm1869 = vcmp.ge.f32.partialorder %v1837, 0.0
        %vm1870 = vcmp.ge.f32.partialorder %v1838, 0.0
        %vm1871 = vcmp.ge.f32.partialorder %v1839, 0.0
        %vm1872 = vcmp.ge.f32.partialorder %v1840, 0.0
        %vm1873 = vcmp.ge.f32.partialorder %v1841, 0.0
        %vm1874 = vcmp.ge.f32.partialorder %v1842, 0.0
        %vm1875 = vcmp.ge.f32.partialorder %v1843, 0.0
        %vm1876 = vcmp.ge.f32.partialorder %v1844, 0.0
        %vm1877 = vcmp.ge.f32.partialorder %v1845, 0.0
        %vm1878 = vcmp.ge.f32.partialorder %v1846, 0.0
        %vm1879 = vcmp.ge.f32.partialorder %v1847, 0.0
        %vm1880 = vcmp.ge.f32.partialorder %v1848, 0.0
        %v1881 = vmul.f32 %v1817, 0.2
        %v1882 = vmul.f32 %v1818, 0.2
        %v1883 = vmul.f32 %v1819, 0.2
        %v1884 = vmul.f32 %v1820, 0.2
        %v1885 = vmul.f32 %v1821, 0.2
        %v1886 = vmul.f32 %v1822, 0.2
        %v1887 = vmul.f32 %v1823, 0.2
        %v1888 = vmul.f32 %v1824, 0.2
        %v1889 = vmul.f32 %v1825, 0.2
        %v1890 = vmul.f32 %v1826, 0.2
        %v1891 = vmul.f32 %v1827, 0.2
        %v1892 = vmul.f32 %v1828, 0.2
        %v1893 = vmul.f32 %v1829, 0.2
        %v1894 = vmul.f32 %v1830, 0.2
        %v1895 = vmul.f32 %v1831, 0.2
        %v1896 = vmul.f32 %v1832, 0.2
        %v1897 = vmul.f32 %v1833, 0.2
        %v1898 = vmul.f32 %v1834, 0.2
        %v1899 = vmul.f32 %v1835, 0.2
        %v1900 = vmul.f32 %v1836, 0.2
        %v1901 = vmul.f32 %v1837, 0.2
        %v1902 = vmul.f32 %v1838, 0.2
        %v1903 = vmul.f32 %v1839, 0.2
        %v1904 = vmul.f32 %v1840, 0.2
        %v1905 = vmul.f32 %v1841, 0.2
        %v1906 = vmul.f32 %v1842, 0.2
        %v1907 = vmul.f32 %v1843, 0.2
        %v1908 = vmul.f32 %v1844, 0.2
        %v1909 = vmul.f32 %v1845, 0.2
        %v1910 = vmul.f32 %v1846, 0.2
        %v1911 = vmul.f32 %v1847, 0.2
        %v1912 = vmul.f32 %v1848, 0.2
        %v1913 = vsel %vm1849, %v1817, %v1881
        %v1914 = vsel %vm1850, %v1818, %v1882
        %v1915 = vsel %vm1851, %v1819, %v1883
        %v1916 = vsel %vm1852, %v1820, %v1884
        %v1917 = vsel %vm1853, %v1821, %v1885
        %v1918 = vsel %vm1854, %v1822, %v1886
        %v1919 = vsel %vm1855, %v1823, %v1887
        %v1920 = vsel %vm1856, %v1824, %v1888
        %v1921 = vsel %vm1857, %v1825, %v1889
        %v1922 = vsel %vm1858, %v1826, %v1890
        %v1923 = vsel %vm1859, %v1827, %v1891
        %v1924 = vsel %vm1860, %v1828, %v1892
        %v1925 = vsel %vm1861, %v1829, %v1893
        %v1926 = vsel %vm1862, %v1830, %v1894
        %v1927 = vsel %vm1863, %v1831, %v1895
        %v1928 = vsel %vm1864, %v1832, %v1896
        %v1929 = vsel %vm1865, %v1833, %v1897
        %v1930 = vsel %vm1866, %v1834, %v1898
        %v1931 = vsel %vm1867, %v1835, %v1899
        %v1932 = vsel %vm1868, %v1836, %v1900
        %v1933 = vsel %vm1869, %v1837, %v1901
        %v1934 = vsel %vm1870, %v1838, %v1902
        %v1935 = vsel %vm1871, %v1839, %v1903
        %v1936 = vsel %vm1872, %v1840, %v1904
        %v1937 = vsel %vm1873, %v1841, %v1905
        %v1938 = vsel %vm1874, %v1842, %v1906
        %v1939 = vsel %vm1875, %v1843, %v1907
        %v1940 = vsel %vm1876, %v1844, %v1908
        %v1941 = vsel %vm1877, %v1845, %v1909
        %v1942 = vsel %vm1878, %v1846, %v1910
        %v1943 = vsel %vm1879, %v1847, %v1911
        %v1944 = vsel %vm1880, %v1848, %v1912
        %v1945 = vsel %vm1098, %v1913, -1e+30
        %v1946 = vsel %vm1099, %v1914, -1e+30
        %v1947 = vsel %vm1100, %v1915, -1e+30
        %v1948 = vsel %vm1101, %v1916, -1e+30
        %v1949 = vsel %vm1102, %v1917, -1e+30
        %v1950 = vsel %vm1103, %v1918, -1e+30
        %v1951 = vsel %vm1104, %v1919, -1e+30
        %v1952 = vsel %vm1105, %v1920, -1e+30
        %v1953 = vsel %vm1106, %v1921, -1e+30
        %v1954 = vsel %vm1107, %v1922, -1e+30
        %v1955 = vsel %vm1108, %v1923, -1e+30
        %v1956 = vsel %vm1109, %v1924, -1e+30
        %v1957 = vsel %vm1110, %v1925, -1e+30
        %v1958 = vsel %vm1111, %v1926, -1e+30
        %v1959 = vsel %vm1112, %v1927, -1e+30
        %v1960 = vsel %vm1113, %v1928, -1e+30
        %v1961 = vsel %vm1114, %v1929, -1e+30
        %v1962 = vsel %vm1115, %v1930, -1e+30
        %v1963 = vsel %vm1116, %v1931, -1e+30
        %v1964 = vsel %vm1117, %v1932, -1e+30
        %v1965 = vsel %vm1118, %v1933, -1e+30
        %v1966 = vsel %vm1119, %v1934, -1e+30
        %v1967 = vsel %vm1120, %v1935, -1e+30
        %v1968 = vsel %vm1121, %v1936, -1e+30
        %v1969 = vsel %vm1122, %v1937, -1e+30
        %v1970 = vsel %vm1123, %v1938, -1e+30
        %v1971 = vsel %vm1124, %v1939, -1e+30
        %v1972 = vsel %vm1125, %v1940, -1e+30
        %v1973 = vsel %vm1126, %v1941, -1e+30
        %v1974 = vsel %vm1127, %v1942, -1e+30
        %v1975 = vsel %vm1128, %v1943, -1e+30
        %v1976 = vsel %vm1129, %v1944, -1e+30
        %v1977 = vmax.f32 %v1945, %v1946
        %1978 = vmax.xlane.f32.xlu0 %v1977
        %v1979 = vpop.xlane.xlu0 %1978
        %v1980 = vmax.f32 %v1947, %v1948
        %1981 = vmax.xlane.f32.xlu0 %v1980
        %v1982 = vpop.xlane.xlu0 %1981
        %v1983 = vmax.f32 %v1949, %v1950
        %1984 = vmax.xlane.f32.xlu0 %v1983
        %v1985 = vpop.xlane.xlu0 %1984
        %v1986 = vmax.f32 %v1951, %v1952
        %1987 = vmax.xlane.f32.xlu0 %v1986
        %v1988 = vpop.xlane.xlu0 %1987
        %v1989 = vmax.f32 %v1953, %v1954
        %1990 = vmax.xlane.f32.xlu0 %v1989
        %v1991 = vpop.xlane.xlu0 %1990
        %v1992 = vmax.f32 %v1955, %v1956
        %1993 = vmax.xlane.f32.xlu0 %v1992
        %v1994 = vpop.xlane.xlu0 %1993
        %v1995 = vmax.f32 %v1957, %v1958
        %1996 = vmax.xlane.f32.xlu0 %v1995
        %v1997 = vpop.xlane.xlu0 %1996
        %v1998 = vmax.f32 %v1959, %v1960
        %1999 = vmax.xlane.f32.xlu0 %v1998
        %v2000 = vpop.xlane.xlu0 %1999
        %v2001 = vmax.f32 %v1961, %v1962
        %2002 = vmax.xlane.f32.xlu0 %v2001
        %v2003 = vpop.xlane.xlu0 %2002
        %v2004 = vmax.f32 %v1963, %v1964
        %2005 = vmax.xlane.f32.xlu0 %v2004
        %v2006 = vpop.xlane.xlu0 %2005
        %v2007 = vmax.f32 %v1965, %v1966
        %2008 = vmax.xlane.f32.xlu0 %v2007
        %v2009 = vpop.xlane.xlu0 %2008
        %v2010 = vmax.f32 %v1967, %v1968
        %2011 = vmax.xlane.f32.xlu0 %v2010
        %v2012 = vpop.xlane.xlu0 %2011
        %v2013 = vmax.f32 %v1969, %v1970
        %2014 = vmax.xlane.f32.xlu0 %v2013
        %v2015 = vpop.xlane.xlu0 %2014
        %v2016 = vmax.f32 %v1971, %v1972
        %2017 = vmax.xlane.f32.xlu0 %v2016
        %v2018 = vpop.xlane.xlu0 %2017
        %v2019 = vmax.f32 %v1973, %v1974
        %2020 = vmax.xlane.f32.xlu0 %v2019
        %v2021 = vpop.xlane.xlu0 %2020
        %v2022 = vmax.f32 %v1975, %v1976
        %2023 = vmax.xlane.f32.xlu0 %v2022
        %v2024 = vpop.xlane.xlu0 %2023
        %v2025 = vsub.f32 %v1945, %v1979
        %v2026 = vsub.f32 %v1946, %v1979
        %v2027 = vsub.f32 %v1947, %v1982
        %v2028 = vsub.f32 %v1948, %v1982
        %v2029 = vsub.f32 %v1949, %v1985
        %v2030 = vsub.f32 %v1950, %v1985
        %v2031 = vsub.f32 %v1951, %v1988
        %v2032 = vsub.f32 %v1952, %v1988
        %v2033 = vsub.f32 %v1953, %v1991
        %v2034 = vsub.f32 %v1954, %v1991
        %v2035 = vsub.f32 %v1955, %v1994
        %v2036 = vsub.f32 %v1956, %v1994
        %v2037 = vsub.f32 %v1957, %v1997
        %v2038 = vsub.f32 %v1958, %v1997
        %v2039 = vsub.f32 %v1959, %v2000
        %v2040 = vsub.f32 %v1960, %v2000
        %v2041 = vsub.f32 %v1961, %v2003
        %v2042 = vsub.f32 %v1962, %v2003
        %v2043 = vsub.f32 %v1963, %v2006
        %v2044 = vsub.f32 %v1964, %v2006
        %v2045 = vsub.f32 %v1965, %v2009
        %v2046 = vsub.f32 %v1966, %v2009
        %v2047 = vsub.f32 %v1967, %v2012
        %v2048 = vsub.f32 %v1968, %v2012
        %v2049 = vsub.f32 %v1969, %v2015
        %v2050 = vsub.f32 %v1970, %v2015
        %v2051 = vsub.f32 %v1971, %v2018
        %v2052 = vsub.f32 %v1972, %v2018
        %v2053 = vsub.f32 %v1973, %v2021
        %v2054 = vsub.f32 %v1974, %v2021
        %v2055 = vsub.f32 %v1975, %v2024
        %v2056 = vsub.f32 %v1976, %v2024
        %v2057 = vmul.f32 %v2025, 1.442695
        %v2058 = vpow.pop %v2057
        %v2059 = vmul.f32 %v2026, 1.442695
        %v2060 = vpow.pop %v2059
        %v2061 = vmul.f32 %v2027, 1.442695
        %v2062 = vpow.pop %v2061
        %v2063 = vmul.f32 %v2028, 1.442695
        %v2064 = vpow.pop %v2063
        %v2065 = vmul.f32 %v2029, 1.442695
        %v2066 = vpow.pop %v2065
        %v2067 = vmul.f32 %v2030, 1.442695
        %v2068 = vpow.pop %v2067
        %v2069 = vmul.f32 %v2031, 1.442695
        %v2070 = vpow.pop %v2069
        %v2071 = vmul.f32 %v2032, 1.442695
        %v2072 = vpow.pop %v2071
        %v2073 = vmul.f32 %v2033, 1.442695
        %v2074 = vpow.pop %v2073
        %v2075 = vmul.f32 %v2034, 1.442695
        %v2076 = vpow.pop %v2075
        %v2077 = vmul.f32 %v2035, 1.442695
        %v2078 = vpow.pop %v2077
        %v2079 = vmul.f32 %v2036, 1.442695
        %v2080 = vpow.pop %v2079
        %v2081 = vmul.f32 %v2037, 1.442695
        %v2082 = vpow.pop %v2081
        %v2083 = vmul.f32 %v2038, 1.442695
        %v2084 = vpow.pop %v2083
        %v2085 = vmul.f32 %v2039, 1.442695
        %v2086 = vpow.pop %v2085
        %v2087 = vmul.f32 %v2040, 1.442695
        %v2088 = vpow.pop %v2087
        %v2089 = vmul.f32 %v2041, 1.442695
        %v2090 = vpow.pop %v2089
        %v2091 = vmul.f32 %v2042, 1.442695
        %v2092 = vpow.pop %v2091
        %v2093 = vmul.f32 %v2043, 1.442695
        %v2094 = vpow.pop %v2093
        %v2095 = vmul.f32 %v2044, 1.442695
        %v2096 = vpow.pop %v2095
        %v2097 = vmul.f32 %v2045, 1.442695
        %v2098 = vpow.pop %v2097
        %v2099 = vmul.f32 %v2046, 1.442695
        %v2100 = vpow.pop %v2099
        %v2101 = vmul.f32 %v2047, 1.442695
        %v2102 = vpow.pop %v2101
        %v2103 = vmul.f32 %v2048, 1.442695
        %v2104 = vpow.pop %v2103
        %v2105 = vmul.f32 %v2049, 1.442695
        %v2106 = vpow.pop %v2105
        %v2107 = vmul.f32 %v2050, 1.442695
        %v2108 = vpow.pop %v2107
        %v2109 = vmul.f32 %v2051, 1.442695
        %v2110 = vpow.pop %v2109
        %v2111 = vmul.f32 %v2052, 1.442695
        %v2112 = vpow.pop %v2111
        %v2113 = vmul.f32 %v2053, 1.442695
        %v2114 = vpow.pop %v2113
        %v2115 = vmul.f32 %v2054, 1.442695
        %v2116 = vpow.pop %v2115
        %v2117 = vmul.f32 %v2055, 1.442695
        %v2118 = vpow.pop %v2117
        %v2119 = vmul.f32 %v2056, 1.442695
        %v2120 = vpow.pop %v2119
        %v2121 = vmul.f32 %v1306, %v2058
        %v2122 = vmul.f32 %v1307, %v2060
        %v2123 = vmul.f32 %v1308, %v2062
        %v2124 = vmul.f32 %v1309, %v2064
        %v2125 = vmul.f32 %v1310, %v2066
        %v2126 = vmul.f32 %v1311, %v2068
        %v2127 = vmul.f32 %v1312, %v2070
        %v2128 = vmul.f32 %v1313, %v2072
        %v2129 = vmul.f32 %v1314, %v2074
        %v2130 = vmul.f32 %v1315, %v2076
        %v2131 = vmul.f32 %v1316, %v2078
        %v2132 = vmul.f32 %v1317, %v2080
        %v2133 = vmul.f32 %v1318, %v2082
        %v2134 = vmul.f32 %v1319, %v2084
        %v2135 = vmul.f32 %v1320, %v2086
        %v2136 = vmul.f32 %v1321, %v2088
        %v2137 = vmul.f32 %v1322, %v2090
        %v2138 = vmul.f32 %v1323, %v2092
        %v2139 = vmul.f32 %v1324, %v2094
        %v2140 = vmul.f32 %v1325, %v2096
        %v2141 = vmul.f32 %v1326, %v2098
        %v2142 = vmul.f32 %v1327, %v2100
        %v2143 = vmul.f32 %v1328, %v2102
        %v2144 = vmul.f32 %v1329, %v2104
        %v2145 = vmul.f32 %v1330, %v2106
        %v2146 = vmul.f32 %v1331, %v2108
        %v2147 = vmul.f32 %v1332, %v2110
        %v2148 = vmul.f32 %v1333, %v2112
        %v2149 = vmul.f32 %v1334, %v2114
        %v2150 = vmul.f32 %v1335, %v2116
        %v2151 = vmul.f32 %v1336, %v2118
        %v2152 = vmul.f32 %v1337, %v2120
        %v2153 = vadd.f32 %v2121, %v2122
        %2154 = vadd.xlane.f32.xlu0 %v2153
        %v2155 = vpop.xlane.xlu0 %2154
        %v2156 = vadd.f32 %v2123, %v2124
        %2157 = vadd.xlane.f32.xlu0 %v2156
        %v2158 = vpop.xlane.xlu0 %2157
        %v2159 = vadd.f32 %v2125, %v2126
        %2160 = vadd.xlane.f32.xlu0 %v2159
        %v2161 = vpop.xlane.xlu0 %2160
        %v2162 = vadd.f32 %v2127, %v2128
        %2163 = vadd.xlane.f32.xlu0 %v2162
        %v2164 = vpop.xlane.xlu0 %2163
        %v2165 = vadd.f32 %v2129, %v2130
        %2166 = vadd.xlane.f32.xlu0 %v2165
        %v2167 = vpop.xlane.xlu0 %2166
        %v2168 = vadd.f32 %v2131, %v2132
        %2169 = vadd.xlane.f32.xlu0 %v2168
        %v2170 = vpop.xlane.xlu0 %2169
        %v2171 = vadd.f32 %v2133, %v2134
        %2172 = vadd.xlane.f32.xlu0 %v2171
        %v2173 = vpop.xlane.xlu0 %2172
        %v2174 = vadd.f32 %v2135, %v2136
        %2175 = vadd.xlane.f32.xlu0 %v2174
        %v2176 = vpop.xlane.xlu0 %2175
        %v2177 = vadd.f32 %v2137, %v2138
        %2178 = vadd.xlane.f32.xlu0 %v2177
        %v2179 = vpop.xlane.xlu0 %2178
        %v2180 = vadd.f32 %v2139, %v2140
        %2181 = vadd.xlane.f32.xlu0 %v2180
        %v2182 = vpop.xlane.xlu0 %2181
        %v2183 = vadd.f32 %v2141, %v2142
        %2184 = vadd.xlane.f32.xlu0 %v2183
        %v2185 = vpop.xlane.xlu0 %2184
        %v2186 = vadd.f32 %v2143, %v2144
        %2187 = vadd.xlane.f32.xlu0 %v2186
        %v2188 = vpop.xlane.xlu0 %2187
        %v2189 = vadd.f32 %v2145, %v2146
        %2190 = vadd.xlane.f32.xlu0 %v2189
        %v2191 = vpop.xlane.xlu0 %2190
        %v2192 = vadd.f32 %v2147, %v2148
        %2193 = vadd.xlane.f32.xlu0 %v2192
        %v2194 = vpop.xlane.xlu0 %2193
        %v2195 = vadd.f32 %v2149, %v2150
        %2196 = vadd.xlane.f32.xlu0 %v2195
        %v2197 = vpop.xlane.xlu0 %2196
        %v2198 = vadd.f32 %v2151, %v2152
        %2199 = vadd.xlane.f32.xlu0 %v2198
        %v2200 = vpop.xlane.xlu0 %2199
        %v2201 = vpack.c.bf16 %v2123, %v2121
        %v2202 = vpack.c.bf16 %v2124, %v2122
        %v2203 = vpack.c.bf16 %v2127, %v2125
        %v2204 = vpack.c.bf16 %v2128, %v2126
        %v2205 = vpack.c.bf16 %v2131, %v2129
        %v2206 = vpack.c.bf16 %v2132, %v2130
        %v2207 = vpack.c.bf16 %v2135, %v2133
        %v2208 = vpack.c.bf16 %v2136, %v2134
        %v2209 = vpack.c.bf16 %v2139, %v2137
        %v2210 = vpack.c.bf16 %v2140, %v2138
        %v2211 = vpack.c.bf16 %v2143, %v2141
        %v2212 = vpack.c.bf16 %v2144, %v2142
        %v2213 = vpack.c.bf16 %v2147, %v2145
        %v2214 = vpack.c.bf16 %v2148, %v2146
        %v2215 = vpack.c.bf16 %v2151, %v2149
        %v2216 = vpack.c.bf16 %v2152, %v2150
        %2217 = vrot.lane.b32.xlu0 %v1498, 120
        %v2218 = vpop.permute.xlu0 %2217
        %2219 = vrot.lane.b32.xlu0 %v1499, 120
        %v2220 = vpop.permute.xlu0 %2219
        %2221 = vrot.lane.b32.xlu0 %v1500, 120
        %v2222 = vpop.permute.xlu0 %2221
        %2223 = vrot.lane.b32.xlu0 %v1501, 120
        %v2224 = vpop.permute.xlu0 %2223
        %2225 = vrot.lane.b32.xlu0 %v1502, 120
        %v2226 = vpop.permute.xlu0 %2225
        %2227 = vrot.lane.b32.xlu0 %v1503, 120
        %v2228 = vpop.permute.xlu0 %2227
        %2229 = vrot.lane.b32.xlu0 %v1504, 120
        %v2230 = vpop.permute.xlu0 %2229
        %2231 = vrot.lane.b32.xlu0 %v1505, 120
        %v2232 = vpop.permute.xlu0 %2231
        %2233 = vrot.lane.b32.xlu0 %v1506, 120
        %v2234 = vpop.permute.xlu0 %2233
        %2235 = vrot.lane.b32.xlu0 %v1507, 120
        %v2236 = vpop.permute.xlu0 %2235
        %2237 = vrot.lane.b32.xlu0 %v1508, 120
        %v2238 = vpop.permute.xlu0 %2237
        %2239 = vrot.lane.b32.xlu0 %v1509, 120
        %v2240 = vpop.permute.xlu0 %2239
        %2241 = vrot.lane.b32.xlu0 %v1510, 120
        %v2242 = vpop.permute.xlu0 %2241
        %2243 = vrot.lane.b32.xlu0 %v1511, 120
        %v2244 = vpop.permute.xlu0 %2243
        %2245 = vrot.lane.b32.xlu0 %v1512, 120
        %v2246 = vpop.permute.xlu0 %2245
        %2247 = vrot.lane.b32.xlu0 %v1513, 120
        %v2248 = vpop.permute.xlu0 %2247
        %2265 = vmatprep.subr.bf16.mxu0 0
        %2266 = vmatpush1.bf16.msra.mxu0 %v2232
        %2267 = vmatprep.subr.bf16.mxu0 0
        %2268 = vmatpush1.bf16.msra.mxu0 %v2230
        %2269 = vmatprep.subr.bf16.mxu0 0
        %2270 = vmatpush1.bf16.msra.mxu0 %v2228
        %2271 = vmatprep.subr.bf16.mxu0 0
        %2272 = vmatpush1.bf16.msra.mxu0 %v2226
        %2273 = vmatprep.subr.bf16.mxu0 0
        %2274 = vmatpush1.bf16.msra.mxu0 %v2224
        %2275 = vmatprep.subr.bf16.mxu0 0
        %2276 = vmatpush1.bf16.msra.mxu0 %v2222
        %2277 = vmatprep.subr.bf16.mxu0 0
        %2278 = vmatpush1.bf16.msra.mxu0 %v2220
        %2279 = vmatprep.subr.bf16.mxu0 0
        %2280 = vmatpush1.bf16.msra.mxu0 %v2218
        %2281 = vmatprep.subr.bf16.mxu0 0
        %2282 = vmatpush2.bf16.msra.mxu0 %v2248
        %2283 = vmatprep.subr.bf16.mxu0 0
        %2284 = vmatpush2.bf16.msra.mxu0 %v2246
        %2285 = vmatprep.subr.bf16.mxu0 0
        %2286 = vmatpush2.bf16.msra.mxu0 %v2244
        %2287 = vmatprep.subr.bf16.mxu0 0
        %2288 = vmatpush2.bf16.msra.mxu0 %v2242
        %2289 = vmatprep.subr.bf16.mxu0 0
        %2290 = vmatpush2.bf16.msra.mxu0 %v2240
        %2291 = vmatprep.subr.bf16.mxu0 0
        %2292 = vmatpush2.bf16.msra.mxu0 %v2238
        %2293 = vmatprep.subr.bf16.mxu0 0
        %2294 = vmatpush2.bf16.msra.mxu0 %v2236
        %2295 = vmatprep.subr.bf16.mxu0 0
        %2296 = vmatpush2.bf16.msra.mxu0 %v2234
        %2297 = vmatprep.mubr.bf16.mxu0 %v2202
        %2298 = vmatmul.mubr.bf16.gmra.mxu0 %v2201
        %v2299 = vpop.f32.mrf.mxu0
        %v2300 = vadd.f32 0.0, %v2299
        %v2301 = vpop.f32.mrf.mxu0
        %v2302 = vpop.f32.mrf.mxu0
        %v2303 = vadd.f32 0.0, %v2302
        %v2304 = vpop.f32.mrf.mxu0
        %2305 = vmatprep.mubr.bf16.mxu0 %v2204
        %2306 = vmatmul.mubr.bf16.gmra.mxu0 %v2203
        %v2307 = vpop.f32.mrf.mxu0
        %v2308 = vadd.f32 0.0, %v2307
        %v2309 = vpop.f32.mrf.mxu0
        %v2310 = vpop.f32.mrf.mxu0
        %v2311 = vadd.f32 0.0, %v2310
        %v2312 = vpop.f32.mrf.mxu0
        %2313 = vmatprep.mubr.bf16.mxu0 %v2206
        %2314 = vmatmul.mubr.bf16.gmra.mxu0 %v2205
        %v2315 = vpop.f32.mrf.mxu0
        %v2316 = vadd.f32 0.0, %v2315
        %v2317 = vpop.f32.mrf.mxu0
        %v2318 = vpop.f32.mrf.mxu0
        %v2319 = vadd.f32 0.0, %v2318
        %v2320 = vpop.f32.mrf.mxu0
        %2321 = vmatprep.mubr.bf16.mxu0 %v2208
        %2322 = vmatmul.mubr.bf16.gmra.mxu0 %v2207
        %v2323 = vpop.f32.mrf.mxu0
        %v2324 = vadd.f32 0.0, %v2323
        %v2325 = vpop.f32.mrf.mxu0
        %v2326 = vpop.f32.mrf.mxu0
        %v2327 = vadd.f32 0.0, %v2326
        %v2328 = vpop.f32.mrf.mxu0
        %2329 = vmatprep.mubr.bf16.mxu0 %v2210
        %2330 = vmatmul.mubr.bf16.gmra.mxu0 %v2209
        %v2331 = vpop.f32.mrf.mxu0
        %v2332 = vadd.f32 0.0, %v2331
        %v2333 = vpop.f32.mrf.mxu0
        %v2334 = vpop.f32.mrf.mxu0
        %v2335 = vadd.f32 0.0, %v2334
        %v2336 = vpop.f32.mrf.mxu0
        %2337 = vmatprep.mubr.bf16.mxu0 %v2212
        %2338 = vmatmul.mubr.bf16.gmra.mxu0 %v2211
        %v2339 = vpop.f32.mrf.mxu0
        %v2340 = vadd.f32 0.0, %v2339
        %v2341 = vpop.f32.mrf.mxu0
        %v2342 = vpop.f32.mrf.mxu0
        %v2343 = vadd.f32 0.0, %v2342
        %v2344 = vpop.f32.mrf.mxu0
        %2345 = vmatprep.mubr.bf16.mxu0 %v2214
        %2346 = vmatmul.mubr.bf16.gmra.mxu0 %v2213
        %v2347 = vpop.f32.mrf.mxu0
        %v2348 = vadd.f32 0.0, %v2347
        %v2349 = vpop.f32.mrf.mxu0
        %v2350 = vpop.f32.mrf.mxu0
        %v2351 = vadd.f32 0.0, %v2350
        %v2352 = vpop.f32.mrf.mxu0
        %2353 = vmatprep.mubr.bf16.mxu0 %v2216
        %2354 = vmatmul.mubr.bf16.gmra.mxu0 %v2215
        %v2355 = vpop.f32.mrf.mxu0
        %v2356 = vadd.f32 0.0, %v2355
        %v2357 = vpop.f32.mrf.mxu0
        %v2358 = vpop.f32.mrf.mxu0
        %v2359 = vadd.f32 0.0, %v2358
        %v2360 = vpop.f32.mrf.mxu0
        %2361 = vdwg.mxu0
        %v2362 = vrcp.pop %v2155
        %v2363 = vrcp.pop %v2158
        %v2364 = vrcp.pop %v2161
        %v2365 = vrcp.pop %v2164
        %v2366 = vrcp.pop %v2167
        %v2367 = vrcp.pop %v2170
        %v2368 = vrcp.pop %v2173
        %v2369 = vrcp.pop %v2176
        %v2370 = vrcp.pop %v2179
        %v2371 = vrcp.pop %v2182
        %v2372 = vrcp.pop %v2185
        %v2373 = vrcp.pop %v2188
        %v2374 = vrcp.pop %v2191
        %v2375 = vrcp.pop %v2194
        %v2376 = vrcp.pop %v2197
        %v2377 = vrcp.pop %v2200
        %v2378 = vmul.f32 %v2300, %v2362
        %v2379 = vmul.f32 %v2303, %v2363
        %v2380 = vmul.f32 %v2308, %v2364
        %v2381 = vmul.f32 %v2311, %v2365
        %v2382 = vmul.f32 %v2316, %v2366
        %v2383 = vmul.f32 %v2319, %v2367
        %v2384 = vmul.f32 %v2324, %v2368
        %v2385 = vmul.f32 %v2327, %v2369
        %v2386 = vmul.f32 %v2332, %v2370
        %v2387 = vmul.f32 %v2335, %v2371
        %v2388 = vmul.f32 %v2340, %v2372
        %v2389 = vmul.f32 %v2343, %v2373
        %v2390 = vmul.f32 %v2348, %v2374
        %v2391 = vmul.f32 %v2351, %v2375
        %v2392 = vmul.f32 %v2356, %v2376
        %v2393 = vmul.f32 %v2359, %v2377
        %2394 = vrot.lane.b32.xlu0 %v1663, 120
        %v2395 = vpop.permute.xlu0 %2394
        %v2397 = vadd.f32 %v2378, %v2395
        %v2398 = vadd.f32 %v2379, %v2395
        %v2399 = vadd.f32 %v2380, %v2395
        %v2400 = vadd.f32 %v2381, %v2395
        %v2401 = vadd.f32 %v2382, %v2395
        %v2402 = vadd.f32 %v2383, %v2395
        %v2403 = vadd.f32 %v2384, %v2395
        %v2404 = vadd.f32 %v2385, %v2395
        %v2405 = vadd.f32 %v2386, %v2395
        %v2406 = vadd.f32 %v2387, %v2395
        %v2407 = vadd.f32 %v2388, %v2395
        %v2408 = vadd.f32 %v2389, %v2395
        %v2409 = vadd.f32 %v2390, %v2395
        %v2410 = vadd.f32 %v2391, %v2395
        %v2411 = vadd.f32 %v2392, %v2395
        %v2412 = vadd.f32 %v2393, %v2395
        %vm2413 = vcmp.ge.f32.partialorder %v2397, 0.0
        %vm2414 = vcmp.ge.f32.partialorder %v2398, 0.0
        %vm2415 = vcmp.ge.f32.partialorder %v2399, 0.0
        %vm2416 = vcmp.ge.f32.partialorder %v2400, 0.0
        %vm2417 = vcmp.ge.f32.partialorder %v2401, 0.0
        %vm2418 = vcmp.ge.f32.partialorder %v2402, 0.0
        %vm2419 = vcmp.ge.f32.partialorder %v2403, 0.0
        %vm2420 = vcmp.ge.f32.partialorder %v2404, 0.0
        %vm2421 = vcmp.ge.f32.partialorder %v2405, 0.0
        %vm2422 = vcmp.ge.f32.partialorder %v2406, 0.0
        %vm2423 = vcmp.ge.f32.partialorder %v2407, 0.0
        %vm2424 = vcmp.ge.f32.partialorder %v2408, 0.0
        %vm2425 = vcmp.ge.f32.partialorder %v2409, 0.0
        %vm2426 = vcmp.ge.f32.partialorder %v2410, 0.0
        %vm2427 = vcmp.ge.f32.partialorder %v2411, 0.0
        %vm2428 = vcmp.ge.f32.partialorder %v2412, 0.0
        %v2429 = vmul.f32 %v2397, 0.01
        %v2430 = vmul.f32 %v2398, 0.01
        %v2431 = vmul.f32 %v2399, 0.01
        %v2432 = vmul.f32 %v2400, 0.01
        %v2433 = vmul.f32 %v2401, 0.01
        %v2434 = vmul.f32 %v2402, 0.01
        %v2435 = vmul.f32 %v2403, 0.01
        %v2436 = vmul.f32 %v2404, 0.01
        %v2437 = vmul.f32 %v2405, 0.01
        %v2438 = vmul.f32 %v2406, 0.01
        %v2439 = vmul.f32 %v2407, 0.01
        %v2440 = vmul.f32 %v2408, 0.01
        %v2441 = vmul.f32 %v2409, 0.01
        %v2442 = vmul.f32 %v2410, 0.01
        %v2443 = vmul.f32 %v2411, 0.01
        %v2444 = vmul.f32 %v2412, 0.01
        %v2445 = vsel %vm2413, %v2397, %v2429
        %v2446 = vsel %vm2414, %v2398, %v2430
        %v2447 = vsel %vm2415, %v2399, %v2431
        %v2448 = vsel %vm2416, %v2400, %v2432
        %v2449 = vsel %vm2417, %v2401, %v2433
        %v2450 = vsel %vm2418, %v2402, %v2434
        %v2451 = vsel %vm2419, %v2403, %v2435
        %v2452 = vsel %vm2420, %v2404, %v2436
        %v2453 = vsel %vm2421, %v2405, %v2437
        %v2454 = vsel %vm2422, %v2406, %v2438
        %v2455 = vsel %vm2423, %v2407, %v2439
        %v2456 = vsel %vm2424, %v2408, %v2440
        %v2457 = vsel %vm2425, %v2409, %v2441
        %v2458 = vsel %vm2426, %v2410, %v2442
        %v2459 = vsel %vm2427, %v2411, %v2443
        %v2460 = vsel %vm2428, %v2412, %v2444
        %v2461 = vtanh.pop %v2445
        %v2462 = vtanh.pop %v2446
        %v2463 = vtanh.pop %v2447
        %v2464 = vtanh.pop %v2448
        %v2465 = vtanh.pop %v2449
        %v2466 = vtanh.pop %v2450
        %v2467 = vtanh.pop %v2451
        %v2468 = vtanh.pop %v2452
        %v2469 = vtanh.pop %v2453
        %v2470 = vtanh.pop %v2454
        %v2471 = vtanh.pop %v2455
        %v2472 = vtanh.pop %v2456
        %v2473 = vtanh.pop %v2457
        %v2474 = vtanh.pop %v2458
        %v2475 = vtanh.pop %v2459
        %v2476 = vtanh.pop %v2460
        %2477 = vset.pattern.permute.xlu0 2
        %2478 = vperm.xlu0 %2477, %v783
        %v2479 = vpop.permute.xlu0 %2478
        %2481 = vset.pattern.permute.xlu0 2
        %2482 = vperm.xlu0 %2481, %v784
        %v2483 = vpop.permute.xlu0 %2482
        %2485 = vset.pattern.permute.xlu0 2
        %2486 = vperm.xlu0 %2485, %v785
        %v2487 = vpop.permute.xlu0 %2486
        %2489 = vset.pattern.permute.xlu0 2
        %2490 = vperm.xlu0 %2489, %v786
        %v2491 = vpop.permute.xlu0 %2490
        %2493 = vset.pattern.permute.xlu0 2
        %2494 = vperm.xlu0 %2493, %v787
        %v2495 = vpop.permute.xlu0 %2494
        %2497 = vset.pattern.permute.xlu0 2
        %2498 = vperm.xlu0 %2497, %v788
        %v2499 = vpop.permute.xlu0 %2498
        %2501 = vset.pattern.permute.xlu0 2
        %2502 = vperm.xlu0 %2501, %v789
        %v2503 = vpop.permute.xlu0 %2502
        %2505 = vset.pattern.permute.xlu0 2
        %2506 = vperm.xlu0 %2505, %v790
        %v2507 = vpop.permute.xlu0 %2506
        %2509 = vset.pattern.permute.xlu0 2
        %2510 = vperm.xlu0 %2509, %v791
        %v2511 = vpop.permute.xlu0 %2510
        %2513 = vset.pattern.permute.xlu0 2
        %2514 = vperm.xlu0 %2513, %v792
        %v2515 = vpop.permute.xlu0 %2514
        %2517 = vset.pattern.permute.xlu0 2
        %2518 = vperm.xlu0 %2517, %v793
        %v2519 = vpop.permute.xlu0 %2518
        %2521 = vset.pattern.permute.xlu0 2
        %2522 = vperm.xlu0 %2521, %v794
        %v2523 = vpop.permute.xlu0 %2522
        %2525 = vset.pattern.permute.xlu0 2
        %2526 = vperm.xlu0 %2525, %v795
        %v2527 = vpop.permute.xlu0 %2526
        %2529 = vset.pattern.permute.xlu0 2
        %2530 = vperm.xlu0 %2529, %v796
        %v2531 = vpop.permute.xlu0 %2530
        %2533 = vset.pattern.permute.xlu0 2
        %2534 = vperm.xlu0 %2533, %v797
        %v2535 = vpop.permute.xlu0 %2534
        %2537 = vset.pattern.permute.xlu0 2
        %2538 = vperm.xlu0 %2537, %v798
        %v2539 = vpop.permute.xlu0 %2538
        %v2541 = vlaneseq
        %v2542 = vshrl.u32 %v2541, 7
        %v2543 = vsub.s32 2, %v2542
        %v2544 = vrot.slane %v799, %v2543
        %v2545 = vlaneseq
        %v2546 = vshrl.u32 %v2545, 7
        %v2547 = vsub.s32 2, %v2546
        %v2548 = vrot.slane %v800, %v2547
        %v2549 = vadd.f32 %v2479, %v2544
        %v2550 = vadd.f32 %v2479, %v2548
        %v2551 = vadd.f32 %v2483, %v2544
        %v2552 = vadd.f32 %v2483, %v2548
        %v2553 = vadd.f32 %v2487, %v2544
        %v2554 = vadd.f32 %v2487, %v2548
        %v2555 = vadd.f32 %v2491, %v2544
        %v2556 = vadd.f32 %v2491, %v2548
        %v2557 = vadd.f32 %v2495, %v2544
        %v2558 = vadd.f32 %v2495, %v2548
        %v2559 = vadd.f32 %v2499, %v2544
        %v2560 = vadd.f32 %v2499, %v2548
        %v2561 = vadd.f32 %v2503, %v2544
        %v2562 = vadd.f32 %v2503, %v2548
        %v2563 = vadd.f32 %v2507, %v2544
        %v2564 = vadd.f32 %v2507, %v2548
        %v2565 = vadd.f32 %v2511, %v2544
        %v2566 = vadd.f32 %v2511, %v2548
        %v2567 = vadd.f32 %v2515, %v2544
        %v2568 = vadd.f32 %v2515, %v2548
        %v2569 = vadd.f32 %v2519, %v2544
        %v2570 = vadd.f32 %v2519, %v2548
        %v2571 = vadd.f32 %v2523, %v2544
        %v2572 = vadd.f32 %v2523, %v2548
        %v2573 = vadd.f32 %v2527, %v2544
        %v2574 = vadd.f32 %v2527, %v2548
        %v2575 = vadd.f32 %v2531, %v2544
        %v2576 = vadd.f32 %v2531, %v2548
        %v2577 = vadd.f32 %v2535, %v2544
        %v2578 = vadd.f32 %v2535, %v2548
        %v2579 = vadd.f32 %v2539, %v2544
        %v2580 = vadd.f32 %v2539, %v2548
        %vm2581 = vcmp.ge.f32.partialorder %v2549, 0.0
        %vm2582 = vcmp.ge.f32.partialorder %v2550, 0.0
        %vm2583 = vcmp.ge.f32.partialorder %v2551, 0.0
        %vm2584 = vcmp.ge.f32.partialorder %v2552, 0.0
        %vm2585 = vcmp.ge.f32.partialorder %v2553, 0.0
        %vm2586 = vcmp.ge.f32.partialorder %v2554, 0.0
        %vm2587 = vcmp.ge.f32.partialorder %v2555, 0.0
        %vm2588 = vcmp.ge.f32.partialorder %v2556, 0.0
        %vm2589 = vcmp.ge.f32.partialorder %v2557, 0.0
        %vm2590 = vcmp.ge.f32.partialorder %v2558, 0.0
        %vm2591 = vcmp.ge.f32.partialorder %v2559, 0.0
        %vm2592 = vcmp.ge.f32.partialorder %v2560, 0.0
        %vm2593 = vcmp.ge.f32.partialorder %v2561, 0.0
        %vm2594 = vcmp.ge.f32.partialorder %v2562, 0.0
        %vm2595 = vcmp.ge.f32.partialorder %v2563, 0.0
        %vm2596 = vcmp.ge.f32.partialorder %v2564, 0.0
        %vm2597 = vcmp.ge.f32.partialorder %v2565, 0.0
        %vm2598 = vcmp.ge.f32.partialorder %v2566, 0.0
        %vm2599 = vcmp.ge.f32.partialorder %v2567, 0.0
        %vm2600 = vcmp.ge.f32.partialorder %v2568, 0.0
        %vm2601 = vcmp.ge.f32.partialorder %v2569, 0.0
        %vm2602 = vcmp.ge.f32.partialorder %v2570, 0.0
        %vm2603 = vcmp.ge.f32.partialorder %v2571, 0.0
        %vm2604 = vcmp.ge.f32.partialorder %v2572, 0.0
        %vm2605 = vcmp.ge.f32.partialorder %v2573, 0.0
        %vm2606 = vcmp.ge.f32.partialorder %v2574, 0.0
        %vm2607 = vcmp.ge.f32.partialorder %v2575, 0.0
        %vm2608 = vcmp.ge.f32.partialorder %v2576, 0.0
        %vm2609 = vcmp.ge.f32.partialorder %v2577, 0.0
        %vm2610 = vcmp.ge.f32.partialorder %v2578, 0.0
        %vm2611 = vcmp.ge.f32.partialorder %v2579, 0.0
        %vm2612 = vcmp.ge.f32.partialorder %v2580, 0.0
        %v2613 = vmul.f32 %v2549, 0.2
        %v2614 = vmul.f32 %v2550, 0.2
        %v2615 = vmul.f32 %v2551, 0.2
        %v2616 = vmul.f32 %v2552, 0.2
        %v2617 = vmul.f32 %v2553, 0.2
        %v2618 = vmul.f32 %v2554, 0.2
        %v2619 = vmul.f32 %v2555, 0.2
        %v2620 = vmul.f32 %v2556, 0.2
        %v2621 = vmul.f32 %v2557, 0.2
        %v2622 = vmul.f32 %v2558, 0.2
        %v2623 = vmul.f32 %v2559, 0.2
        %v2624 = vmul.f32 %v2560, 0.2
        %v2625 = vmul.f32 %v2561, 0.2
        %v2626 = vmul.f32 %v2562, 0.2
        %v2627 = vmul.f32 %v2563, 0.2
        %v2628 = vmul.f32 %v2564, 0.2
        %v2629 = vmul.f32 %v2565, 0.2
        %v2630 = vmul.f32 %v2566, 0.2
        %v2631 = vmul.f32 %v2567, 0.2
        %v2632 = vmul.f32 %v2568, 0.2
        %v2633 = vmul.f32 %v2569, 0.2
        %v2634 = vmul.f32 %v2570, 0.2
        %v2635 = vmul.f32 %v2571, 0.2
        %v2636 = vmul.f32 %v2572, 0.2
        %v2637 = vmul.f32 %v2573, 0.2
        %v2638 = vmul.f32 %v2574, 0.2
        %v2639 = vmul.f32 %v2575, 0.2
        %v2640 = vmul.f32 %v2576, 0.2
        %v2641 = vmul.f32 %v2577, 0.2
        %v2642 = vmul.f32 %v2578, 0.2
        %v2643 = vmul.f32 %v2579, 0.2
        %v2644 = vmul.f32 %v2580, 0.2
        %v2645 = vsel %vm2581, %v2549, %v2613
        %v2646 = vsel %vm2582, %v2550, %v2614
        %v2647 = vsel %vm2583, %v2551, %v2615
        %v2648 = vsel %vm2584, %v2552, %v2616
        %v2649 = vsel %vm2585, %v2553, %v2617
        %v2650 = vsel %vm2586, %v2554, %v2618
        %v2651 = vsel %vm2587, %v2555, %v2619
        %v2652 = vsel %vm2588, %v2556, %v2620
        %v2653 = vsel %vm2589, %v2557, %v2621
        %v2654 = vsel %vm2590, %v2558, %v2622
        %v2655 = vsel %vm2591, %v2559, %v2623
        %v2656 = vsel %vm2592, %v2560, %v2624
        %v2657 = vsel %vm2593, %v2561, %v2625
        %v2658 = vsel %vm2594, %v2562, %v2626
        %v2659 = vsel %vm2595, %v2563, %v2627
        %v2660 = vsel %vm2596, %v2564, %v2628
        %v2661 = vsel %vm2597, %v2565, %v2629
        %v2662 = vsel %vm2598, %v2566, %v2630
        %v2663 = vsel %vm2599, %v2567, %v2631
        %v2664 = vsel %vm2600, %v2568, %v2632
        %v2665 = vsel %vm2601, %v2569, %v2633
        %v2666 = vsel %vm2602, %v2570, %v2634
        %v2667 = vsel %vm2603, %v2571, %v2635
        %v2668 = vsel %vm2604, %v2572, %v2636
        %v2669 = vsel %vm2605, %v2573, %v2637
        %v2670 = vsel %vm2606, %v2574, %v2638
        %v2671 = vsel %vm2607, %v2575, %v2639
        %v2672 = vsel %vm2608, %v2576, %v2640
        %v2673 = vsel %vm2609, %v2577, %v2641
        %v2674 = vsel %vm2610, %v2578, %v2642
        %v2675 = vsel %vm2611, %v2579, %v2643
        %v2676 = vsel %vm2612, %v2580, %v2644
        %v2677 = vsel %vm1098, %v2645, -1e+30
        %v2678 = vsel %vm1099, %v2646, -1e+30
        %v2679 = vsel %vm1100, %v2647, -1e+30
        %v2680 = vsel %vm1101, %v2648, -1e+30
        %v2681 = vsel %vm1102, %v2649, -1e+30
        %v2682 = vsel %vm1103, %v2650, -1e+30
        %v2683 = vsel %vm1104, %v2651, -1e+30
        %v2684 = vsel %vm1105, %v2652, -1e+30
        %v2685 = vsel %vm1106, %v2653, -1e+30
        %v2686 = vsel %vm1107, %v2654, -1e+30
        %v2687 = vsel %vm1108, %v2655, -1e+30
        %v2688 = vsel %vm1109, %v2656, -1e+30
        %v2689 = vsel %vm1110, %v2657, -1e+30
        %v2690 = vsel %vm1111, %v2658, -1e+30
        %v2691 = vsel %vm1112, %v2659, -1e+30
        %v2692 = vsel %vm1113, %v2660, -1e+30
        %v2693 = vsel %vm1114, %v2661, -1e+30
        %v2694 = vsel %vm1115, %v2662, -1e+30
        %v2695 = vsel %vm1116, %v2663, -1e+30
        %v2696 = vsel %vm1117, %v2664, -1e+30
        %v2697 = vsel %vm1118, %v2665, -1e+30
        %v2698 = vsel %vm1119, %v2666, -1e+30
        %v2699 = vsel %vm1120, %v2667, -1e+30
        %v2700 = vsel %vm1121, %v2668, -1e+30
        %v2701 = vsel %vm1122, %v2669, -1e+30
        %v2702 = vsel %vm1123, %v2670, -1e+30
        %v2703 = vsel %vm1124, %v2671, -1e+30
        %v2704 = vsel %vm1125, %v2672, -1e+30
        %v2705 = vsel %vm1126, %v2673, -1e+30
        %v2706 = vsel %vm1127, %v2674, -1e+30
        %v2707 = vsel %vm1128, %v2675, -1e+30
        %v2708 = vsel %vm1129, %v2676, -1e+30
        %v2709 = vmax.f32 %v2677, %v2678
        %2710 = vmax.xlane.f32.xlu0 %v2709
        %v2711 = vpop.xlane.xlu0 %2710
        %v2712 = vmax.f32 %v2679, %v2680
        %2713 = vmax.xlane.f32.xlu0 %v2712
        %v2714 = vpop.xlane.xlu0 %2713
        %v2715 = vmax.f32 %v2681, %v2682
        %2716 = vmax.xlane.f32.xlu0 %v2715
        %v2717 = vpop.xlane.xlu0 %2716
        %v2718 = vmax.f32 %v2683, %v2684
        %2719 = vmax.xlane.f32.xlu0 %v2718
        %v2720 = vpop.xlane.xlu0 %2719
        %v2721 = vmax.f32 %v2685, %v2686
        %2722 = vmax.xlane.f32.xlu0 %v2721
        %v2723 = vpop.xlane.xlu0 %2722
        %v2724 = vmax.f32 %v2687, %v2688
        %2725 = vmax.xlane.f32.xlu0 %v2724
        %v2726 = vpop.xlane.xlu0 %2725
        %v2727 = vmax.f32 %v2689, %v2690
        %2728 = vmax.xlane.f32.xlu0 %v2727
        %v2729 = vpop.xlane.xlu0 %2728
        %v2730 = vmax.f32 %v2691, %v2692
        %2731 = vmax.xlane.f32.xlu0 %v2730
        %v2732 = vpop.xlane.xlu0 %2731
        %v2733 = vmax.f32 %v2693, %v2694
        %2734 = vmax.xlane.f32.xlu0 %v2733
        %v2735 = vpop.xlane.xlu0 %2734
        %v2736 = vmax.f32 %v2695, %v2696
        %2737 = vmax.xlane.f32.xlu0 %v2736
        %v2738 = vpop.xlane.xlu0 %2737
        %v2739 = vmax.f32 %v2697, %v2698
        %2740 = vmax.xlane.f32.xlu0 %v2739
        %v2741 = vpop.xlane.xlu0 %2740
        %v2742 = vmax.f32 %v2699, %v2700
        %2743 = vmax.xlane.f32.xlu0 %v2742
        %v2744 = vpop.xlane.xlu0 %2743
        %v2745 = vmax.f32 %v2701, %v2702
        %2746 = vmax.xlane.f32.xlu0 %v2745
        %v2747 = vpop.xlane.xlu0 %2746
        %v2748 = vmax.f32 %v2703, %v2704
        %2749 = vmax.xlane.f32.xlu0 %v2748
        %v2750 = vpop.xlane.xlu0 %2749
        %v2751 = vmax.f32 %v2705, %v2706
        %2752 = vmax.xlane.f32.xlu0 %v2751
        %v2753 = vpop.xlane.xlu0 %2752
        %v2754 = vmax.f32 %v2707, %v2708
        %2755 = vmax.xlane.f32.xlu0 %v2754
        %v2756 = vpop.xlane.xlu0 %2755
        %v2757 = vsub.f32 %v2677, %v2711
        %v2758 = vsub.f32 %v2678, %v2711
        %v2759 = vsub.f32 %v2679, %v2714
        %v2760 = vsub.f32 %v2680, %v2714
        %v2761 = vsub.f32 %v2681, %v2717
        %v2762 = vsub.f32 %v2682, %v2717
        %v2763 = vsub.f32 %v2683, %v2720
        %v2764 = vsub.f32 %v2684, %v2720
        %v2765 = vsub.f32 %v2685, %v2723
        %v2766 = vsub.f32 %v2686, %v2723
        %v2767 = vsub.f32 %v2687, %v2726
        %v2768 = vsub.f32 %v2688, %v2726
        %v2769 = vsub.f32 %v2689, %v2729
        %v2770 = vsub.f32 %v2690, %v2729
        %v2771 = vsub.f32 %v2691, %v2732
        %v2772 = vsub.f32 %v2692, %v2732
        %v2773 = vsub.f32 %v2693, %v2735
        %v2774 = vsub.f32 %v2694, %v2735
        %v2775 = vsub.f32 %v2695, %v2738
        %v2776 = vsub.f32 %v2696, %v2738
        %v2777 = vsub.f32 %v2697, %v2741
        %v2778 = vsub.f32 %v2698, %v2741
        %v2779 = vsub.f32 %v2699, %v2744
        %v2780 = vsub.f32 %v2700, %v2744
        %v2781 = vsub.f32 %v2701, %v2747
        %v2782 = vsub.f32 %v2702, %v2747
        %v2783 = vsub.f32 %v2703, %v2750
        %v2784 = vsub.f32 %v2704, %v2750
        %v2785 = vsub.f32 %v2705, %v2753
        %v2786 = vsub.f32 %v2706, %v2753
        %v2787 = vsub.f32 %v2707, %v2756
        %v2788 = vsub.f32 %v2708, %v2756
        %v2789 = vmul.f32 %v2757, 1.442695
        %v2790 = vpow.pop %v2789
        %v2791 = vmul.f32 %v2758, 1.442695
        %v2792 = vpow.pop %v2791
        %v2793 = vmul.f32 %v2759, 1.442695
        %v2794 = vpow.pop %v2793
        %v2795 = vmul.f32 %v2760, 1.442695
        %v2796 = vpow.pop %v2795
        %v2797 = vmul.f32 %v2761, 1.442695
        %v2798 = vpow.pop %v2797
        %v2799 = vmul.f32 %v2762, 1.442695
        %v2800 = vpow.pop %v2799
        %v2801 = vmul.f32 %v2763, 1.442695
        %v2802 = vpow.pop %v2801
        %v2803 = vmul.f32 %v2764, 1.442695
        %v2804 = vpow.pop %v2803
        %v2805 = vmul.f32 %v2765, 1.442695
        %v2806 = vpow.pop %v2805
        %v2807 = vmul.f32 %v2766, 1.442695
        %v2808 = vpow.pop %v2807
        %v2809 = vmul.f32 %v2767, 1.442695
        %v2810 = vpow.pop %v2809
        %v2811 = vmul.f32 %v2768, 1.442695
        %v2812 = vpow.pop %v2811
        %v2813 = vmul.f32 %v2769, 1.442695
        %v2814 = vpow.pop %v2813
        %v2815 = vmul.f32 %v2770, 1.442695
        %v2816 = vpow.pop %v2815
        %v2817 = vmul.f32 %v2771, 1.442695
        %v2818 = vpow.pop %v2817
        %v2819 = vmul.f32 %v2772, 1.442695
        %v2820 = vpow.pop %v2819
        %v2821 = vmul.f32 %v2773, 1.442695
        %v2822 = vpow.pop %v2821
        %v2823 = vmul.f32 %v2774, 1.442695
        %v2824 = vpow.pop %v2823
        %v2825 = vmul.f32 %v2775, 1.442695
        %v2826 = vpow.pop %v2825
        %v2827 = vmul.f32 %v2776, 1.442695
        %v2828 = vpow.pop %v2827
        %v2829 = vmul.f32 %v2777, 1.442695
        %v2830 = vpow.pop %v2829
        %v2831 = vmul.f32 %v2778, 1.442695
        %v2832 = vpow.pop %v2831
        %v2833 = vmul.f32 %v2779, 1.442695
        %v2834 = vpow.pop %v2833
        %v2835 = vmul.f32 %v2780, 1.442695
        %v2836 = vpow.pop %v2835
        %v2837 = vmul.f32 %v2781, 1.442695
        %v2838 = vpow.pop %v2837
        %v2839 = vmul.f32 %v2782, 1.442695
        %v2840 = vpow.pop %v2839
        %v2841 = vmul.f32 %v2783, 1.442695
        %v2842 = vpow.pop %v2841
        %v2843 = vmul.f32 %v2784, 1.442695
        %v2844 = vpow.pop %v2843
        %v2845 = vmul.f32 %v2785, 1.442695
        %v2846 = vpow.pop %v2845
        %v2847 = vmul.f32 %v2786, 1.442695
        %v2848 = vpow.pop %v2847
        %v2849 = vmul.f32 %v2787, 1.442695
        %v2850 = vpow.pop %v2849
        %v2851 = vmul.f32 %v2788, 1.442695
        %v2852 = vpow.pop %v2851
        %v2853 = vmul.f32 %v1306, %v2790
        %v2854 = vmul.f32 %v1307, %v2792
        %v2855 = vmul.f32 %v1308, %v2794
        %v2856 = vmul.f32 %v1309, %v2796
        %v2857 = vmul.f32 %v1310, %v2798
        %v2858 = vmul.f32 %v1311, %v2800
        %v2859 = vmul.f32 %v1312, %v2802
        %v2860 = vmul.f32 %v1313, %v2804
        %v2861 = vmul.f32 %v1314, %v2806
        %v2862 = vmul.f32 %v1315, %v2808
        %v2863 = vmul.f32 %v1316, %v2810
        %v2864 = vmul.f32 %v1317, %v2812
        %v2865 = vmul.f32 %v1318, %v2814
        %v2866 = vmul.f32 %v1319, %v2816
        %v2867 = vmul.f32 %v1320, %v2818
        %v2868 = vmul.f32 %v1321, %v2820
        %v2869 = vmul.f32 %v1322, %v2822
        %v2870 = vmul.f32 %v1323, %v2824
        %v2871 = vmul.f32 %v1324, %v2826
        %v2872 = vmul.f32 %v1325, %v2828
        %v2873 = vmul.f32 %v1326, %v2830
        %v2874 = vmul.f32 %v1327, %v2832
        %v2875 = vmul.f32 %v1328, %v2834
        %v2876 = vmul.f32 %v1329, %v2836
        %v2877 = vmul.f32 %v1330, %v2838
        %v2878 = vmul.f32 %v1331, %v2840
        %v2879 = vmul.f32 %v1332, %v2842
        %v2880 = vmul.f32 %v1333, %v2844
        %v2881 = vmul.f32 %v1334, %v2846
        %v2882 = vmul.f32 %v1335, %v2848
        %v2883 = vmul.f32 %v1336, %v2850
        %v2884 = vmul.f32 %v1337, %v2852
        %v2885 = vadd.f32 %v2853, %v2854
        %2886 = vadd.xlane.f32.xlu0 %v2885
        %v2887 = vpop.xlane.xlu0 %2886
        %v2888 = vadd.f32 %v2855, %v2856
        %2889 = vadd.xlane.f32.xlu0 %v2888
        %v2890 = vpop.xlane.xlu0 %2889
        %v2891 = vadd.f32 %v2857, %v2858
        %2892 = vadd.xlane.f32.xlu0 %v2891
        %v2893 = vpop.xlane.xlu0 %2892
        %v2894 = vadd.f32 %v2859, %v2860
        %2895 = vadd.xlane.f32.xlu0 %v2894
        %v2896 = vpop.xlane.xlu0 %2895
        %v2897 = vadd.f32 %v2861, %v2862
        %2898 = vadd.xlane.f32.xlu0 %v2897
        %v2899 = vpop.xlane.xlu0 %2898
        %v2900 = vadd.f32 %v2863, %v2864
        %2901 = vadd.xlane.f32.xlu0 %v2900
        %v2902 = vpop.xlane.xlu0 %2901
        %v2903 = vadd.f32 %v2865, %v2866
        %2904 = vadd.xlane.f32.xlu0 %v2903
        %v2905 = vpop.xlane.xlu0 %2904
        %v2906 = vadd.f32 %v2867, %v2868
        %2907 = vadd.xlane.f32.xlu0 %v2906
        %v2908 = vpop.xlane.xlu0 %2907
        %v2909 = vadd.f32 %v2869, %v2870
        %2910 = vadd.xlane.f32.xlu0 %v2909
        %v2911 = vpop.xlane.xlu0 %2910
        %v2912 = vadd.f32 %v2871, %v2872
        %2913 = vadd.xlane.f32.xlu0 %v2912
        %v2914 = vpop.xlane.xlu0 %2913
        %v2915 = vadd.f32 %v2873, %v2874
        %2916 = vadd.xlane.f32.xlu0 %v2915
        %v2917 = vpop.xlane.xlu0 %2916
        %v2918 = vadd.f32 %v2875, %v2876
        %2919 = vadd.xlane.f32.xlu0 %v2918
        %v2920 = vpop.xlane.xlu0 %2919
        %v2921 = vadd.f32 %v2877, %v2878
        %2922 = vadd.xlane.f32.xlu0 %v2921
        %v2923 = vpop.xlane.xlu0 %2922
        %v2924 = vadd.f32 %v2879, %v2880
        %2925 = vadd.xlane.f32.xlu0 %v2924
        %v2926 = vpop.xlane.xlu0 %2925
        %v2927 = vadd.f32 %v2881, %v2882
        %2928 = vadd.xlane.f32.xlu0 %v2927
        %v2929 = vpop.xlane.xlu0 %2928
        %v2930 = vadd.f32 %v2883, %v2884
        %2931 = vadd.xlane.f32.xlu0 %v2930
        %v2932 = vpop.xlane.xlu0 %2931
        %v2933 = vpack.c.bf16 %v2855, %v2853
        %v2934 = vpack.c.bf16 %v2856, %v2854
        %v2935 = vpack.c.bf16 %v2859, %v2857
        %v2936 = vpack.c.bf16 %v2860, %v2858
        %v2937 = vpack.c.bf16 %v2863, %v2861
        %v2938 = vpack.c.bf16 %v2864, %v2862
        %v2939 = vpack.c.bf16 %v2867, %v2865
        %v2940 = vpack.c.bf16 %v2868, %v2866
        %v2941 = vpack.c.bf16 %v2871, %v2869
        %v2942 = vpack.c.bf16 %v2872, %v2870
        %v2943 = vpack.c.bf16 %v2875, %v2873
        %v2944 = vpack.c.bf16 %v2876, %v2874
        %v2945 = vpack.c.bf16 %v2879, %v2877
        %v2946 = vpack.c.bf16 %v2880, %v2878
        %v2947 = vpack.c.bf16 %v2883, %v2881
        %v2948 = vpack.c.bf16 %v2884, %v2882
        %2949 = vrot.lane.b32.xlu0 %v1498, 112
        %v2950 = vpop.permute.xlu0 %2949
        %2951 = vrot.lane.b32.xlu0 %v1499, 112
        %v2952 = vpop.permute.xlu0 %2951
        %2953 = vrot.lane.b32.xlu0 %v1500, 112
        %v2954 = vpop.permute.xlu0 %2953
        %2955 = vrot.lane.b32.xlu0 %v1501, 112
        %v2956 = vpop.permute.xlu0 %2955
        %2957 = vrot.lane.b32.xlu0 %v1502, 112
        %v2958 = vpop.permute.xlu0 %2957
        %2959 = vrot.lane.b32.xlu0 %v1503, 112
        %v2960 = vpop.permute.xlu0 %2959
        %2961 = vrot.lane.b32.xlu0 %v1504, 112
        %v2962 = vpop.permute.xlu0 %2961
        %2963 = vrot.lane.b32.xlu0 %v1505, 112
        %v2964 = vpop.permute.xlu0 %2963
        %2965 = vrot.lane.b32.xlu0 %v1506, 112
        %v2966 = vpop.permute.xlu0 %2965
        %2967 = vrot.lane.b32.xlu0 %v1507, 112
        %v2968 = vpop.permute.xlu0 %2967
        %2969 = vrot.lane.b32.xlu0 %v1508, 112
        %v2970 = vpop.permute.xlu0 %2969
        %2971 = vrot.lane.b32.xlu0 %v1509, 112
        %v2972 = vpop.permute.xlu0 %2971
        %2973 = vrot.lane.b32.xlu0 %v1510, 112
        %v2974 = vpop.permute.xlu0 %2973
        %2975 = vrot.lane.b32.xlu0 %v1511, 112
        %v2976 = vpop.permute.xlu0 %2975
        %2977 = vrot.lane.b32.xlu0 %v1512, 112
        %v2978 = vpop.permute.xlu0 %2977
        %2979 = vrot.lane.b32.xlu0 %v1513, 112
        %v2980 = vpop.permute.xlu0 %2979
        %2997 = vmatprep.subr.bf16.mxu0 0
        %2998 = vmatpush1.bf16.msra.mxu0 %v2964
        %2999 = vmatprep.subr.bf16.mxu0 0
        %3000 = vmatpush1.bf16.msra.mxu0 %v2962
        %3001 = vmatprep.subr.bf16.mxu0 0
        %3002 = vmatpush1.bf16.msra.mxu0 %v2960
        %3003 = vmatprep.subr.bf16.mxu0 0
        %3004 = vmatpush1.bf16.msra.mxu0 %v2958
        %3005 = vmatprep.subr.bf16.mxu0 0
        %3006 = vmatpush1.bf16.msra.mxu0 %v2956
        %3007 = vmatprep.subr.bf16.mxu0 0
        %3008 = vmatpush1.bf16.msra.mxu0 %v2954
        %3009 = vmatprep.subr.bf16.mxu0 0
        %3010 = vmatpush1.bf16.msra.mxu0 %v2952
        %3011 = vmatprep.subr.bf16.mxu0 0
        %3012 = vmatpush1.bf16.msra.mxu0 %v2950
        %3013 = vmatprep.subr.bf16.mxu0 0
        %3014 = vmatpush2.bf16.msra.mxu0 %v2980
        %3015 = vmatprep.subr.bf16.mxu0 0
        %3016 = vmatpush2.bf16.msra.mxu0 %v2978
        %3017 = vmatprep.subr.bf16.mxu0 0
        %3018 = vmatpush2.bf16.msra.mxu0 %v2976
        %3019 = vmatprep.subr.bf16.mxu0 0
        %3020 = vmatpush2.bf16.msra.mxu0 %v2974
        %3021 = vmatprep.subr.bf16.mxu0 0
        %3022 = vmatpush2.bf16.msra.mxu0 %v2972
        %3023 = vmatprep.subr.bf16.mxu0 0
        %3024 = vmatpush2.bf16.msra.mxu0 %v2970
        %3025 = vmatprep.subr.bf16.mxu0 0
        %3026 = vmatpush2.bf16.msra.mxu0 %v2968
        %3027 = vmatprep.subr.bf16.mxu0 0
        %3028 = vmatpush2.bf16.msra.mxu0 %v2966
        %3029 = vmatprep.mubr.bf16.mxu0 %v2934
        %3030 = vmatmul.mubr.bf16.gmra.mxu0 %v2933
        %v3031 = vpop.f32.mrf.mxu0
        %v3032 = vadd.f32 0.0, %v3031
        %v3033 = vpop.f32.mrf.mxu0
        %v3034 = vpop.f32.mrf.mxu0
        %v3035 = vadd.f32 0.0, %v3034
        %v3036 = vpop.f32.mrf.mxu0
        %3037 = vmatprep.mubr.bf16.mxu0 %v2936
        %3038 = vmatmul.mubr.bf16.gmra.mxu0 %v2935
        %v3039 = vpop.f32.mrf.mxu0
        %v3040 = vadd.f32 0.0, %v3039
        %v3041 = vpop.f32.mrf.mxu0
        %v3042 = vpop.f32.mrf.mxu0
        %v3043 = vadd.f32 0.0, %v3042
        %v3044 = vpop.f32.mrf.mxu0
        %3045 = vmatprep.mubr.bf16.mxu0 %v2938
        %3046 = vmatmul.mubr.bf16.gmra.mxu0 %v2937
        %v3047 = vpop.f32.mrf.mxu0
        %v3048 = vadd.f32 0.0, %v3047
        %v3049 = vpop.f32.mrf.mxu0
        %v3050 = vpop.f32.mrf.mxu0
        %v3051 = vadd.f32 0.0, %v3050
        %v3052 = vpop.f32.mrf.mxu0
        %3053 = vmatprep.mubr.bf16.mxu0 %v2940
        %3054 = vmatmul.mubr.bf16.gmra.mxu0 %v2939
        %v3055 = vpop.f32.mrf.mxu0
        %v3056 = vadd.f32 0.0, %v3055
        %v3057 = vpop.f32.mrf.mxu0
        %v3058 = vpop.f32.mrf.mxu0
        %v3059 = vadd.f32 0.0, %v3058
        %v3060 = vpop.f32.mrf.mxu0
        %3061 = vmatprep.mubr.bf16.mxu0 %v2942
        %3062 = vmatmul.mubr.bf16.gmra.mxu0 %v2941
        %v3063 = vpop.f32.mrf.mxu0
        %v3064 = vadd.f32 0.0, %v3063
        %v3065 = vpop.f32.mrf.mxu0
        %v3066 = vpop.f32.mrf.mxu0
        %v3067 = vadd.f32 0.0, %v3066
        %v3068 = vpop.f32.mrf.mxu0
        %3069 = vmatprep.mubr.bf16.mxu0 %v2944
        %3070 = vmatmul.mubr.bf16.gmra.mxu0 %v2943
        %v3071 = vpop.f32.mrf.mxu0
        %v3072 = vadd.f32 0.0, %v3071
        %v3073 = vpop.f32.mrf.mxu0
        %v3074 = vpop.f32.mrf.mxu0
        %v3075 = vadd.f32 0.0, %v3074
        %v3076 = vpop.f32.mrf.mxu0
        %3077 = vmatprep.mubr.bf16.mxu0 %v2946
        %3078 = vmatmul.mubr.bf16.gmra.mxu0 %v2945
        %v3079 = vpop.f32.mrf.mxu0
        %v3080 = vadd.f32 0.0, %v3079
        %v3081 = vpop.f32.mrf.mxu0
        %v3082 = vpop.f32.mrf.mxu0
        %v3083 = vadd.f32 0.0, %v3082
        %v3084 = vpop.f32.mrf.mxu0
        %3085 = vmatprep.mubr.bf16.mxu0 %v2948
        %3086 = vmatmul.mubr.bf16.gmra.mxu0 %v2947
        %v3087 = vpop.f32.mrf.mxu0
        %v3088 = vadd.f32 0.0, %v3087
        %v3089 = vpop.f32.mrf.mxu0
        %v3090 = vpop.f32.mrf.mxu0
        %v3091 = vadd.f32 0.0, %v3090
        %v3092 = vpop.f32.mrf.mxu0
        %3093 = vdwg.mxu0
        %v3094 = vrcp.pop %v2887
        %v3095 = vrcp.pop %v2890
        %v3096 = vrcp.pop %v2893
        %v3097 = vrcp.pop %v2896
        %v3098 = vrcp.pop %v2899
        %v3099 = vrcp.pop %v2902
        %v3100 = vrcp.pop %v2905
        %v3101 = vrcp.pop %v2908
        %v3102 = vrcp.pop %v2911
        %v3103 = vrcp.pop %v2914
        %v3104 = vrcp.pop %v2917
        %v3105 = vrcp.pop %v2920
        %v3106 = vrcp.pop %v2923
        %v3107 = vrcp.pop %v2926
        %v3108 = vrcp.pop %v2929
        %v3109 = vrcp.pop %v2932
        %v3110 = vmul.f32 %v3032, %v3094
        %v3111 = vmul.f32 %v3035, %v3095
        %v3112 = vmul.f32 %v3040, %v3096
        %v3113 = vmul.f32 %v3043, %v3097
        %v3114 = vmul.f32 %v3048, %v3098
        %v3115 = vmul.f32 %v3051, %v3099
        %v3116 = vmul.f32 %v3056, %v3100
        %v3117 = vmul.f32 %v3059, %v3101
        %v3118 = vmul.f32 %v3064, %v3102
        %v3119 = vmul.f32 %v3067, %v3103
        %v3120 = vmul.f32 %v3072, %v3104
        %v3121 = vmul.f32 %v3075, %v3105
        %v3122 = vmul.f32 %v3080, %v3106
        %v3123 = vmul.f32 %v3083, %v3107
        %v3124 = vmul.f32 %v3088, %v3108
        %v3125 = vmul.f32 %v3091, %v3109
        %3126 = vrot.lane.b32.xlu0 %v1663, 112
        %v3127 = vpop.permute.xlu0 %3126
        %v3129 = vadd.f32 %v3110, %v3127
        %v3130 = vadd.f32 %v3111, %v3127
        %v3131 = vadd.f32 %v3112, %v3127
        %v3132 = vadd.f32 %v3113, %v3127
        %v3133 = vadd.f32 %v3114, %v3127
        %v3134 = vadd.f32 %v3115, %v3127
        %v3135 = vadd.f32 %v3116, %v3127
        %v3136 = vadd.f32 %v3117, %v3127
        %v3137 = vadd.f32 %v3118, %v3127
        %v3138 = vadd.f32 %v3119, %v3127
        %v3139 = vadd.f32 %v3120, %v3127
        %v3140 = vadd.f32 %v3121, %v3127
        %v3141 = vadd.f32 %v3122, %v3127
        %v3142 = vadd.f32 %v3123, %v3127
        %v3143 = vadd.f32 %v3124, %v3127
        %v3144 = vadd.f32 %v3125, %v3127
        %vm3145 = vcmp.ge.f32.partialorder %v3129, 0.0
        %vm3146 = vcmp.ge.f32.partialorder %v3130, 0.0
        %vm3147 = vcmp.ge.f32.partialorder %v3131, 0.0
        %vm3148 = vcmp.ge.f32.partialorder %v3132, 0.0
        %vm3149 = vcmp.ge.f32.partialorder %v3133, 0.0
        %vm3150 = vcmp.ge.f32.partialorder %v3134, 0.0
        %vm3151 = vcmp.ge.f32.partialorder %v3135, 0.0
        %vm3152 = vcmp.ge.f32.partialorder %v3136, 0.0
        %vm3153 = vcmp.ge.f32.partialorder %v3137, 0.0
        %vm3154 = vcmp.ge.f32.partialorder %v3138, 0.0
        %vm3155 = vcmp.ge.f32.partialorder %v3139, 0.0
        %vm3156 = vcmp.ge.f32.partialorder %v3140, 0.0
        %vm3157 = vcmp.ge.f32.partialorder %v3141, 0.0
        %vm3158 = vcmp.ge.f32.partialorder %v3142, 0.0
        %vm3159 = vcmp.ge.f32.partialorder %v3143, 0.0
        %vm3160 = vcmp.ge.f32.partialorder %v3144, 0.0
        %v3161 = vmul.f32 %v3129, 0.01
        %v3162 = vmul.f32 %v3130, 0.01
        %v3163 = vmul.f32 %v3131, 0.01
        %v3164 = vmul.f32 %v3132, 0.01
        %v3165 = vmul.f32 %v3133, 0.01
        %v3166 = vmul.f32 %v3134, 0.01
        %v3167 = vmul.f32 %v3135, 0.01
        %v3168 = vmul.f32 %v3136, 0.01
        %v3169 = vmul.f32 %v3137, 0.01
        %v3170 = vmul.f32 %v3138, 0.01
        %v3171 = vmul.f32 %v3139, 0.01
        %v3172 = vmul.f32 %v3140, 0.01
        %v3173 = vmul.f32 %v3141, 0.01
        %v3174 = vmul.f32 %v3142, 0.01
        %v3175 = vmul.f32 %v3143, 0.01
        %v3176 = vmul.f32 %v3144, 0.01
        %v3177 = vsel %vm3145, %v3129, %v3161
        %v3178 = vsel %vm3146, %v3130, %v3162
        %v3179 = vsel %vm3147, %v3131, %v3163
        %v3180 = vsel %vm3148, %v3132, %v3164
        %v3181 = vsel %vm3149, %v3133, %v3165
        %v3182 = vsel %vm3150, %v3134, %v3166
        %v3183 = vsel %vm3151, %v3135, %v3167
        %v3184 = vsel %vm3152, %v3136, %v3168
        %v3185 = vsel %vm3153, %v3137, %v3169
        %v3186 = vsel %vm3154, %v3138, %v3170
        %v3187 = vsel %vm3155, %v3139, %v3171
        %v3188 = vsel %vm3156, %v3140, %v3172
        %v3189 = vsel %vm3157, %v3141, %v3173
        %v3190 = vsel %vm3158, %v3142, %v3174
        %v3191 = vsel %vm3159, %v3143, %v3175
        %v3192 = vsel %vm3160, %v3144, %v3176
        %v3193 = vtanh.pop %v3177
        %v3194 = vtanh.pop %v3178
        %v3195 = vtanh.pop %v3179
        %v3196 = vtanh.pop %v3180
        %v3197 = vtanh.pop %v3181
        %v3198 = vtanh.pop %v3182
        %v3199 = vtanh.pop %v3183
        %v3200 = vtanh.pop %v3184
        %v3201 = vtanh.pop %v3185
        %v3202 = vtanh.pop %v3186
        %v3203 = vtanh.pop %v3187
        %v3204 = vtanh.pop %v3188
        %v3205 = vtanh.pop %v3189
        %v3206 = vtanh.pop %v3190
        %v3207 = vtanh.pop %v3191
        %v3208 = vtanh.pop %v3192
        %3209 = vset.pattern.permute.xlu0 3
        %3210 = vperm.xlu0 %3209, %v783
        %v3211 = vpop.permute.xlu0 %3210
        %3213 = vset.pattern.permute.xlu0 3
        %3214 = vperm.xlu0 %3213, %v784
        %v3215 = vpop.permute.xlu0 %3214
        %3217 = vset.pattern.permute.xlu0 3
        %3218 = vperm.xlu0 %3217, %v785
        %v3219 = vpop.permute.xlu0 %3218
        %3221 = vset.pattern.permute.xlu0 3
        %3222 = vperm.xlu0 %3221, %v786
        %v3223 = vpop.permute.xlu0 %3222
        %3225 = vset.pattern.permute.xlu0 3
        %3226 = vperm.xlu0 %3225, %v787
        %v3227 = vpop.permute.xlu0 %3226
        %3229 = vset.pattern.permute.xlu0 3
        %3230 = vperm.xlu0 %3229, %v788
        %v3231 = vpop.permute.xlu0 %3230
        %3233 = vset.pattern.permute.xlu0 3
        %3234 = vperm.xlu0 %3233, %v789
        %v3235 = vpop.permute.xlu0 %3234
        %3237 = vset.pattern.permute.xlu0 3
        %3238 = vperm.xlu0 %3237, %v790
        %v3239 = vpop.permute.xlu0 %3238
        %3241 = vset.pattern.permute.xlu0 3
        %3242 = vperm.xlu0 %3241, %v791
        %v3243 = vpop.permute.xlu0 %3242
        %3245 = vset.pattern.permute.xlu0 3
        %3246 = vperm.xlu0 %3245, %v792
        %v3247 = vpop.permute.xlu0 %3246
        %3249 = vset.pattern.permute.xlu0 3
        %3250 = vperm.xlu0 %3249, %v793
        %v3251 = vpop.permute.xlu0 %3250
        %3253 = vset.pattern.permute.xlu0 3
        %3254 = vperm.xlu0 %3253, %v794
        %v3255 = vpop.permute.xlu0 %3254
        %3257 = vset.pattern.permute.xlu0 3
        %3258 = vperm.xlu0 %3257, %v795
        %v3259 = vpop.permute.xlu0 %3258
        %3261 = vset.pattern.permute.xlu0 3
        %3262 = vperm.xlu0 %3261, %v796
        %v3263 = vpop.permute.xlu0 %3262
        %3265 = vset.pattern.permute.xlu0 3
        %3266 = vperm.xlu0 %3265, %v797
        %v3267 = vpop.permute.xlu0 %3266
        %3269 = vset.pattern.permute.xlu0 3
        %3270 = vperm.xlu0 %3269, %v798
        %v3271 = vpop.permute.xlu0 %3270
        %v3273 = vlaneseq
        %v3274 = vshrl.u32 %v3273, 7
        %v3275 = vsub.s32 3, %v3274
        %v3276 = vrot.slane %v799, %v3275
        %v3277 = vlaneseq
        %v3278 = vshrl.u32 %v3277, 7
        %v3279 = vsub.s32 3, %v3278
        %v3280 = vrot.slane %v800, %v3279
        %v3281 = vadd.f32 %v3211, %v3276
        %v3282 = vadd.f32 %v3211, %v3280
        %v3283 = vadd.f32 %v3215, %v3276
        %v3284 = vadd.f32 %v3215, %v3280
        %v3285 = vadd.f32 %v3219, %v3276
        %v3286 = vadd.f32 %v3219, %v3280
        %v3287 = vadd.f32 %v3223, %v3276
        %v3288 = vadd.f32 %v3223, %v3280
        %v3289 = vadd.f32 %v3227, %v3276
        %v3290 = vadd.f32 %v3227, %v3280
        %v3291 = vadd.f32 %v3231, %v3276
        %v3292 = vadd.f32 %v3231, %v3280
        %v3293 = vadd.f32 %v3235, %v3276
        %v3294 = vadd.f32 %v3235, %v3280
        %v3295 = vadd.f32 %v3239, %v3276
        %v3296 = vadd.f32 %v3239, %v3280
        %v3297 = vadd.f32 %v3243, %v3276
        %v3298 = vadd.f32 %v3243, %v3280
        %v3299 = vadd.f32 %v3247, %v3276
        %v3300 = vadd.f32 %v3247, %v3280
        %v3301 = vadd.f32 %v3251, %v3276
        %v3302 = vadd.f32 %v3251, %v3280
        %v3303 = vadd.f32 %v3255, %v3276
        %v3304 = vadd.f32 %v3255, %v3280
        %v3305 = vadd.f32 %v3259, %v3276
        %v3306 = vadd.f32 %v3259, %v3280
        %v3307 = vadd.f32 %v3263, %v3276
        %v3308 = vadd.f32 %v3263, %v3280
        %v3309 = vadd.f32 %v3267, %v3276
        %v3310 = vadd.f32 %v3267, %v3280
        %v3311 = vadd.f32 %v3271, %v3276
        %v3312 = vadd.f32 %v3271, %v3280
        %vm3313 = vcmp.ge.f32.partialorder %v3281, 0.0
        %vm3314 = vcmp.ge.f32.partialorder %v3282, 0.0
        %vm3315 = vcmp.ge.f32.partialorder %v3283, 0.0
        %vm3316 = vcmp.ge.f32.partialorder %v3284, 0.0
        %vm3317 = vcmp.ge.f32.partialorder %v3285, 0.0
        %vm3318 = vcmp.ge.f32.partialorder %v3286, 0.0
        %vm3319 = vcmp.ge.f32.partialorder %v3287, 0.0
        %vm3320 = vcmp.ge.f32.partialorder %v3288, 0.0
        %vm3321 = vcmp.ge.f32.partialorder %v3289, 0.0
        %vm3322 = vcmp.ge.f32.partialorder %v3290, 0.0
        %vm3323 = vcmp.ge.f32.partialorder %v3291, 0.0
        %vm3324 = vcmp.ge.f32.partialorder %v3292, 0.0
        %vm3325 = vcmp.ge.f32.partialorder %v3293, 0.0
        %vm3326 = vcmp.ge.f32.partialorder %v3294, 0.0
        %vm3327 = vcmp.ge.f32.partialorder %v3295, 0.0
        %vm3328 = vcmp.ge.f32.partialorder %v3296, 0.0
        %vm3329 = vcmp.ge.f32.partialorder %v3297, 0.0
        %vm3330 = vcmp.ge.f32.partialorder %v3298, 0.0
        %vm3331 = vcmp.ge.f32.partialorder %v3299, 0.0
        %vm3332 = vcmp.ge.f32.partialorder %v3300, 0.0
        %vm3333 = vcmp.ge.f32.partialorder %v3301, 0.0
        %vm3334 = vcmp.ge.f32.partialorder %v3302, 0.0
        %vm3335 = vcmp.ge.f32.partialorder %v3303, 0.0
        %vm3336 = vcmp.ge.f32.partialorder %v3304, 0.0
        %vm3337 = vcmp.ge.f32.partialorder %v3305, 0.0
        %vm3338 = vcmp.ge.f32.partialorder %v3306, 0.0
        %vm3339 = vcmp.ge.f32.partialorder %v3307, 0.0
        %vm3340 = vcmp.ge.f32.partialorder %v3308, 0.0
        %vm3341 = vcmp.ge.f32.partialorder %v3309, 0.0
        %vm3342 = vcmp.ge.f32.partialorder %v3310, 0.0
        %vm3343 = vcmp.ge.f32.partialorder %v3311, 0.0
        %vm3344 = vcmp.ge.f32.partialorder %v3312, 0.0
        %v3345 = vmul.f32 %v3281, 0.2
        %v3346 = vmul.f32 %v3282, 0.2
        %v3347 = vmul.f32 %v3283, 0.2
        %v3348 = vmul.f32 %v3284, 0.2
        %v3349 = vmul.f32 %v3285, 0.2
        %v3350 = vmul.f32 %v3286, 0.2
        %v3351 = vmul.f32 %v3287, 0.2
        %v3352 = vmul.f32 %v3288, 0.2
        %v3353 = vmul.f32 %v3289, 0.2
        %v3354 = vmul.f32 %v3290, 0.2
        %v3355 = vmul.f32 %v3291, 0.2
        %v3356 = vmul.f32 %v3292, 0.2
        %v3357 = vmul.f32 %v3293, 0.2
        %v3358 = vmul.f32 %v3294, 0.2
        %v3359 = vmul.f32 %v3295, 0.2
        %v3360 = vmul.f32 %v3296, 0.2
        %v3361 = vmul.f32 %v3297, 0.2
        %v3362 = vmul.f32 %v3298, 0.2
        %v3363 = vmul.f32 %v3299, 0.2
        %v3364 = vmul.f32 %v3300, 0.2
        %v3365 = vmul.f32 %v3301, 0.2
        %v3366 = vmul.f32 %v3302, 0.2
        %v3367 = vmul.f32 %v3303, 0.2
        %v3368 = vmul.f32 %v3304, 0.2
        %v3369 = vmul.f32 %v3305, 0.2
        %v3370 = vmul.f32 %v3306, 0.2
        %v3371 = vmul.f32 %v3307, 0.2
        %v3372 = vmul.f32 %v3308, 0.2
        %v3373 = vmul.f32 %v3309, 0.2
        %v3374 = vmul.f32 %v3310, 0.2
        %v3375 = vmul.f32 %v3311, 0.2
        %v3376 = vmul.f32 %v3312, 0.2
        %v3377 = vsel %vm3313, %v3281, %v3345
        %v3378 = vsel %vm3314, %v3282, %v3346
        %v3379 = vsel %vm3315, %v3283, %v3347
        %v3380 = vsel %vm3316, %v3284, %v3348
        %v3381 = vsel %vm3317, %v3285, %v3349
        %v3382 = vsel %vm3318, %v3286, %v3350
        %v3383 = vsel %vm3319, %v3287, %v3351
        %v3384 = vsel %vm3320, %v3288, %v3352
        %v3385 = vsel %vm3321, %v3289, %v3353
        %v3386 = vsel %vm3322, %v3290, %v3354
        %v3387 = vsel %vm3323, %v3291, %v3355
        %v3388 = vsel %vm3324, %v3292, %v3356
        %v3389 = vsel %vm3325, %v3293, %v3357
        %v3390 = vsel %vm3326, %v3294, %v3358
        %v3391 = vsel %vm3327, %v3295, %v3359
        %v3392 = vsel %vm3328, %v3296, %v3360
        %v3393 = vsel %vm3329, %v3297, %v3361
        %v3394 = vsel %vm3330, %v3298, %v3362
        %v3395 = vsel %vm3331, %v3299, %v3363
        %v3396 = vsel %vm3332, %v3300, %v3364
        %v3397 = vsel %vm3333, %v3301, %v3365
        %v3398 = vsel %vm3334, %v3302, %v3366
        %v3399 = vsel %vm3335, %v3303, %v3367
        %v3400 = vsel %vm3336, %v3304, %v3368
        %v3401 = vsel %vm3337, %v3305, %v3369
        %v3402 = vsel %vm3338, %v3306, %v3370
        %v3403 = vsel %vm3339, %v3307, %v3371
        %v3404 = vsel %vm3340, %v3308, %v3372
        %v3405 = vsel %vm3341, %v3309, %v3373
        %v3406 = vsel %vm3342, %v3310, %v3374
        %v3407 = vsel %vm3343, %v3311, %v3375
        %v3408 = vsel %vm3344, %v3312, %v3376
        %v3409 = vsel %vm1098, %v3377, -1e+30
        %v3410 = vsel %vm1099, %v3378, -1e+30
        %v3411 = vsel %vm1100, %v3379, -1e+30
        %v3412 = vsel %vm1101, %v3380, -1e+30
        %v3413 = vsel %vm1102, %v3381, -1e+30
        %v3414 = vsel %vm1103, %v3382, -1e+30
        %v3415 = vsel %vm1104, %v3383, -1e+30
        %v3416 = vsel %vm1105, %v3384, -1e+30
        %v3417 = vsel %vm1106, %v3385, -1e+30
        %v3418 = vsel %vm1107, %v3386, -1e+30
        %v3419 = vsel %vm1108, %v3387, -1e+30
        %v3420 = vsel %vm1109, %v3388, -1e+30
        %v3421 = vsel %vm1110, %v3389, -1e+30
        %v3422 = vsel %vm1111, %v3390, -1e+30
        %v3423 = vsel %vm1112, %v3391, -1e+30
        %v3424 = vsel %vm1113, %v3392, -1e+30
        %v3425 = vsel %vm1114, %v3393, -1e+30
        %v3426 = vsel %vm1115, %v3394, -1e+30
        %v3427 = vsel %vm1116, %v3395, -1e+30
        %v3428 = vsel %vm1117, %v3396, -1e+30
        %v3429 = vsel %vm1118, %v3397, -1e+30
        %v3430 = vsel %vm1119, %v3398, -1e+30
        %v3431 = vsel %vm1120, %v3399, -1e+30
        %v3432 = vsel %vm1121, %v3400, -1e+30
        %v3433 = vsel %vm1122, %v3401, -1e+30
        %v3434 = vsel %vm1123, %v3402, -1e+30
        %v3435 = vsel %vm1124, %v3403, -1e+30
        %v3436 = vsel %vm1125, %v3404, -1e+30
        %v3437 = vsel %vm1126, %v3405, -1e+30
        %v3438 = vsel %vm1127, %v3406, -1e+30
        %v3439 = vsel %vm1128, %v3407, -1e+30
        %v3440 = vsel %vm1129, %v3408, -1e+30
        %v3441 = vmax.f32 %v3409, %v3410
        %3442 = vmax.xlane.f32.xlu0 %v3441
        %v3443 = vpop.xlane.xlu0 %3442
        %v3444 = vmax.f32 %v3411, %v3412
        %3445 = vmax.xlane.f32.xlu0 %v3444
        %v3446 = vpop.xlane.xlu0 %3445
        %v3447 = vmax.f32 %v3413, %v3414
        %3448 = vmax.xlane.f32.xlu0 %v3447
        %v3449 = vpop.xlane.xlu0 %3448
        %v3450 = vmax.f32 %v3415, %v3416
        %3451 = vmax.xlane.f32.xlu0 %v3450
        %v3452 = vpop.xlane.xlu0 %3451
        %v3453 = vmax.f32 %v3417, %v3418
        %3454 = vmax.xlane.f32.xlu0 %v3453
        %v3455 = vpop.xlane.xlu0 %3454
        %v3456 = vmax.f32 %v3419, %v3420
        %3457 = vmax.xlane.f32.xlu0 %v3456
        %v3458 = vpop.xlane.xlu0 %3457
        %v3459 = vmax.f32 %v3421, %v3422
        %3460 = vmax.xlane.f32.xlu0 %v3459
        %v3461 = vpop.xlane.xlu0 %3460
        %v3462 = vmax.f32 %v3423, %v3424
        %3463 = vmax.xlane.f32.xlu0 %v3462
        %v3464 = vpop.xlane.xlu0 %3463
        %v3465 = vmax.f32 %v3425, %v3426
        %3466 = vmax.xlane.f32.xlu0 %v3465
        %v3467 = vpop.xlane.xlu0 %3466
        %v3468 = vmax.f32 %v3427, %v3428
        %3469 = vmax.xlane.f32.xlu0 %v3468
        %v3470 = vpop.xlane.xlu0 %3469
        %v3471 = vmax.f32 %v3429, %v3430
        %3472 = vmax.xlane.f32.xlu0 %v3471
        %v3473 = vpop.xlane.xlu0 %3472
        %v3474 = vmax.f32 %v3431, %v3432
        %3475 = vmax.xlane.f32.xlu0 %v3474
        %v3476 = vpop.xlane.xlu0 %3475
        %v3477 = vmax.f32 %v3433, %v3434
        %3478 = vmax.xlane.f32.xlu0 %v3477
        %v3479 = vpop.xlane.xlu0 %3478
        %v3480 = vmax.f32 %v3435, %v3436
        %3481 = vmax.xlane.f32.xlu0 %v3480
        %v3482 = vpop.xlane.xlu0 %3481
        %v3483 = vmax.f32 %v3437, %v3438
        %3484 = vmax.xlane.f32.xlu0 %v3483
        %v3485 = vpop.xlane.xlu0 %3484
        %v3486 = vmax.f32 %v3439, %v3440
        %3487 = vmax.xlane.f32.xlu0 %v3486
        %v3488 = vpop.xlane.xlu0 %3487
        %v3489 = vsub.f32 %v3409, %v3443
        %v3490 = vsub.f32 %v3410, %v3443
        %v3491 = vsub.f32 %v3411, %v3446
        %v3492 = vsub.f32 %v3412, %v3446
        %v3493 = vsub.f32 %v3413, %v3449
        %v3494 = vsub.f32 %v3414, %v3449
        %v3495 = vsub.f32 %v3415, %v3452
        %v3496 = vsub.f32 %v3416, %v3452
        %v3497 = vsub.f32 %v3417, %v3455
        %v3498 = vsub.f32 %v3418, %v3455
        %v3499 = vsub.f32 %v3419, %v3458
        %v3500 = vsub.f32 %v3420, %v3458
        %v3501 = vsub.f32 %v3421, %v3461
        %v3502 = vsub.f32 %v3422, %v3461
        %v3503 = vsub.f32 %v3423, %v3464
        %v3504 = vsub.f32 %v3424, %v3464
        %v3505 = vsub.f32 %v3425, %v3467
        %v3506 = vsub.f32 %v3426, %v3467
        %v3507 = vsub.f32 %v3427, %v3470
        %v3508 = vsub.f32 %v3428, %v3470
        %v3509 = vsub.f32 %v3429, %v3473
        %v3510 = vsub.f32 %v3430, %v3473
        %v3511 = vsub.f32 %v3431, %v3476
        %v3512 = vsub.f32 %v3432, %v3476
        %v3513 = vsub.f32 %v3433, %v3479
        %v3514 = vsub.f32 %v3434, %v3479
        %v3515 = vsub.f32 %v3435, %v3482
        %v3516 = vsub.f32 %v3436, %v3482
        %v3517 = vsub.f32 %v3437, %v3485
        %v3518 = vsub.f32 %v3438, %v3485
        %v3519 = vsub.f32 %v3439, %v3488
        %v3520 = vsub.f32 %v3440, %v3488
        %v3521 = vmul.f32 %v3489, 1.442695
        %v3522 = vpow.pop %v3521
        %v3523 = vmul.f32 %v3490, 1.442695
        %v3524 = vpow.pop %v3523
        %v3525 = vmul.f32 %v3491, 1.442695
        %v3526 = vpow.pop %v3525
        %v3527 = vmul.f32 %v3492, 1.442695
        %v3528 = vpow.pop %v3527
        %v3529 = vmul.f32 %v3493, 1.442695
        %v3530 = vpow.pop %v3529
        %v3531 = vmul.f32 %v3494, 1.442695
        %v3532 = vpow.pop %v3531
        %v3533 = vmul.f32 %v3495, 1.442695
        %v3534 = vpow.pop %v3533
        %v3535 = vmul.f32 %v3496, 1.442695
        %v3536 = vpow.pop %v3535
        %v3537 = vmul.f32 %v3497, 1.442695
        %v3538 = vpow.pop %v3537
        %v3539 = vmul.f32 %v3498, 1.442695
        %v3540 = vpow.pop %v3539
        %v3541 = vmul.f32 %v3499, 1.442695
        %v3542 = vpow.pop %v3541
        %v3543 = vmul.f32 %v3500, 1.442695
        %v3544 = vpow.pop %v3543
        %v3545 = vmul.f32 %v3501, 1.442695
        %v3546 = vpow.pop %v3545
        %v3547 = vmul.f32 %v3502, 1.442695
        %v3548 = vpow.pop %v3547
        %v3549 = vmul.f32 %v3503, 1.442695
        %v3550 = vpow.pop %v3549
        %v3551 = vmul.f32 %v3504, 1.442695
        %v3552 = vpow.pop %v3551
        %v3553 = vmul.f32 %v3505, 1.442695
        %v3554 = vpow.pop %v3553
        %v3555 = vmul.f32 %v3506, 1.442695
        %v3556 = vpow.pop %v3555
        %v3557 = vmul.f32 %v3507, 1.442695
        %v3558 = vpow.pop %v3557
        %v3559 = vmul.f32 %v3508, 1.442695
        %v3560 = vpow.pop %v3559
        %v3561 = vmul.f32 %v3509, 1.442695
        %v3562 = vpow.pop %v3561
        %v3563 = vmul.f32 %v3510, 1.442695
        %v3564 = vpow.pop %v3563
        %v3565 = vmul.f32 %v3511, 1.442695
        %v3566 = vpow.pop %v3565
        %v3567 = vmul.f32 %v3512, 1.442695
        %v3568 = vpow.pop %v3567
        %v3569 = vmul.f32 %v3513, 1.442695
        %v3570 = vpow.pop %v3569
        %v3571 = vmul.f32 %v3514, 1.442695
        %v3572 = vpow.pop %v3571
        %v3573 = vmul.f32 %v3515, 1.442695
        %v3574 = vpow.pop %v3573
        %v3575 = vmul.f32 %v3516, 1.442695
        %v3576 = vpow.pop %v3575
        %v3577 = vmul.f32 %v3517, 1.442695
        %v3578 = vpow.pop %v3577
        %v3579 = vmul.f32 %v3518, 1.442695
        %v3580 = vpow.pop %v3579
        %v3581 = vmul.f32 %v3519, 1.442695
        %v3582 = vpow.pop %v3581
        %v3583 = vmul.f32 %v3520, 1.442695
        %v3584 = vpow.pop %v3583
        %v3585 = vmul.f32 %v1306, %v3522
        %v3586 = vmul.f32 %v1307, %v3524
        %v3587 = vmul.f32 %v1308, %v3526
        %v3588 = vmul.f32 %v1309, %v3528
        %v3589 = vmul.f32 %v1310, %v3530
        %v3590 = vmul.f32 %v1311, %v3532
        %v3591 = vmul.f32 %v1312, %v3534
        %v3592 = vmul.f32 %v1313, %v3536
        %v3593 = vmul.f32 %v1314, %v3538
        %v3594 = vmul.f32 %v1315, %v3540
        %v3595 = vmul.f32 %v1316, %v3542
        %v3596 = vmul.f32 %v1317, %v3544
        %v3597 = vmul.f32 %v1318, %v3546
        %v3598 = vmul.f32 %v1319, %v3548
        %v3599 = vmul.f32 %v1320, %v3550
        %v3600 = vmul.f32 %v1321, %v3552
        %v3601 = vmul.f32 %v1322, %v3554
        %v3602 = vmul.f32 %v1323, %v3556
        %v3603 = vmul.f32 %v1324, %v3558
        %v3604 = vmul.f32 %v1325, %v3560
        %v3605 = vmul.f32 %v1326, %v3562
        %v3606 = vmul.f32 %v1327, %v3564
        %v3607 = vmul.f32 %v1328, %v3566
        %v3608 = vmul.f32 %v1329, %v3568
        %v3609 = vmul.f32 %v1330, %v3570
        %v3610 = vmul.f32 %v1331, %v3572
        %v3611 = vmul.f32 %v1332, %v3574
        %v3612 = vmul.f32 %v1333, %v3576
        %v3613 = vmul.f32 %v1334, %v3578
        %v3614 = vmul.f32 %v1335, %v3580
        %v3615 = vmul.f32 %v1336, %v3582
        %v3616 = vmul.f32 %v1337, %v3584
        %v3617 = vadd.f32 %v3585, %v3586
        %3618 = vadd.xlane.f32.xlu0 %v3617
        %v3619 = vpop.xlane.xlu0 %3618
        %v3620 = vadd.f32 %v3587, %v3588
        %3621 = vadd.xlane.f32.xlu0 %v3620
        %v3622 = vpop.xlane.xlu0 %3621
        %v3623 = vadd.f32 %v3589, %v3590
        %3624 = vadd.xlane.f32.xlu0 %v3623
        %v3625 = vpop.xlane.xlu0 %3624
        %v3626 = vadd.f32 %v3591, %v3592
        %3627 = vadd.xlane.f32.xlu0 %v3626
        %v3628 = vpop.xlane.xlu0 %3627
        %v3629 = vadd.f32 %v3593, %v3594
        %3630 = vadd.xlane.f32.xlu0 %v3629
        %v3631 = vpop.xlane.xlu0 %3630
        %v3632 = vadd.f32 %v3595, %v3596
        %3633 = vadd.xlane.f32.xlu0 %v3632
        %v3634 = vpop.xlane.xlu0 %3633
        %v3635 = vadd.f32 %v3597, %v3598
        %3636 = vadd.xlane.f32.xlu0 %v3635
        %v3637 = vpop.xlane.xlu0 %3636
        %v3638 = vadd.f32 %v3599, %v3600
        %3639 = vadd.xlane.f32.xlu0 %v3638
        %v3640 = vpop.xlane.xlu0 %3639
        %v3641 = vadd.f32 %v3601, %v3602
        %3642 = vadd.xlane.f32.xlu0 %v3641
        %v3643 = vpop.xlane.xlu0 %3642
        %v3644 = vadd.f32 %v3603, %v3604
        %3645 = vadd.xlane.f32.xlu0 %v3644
        %v3646 = vpop.xlane.xlu0 %3645
        %v3647 = vadd.f32 %v3605, %v3606
        %3648 = vadd.xlane.f32.xlu0 %v3647
        %v3649 = vpop.xlane.xlu0 %3648
        %v3650 = vadd.f32 %v3607, %v3608
        %3651 = vadd.xlane.f32.xlu0 %v3650
        %v3652 = vpop.xlane.xlu0 %3651
        %v3653 = vadd.f32 %v3609, %v3610
        %3654 = vadd.xlane.f32.xlu0 %v3653
        %v3655 = vpop.xlane.xlu0 %3654
        %v3656 = vadd.f32 %v3611, %v3612
        %3657 = vadd.xlane.f32.xlu0 %v3656
        %v3658 = vpop.xlane.xlu0 %3657
        %v3659 = vadd.f32 %v3613, %v3614
        %3660 = vadd.xlane.f32.xlu0 %v3659
        %v3661 = vpop.xlane.xlu0 %3660
        %v3662 = vadd.f32 %v3615, %v3616
        %3663 = vadd.xlane.f32.xlu0 %v3662
        %v3664 = vpop.xlane.xlu0 %3663
        %v3665 = vpack.c.bf16 %v3587, %v3585
        %v3666 = vpack.c.bf16 %v3588, %v3586
        %v3667 = vpack.c.bf16 %v3591, %v3589
        %v3668 = vpack.c.bf16 %v3592, %v3590
        %v3669 = vpack.c.bf16 %v3595, %v3593
        %v3670 = vpack.c.bf16 %v3596, %v3594
        %v3671 = vpack.c.bf16 %v3599, %v3597
        %v3672 = vpack.c.bf16 %v3600, %v3598
        %v3673 = vpack.c.bf16 %v3603, %v3601
        %v3674 = vpack.c.bf16 %v3604, %v3602
        %v3675 = vpack.c.bf16 %v3607, %v3605
        %v3676 = vpack.c.bf16 %v3608, %v3606
        %v3677 = vpack.c.bf16 %v3611, %v3609
        %v3678 = vpack.c.bf16 %v3612, %v3610
        %v3679 = vpack.c.bf16 %v3615, %v3613
        %v3680 = vpack.c.bf16 %v3616, %v3614
        %3681 = vrot.lane.b32.xlu0 %v1498, 104
        %v3682 = vpop.permute.xlu0 %3681
        %3683 = vrot.lane.b32.xlu0 %v1499, 104
        %v3684 = vpop.permute.xlu0 %3683
        %3685 = vrot.lane.b32.xlu0 %v1500, 104
        %v3686 = vpop.permute.xlu0 %3685
        %3687 = vrot.lane.b32.xlu0 %v1501, 104
        %v3688 = vpop.permute.xlu0 %3687
        %3689 = vrot.lane.b32.xlu0 %v1502, 104
        %v3690 = vpop.permute.xlu0 %3689
        %3691 = vrot.lane.b32.xlu0 %v1503, 104
        %v3692 = vpop.permute.xlu0 %3691
        %3693 = vrot.lane.b32.xlu0 %v1504, 104
        %v3694 = vpop.permute.xlu0 %3693
        %3695 = vrot.lane.b32.xlu0 %v1505, 104
        %v3696 = vpop.permute.xlu0 %3695
        %3697 = vrot.lane.b32.xlu0 %v1506, 104
        %v3698 = vpop.permute.xlu0 %3697
        %3699 = vrot.lane.b32.xlu0 %v1507, 104
        %v3700 = vpop.permute.xlu0 %3699
        %3701 = vrot.lane.b32.xlu0 %v1508, 104
        %v3702 = vpop.permute.xlu0 %3701
        %3703 = vrot.lane.b32.xlu0 %v1509, 104
        %v3704 = vpop.permute.xlu0 %3703
        %3705 = vrot.lane.b32.xlu0 %v1510, 104
        %v3706 = vpop.permute.xlu0 %3705
        %3707 = vrot.lane.b32.xlu0 %v1511, 104
        %v3708 = vpop.permute.xlu0 %3707
        %3709 = vrot.lane.b32.xlu0 %v1512, 104
        %v3710 = vpop.permute.xlu0 %3709
        %3711 = vrot.lane.b32.xlu0 %v1513, 104
        %v3712 = vpop.permute.xlu0 %3711
        %3729 = vmatprep.subr.bf16.mxu0 0
        %3730 = vmatpush1.bf16.msra.mxu0 %v3696
        %3731 = vmatprep.subr.bf16.mxu0 0
        %3732 = vmatpush1.bf16.msra.mxu0 %v3694
        %3733 = vmatprep.subr.bf16.mxu0 0
        %3734 = vmatpush1.bf16.msra.mxu0 %v3692
        %3735 = vmatprep.subr.bf16.mxu0 0
        %3736 = vmatpush1.bf16.msra.mxu0 %v3690
        %3737 = vmatprep.subr.bf16.mxu0 0
        %3738 = vmatpush1.bf16.msra.mxu0 %v3688
        %3739 = vmatprep.subr.bf16.mxu0 0
        %3740 = vmatpush1.bf16.msra.mxu0 %v3686
        %3741 = vmatprep.subr.bf16.mxu0 0
        %3742 = vmatpush1.bf16.msra.mxu0 %v3684
        %3743 = vmatprep.subr.bf16.mxu0 0
        %3744 = vmatpush1.bf16.msra.mxu0 %v3682
        %3745 = vmatprep.subr.bf16.mxu0 0
        %3746 = vmatpush2.bf16.msra.mxu0 %v3712
        %3747 = vmatprep.subr.bf16.mxu0 0
        %3748 = vmatpush2.bf16.msra.mxu0 %v3710
        %3749 = vmatprep.subr.bf16.mxu0 0
        %3750 = vmatpush2.bf16.msra.mxu0 %v3708
        %3751 = vmatprep.subr.bf16.mxu0 0
        %3752 = vmatpush2.bf16.msra.mxu0 %v3706
        %3753 = vmatprep.subr.bf16.mxu0 0
        %3754 = vmatpush2.bf16.msra.mxu0 %v3704
        %3755 = vmatprep.subr.bf16.mxu0 0
        %3756 = vmatpush2.bf16.msra.mxu0 %v3702
        %3757 = vmatprep.subr.bf16.mxu0 0
        %3758 = vmatpush2.bf16.msra.mxu0 %v3700
        %3759 = vmatprep.subr.bf16.mxu0 0
        %3760 = vmatpush2.bf16.msra.mxu0 %v3698
        %3761 = vmatprep.mubr.bf16.mxu0 %v3666
        %3762 = vmatmul.mubr.bf16.gmra.mxu0 %v3665
        %v3763 = vpop.f32.mrf.mxu0
        %v3764 = vadd.f32 0.0, %v3763
        %v3765 = vpop.f32.mrf.mxu0
        %v3766 = vpop.f32.mrf.mxu0
        %v3767 = vadd.f32 0.0, %v3766
        %v3768 = vpop.f32.mrf.mxu0
        %3769 = vmatprep.mubr.bf16.mxu0 %v3668
        %3770 = vmatmul.mubr.bf16.gmra.mxu0 %v3667
        %v3771 = vpop.f32.mrf.mxu0
        %v3772 = vadd.f32 0.0, %v3771
        %v3773 = vpop.f32.mrf.mxu0
        %v3774 = vpop.f32.mrf.mxu0
        %v3775 = vadd.f32 0.0, %v3774
        %v3776 = vpop.f32.mrf.mxu0
        %3777 = vmatprep.mubr.bf16.mxu0 %v3670
        %3778 = vmatmul.mubr.bf16.gmra.mxu0 %v3669
        %v3779 = vpop.f32.mrf.mxu0
        %v3780 = vadd.f32 0.0, %v3779
        %v3781 = vpop.f32.mrf.mxu0
        %v3782 = vpop.f32.mrf.mxu0
        %v3783 = vadd.f32 0.0, %v3782
        %v3784 = vpop.f32.mrf.mxu0
        %3785 = vmatprep.mubr.bf16.mxu0 %v3672
        %3786 = vmatmul.mubr.bf16.gmra.mxu0 %v3671
        %v3787 = vpop.f32.mrf.mxu0
        %v3788 = vadd.f32 0.0, %v3787
        %v3789 = vpop.f32.mrf.mxu0
        %v3790 = vpop.f32.mrf.mxu0
        %v3791 = vadd.f32 0.0, %v3790
        %v3792 = vpop.f32.mrf.mxu0
        %3793 = vmatprep.mubr.bf16.mxu0 %v3674
        %3794 = vmatmul.mubr.bf16.gmra.mxu0 %v3673
        %v3795 = vpop.f32.mrf.mxu0
        %v3796 = vadd.f32 0.0, %v3795
        %v3797 = vpop.f32.mrf.mxu0
        %v3798 = vpop.f32.mrf.mxu0
        %v3799 = vadd.f32 0.0, %v3798
        %v3800 = vpop.f32.mrf.mxu0
        %3801 = vmatprep.mubr.bf16.mxu0 %v3676
        %3802 = vmatmul.mubr.bf16.gmra.mxu0 %v3675
        %v3803 = vpop.f32.mrf.mxu0
        %v3804 = vadd.f32 0.0, %v3803
        %v3805 = vpop.f32.mrf.mxu0
        %v3806 = vpop.f32.mrf.mxu0
        %v3807 = vadd.f32 0.0, %v3806
        %v3808 = vpop.f32.mrf.mxu0
        %3809 = vmatprep.mubr.bf16.mxu0 %v3678
        %3810 = vmatmul.mubr.bf16.gmra.mxu0 %v3677
        %v3811 = vpop.f32.mrf.mxu0
        %v3812 = vadd.f32 0.0, %v3811
        %v3813 = vpop.f32.mrf.mxu0
        %v3814 = vpop.f32.mrf.mxu0
        %v3815 = vadd.f32 0.0, %v3814
        %v3816 = vpop.f32.mrf.mxu0
        %3817 = vmatprep.mubr.bf16.mxu0 %v3680
        %3818 = vmatmul.mubr.bf16.gmra.mxu0 %v3679
        %v3819 = vpop.f32.mrf.mxu0
        %v3820 = vadd.f32 0.0, %v3819
        %v3821 = vpop.f32.mrf.mxu0
        %v3822 = vpop.f32.mrf.mxu0
        %v3823 = vadd.f32 0.0, %v3822
        %v3824 = vpop.f32.mrf.mxu0
        %3825 = vdwg.mxu0
        %v3826 = vrcp.pop %v3619
        %v3827 = vrcp.pop %v3622
        %v3828 = vrcp.pop %v3625
        %v3829 = vrcp.pop %v3628
        %v3830 = vrcp.pop %v3631
        %v3831 = vrcp.pop %v3634
        %v3832 = vrcp.pop %v3637
        %v3833 = vrcp.pop %v3640
        %v3834 = vrcp.pop %v3643
        %v3835 = vrcp.pop %v3646
        %v3836 = vrcp.pop %v3649
        %v3837 = vrcp.pop %v3652
        %v3838 = vrcp.pop %v3655
        %v3839 = vrcp.pop %v3658
        %v3840 = vrcp.pop %v3661
        %v3841 = vrcp.pop %v3664
        %v3842 = vmul.f32 %v3764, %v3826
        %v3843 = vmul.f32 %v3767, %v3827
        %v3844 = vmul.f32 %v3772, %v3828
        %v3845 = vmul.f32 %v3775, %v3829
        %v3846 = vmul.f32 %v3780, %v3830
        %v3847 = vmul.f32 %v3783, %v3831
        %v3848 = vmul.f32 %v3788, %v3832
        %v3849 = vmul.f32 %v3791, %v3833
        %v3850 = vmul.f32 %v3796, %v3834
        %v3851 = vmul.f32 %v3799, %v3835
        %v3852 = vmul.f32 %v3804, %v3836
        %v3853 = vmul.f32 %v3807, %v3837
        %v3854 = vmul.f32 %v3812, %v3838
        %v3855 = vmul.f32 %v3815, %v3839
        %v3856 = vmul.f32 %v3820, %v3840
        %v3857 = vmul.f32 %v3823, %v3841
        %3858 = vrot.lane.b32.xlu0 %v1663, 104
        %v3859 = vpop.permute.xlu0 %3858
        %v3861 = vadd.f32 %v3842, %v3859
        %v3862 = vadd.f32 %v3843, %v3859
        %v3863 = vadd.f32 %v3844, %v3859
        %v3864 = vadd.f32 %v3845, %v3859
        %v3865 = vadd.f32 %v3846, %v3859
        %v3866 = vadd.f32 %v3847, %v3859
        %v3867 = vadd.f32 %v3848, %v3859
        %v3868 = vadd.f32 %v3849, %v3859
        %v3869 = vadd.f32 %v3850, %v3859
        %v3870 = vadd.f32 %v3851, %v3859
        %v3871 = vadd.f32 %v3852, %v3859
        %v3872 = vadd.f32 %v3853, %v3859
        %v3873 = vadd.f32 %v3854, %v3859
        %v3874 = vadd.f32 %v3855, %v3859
        %v3875 = vadd.f32 %v3856, %v3859
        %v3876 = vadd.f32 %v3857, %v3859
        %vm3877 = vcmp.ge.f32.partialorder %v3861, 0.0
        %vm3878 = vcmp.ge.f32.partialorder %v3862, 0.0
        %vm3879 = vcmp.ge.f32.partialorder %v3863, 0.0
        %vm3880 = vcmp.ge.f32.partialorder %v3864, 0.0
        %vm3881 = vcmp.ge.f32.partialorder %v3865, 0.0
        %vm3882 = vcmp.ge.f32.partialorder %v3866, 0.0
        %vm3883 = vcmp.ge.f32.partialorder %v3867, 0.0
        %vm3884 = vcmp.ge.f32.partialorder %v3868, 0.0
        %vm3885 = vcmp.ge.f32.partialorder %v3869, 0.0
        %vm3886 = vcmp.ge.f32.partialorder %v3870, 0.0
        %vm3887 = vcmp.ge.f32.partialorder %v3871, 0.0
        %vm3888 = vcmp.ge.f32.partialorder %v3872, 0.0
        %vm3889 = vcmp.ge.f32.partialorder %v3873, 0.0
        %vm3890 = vcmp.ge.f32.partialorder %v3874, 0.0
        %vm3891 = vcmp.ge.f32.partialorder %v3875, 0.0
        %vm3892 = vcmp.ge.f32.partialorder %v3876, 0.0
        %v3893 = vmul.f32 %v3861, 0.01
        %v3894 = vmul.f32 %v3862, 0.01
        %v3895 = vmul.f32 %v3863, 0.01
        %v3896 = vmul.f32 %v3864, 0.01
        %v3897 = vmul.f32 %v3865, 0.01
        %v3898 = vmul.f32 %v3866, 0.01
        %v3899 = vmul.f32 %v3867, 0.01
        %v3900 = vmul.f32 %v3868, 0.01
        %v3901 = vmul.f32 %v3869, 0.01
        %v3902 = vmul.f32 %v3870, 0.01
        %v3903 = vmul.f32 %v3871, 0.01
        %v3904 = vmul.f32 %v3872, 0.01
        %v3905 = vmul.f32 %v3873, 0.01
        %v3906 = vmul.f32 %v3874, 0.01
        %v3907 = vmul.f32 %v3875, 0.01
        %v3908 = vmul.f32 %v3876, 0.01
        %v3909 = vsel %vm3877, %v3861, %v3893
        %v3910 = vsel %vm3878, %v3862, %v3894
        %v3911 = vsel %vm3879, %v3863, %v3895
        %v3912 = vsel %vm3880, %v3864, %v3896
        %v3913 = vsel %vm3881, %v3865, %v3897
        %v3914 = vsel %vm3882, %v3866, %v3898
        %v3915 = vsel %vm3883, %v3867, %v3899
        %v3916 = vsel %vm3884, %v3868, %v3900
        %v3917 = vsel %vm3885, %v3869, %v3901
        %v3918 = vsel %vm3886, %v3870, %v3902
        %v3919 = vsel %vm3887, %v3871, %v3903
        %v3920 = vsel %vm3888, %v3872, %v3904
        %v3921 = vsel %vm3889, %v3873, %v3905
        %v3922 = vsel %vm3890, %v3874, %v3906
        %v3923 = vsel %vm3891, %v3875, %v3907
        %v3924 = vsel %vm3892, %v3876, %v3908
        %v3925 = vtanh.pop %v3909
        %v3926 = vtanh.pop %v3910
        %v3927 = vtanh.pop %v3911
        %v3928 = vtanh.pop %v3912
        %v3929 = vtanh.pop %v3913
        %v3930 = vtanh.pop %v3914
        %v3931 = vtanh.pop %v3915
        %v3932 = vtanh.pop %v3916
        %v3933 = vtanh.pop %v3917
        %v3934 = vtanh.pop %v3918
        %v3935 = vtanh.pop %v3919
        %v3936 = vtanh.pop %v3920
        %v3937 = vtanh.pop %v3921
        %v3938 = vtanh.pop %v3922
        %v3939 = vtanh.pop %v3923
        %v3940 = vtanh.pop %v3924
        %3941 = vset.pattern.permute.xlu0 4
        %3942 = vperm.xlu0 %3941, %v783
        %v3943 = vpop.permute.xlu0 %3942
        %3945 = vset.pattern.permute.xlu0 4
        %3946 = vperm.xlu0 %3945, %v784
        %v3947 = vpop.permute.xlu0 %3946
        %3949 = vset.pattern.permute.xlu0 4
        %3950 = vperm.xlu0 %3949, %v785
        %v3951 = vpop.permute.xlu0 %3950
        %3953 = vset.pattern.permute.xlu0 4
        %3954 = vperm.xlu0 %3953, %v786
        %v3955 = vpop.permute.xlu0 %3954
        %3957 = vset.pattern.permute.xlu0 4
        %3958 = vperm.xlu0 %3957, %v787
        %v3959 = vpop.permute.xlu0 %3958
        %3961 = vset.pattern.permute.xlu0 4
        %3962 = vperm.xlu0 %3961, %v788
        %v3963 = vpop.permute.xlu0 %3962
        %3965 = vset.pattern.permute.xlu0 4
        %3966 = vperm.xlu0 %3965, %v789
        %v3967 = vpop.permute.xlu0 %3966
        %3969 = vset.pattern.permute.xlu0 4
        %3970 = vperm.xlu0 %3969, %v790
        %v3971 = vpop.permute.xlu0 %3970
        %3973 = vset.pattern.permute.xlu0 4
        %3974 = vperm.xlu0 %3973, %v791
        %v3975 = vpop.permute.xlu0 %3974
        %3977 = vset.pattern.permute.xlu0 4
        %3978 = vperm.xlu0 %3977, %v792
        %v3979 = vpop.permute.xlu0 %3978
        %3981 = vset.pattern.permute.xlu0 4
        %3982 = vperm.xlu0 %3981, %v793
        %v3983 = vpop.permute.xlu0 %3982
        %3985 = vset.pattern.permute.xlu0 4
        %3986 = vperm.xlu0 %3985, %v794
        %v3987 = vpop.permute.xlu0 %3986
        %3989 = vset.pattern.permute.xlu0 4
        %3990 = vperm.xlu0 %3989, %v795
        %v3991 = vpop.permute.xlu0 %3990
        %3993 = vset.pattern.permute.xlu0 4
        %3994 = vperm.xlu0 %3993, %v796
        %v3995 = vpop.permute.xlu0 %3994
        %3997 = vset.pattern.permute.xlu0 4
        %3998 = vperm.xlu0 %3997, %v797
        %v3999 = vpop.permute.xlu0 %3998
        %4001 = vset.pattern.permute.xlu0 4
        %4002 = vperm.xlu0 %4001, %v798
        %v4003 = vpop.permute.xlu0 %4002
        %v4005 = vlaneseq
        %v4006 = vshrl.u32 %v4005, 7
        %v4007 = vsub.s32 4, %v4006
        %v4008 = vrot.slane %v799, %v4007
        %v4009 = vlaneseq
        %v4010 = vshrl.u32 %v4009, 7
        %v4011 = vsub.s32 4, %v4010
        %v4012 = vrot.slane %v800, %v4011
        %v4013 = vadd.f32 %v3943, %v4008
        %v4014 = vadd.f32 %v3943, %v4012
        %v4015 = vadd.f32 %v3947, %v4008
        %v4016 = vadd.f32 %v3947, %v4012
        %v4017 = vadd.f32 %v3951, %v4008
        %v4018 = vadd.f32 %v3951, %v4012
        %v4019 = vadd.f32 %v3955, %v4008
        %v4020 = vadd.f32 %v3955, %v4012
        %v4021 = vadd.f32 %v3959, %v4008
        %v4022 = vadd.f32 %v3959, %v4012
        %v4023 = vadd.f32 %v3963, %v4008
        %v4024 = vadd.f32 %v3963, %v4012
        %v4025 = vadd.f32 %v3967, %v4008
        %v4026 = vadd.f32 %v3967, %v4012
        %v4027 = vadd.f32 %v3971, %v4008
        %v4028 = vadd.f32 %v3971, %v4012
        %v4029 = vadd.f32 %v3975, %v4008
        %v4030 = vadd.f32 %v3975, %v4012
        %v4031 = vadd.f32 %v3979, %v4008
        %v4032 = vadd.f32 %v3979, %v4012
        %v4033 = vadd.f32 %v3983, %v4008
        %v4034 = vadd.f32 %v3983, %v4012
        %v4035 = vadd.f32 %v3987, %v4008
        %v4036 = vadd.f32 %v3987, %v4012
        %v4037 = vadd.f32 %v3991, %v4008
        %v4038 = vadd.f32 %v3991, %v4012
        %v4039 = vadd.f32 %v3995, %v4008
        %v4040 = vadd.f32 %v3995, %v4012
        %v4041 = vadd.f32 %v3999, %v4008
        %v4042 = vadd.f32 %v3999, %v4012
        %v4043 = vadd.f32 %v4003, %v4008
        %v4044 = vadd.f32 %v4003, %v4012
        %vm4045 = vcmp.ge.f32.partialorder %v4013, 0.0
        %vm4046 = vcmp.ge.f32.partialorder %v4014, 0.0
        %vm4047 = vcmp.ge.f32.partialorder %v4015, 0.0
        %vm4048 = vcmp.ge.f32.partialorder %v4016, 0.0
        %vm4049 = vcmp.ge.f32.partialorder %v4017, 0.0
        %vm4050 = vcmp.ge.f32.partialorder %v4018, 0.0
        %vm4051 = vcmp.ge.f32.partialorder %v4019, 0.0
        %vm4052 = vcmp.ge.f32.partialorder %v4020, 0.0
        %vm4053 = vcmp.ge.f32.partialorder %v4021, 0.0
        %vm4054 = vcmp.ge.f32.partialorder %v4022, 0.0
        %vm4055 = vcmp.ge.f32.partialorder %v4023, 0.0
        %vm4056 = vcmp.ge.f32.partialorder %v4024, 0.0
        %vm4057 = vcmp.ge.f32.partialorder %v4025, 0.0
        %vm4058 = vcmp.ge.f32.partialorder %v4026, 0.0
        %vm4059 = vcmp.ge.f32.partialorder %v4027, 0.0
        %vm4060 = vcmp.ge.f32.partialorder %v4028, 0.0
        %vm4061 = vcmp.ge.f32.partialorder %v4029, 0.0
        %vm4062 = vcmp.ge.f32.partialorder %v4030, 0.0
        %vm4063 = vcmp.ge.f32.partialorder %v4031, 0.0
        %vm4064 = vcmp.ge.f32.partialorder %v4032, 0.0
        %vm4065 = vcmp.ge.f32.partialorder %v4033, 0.0
        %vm4066 = vcmp.ge.f32.partialorder %v4034, 0.0
        %vm4067 = vcmp.ge.f32.partialorder %v4035, 0.0
        %vm4068 = vcmp.ge.f32.partialorder %v4036, 0.0
        %vm4069 = vcmp.ge.f32.partialorder %v4037, 0.0
        %vm4070 = vcmp.ge.f32.partialorder %v4038, 0.0
        %vm4071 = vcmp.ge.f32.partialorder %v4039, 0.0
        %vm4072 = vcmp.ge.f32.partialorder %v4040, 0.0
        %vm4073 = vcmp.ge.f32.partialorder %v4041, 0.0
        %vm4074 = vcmp.ge.f32.partialorder %v4042, 0.0
        %vm4075 = vcmp.ge.f32.partialorder %v4043, 0.0
        %vm4076 = vcmp.ge.f32.partialorder %v4044, 0.0
        %v4077 = vmul.f32 %v4013, 0.2
        %v4078 = vmul.f32 %v4014, 0.2
        %v4079 = vmul.f32 %v4015, 0.2
        %v4080 = vmul.f32 %v4016, 0.2
        %v4081 = vmul.f32 %v4017, 0.2
        %v4082 = vmul.f32 %v4018, 0.2
        %v4083 = vmul.f32 %v4019, 0.2
        %v4084 = vmul.f32 %v4020, 0.2
        %v4085 = vmul.f32 %v4021, 0.2
        %v4086 = vmul.f32 %v4022, 0.2
        %v4087 = vmul.f32 %v4023, 0.2
        %v4088 = vmul.f32 %v4024, 0.2
        %v4089 = vmul.f32 %v4025, 0.2
        %v4090 = vmul.f32 %v4026, 0.2
        %v4091 = vmul.f32 %v4027, 0.2
        %v4092 = vmul.f32 %v4028, 0.2
        %v4093 = vmul.f32 %v4029, 0.2
        %v4094 = vmul.f32 %v4030, 0.2
        %v4095 = vmul.f32 %v4031, 0.2
        %v4096 = vmul.f32 %v4032, 0.2
        %v4097 = vmul.f32 %v4033, 0.2
        %v4098 = vmul.f32 %v4034, 0.2
        %v4099 = vmul.f32 %v4035, 0.2
        %v4100 = vmul.f32 %v4036, 0.2
        %v4101 = vmul.f32 %v4037, 0.2
        %v4102 = vmul.f32 %v4038, 0.2
        %v4103 = vmul.f32 %v4039, 0.2
        %v4104 = vmul.f32 %v4040, 0.2
        %v4105 = vmul.f32 %v4041, 0.2
        %v4106 = vmul.f32 %v4042, 0.2
        %v4107 = vmul.f32 %v4043, 0.2
        %v4108 = vmul.f32 %v4044, 0.2
        %v4109 = vsel %vm4045, %v4013, %v4077
        %v4110 = vsel %vm4046, %v4014, %v4078
        %v4111 = vsel %vm4047, %v4015, %v4079
        %v4112 = vsel %vm4048, %v4016, %v4080
        %v4113 = vsel %vm4049, %v4017, %v4081
        %v4114 = vsel %vm4050, %v4018, %v4082
        %v4115 = vsel %vm4051, %v4019, %v4083
        %v4116 = vsel %vm4052, %v4020, %v4084
        %v4117 = vsel %vm4053, %v4021, %v4085
        %v4118 = vsel %vm4054, %v4022, %v4086
        %v4119 = vsel %vm4055, %v4023, %v4087
        %v4120 = vsel %vm4056, %v4024, %v4088
        %v4121 = vsel %vm4057, %v4025, %v4089
        %v4122 = vsel %vm4058, %v4026, %v4090
        %v4123 = vsel %vm4059, %v4027, %v4091
        %v4124 = vsel %vm4060, %v4028, %v4092
        %v4125 = vsel %vm4061, %v4029, %v4093
        %v4126 = vsel %vm4062, %v4030, %v4094
        %v4127 = vsel %vm4063, %v4031, %v4095
        %v4128 = vsel %vm4064, %v4032, %v4096
        %v4129 = vsel %vm4065, %v4033, %v4097
        %v4130 = vsel %vm4066, %v4034, %v4098
        %v4131 = vsel %vm4067, %v4035, %v4099
        %v4132 = vsel %vm4068, %v4036, %v4100
        %v4133 = vsel %vm4069, %v4037, %v4101
        %v4134 = vsel %vm4070, %v4038, %v4102
        %v4135 = vsel %vm4071, %v4039, %v4103
        %v4136 = vsel %vm4072, %v4040, %v4104
        %v4137 = vsel %vm4073, %v4041, %v4105
        %v4138 = vsel %vm4074, %v4042, %v4106
        %v4139 = vsel %vm4075, %v4043, %v4107
        %v4140 = vsel %vm4076, %v4044, %v4108
        %v4141 = vsel %vm1098, %v4109, -1e+30
        %v4142 = vsel %vm1099, %v4110, -1e+30
        %v4143 = vsel %vm1100, %v4111, -1e+30
        %v4144 = vsel %vm1101, %v4112, -1e+30
        %v4145 = vsel %vm1102, %v4113, -1e+30
        %v4146 = vsel %vm1103, %v4114, -1e+30
        %v4147 = vsel %vm1104, %v4115, -1e+30
        %v4148 = vsel %vm1105, %v4116, -1e+30
        %v4149 = vsel %vm1106, %v4117, -1e+30
        %v4150 = vsel %vm1107, %v4118, -1e+30
        %v4151 = vsel %vm1108, %v4119, -1e+30
        %v4152 = vsel %vm1109, %v4120, -1e+30
        %v4153 = vsel %vm1110, %v4121, -1e+30
        %v4154 = vsel %vm1111, %v4122, -1e+30
        %v4155 = vsel %vm1112, %v4123, -1e+30
        %v4156 = vsel %vm1113, %v4124, -1e+30
        %v4157 = vsel %vm1114, %v4125, -1e+30
        %v4158 = vsel %vm1115, %v4126, -1e+30
        %v4159 = vsel %vm1116, %v4127, -1e+30
        %v4160 = vsel %vm1117, %v4128, -1e+30
        %v4161 = vsel %vm1118, %v4129, -1e+30
        %v4162 = vsel %vm1119, %v4130, -1e+30
        %v4163 = vsel %vm1120, %v4131, -1e+30
        %v4164 = vsel %vm1121, %v4132, -1e+30
        %v4165 = vsel %vm1122, %v4133, -1e+30
        %v4166 = vsel %vm1123, %v4134, -1e+30
        %v4167 = vsel %vm1124, %v4135, -1e+30
        %v4168 = vsel %vm1125, %v4136, -1e+30
        %v4169 = vsel %vm1126, %v4137, -1e+30
        %v4170 = vsel %vm1127, %v4138, -1e+30
        %v4171 = vsel %vm1128, %v4139, -1e+30
        %v4172 = vsel %vm1129, %v4140, -1e+30
        %v4173 = vmax.f32 %v4141, %v4142
        %4174 = vmax.xlane.f32.xlu0 %v4173
        %v4175 = vpop.xlane.xlu0 %4174
        %v4176 = vmax.f32 %v4143, %v4144
        %4177 = vmax.xlane.f32.xlu0 %v4176
        %v4178 = vpop.xlane.xlu0 %4177
        %v4179 = vmax.f32 %v4145, %v4146
        %4180 = vmax.xlane.f32.xlu0 %v4179
        %v4181 = vpop.xlane.xlu0 %4180
        %v4182 = vmax.f32 %v4147, %v4148
        %4183 = vmax.xlane.f32.xlu0 %v4182
        %v4184 = vpop.xlane.xlu0 %4183
        %v4185 = vmax.f32 %v4149, %v4150
        %4186 = vmax.xlane.f32.xlu0 %v4185
        %v4187 = vpop.xlane.xlu0 %4186
        %v4188 = vmax.f32 %v4151, %v4152
        %4189 = vmax.xlane.f32.xlu0 %v4188
        %v4190 = vpop.xlane.xlu0 %4189
        %v4191 = vmax.f32 %v4153, %v4154
        %4192 = vmax.xlane.f32.xlu0 %v4191
        %v4193 = vpop.xlane.xlu0 %4192
        %v4194 = vmax.f32 %v4155, %v4156
        %4195 = vmax.xlane.f32.xlu0 %v4194
        %v4196 = vpop.xlane.xlu0 %4195
        %v4197 = vmax.f32 %v4157, %v4158
        %4198 = vmax.xlane.f32.xlu0 %v4197
        %v4199 = vpop.xlane.xlu0 %4198
        %v4200 = vmax.f32 %v4159, %v4160
        %4201 = vmax.xlane.f32.xlu0 %v4200
        %v4202 = vpop.xlane.xlu0 %4201
        %v4203 = vmax.f32 %v4161, %v4162
        %4204 = vmax.xlane.f32.xlu0 %v4203
        %v4205 = vpop.xlane.xlu0 %4204
        %v4206 = vmax.f32 %v4163, %v4164
        %4207 = vmax.xlane.f32.xlu0 %v4206
        %v4208 = vpop.xlane.xlu0 %4207
        %v4209 = vmax.f32 %v4165, %v4166
        %4210 = vmax.xlane.f32.xlu0 %v4209
        %v4211 = vpop.xlane.xlu0 %4210
        %v4212 = vmax.f32 %v4167, %v4168
        %4213 = vmax.xlane.f32.xlu0 %v4212
        %v4214 = vpop.xlane.xlu0 %4213
        %v4215 = vmax.f32 %v4169, %v4170
        %4216 = vmax.xlane.f32.xlu0 %v4215
        %v4217 = vpop.xlane.xlu0 %4216
        %v4218 = vmax.f32 %v4171, %v4172
        %4219 = vmax.xlane.f32.xlu0 %v4218
        %v4220 = vpop.xlane.xlu0 %4219
        %v4221 = vsub.f32 %v4141, %v4175
        %v4222 = vsub.f32 %v4142, %v4175
        %v4223 = vsub.f32 %v4143, %v4178
        %v4224 = vsub.f32 %v4144, %v4178
        %v4225 = vsub.f32 %v4145, %v4181
        %v4226 = vsub.f32 %v4146, %v4181
        %v4227 = vsub.f32 %v4147, %v4184
        %v4228 = vsub.f32 %v4148, %v4184
        %v4229 = vsub.f32 %v4149, %v4187
        %v4230 = vsub.f32 %v4150, %v4187
        %v4231 = vsub.f32 %v4151, %v4190
        %v4232 = vsub.f32 %v4152, %v4190
        %v4233 = vsub.f32 %v4153, %v4193
        %v4234 = vsub.f32 %v4154, %v4193
        %v4235 = vsub.f32 %v4155, %v4196
        %v4236 = vsub.f32 %v4156, %v4196
        %v4237 = vsub.f32 %v4157, %v4199
        %v4238 = vsub.f32 %v4158, %v4199
        %v4239 = vsub.f32 %v4159, %v4202
        %v4240 = vsub.f32 %v4160, %v4202
        %v4241 = vsub.f32 %v4161, %v4205
        %v4242 = vsub.f32 %v4162, %v4205
        %v4243 = vsub.f32 %v4163, %v4208
        %v4244 = vsub.f32 %v4164, %v4208
        %v4245 = vsub.f32 %v4165, %v4211
        %v4246 = vsub.f32 %v4166, %v4211
        %v4247 = vsub.f32 %v4167, %v4214
        %v4248 = vsub.f32 %v4168, %v4214
        %v4249 = vsub.f32 %v4169, %v4217
        %v4250 = vsub.f32 %v4170, %v4217
        %v4251 = vsub.f32 %v4171, %v4220
        %v4252 = vsub.f32 %v4172, %v4220
        %v4253 = vmul.f32 %v4221, 1.442695
        %v4254 = vpow.pop %v4253
        %v4255 = vmul.f32 %v4222, 1.442695
        %v4256 = vpow.pop %v4255
        %v4257 = vmul.f32 %v4223, 1.442695
        %v4258 = vpow.pop %v4257
        %v4259 = vmul.f32 %v4224, 1.442695
        %v4260 = vpow.pop %v4259
        %v4261 = vmul.f32 %v4225, 1.442695
        %v4262 = vpow.pop %v4261
        %v4263 = vmul.f32 %v4226, 1.442695
        %v4264 = vpow.pop %v4263
        %v4265 = vmul.f32 %v4227, 1.442695
        %v4266 = vpow.pop %v4265
        %v4267 = vmul.f32 %v4228, 1.442695
        %v4268 = vpow.pop %v4267
        %v4269 = vmul.f32 %v4229, 1.442695
        %v4270 = vpow.pop %v4269
        %v4271 = vmul.f32 %v4230, 1.442695
        %v4272 = vpow.pop %v4271
        %v4273 = vmul.f32 %v4231, 1.442695
        %v4274 = vpow.pop %v4273
        %v4275 = vmul.f32 %v4232, 1.442695
        %v4276 = vpow.pop %v4275
        %v4277 = vmul.f32 %v4233, 1.442695
        %v4278 = vpow.pop %v4277
        %v4279 = vmul.f32 %v4234, 1.442695
        %v4280 = vpow.pop %v4279
        %v4281 = vmul.f32 %v4235, 1.442695
        %v4282 = vpow.pop %v4281
        %v4283 = vmul.f32 %v4236, 1.442695
        %v4284 = vpow.pop %v4283
        %v4285 = vmul.f32 %v4237, 1.442695
        %v4286 = vpow.pop %v4285
        %v4287 = vmul.f32 %v4238, 1.442695
        %v4288 = vpow.pop %v4287
        %v4289 = vmul.f32 %v4239, 1.442695
        %v4290 = vpow.pop %v4289
        %v4291 = vmul.f32 %v4240, 1.442695
        %v4292 = vpow.pop %v4291
        %v4293 = vmul.f32 %v4241, 1.442695
        %v4294 = vpow.pop %v4293
        %v4295 = vmul.f32 %v4242, 1.442695
        %v4296 = vpow.pop %v4295
        %v4297 = vmul.f32 %v4243, 1.442695
        %v4298 = vpow.pop %v4297
        %v4299 = vmul.f32 %v4244, 1.442695
        %v4300 = vpow.pop %v4299
        %v4301 = vmul.f32 %v4245, 1.442695
        %v4302 = vpow.pop %v4301
        %v4303 = vmul.f32 %v4246, 1.442695
        %v4304 = vpow.pop %v4303
        %v4305 = vmul.f32 %v4247, 1.442695
        %v4306 = vpow.pop %v4305
        %v4307 = vmul.f32 %v4248, 1.442695
        %v4308 = vpow.pop %v4307
        %v4309 = vmul.f32 %v4249, 1.442695
        %v4310 = vpow.pop %v4309
        %v4311 = vmul.f32 %v4250, 1.442695
        %v4312 = vpow.pop %v4311
        %v4313 = vmul.f32 %v4251, 1.442695
        %v4314 = vpow.pop %v4313
        %v4315 = vmul.f32 %v4252, 1.442695
        %v4316 = vpow.pop %v4315
        %v4317 = vmul.f32 %v1306, %v4254
        %v4318 = vmul.f32 %v1307, %v4256
        %v4319 = vmul.f32 %v1308, %v4258
        %v4320 = vmul.f32 %v1309, %v4260
        %v4321 = vmul.f32 %v1310, %v4262
        %v4322 = vmul.f32 %v1311, %v4264
        %v4323 = vmul.f32 %v1312, %v4266
        %v4324 = vmul.f32 %v1313, %v4268
        %v4325 = vmul.f32 %v1314, %v4270
        %v4326 = vmul.f32 %v1315, %v4272
        %v4327 = vmul.f32 %v1316, %v4274
        %v4328 = vmul.f32 %v1317, %v4276
        %v4329 = vmul.f32 %v1318, %v4278
        %v4330 = vmul.f32 %v1319, %v4280
        %v4331 = vmul.f32 %v1320, %v4282
        %v4332 = vmul.f32 %v1321, %v4284
        %v4333 = vmul.f32 %v1322, %v4286
        %v4334 = vmul.f32 %v1323, %v4288
        %v4335 = vmul.f32 %v1324, %v4290
        %v4336 = vmul.f32 %v1325, %v4292
        %v4337 = vmul.f32 %v1326, %v4294
        %v4338 = vmul.f32 %v1327, %v4296
        %v4339 = vmul.f32 %v1328, %v4298
        %v4340 = vmul.f32 %v1329, %v4300
        %v4341 = vmul.f32 %v1330, %v4302
        %v4342 = vmul.f32 %v1331, %v4304
        %v4343 = vmul.f32 %v1332, %v4306
        %v4344 = vmul.f32 %v1333, %v4308
        %v4345 = vmul.f32 %v1334, %v4310
        %v4346 = vmul.f32 %v1335, %v4312
        %v4347 = vmul.f32 %v1336, %v4314
        %v4348 = vmul.f32 %v1337, %v4316
        %v4349 = vadd.f32 %v4317, %v4318
        %4350 = vadd.xlane.f32.xlu0 %v4349
        %v4351 = vpop.xlane.xlu0 %4350
        %v4352 = vadd.f32 %v4319, %v4320
        %4353 = vadd.xlane.f32.xlu0 %v4352
        %v4354 = vpop.xlane.xlu0 %4353
        %v4355 = vadd.f32 %v4321, %v4322
        %4356 = vadd.xlane.f32.xlu0 %v4355
        %v4357 = vpop.xlane.xlu0 %4356
        %v4358 = vadd.f32 %v4323, %v4324
        %4359 = vadd.xlane.f32.xlu0 %v4358
        %v4360 = vpop.xlane.xlu0 %4359
        %v4361 = vadd.f32 %v4325, %v4326
        %4362 = vadd.xlane.f32.xlu0 %v4361
        %v4363 = vpop.xlane.xlu0 %4362
        %v4364 = vadd.f32 %v4327, %v4328
        %4365 = vadd.xlane.f32.xlu0 %v4364
        %v4366 = vpop.xlane.xlu0 %4365
        %v4367 = vadd.f32 %v4329, %v4330
        %4368 = vadd.xlane.f32.xlu0 %v4367
        %v4369 = vpop.xlane.xlu0 %4368
        %v4370 = vadd.f32 %v4331, %v4332
        %4371 = vadd.xlane.f32.xlu0 %v4370
        %v4372 = vpop.xlane.xlu0 %4371
        %v4373 = vadd.f32 %v4333, %v4334
        %4374 = vadd.xlane.f32.xlu0 %v4373
        %v4375 = vpop.xlane.xlu0 %4374
        %v4376 = vadd.f32 %v4335, %v4336
        %4377 = vadd.xlane.f32.xlu0 %v4376
        %v4378 = vpop.xlane.xlu0 %4377
        %v4379 = vadd.f32 %v4337, %v4338
        %4380 = vadd.xlane.f32.xlu0 %v4379
        %v4381 = vpop.xlane.xlu0 %4380
        %v4382 = vadd.f32 %v4339, %v4340
        %4383 = vadd.xlane.f32.xlu0 %v4382
        %v4384 = vpop.xlane.xlu0 %4383
        %v4385 = vadd.f32 %v4341, %v4342
        %4386 = vadd.xlane.f32.xlu0 %v4385
        %v4387 = vpop.xlane.xlu0 %4386
        %v4388 = vadd.f32 %v4343, %v4344
        %4389 = vadd.xlane.f32.xlu0 %v4388
        %v4390 = vpop.xlane.xlu0 %4389
        %v4391 = vadd.f32 %v4345, %v4346
        %4392 = vadd.xlane.f32.xlu0 %v4391
        %v4393 = vpop.xlane.xlu0 %4392
        %v4394 = vadd.f32 %v4347, %v4348
        %4395 = vadd.xlane.f32.xlu0 %v4394
        %v4396 = vpop.xlane.xlu0 %4395
        %v4397 = vpack.c.bf16 %v4319, %v4317
        %v4398 = vpack.c.bf16 %v4320, %v4318
        %v4399 = vpack.c.bf16 %v4323, %v4321
        %v4400 = vpack.c.bf16 %v4324, %v4322
        %v4401 = vpack.c.bf16 %v4327, %v4325
        %v4402 = vpack.c.bf16 %v4328, %v4326
        %v4403 = vpack.c.bf16 %v4331, %v4329
        %v4404 = vpack.c.bf16 %v4332, %v4330
        %v4405 = vpack.c.bf16 %v4335, %v4333
        %v4406 = vpack.c.bf16 %v4336, %v4334
        %v4407 = vpack.c.bf16 %v4339, %v4337
        %v4408 = vpack.c.bf16 %v4340, %v4338
        %v4409 = vpack.c.bf16 %v4343, %v4341
        %v4410 = vpack.c.bf16 %v4344, %v4342
        %v4411 = vpack.c.bf16 %v4347, %v4345
        %v4412 = vpack.c.bf16 %v4348, %v4346
        %4413 = vrot.lane.b32.xlu0 %v1498, 96
        %v4414 = vpop.permute.xlu0 %4413
        %4415 = vrot.lane.b32.xlu0 %v1499, 96
        %v4416 = vpop.permute.xlu0 %4415
        %4417 = vrot.lane.b32.xlu0 %v1500, 96
        %v4418 = vpop.permute.xlu0 %4417
        %4419 = vrot.lane.b32.xlu0 %v1501, 96
        %v4420 = vpop.permute.xlu0 %4419
        %4421 = vrot.lane.b32.xlu0 %v1502, 96
        %v4422 = vpop.permute.xlu0 %4421
        %4423 = vrot.lane.b32.xlu0 %v1503, 96
        %v4424 = vpop.permute.xlu0 %4423
        %4425 = vrot.lane.b32.xlu0 %v1504, 96
        %v4426 = vpop.permute.xlu0 %4425
        %4427 = vrot.lane.b32.xlu0 %v1505, 96
        %v4428 = vpop.permute.xlu0 %4427
        %4429 = vrot.lane.b32.xlu0 %v1506, 96
        %v4430 = vpop.permute.xlu0 %4429
        %4431 = vrot.lane.b32.xlu0 %v1507, 96
        %v4432 = vpop.permute.xlu0 %4431
        %4433 = vrot.lane.b32.xlu0 %v1508, 96
        %v4434 = vpop.permute.xlu0 %4433
        %4435 = vrot.lane.b32.xlu0 %v1509, 96
        %v4436 = vpop.permute.xlu0 %4435
        %4437 = vrot.lane.b32.xlu0 %v1510, 96
        %v4438 = vpop.permute.xlu0 %4437
        %4439 = vrot.lane.b32.xlu0 %v1511, 96
        %v4440 = vpop.permute.xlu0 %4439
        %4441 = vrot.lane.b32.xlu0 %v1512, 96
        %v4442 = vpop.permute.xlu0 %4441
        %4443 = vrot.lane.b32.xlu0 %v1513, 96
        %v4444 = vpop.permute.xlu0 %4443
        %4461 = vmatprep.subr.bf16.mxu0 0
        %4462 = vmatpush1.bf16.msra.mxu0 %v4428
        %4463 = vmatprep.subr.bf16.mxu0 0
        %4464 = vmatpush1.bf16.msra.mxu0 %v4426
        %4465 = vmatprep.subr.bf16.mxu0 0
        %4466 = vmatpush1.bf16.msra.mxu0 %v4424
        %4467 = vmatprep.subr.bf16.mxu0 0
        %4468 = vmatpush1.bf16.msra.mxu0 %v4422
        %4469 = vmatprep.subr.bf16.mxu0 0
        %4470 = vmatpush1.bf16.msra.mxu0 %v4420
        %4471 = vmatprep.subr.bf16.mxu0 0
        %4472 = vmatpush1.bf16.msra.mxu0 %v4418
        %4473 = vmatprep.subr.bf16.mxu0 0
        %4474 = vmatpush1.bf16.msra.mxu0 %v4416
        %4475 = vmatprep.subr.bf16.mxu0 0
        %4476 = vmatpush1.bf16.msra.mxu0 %v4414
        %4477 = vmatprep.subr.bf16.mxu0 0
        %4478 = vmatpush2.bf16.msra.mxu0 %v4444
        %4479 = vmatprep.subr.bf16.mxu0 0
        %4480 = vmatpush2.bf16.msra.mxu0 %v4442
        %4481 = vmatprep.subr.bf16.mxu0 0
        %4482 = vmatpush2.bf16.msra.mxu0 %v4440
        %4483 = vmatprep.subr.bf16.mxu0 0
        %4484 = vmatpush2.bf16.msra.mxu0 %v4438
        %4485 = vmatprep.subr.bf16.mxu0 0
        %4486 = vmatpush2.bf16.msra.mxu0 %v4436
        %4487 = vmatprep.subr.bf16.mxu0 0
        %4488 = vmatpush2.bf16.msra.mxu0 %v4434
        %4489 = vmatprep.subr.bf16.mxu0 0
        %4490 = vmatpush2.bf16.msra.mxu0 %v4432
        %4491 = vmatprep.subr.bf16.mxu0 0
        %4492 = vmatpush2.bf16.msra.mxu0 %v4430
        %4493 = vmatprep.mubr.bf16.mxu0 %v4398
        %4494 = vmatmul.mubr.bf16.gmra.mxu0 %v4397
        %v4495 = vpop.f32.mrf.mxu0
        %v4496 = vadd.f32 0.0, %v4495
        %v4497 = vpop.f32.mrf.mxu0
        %v4498 = vpop.f32.mrf.mxu0
        %v4499 = vadd.f32 0.0, %v4498
        %v4500 = vpop.f32.mrf.mxu0
        %4501 = vmatprep.mubr.bf16.mxu0 %v4400
        %4502 = vmatmul.mubr.bf16.gmra.mxu0 %v4399
        %v4503 = vpop.f32.mrf.mxu0
        %v4504 = vadd.f32 0.0, %v4503
        %v4505 = vpop.f32.mrf.mxu0
        %v4506 = vpop.f32.mrf.mxu0
        %v4507 = vadd.f32 0.0, %v4506
        %v4508 = vpop.f32.mrf.mxu0
        %4509 = vmatprep.mubr.bf16.mxu0 %v4402
        %4510 = vmatmul.mubr.bf16.gmra.mxu0 %v4401
        %v4511 = vpop.f32.mrf.mxu0
        %v4512 = vadd.f32 0.0, %v4511
        %v4513 = vpop.f32.mrf.mxu0
        %v4514 = vpop.f32.mrf.mxu0
        %v4515 = vadd.f32 0.0, %v4514
        %v4516 = vpop.f32.mrf.mxu0
        %4517 = vmatprep.mubr.bf16.mxu0 %v4404
        %4518 = vmatmul.mubr.bf16.gmra.mxu0 %v4403
        %v4519 = vpop.f32.mrf.mxu0
        %v4520 = vadd.f32 0.0, %v4519
        %v4521 = vpop.f32.mrf.mxu0
        %v4522 = vpop.f32.mrf.mxu0
        %v4523 = vadd.f32 0.0, %v4522
        %v4524 = vpop.f32.mrf.mxu0
        %4525 = vmatprep.mubr.bf16.mxu0 %v4406
        %4526 = vmatmul.mubr.bf16.gmra.mxu0 %v4405
        %v4527 = vpop.f32.mrf.mxu0
        %v4528 = vadd.f32 0.0, %v4527
        %v4529 = vpop.f32.mrf.mxu0
        %v4530 = vpop.f32.mrf.mxu0
        %v4531 = vadd.f32 0.0, %v4530
        %v4532 = vpop.f32.mrf.mxu0
        %4533 = vmatprep.mubr.bf16.mxu0 %v4408
        %4534 = vmatmul.mubr.bf16.gmra.mxu0 %v4407
        %v4535 = vpop.f32.mrf.mxu0
        %v4536 = vadd.f32 0.0, %v4535
        %v4537 = vpop.f32.mrf.mxu0
        %v4538 = vpop.f32.mrf.mxu0
        %v4539 = vadd.f32 0.0, %v4538
        %v4540 = vpop.f32.mrf.mxu0
        %4541 = vmatprep.mubr.bf16.mxu0 %v4410
        %4542 = vmatmul.mubr.bf16.gmra.mxu0 %v4409
        %v4543 = vpop.f32.mrf.mxu0
        %v4544 = vadd.f32 0.0, %v4543
        %v4545 = vpop.f32.mrf.mxu0
        %v4546 = vpop.f32.mrf.mxu0
        %v4547 = vadd.f32 0.0, %v4546
        %v4548 = vpop.f32.mrf.mxu0
        %4549 = vmatprep.mubr.bf16.mxu0 %v4412
        %4550 = vmatmul.mubr.bf16.gmra.mxu0 %v4411
        %v4551 = vpop.f32.mrf.mxu0
        %v4552 = vadd.f32 0.0, %v4551
        %v4553 = vpop.f32.mrf.mxu0
        %v4554 = vpop.f32.mrf.mxu0
        %v4555 = vadd.f32 0.0, %v4554
        %v4556 = vpop.f32.mrf.mxu0
        %4557 = vdwg.mxu0
        %v4558 = vrcp.pop %v4351
        %v4559 = vrcp.pop %v4354
        %v4560 = vrcp.pop %v4357
        %v4561 = vrcp.pop %v4360
        %v4562 = vrcp.pop %v4363
        %v4563 = vrcp.pop %v4366
        %v4564 = vrcp.pop %v4369
        %v4565 = vrcp.pop %v4372
        %v4566 = vrcp.pop %v4375
        %v4567 = vrcp.pop %v4378
        %v4568 = vrcp.pop %v4381
        %v4569 = vrcp.pop %v4384
        %v4570 = vrcp.pop %v4387
        %v4571 = vrcp.pop %v4390
        %v4572 = vrcp.pop %v4393
        %v4573 = vrcp.pop %v4396
        %v4574 = vmul.f32 %v4496, %v4558
        %v4575 = vmul.f32 %v4499, %v4559
        %v4576 = vmul.f32 %v4504, %v4560
        %v4577 = vmul.f32 %v4507, %v4561
        %v4578 = vmul.f32 %v4512, %v4562
        %v4579 = vmul.f32 %v4515, %v4563
        %v4580 = vmul.f32 %v4520, %v4564
        %v4581 = vmul.f32 %v4523, %v4565
        %v4582 = vmul.f32 %v4528, %v4566
        %v4583 = vmul.f32 %v4531, %v4567
        %v4584 = vmul.f32 %v4536, %v4568
        %v4585 = vmul.f32 %v4539, %v4569
        %v4586 = vmul.f32 %v4544, %v4570
        %v4587 = vmul.f32 %v4547, %v4571
        %v4588 = vmul.f32 %v4552, %v4572
        %v4589 = vmul.f32 %v4555, %v4573
        %4590 = vrot.lane.b32.xlu0 %v1663, 96
        %v4591 = vpop.permute.xlu0 %4590
        %v4593 = vadd.f32 %v4574, %v4591
        %v4594 = vadd.f32 %v4575, %v4591
        %v4595 = vadd.f32 %v4576, %v4591
        %v4596 = vadd.f32 %v4577, %v4591
        %v4597 = vadd.f32 %v4578, %v4591
        %v4598 = vadd.f32 %v4579, %v4591
        %v4599 = vadd.f32 %v4580, %v4591
        %v4600 = vadd.f32 %v4581, %v4591
        %v4601 = vadd.f32 %v4582, %v4591
        %v4602 = vadd.f32 %v4583, %v4591
        %v4603 = vadd.f32 %v4584, %v4591
        %v4604 = vadd.f32 %v4585, %v4591
        %v4605 = vadd.f32 %v4586, %v4591
        %v4606 = vadd.f32 %v4587, %v4591
        %v4607 = vadd.f32 %v4588, %v4591
        %v4608 = vadd.f32 %v4589, %v4591
        %vm4609 = vcmp.ge.f32.partialorder %v4593, 0.0
        %vm4610 = vcmp.ge.f32.partialorder %v4594, 0.0
        %vm4611 = vcmp.ge.f32.partialorder %v4595, 0.0
        %vm4612 = vcmp.ge.f32.partialorder %v4596, 0.0
        %vm4613 = vcmp.ge.f32.partialorder %v4597, 0.0
        %vm4614 = vcmp.ge.f32.partialorder %v4598, 0.0
        %vm4615 = vcmp.ge.f32.partialorder %v4599, 0.0
        %vm4616 = vcmp.ge.f32.partialorder %v4600, 0.0
        %vm4617 = vcmp.ge.f32.partialorder %v4601, 0.0
        %vm4618 = vcmp.ge.f32.partialorder %v4602, 0.0
        %vm4619 = vcmp.ge.f32.partialorder %v4603, 0.0
        %vm4620 = vcmp.ge.f32.partialorder %v4604, 0.0
        %vm4621 = vcmp.ge.f32.partialorder %v4605, 0.0
        %vm4622 = vcmp.ge.f32.partialorder %v4606, 0.0
        %vm4623 = vcmp.ge.f32.partialorder %v4607, 0.0
        %vm4624 = vcmp.ge.f32.partialorder %v4608, 0.0
        %v4625 = vmul.f32 %v4593, 0.01
        %v4626 = vmul.f32 %v4594, 0.01
        %v4627 = vmul.f32 %v4595, 0.01
        %v4628 = vmul.f32 %v4596, 0.01
        %v4629 = vmul.f32 %v4597, 0.01
        %v4630 = vmul.f32 %v4598, 0.01
        %v4631 = vmul.f32 %v4599, 0.01
        %v4632 = vmul.f32 %v4600, 0.01
        %v4633 = vmul.f32 %v4601, 0.01
        %v4634 = vmul.f32 %v4602, 0.01
        %v4635 = vmul.f32 %v4603, 0.01
        %v4636 = vmul.f32 %v4604, 0.01
        %v4637 = vmul.f32 %v4605, 0.01
        %v4638 = vmul.f32 %v4606, 0.01
        %v4639 = vmul.f32 %v4607, 0.01
        %v4640 = vmul.f32 %v4608, 0.01
        %v4641 = vsel %vm4609, %v4593, %v4625
        %v4642 = vsel %vm4610, %v4594, %v4626
        %v4643 = vsel %vm4611, %v4595, %v4627
        %v4644 = vsel %vm4612, %v4596, %v4628
        %v4645 = vsel %vm4613, %v4597, %v4629
        %v4646 = vsel %vm4614, %v4598, %v4630
        %v4647 = vsel %vm4615, %v4599, %v4631
        %v4648 = vsel %vm4616, %v4600, %v4632
        %v4649 = vsel %vm4617, %v4601, %v4633
        %v4650 = vsel %vm4618, %v4602, %v4634
        %v4651 = vsel %vm4619, %v4603, %v4635
        %v4652 = vsel %vm4620, %v4604, %v4636
        %v4653 = vsel %vm4621, %v4605, %v4637
        %v4654 = vsel %vm4622, %v4606, %v4638
        %v4655 = vsel %vm4623, %v4607, %v4639
        %v4656 = vsel %vm4624, %v4608, %v4640
        %v4657 = vtanh.pop %v4641
        %v4658 = vtanh.pop %v4642
        %v4659 = vtanh.pop %v4643
        %v4660 = vtanh.pop %v4644
        %v4661 = vtanh.pop %v4645
        %v4662 = vtanh.pop %v4646
        %v4663 = vtanh.pop %v4647
        %v4664 = vtanh.pop %v4648
        %v4665 = vtanh.pop %v4649
        %v4666 = vtanh.pop %v4650
        %v4667 = vtanh.pop %v4651
        %v4668 = vtanh.pop %v4652
        %v4669 = vtanh.pop %v4653
        %v4670 = vtanh.pop %v4654
        %v4671 = vtanh.pop %v4655
        %v4672 = vtanh.pop %v4656
        %4673 = vset.pattern.permute.xlu0 5
        %4674 = vperm.xlu0 %4673, %v783
        %v4675 = vpop.permute.xlu0 %4674
        %4677 = vset.pattern.permute.xlu0 5
        %4678 = vperm.xlu0 %4677, %v784
        %v4679 = vpop.permute.xlu0 %4678
        %4681 = vset.pattern.permute.xlu0 5
        %4682 = vperm.xlu0 %4681, %v785
        %v4683 = vpop.permute.xlu0 %4682
        %4685 = vset.pattern.permute.xlu0 5
        %4686 = vperm.xlu0 %4685, %v786
        %v4687 = vpop.permute.xlu0 %4686
        %4689 = vset.pattern.permute.xlu0 5
        %4690 = vperm.xlu0 %4689, %v787
        %v4691 = vpop.permute.xlu0 %4690
        %4693 = vset.pattern.permute.xlu0 5
        %4694 = vperm.xlu0 %4693, %v788
        %v4695 = vpop.permute.xlu0 %4694
        %4697 = vset.pattern.permute.xlu0 5
        %4698 = vperm.xlu0 %4697, %v789
        %v4699 = vpop.permute.xlu0 %4698
        %4701 = vset.pattern.permute.xlu0 5
        %4702 = vperm.xlu0 %4701, %v790
        %v4703 = vpop.permute.xlu0 %4702
        %4705 = vset.pattern.permute.xlu0 5
        %4706 = vperm.xlu0 %4705, %v791
        %v4707 = vpop.permute.xlu0 %4706
        %4709 = vset.pattern.permute.xlu0 5
        %4710 = vperm.xlu0 %4709, %v792
        %v4711 = vpop.permute.xlu0 %4710
        %4713 = vset.pattern.permute.xlu0 5
        %4714 = vperm.xlu0 %4713, %v793
        %v4715 = vpop.permute.xlu0 %4714
        %4717 = vset.pattern.permute.xlu0 5
        %4718 = vperm.xlu0 %4717, %v794
        %v4719 = vpop.permute.xlu0 %4718
        %4721 = vset.pattern.permute.xlu0 5
        %4722 = vperm.xlu0 %4721, %v795
        %v4723 = vpop.permute.xlu0 %4722
        %4725 = vset.pattern.permute.xlu0 5
        %4726 = vperm.xlu0 %4725, %v796
        %v4727 = vpop.permute.xlu0 %4726
        %4729 = vset.pattern.permute.xlu0 5
        %4730 = vperm.xlu0 %4729, %v797
        %v4731 = vpop.permute.xlu0 %4730
        %4733 = vset.pattern.permute.xlu0 5
        %4734 = vperm.xlu0 %4733, %v798
        %v4735 = vpop.permute.xlu0 %4734
        %v4737 = vlaneseq
        %v4738 = vshrl.u32 %v4737, 7
        %v4739 = vsub.s32 5, %v4738
        %v4740 = vrot.slane %v799, %v4739
        %v4741 = vlaneseq
        %v4742 = vshrl.u32 %v4741, 7
        %v4743 = vsub.s32 5, %v4742
        %v4744 = vrot.slane %v800, %v4743
        %v4745 = vadd.f32 %v4675, %v4740
        %v4746 = vadd.f32 %v4675, %v4744
        %v4747 = vadd.f32 %v4679, %v4740
        %v4748 = vadd.f32 %v4679, %v4744
        %v4749 = vadd.f32 %v4683, %v4740
        %v4750 = vadd.f32 %v4683, %v4744
        %v4751 = vadd.f32 %v4687, %v4740
        %v4752 = vadd.f32 %v4687, %v4744
        %v4753 = vadd.f32 %v4691, %v4740
        %v4754 = vadd.f32 %v4691, %v4744
        %v4755 = vadd.f32 %v4695, %v4740
        %v4756 = vadd.f32 %v4695, %v4744
        %v4757 = vadd.f32 %v4699, %v4740
        %v4758 = vadd.f32 %v4699, %v4744
        %v4759 = vadd.f32 %v4703, %v4740
        %v4760 = vadd.f32 %v4703, %v4744
        %v4761 = vadd.f32 %v4707, %v4740
        %v4762 = vadd.f32 %v4707, %v4744
        %v4763 = vadd.f32 %v4711, %v4740
        %v4764 = vadd.f32 %v4711, %v4744
        %v4765 = vadd.f32 %v4715, %v4740
        %v4766 = vadd.f32 %v4715, %v4744
        %v4767 = vadd.f32 %v4719, %v4740
        %v4768 = vadd.f32 %v4719, %v4744
        %v4769 = vadd.f32 %v4723, %v4740
        %v4770 = vadd.f32 %v4723, %v4744
        %v4771 = vadd.f32 %v4727, %v4740
        %v4772 = vadd.f32 %v4727, %v4744
        %v4773 = vadd.f32 %v4731, %v4740
        %v4774 = vadd.f32 %v4731, %v4744
        %v4775 = vadd.f32 %v4735, %v4740
        %v4776 = vadd.f32 %v4735, %v4744
        %vm4777 = vcmp.ge.f32.partialorder %v4745, 0.0
        %vm4778 = vcmp.ge.f32.partialorder %v4746, 0.0
        %vm4779 = vcmp.ge.f32.partialorder %v4747, 0.0
        %vm4780 = vcmp.ge.f32.partialorder %v4748, 0.0
        %vm4781 = vcmp.ge.f32.partialorder %v4749, 0.0
        %vm4782 = vcmp.ge.f32.partialorder %v4750, 0.0
        %vm4783 = vcmp.ge.f32.partialorder %v4751, 0.0
        %vm4784 = vcmp.ge.f32.partialorder %v4752, 0.0
        %vm4785 = vcmp.ge.f32.partialorder %v4753, 0.0
        %vm4786 = vcmp.ge.f32.partialorder %v4754, 0.0
        %vm4787 = vcmp.ge.f32.partialorder %v4755, 0.0
        %vm4788 = vcmp.ge.f32.partialorder %v4756, 0.0
        %vm4789 = vcmp.ge.f32.partialorder %v4757, 0.0
        %vm4790 = vcmp.ge.f32.partialorder %v4758, 0.0
        %vm4791 = vcmp.ge.f32.partialorder %v4759, 0.0
        %vm4792 = vcmp.ge.f32.partialorder %v4760, 0.0
        %vm4793 = vcmp.ge.f32.partialorder %v4761, 0.0
        %vm4794 = vcmp.ge.f32.partialorder %v4762, 0.0
        %vm4795 = vcmp.ge.f32.partialorder %v4763, 0.0
        %vm4796 = vcmp.ge.f32.partialorder %v4764, 0.0
        %vm4797 = vcmp.ge.f32.partialorder %v4765, 0.0
        %vm4798 = vcmp.ge.f32.partialorder %v4766, 0.0
        %vm4799 = vcmp.ge.f32.partialorder %v4767, 0.0
        %vm4800 = vcmp.ge.f32.partialorder %v4768, 0.0
        %vm4801 = vcmp.ge.f32.partialorder %v4769, 0.0
        %vm4802 = vcmp.ge.f32.partialorder %v4770, 0.0
        %vm4803 = vcmp.ge.f32.partialorder %v4771, 0.0
        %vm4804 = vcmp.ge.f32.partialorder %v4772, 0.0
        %vm4805 = vcmp.ge.f32.partialorder %v4773, 0.0
        %vm4806 = vcmp.ge.f32.partialorder %v4774, 0.0
        %vm4807 = vcmp.ge.f32.partialorder %v4775, 0.0
        %vm4808 = vcmp.ge.f32.partialorder %v4776, 0.0
        %v4809 = vmul.f32 %v4745, 0.2
        %v4810 = vmul.f32 %v4746, 0.2
        %v4811 = vmul.f32 %v4747, 0.2
        %v4812 = vmul.f32 %v4748, 0.2
        %v4813 = vmul.f32 %v4749, 0.2
        %v4814 = vmul.f32 %v4750, 0.2
        %v4815 = vmul.f32 %v4751, 0.2
        %v4816 = vmul.f32 %v4752, 0.2
        %v4817 = vmul.f32 %v4753, 0.2
        %v4818 = vmul.f32 %v4754, 0.2
        %v4819 = vmul.f32 %v4755, 0.2
        %v4820 = vmul.f32 %v4756, 0.2
        %v4821 = vmul.f32 %v4757, 0.2
        %v4822 = vmul.f32 %v4758, 0.2
        %v4823 = vmul.f32 %v4759, 0.2
        %v4824 = vmul.f32 %v4760, 0.2
        %v4825 = vmul.f32 %v4761, 0.2
        %v4826 = vmul.f32 %v4762, 0.2
        %v4827 = vmul.f32 %v4763, 0.2
        %v4828 = vmul.f32 %v4764, 0.2
        %v4829 = vmul.f32 %v4765, 0.2
        %v4830 = vmul.f32 %v4766, 0.2
        %v4831 = vmul.f32 %v4767, 0.2
        %v4832 = vmul.f32 %v4768, 0.2
        %v4833 = vmul.f32 %v4769, 0.2
        %v4834 = vmul.f32 %v4770, 0.2
        %v4835 = vmul.f32 %v4771, 0.2
        %v4836 = vmul.f32 %v4772, 0.2
        %v4837 = vmul.f32 %v4773, 0.2
        %v4838 = vmul.f32 %v4774, 0.2
        %v4839 = vmul.f32 %v4775, 0.2
        %v4840 = vmul.f32 %v4776, 0.2
        %v4841 = vsel %vm4777, %v4745, %v4809
        %v4842 = vsel %vm4778, %v4746, %v4810
        %v4843 = vsel %vm4779, %v4747, %v4811
        %v4844 = vsel %vm4780, %v4748, %v4812
        %v4845 = vsel %vm4781, %v4749, %v4813
        %v4846 = vsel %vm4782, %v4750, %v4814
        %v4847 = vsel %vm4783, %v4751, %v4815
        %v4848 = vsel %vm4784, %v4752, %v4816
        %v4849 = vsel %vm4785, %v4753, %v4817
        %v4850 = vsel %vm4786, %v4754, %v4818
        %v4851 = vsel %vm4787, %v4755, %v4819
        %v4852 = vsel %vm4788, %v4756, %v4820
        %v4853 = vsel %vm4789, %v4757, %v4821
        %v4854 = vsel %vm4790, %v4758, %v4822
        %v4855 = vsel %vm4791, %v4759, %v4823
        %v4856 = vsel %vm4792, %v4760, %v4824
        %v4857 = vsel %vm4793, %v4761, %v4825
        %v4858 = vsel %vm4794, %v4762, %v4826
        %v4859 = vsel %vm4795, %v4763, %v4827
        %v4860 = vsel %vm4796, %v4764, %v4828
        %v4861 = vsel %vm4797, %v4765, %v4829
        %v4862 = vsel %vm4798, %v4766, %v4830
        %v4863 = vsel %vm4799, %v4767, %v4831
        %v4864 = vsel %vm4800, %v4768, %v4832
        %v4865 = vsel %vm4801, %v4769, %v4833
        %v4866 = vsel %vm4802, %v4770, %v4834
        %v4867 = vsel %vm4803, %v4771, %v4835
        %v4868 = vsel %vm4804, %v4772, %v4836
        %v4869 = vsel %vm4805, %v4773, %v4837
        %v4870 = vsel %vm4806, %v4774, %v4838
        %v4871 = vsel %vm4807, %v4775, %v4839
        %v4872 = vsel %vm4808, %v4776, %v4840
        %v4873 = vsel %vm1098, %v4841, -1e+30
        %v4874 = vsel %vm1099, %v4842, -1e+30
        %v4875 = vsel %vm1100, %v4843, -1e+30
        %v4876 = vsel %vm1101, %v4844, -1e+30
        %v4877 = vsel %vm1102, %v4845, -1e+30
        %v4878 = vsel %vm1103, %v4846, -1e+30
        %v4879 = vsel %vm1104, %v4847, -1e+30
        %v4880 = vsel %vm1105, %v4848, -1e+30
        %v4881 = vsel %vm1106, %v4849, -1e+30
        %v4882 = vsel %vm1107, %v4850, -1e+30
        %v4883 = vsel %vm1108, %v4851, -1e+30
        %v4884 = vsel %vm1109, %v4852, -1e+30
        %v4885 = vsel %vm1110, %v4853, -1e+30
        %v4886 = vsel %vm1111, %v4854, -1e+30
        %v4887 = vsel %vm1112, %v4855, -1e+30
        %v4888 = vsel %vm1113, %v4856, -1e+30
        %v4889 = vsel %vm1114, %v4857, -1e+30
        %v4890 = vsel %vm1115, %v4858, -1e+30
        %v4891 = vsel %vm1116, %v4859, -1e+30
        %v4892 = vsel %vm1117, %v4860, -1e+30
        %v4893 = vsel %vm1118, %v4861, -1e+30
        %v4894 = vsel %vm1119, %v4862, -1e+30
        %v4895 = vsel %vm1120, %v4863, -1e+30
        %v4896 = vsel %vm1121, %v4864, -1e+30
        %v4897 = vsel %vm1122, %v4865, -1e+30
        %v4898 = vsel %vm1123, %v4866, -1e+30
        %v4899 = vsel %vm1124, %v4867, -1e+30
        %v4900 = vsel %vm1125, %v4868, -1e+30
        %v4901 = vsel %vm1126, %v4869, -1e+30
        %v4902 = vsel %vm1127, %v4870, -1e+30
        %v4903 = vsel %vm1128, %v4871, -1e+30
        %v4904 = vsel %vm1129, %v4872, -1e+30
        %v4905 = vmax.f32 %v4873, %v4874
        %4906 = vmax.xlane.f32.xlu0 %v4905
        %v4907 = vpop.xlane.xlu0 %4906
        %v4908 = vmax.f32 %v4875, %v4876
        %4909 = vmax.xlane.f32.xlu0 %v4908
        %v4910 = vpop.xlane.xlu0 %4909
        %v4911 = vmax.f32 %v4877, %v4878
        %4912 = vmax.xlane.f32.xlu0 %v4911
        %v4913 = vpop.xlane.xlu0 %4912
        %v4914 = vmax.f32 %v4879, %v4880
        %4915 = vmax.xlane.f32.xlu0 %v4914
        %v4916 = vpop.xlane.xlu0 %4915
        %v4917 = vmax.f32 %v4881, %v4882
        %4918 = vmax.xlane.f32.xlu0 %v4917
        %v4919 = vpop.xlane.xlu0 %4918
        %v4920 = vmax.f32 %v4883, %v4884
        %4921 = vmax.xlane.f32.xlu0 %v4920
        %v4922 = vpop.xlane.xlu0 %4921
        %v4923 = vmax.f32 %v4885, %v4886
        %4924 = vmax.xlane.f32.xlu0 %v4923
        %v4925 = vpop.xlane.xlu0 %4924
        %v4926 = vmax.f32 %v4887, %v4888
        %4927 = vmax.xlane.f32.xlu0 %v4926
        %v4928 = vpop.xlane.xlu0 %4927
        %v4929 = vmax.f32 %v4889, %v4890
        %4930 = vmax.xlane.f32.xlu0 %v4929
        %v4931 = vpop.xlane.xlu0 %4930
        %v4932 = vmax.f32 %v4891, %v4892
        %4933 = vmax.xlane.f32.xlu0 %v4932
        %v4934 = vpop.xlane.xlu0 %4933
        %v4935 = vmax.f32 %v4893, %v4894
        %4936 = vmax.xlane.f32.xlu0 %v4935
        %v4937 = vpop.xlane.xlu0 %4936
        %v4938 = vmax.f32 %v4895, %v4896
        %4939 = vmax.xlane.f32.xlu0 %v4938
        %v4940 = vpop.xlane.xlu0 %4939
        %v4941 = vmax.f32 %v4897, %v4898
        %4942 = vmax.xlane.f32.xlu0 %v4941
        %v4943 = vpop.xlane.xlu0 %4942
        %v4944 = vmax.f32 %v4899, %v4900
        %4945 = vmax.xlane.f32.xlu0 %v4944
        %v4946 = vpop.xlane.xlu0 %4945
        %v4947 = vmax.f32 %v4901, %v4902
        %4948 = vmax.xlane.f32.xlu0 %v4947
        %v4949 = vpop.xlane.xlu0 %4948
        %v4950 = vmax.f32 %v4903, %v4904
        %4951 = vmax.xlane.f32.xlu0 %v4950
        %v4952 = vpop.xlane.xlu0 %4951
        %v4953 = vsub.f32 %v4873, %v4907
        %v4954 = vsub.f32 %v4874, %v4907
        %v4955 = vsub.f32 %v4875, %v4910
        %v4956 = vsub.f32 %v4876, %v4910
        %v4957 = vsub.f32 %v4877, %v4913
        %v4958 = vsub.f32 %v4878, %v4913
        %v4959 = vsub.f32 %v4879, %v4916
        %v4960 = vsub.f32 %v4880, %v4916
        %v4961 = vsub.f32 %v4881, %v4919
        %v4962 = vsub.f32 %v4882, %v4919
        %v4963 = vsub.f32 %v4883, %v4922
        %v4964 = vsub.f32 %v4884, %v4922
        %v4965 = vsub.f32 %v4885, %v4925
        %v4966 = vsub.f32 %v4886, %v4925
        %v4967 = vsub.f32 %v4887, %v4928
        %v4968 = vsub.f32 %v4888, %v4928
        %v4969 = vsub.f32 %v4889, %v4931
        %v4970 = vsub.f32 %v4890, %v4931
        %v4971 = vsub.f32 %v4891, %v4934
        %v4972 = vsub.f32 %v4892, %v4934
        %v4973 = vsub.f32 %v4893, %v4937
        %v4974 = vsub.f32 %v4894, %v4937
        %v4975 = vsub.f32 %v4895, %v4940
        %v4976 = vsub.f32 %v4896, %v4940
        %v4977 = vsub.f32 %v4897, %v4943
        %v4978 = vsub.f32 %v4898, %v4943
        %v4979 = vsub.f32 %v4899, %v4946
        %v4980 = vsub.f32 %v4900, %v4946
        %v4981 = vsub.f32 %v4901, %v4949
        %v4982 = vsub.f32 %v4902, %v4949
        %v4983 = vsub.f32 %v4903, %v4952
        %v4984 = vsub.f32 %v4904, %v4952
        %v4985 = vmul.f32 %v4953, 1.442695
        %v4986 = vpow.pop %v4985
        %v4987 = vmul.f32 %v4954, 1.442695
        %v4988 = vpow.pop %v4987
        %v4989 = vmul.f32 %v4955, 1.442695
        %v4990 = vpow.pop %v4989
        %v4991 = vmul.f32 %v4956, 1.442695
        %v4992 = vpow.pop %v4991
        %v4993 = vmul.f32 %v4957, 1.442695
        %v4994 = vpow.pop %v4993
        %v4995 = vmul.f32 %v4958, 1.442695
        %v4996 = vpow.pop %v4995
        %v4997 = vmul.f32 %v4959, 1.442695
        %v4998 = vpow.pop %v4997
        %v4999 = vmul.f32 %v4960, 1.442695
        %v5000 = vpow.pop %v4999
        %v5001 = vmul.f32 %v4961, 1.442695
        %v5002 = vpow.pop %v5001
        %v5003 = vmul.f32 %v4962, 1.442695
        %v5004 = vpow.pop %v5003
        %v5005 = vmul.f32 %v4963, 1.442695
        %v5006 = vpow.pop %v5005
        %v5007 = vmul.f32 %v4964, 1.442695
        %v5008 = vpow.pop %v5007
        %v5009 = vmul.f32 %v4965, 1.442695
        %v5010 = vpow.pop %v5009
        %v5011 = vmul.f32 %v4966, 1.442695
        %v5012 = vpow.pop %v5011
        %v5013 = vmul.f32 %v4967, 1.442695
        %v5014 = vpow.pop %v5013
        %v5015 = vmul.f32 %v4968, 1.442695
        %v5016 = vpow.pop %v5015
        %v5017 = vmul.f32 %v4969, 1.442695
        %v5018 = vpow.pop %v5017
        %v5019 = vmul.f32 %v4970, 1.442695
        %v5020 = vpow.pop %v5019
        %v5021 = vmul.f32 %v4971, 1.442695
        %v5022 = vpow.pop %v5021
        %v5023 = vmul.f32 %v4972, 1.442695
        %v5024 = vpow.pop %v5023
        %v5025 = vmul.f32 %v4973, 1.442695
        %v5026 = vpow.pop %v5025
        %v5027 = vmul.f32 %v4974, 1.442695
        %v5028 = vpow.pop %v5027
        %v5029 = vmul.f32 %v4975, 1.442695
        %v5030 = vpow.pop %v5029
        %v5031 = vmul.f32 %v4976, 1.442695
        %v5032 = vpow.pop %v5031
        %v5033 = vmul.f32 %v4977, 1.442695
        %v5034 = vpow.pop %v5033
        %v5035 = vmul.f32 %v4978, 1.442695
        %v5036 = vpow.pop %v5035
        %v5037 = vmul.f32 %v4979, 1.442695
        %v5038 = vpow.pop %v5037
        %v5039 = vmul.f32 %v4980, 1.442695
        %v5040 = vpow.pop %v5039
        %v5041 = vmul.f32 %v4981, 1.442695
        %v5042 = vpow.pop %v5041
        %v5043 = vmul.f32 %v4982, 1.442695
        %v5044 = vpow.pop %v5043
        %v5045 = vmul.f32 %v4983, 1.442695
        %v5046 = vpow.pop %v5045
        %v5047 = vmul.f32 %v4984, 1.442695
        %v5048 = vpow.pop %v5047
        %v5049 = vmul.f32 %v1306, %v4986
        %v5050 = vmul.f32 %v1307, %v4988
        %v5051 = vmul.f32 %v1308, %v4990
        %v5052 = vmul.f32 %v1309, %v4992
        %v5053 = vmul.f32 %v1310, %v4994
        %v5054 = vmul.f32 %v1311, %v4996
        %v5055 = vmul.f32 %v1312, %v4998
        %v5056 = vmul.f32 %v1313, %v5000
        %v5057 = vmul.f32 %v1314, %v5002
        %v5058 = vmul.f32 %v1315, %v5004
        %v5059 = vmul.f32 %v1316, %v5006
        %v5060 = vmul.f32 %v1317, %v5008
        %v5061 = vmul.f32 %v1318, %v5010
        %v5062 = vmul.f32 %v1319, %v5012
        %v5063 = vmul.f32 %v1320, %v5014
        %v5064 = vmul.f32 %v1321, %v5016
        %v5065 = vmul.f32 %v1322, %v5018
        %v5066 = vmul.f32 %v1323, %v5020
        %v5067 = vmul.f32 %v1324, %v5022
        %v5068 = vmul.f32 %v1325, %v5024
        %v5069 = vmul.f32 %v1326, %v5026
        %v5070 = vmul.f32 %v1327, %v5028
        %v5071 = vmul.f32 %v1328, %v5030
        %v5072 = vmul.f32 %v1329, %v5032
        %v5073 = vmul.f32 %v1330, %v5034
        %v5074 = vmul.f32 %v1331, %v5036
        %v5075 = vmul.f32 %v1332, %v5038
        %v5076 = vmul.f32 %v1333, %v5040
        %v5077 = vmul.f32 %v1334, %v5042
        %v5078 = vmul.f32 %v1335, %v5044
        %v5079 = vmul.f32 %v1336, %v5046
        %v5080 = vmul.f32 %v1337, %v5048
        %v5081 = vadd.f32 %v5049, %v5050
        %5082 = vadd.xlane.f32.xlu0 %v5081
        %v5083 = vpop.xlane.xlu0 %5082
        %v5084 = vadd.f32 %v5051, %v5052
        %5085 = vadd.xlane.f32.xlu0 %v5084
        %v5086 = vpop.xlane.xlu0 %5085
        %v5087 = vadd.f32 %v5053, %v5054
        %5088 = vadd.xlane.f32.xlu0 %v5087
        %v5089 = vpop.xlane.xlu0 %5088
        %v5090 = vadd.f32 %v5055, %v5056
        %5091 = vadd.xlane.f32.xlu0 %v5090
        %v5092 = vpop.xlane.xlu0 %5091
        %v5093 = vadd.f32 %v5057, %v5058
        %5094 = vadd.xlane.f32.xlu0 %v5093
        %v5095 = vpop.xlane.xlu0 %5094
        %v5096 = vadd.f32 %v5059, %v5060
        %5097 = vadd.xlane.f32.xlu0 %v5096
        %v5098 = vpop.xlane.xlu0 %5097
        %v5099 = vadd.f32 %v5061, %v5062
        %5100 = vadd.xlane.f32.xlu0 %v5099
        %v5101 = vpop.xlane.xlu0 %5100
        %v5102 = vadd.f32 %v5063, %v5064
        %5103 = vadd.xlane.f32.xlu0 %v5102
        %v5104 = vpop.xlane.xlu0 %5103
        %v5105 = vadd.f32 %v5065, %v5066
        %5106 = vadd.xlane.f32.xlu0 %v5105
        %v5107 = vpop.xlane.xlu0 %5106
        %v5108 = vadd.f32 %v5067, %v5068
        %5109 = vadd.xlane.f32.xlu0 %v5108
        %v5110 = vpop.xlane.xlu0 %5109
        %v5111 = vadd.f32 %v5069, %v5070
        %5112 = vadd.xlane.f32.xlu0 %v5111
        %v5113 = vpop.xlane.xlu0 %5112
        %v5114 = vadd.f32 %v5071, %v5072
        %5115 = vadd.xlane.f32.xlu0 %v5114
        %v5116 = vpop.xlane.xlu0 %5115
        %v5117 = vadd.f32 %v5073, %v5074
        %5118 = vadd.xlane.f32.xlu0 %v5117
        %v5119 = vpop.xlane.xlu0 %5118
        %v5120 = vadd.f32 %v5075, %v5076
        %5121 = vadd.xlane.f32.xlu0 %v5120
        %v5122 = vpop.xlane.xlu0 %5121
        %v5123 = vadd.f32 %v5077, %v5078
        %5124 = vadd.xlane.f32.xlu0 %v5123
        %v5125 = vpop.xlane.xlu0 %5124
        %v5126 = vadd.f32 %v5079, %v5080
        %5127 = vadd.xlane.f32.xlu0 %v5126
        %v5128 = vpop.xlane.xlu0 %5127
        %v5129 = vpack.c.bf16 %v5051, %v5049
        %v5130 = vpack.c.bf16 %v5052, %v5050
        %v5131 = vpack.c.bf16 %v5055, %v5053
        %v5132 = vpack.c.bf16 %v5056, %v5054
        %v5133 = vpack.c.bf16 %v5059, %v5057
        %v5134 = vpack.c.bf16 %v5060, %v5058
        %v5135 = vpack.c.bf16 %v5063, %v5061
        %v5136 = vpack.c.bf16 %v5064, %v5062
        %v5137 = vpack.c.bf16 %v5067, %v5065
        %v5138 = vpack.c.bf16 %v5068, %v5066
        %v5139 = vpack.c.bf16 %v5071, %v5069
        %v5140 = vpack.c.bf16 %v5072, %v5070
        %v5141 = vpack.c.bf16 %v5075, %v5073
        %v5142 = vpack.c.bf16 %v5076, %v5074
        %v5143 = vpack.c.bf16 %v5079, %v5077
        %v5144 = vpack.c.bf16 %v5080, %v5078
        %5145 = vrot.lane.b32.xlu0 %v1498, 88
        %v5146 = vpop.permute.xlu0 %5145
        %5147 = vrot.lane.b32.xlu0 %v1499, 88
        %v5148 = vpop.permute.xlu0 %5147
        %5149 = vrot.lane.b32.xlu0 %v1500, 88
        %v5150 = vpop.permute.xlu0 %5149
        %5151 = vrot.lane.b32.xlu0 %v1501, 88
        %v5152 = vpop.permute.xlu0 %5151
        %5153 = vrot.lane.b32.xlu0 %v1502, 88
        %v5154 = vpop.permute.xlu0 %5153
        %5155 = vrot.lane.b32.xlu0 %v1503, 88
        %v5156 = vpop.permute.xlu0 %5155
        %5157 = vrot.lane.b32.xlu0 %v1504, 88
        %v5158 = vpop.permute.xlu0 %5157
        %5159 = vrot.lane.b32.xlu0 %v1505, 88
        %v5160 = vpop.permute.xlu0 %5159
        %5161 = vrot.lane.b32.xlu0 %v1506, 88
        %v5162 = vpop.permute.xlu0 %5161
        %5163 = vrot.lane.b32.xlu0 %v1507, 88
        %v5164 = vpop.permute.xlu0 %5163
        %5165 = vrot.lane.b32.xlu0 %v1508, 88
        %v5166 = vpop.permute.xlu0 %5165
        %5167 = vrot.lane.b32.xlu0 %v1509, 88
        %v5168 = vpop.permute.xlu0 %5167
        %5169 = vrot.lane.b32.xlu0 %v1510, 88
        %v5170 = vpop.permute.xlu0 %5169
        %5171 = vrot.lane.b32.xlu0 %v1511, 88
        %v5172 = vpop.permute.xlu0 %5171
        %5173 = vrot.lane.b32.xlu0 %v1512, 88
        %v5174 = vpop.permute.xlu0 %5173
        %5175 = vrot.lane.b32.xlu0 %v1513, 88
        %v5176 = vpop.permute.xlu0 %5175
        %5193 = vmatprep.subr.bf16.mxu0 0
        %5194 = vmatpush1.bf16.msra.mxu0 %v5160
        %5195 = vmatprep.subr.bf16.mxu0 0
        %5196 = vmatpush1.bf16.msra.mxu0 %v5158
        %5197 = vmatprep.subr.bf16.mxu0 0
        %5198 = vmatpush1.bf16.msra.mxu0 %v5156
        %5199 = vmatprep.subr.bf16.mxu0 0
        %5200 = vmatpush1.bf16.msra.mxu0 %v5154
        %5201 = vmatprep.subr.bf16.mxu0 0
        %5202 = vmatpush1.bf16.msra.mxu0 %v5152
        %5203 = vmatprep.subr.bf16.mxu0 0
        %5204 = vmatpush1.bf16.msra.mxu0 %v5150
        %5205 = vmatprep.subr.bf16.mxu0 0
        %5206 = vmatpush1.bf16.msra.mxu0 %v5148
        %5207 = vmatprep.subr.bf16.mxu0 0
        %5208 = vmatpush1.bf16.msra.mxu0 %v5146
        %5209 = vmatprep.subr.bf16.mxu0 0
        %5210 = vmatpush2.bf16.msra.mxu0 %v5176
        %5211 = vmatprep.subr.bf16.mxu0 0
        %5212 = vmatpush2.bf16.msra.mxu0 %v5174
        %5213 = vmatprep.subr.bf16.mxu0 0
        %5214 = vmatpush2.bf16.msra.mxu0 %v5172
        %5215 = vmatprep.subr.bf16.mxu0 0
        %5216 = vmatpush2.bf16.msra.mxu0 %v5170
        %5217 = vmatprep.subr.bf16.mxu0 0
        %5218 = vmatpush2.bf16.msra.mxu0 %v5168
        %5219 = vmatprep.subr.bf16.mxu0 0
        %5220 = vmatpush2.bf16.msra.mxu0 %v5166
        %5221 = vmatprep.subr.bf16.mxu0 0
        %5222 = vmatpush2.bf16.msra.mxu0 %v5164
        %5223 = vmatprep.subr.bf16.mxu0 0
        %5224 = vmatpush2.bf16.msra.mxu0 %v5162
        %5225 = vmatprep.mubr.bf16.mxu0 %v5130
        %5226 = vmatmul.mubr.bf16.gmra.mxu0 %v5129
        %v5227 = vpop.f32.mrf.mxu0
        %v5228 = vadd.f32 0.0, %v5227
        %v5229 = vpop.f32.mrf.mxu0
        %v5230 = vpop.f32.mrf.mxu0
        %v5231 = vadd.f32 0.0, %v5230
        %v5232 = vpop.f32.mrf.mxu0
        %5233 = vmatprep.mubr.bf16.mxu0 %v5132
        %5234 = vmatmul.mubr.bf16.gmra.mxu0 %v5131
        %v5235 = vpop.f32.mrf.mxu0
        %v5236 = vadd.f32 0.0, %v5235
        %v5237 = vpop.f32.mrf.mxu0
        %v5238 = vpop.f32.mrf.mxu0
        %v5239 = vadd.f32 0.0, %v5238
        %v5240 = vpop.f32.mrf.mxu0
        %5241 = vmatprep.mubr.bf16.mxu0 %v5134
        %5242 = vmatmul.mubr.bf16.gmra.mxu0 %v5133
        %v5243 = vpop.f32.mrf.mxu0
        %v5244 = vadd.f32 0.0, %v5243
        %v5245 = vpop.f32.mrf.mxu0
        %v5246 = vpop.f32.mrf.mxu0
        %v5247 = vadd.f32 0.0, %v5246
        %v5248 = vpop.f32.mrf.mxu0
        %5249 = vmatprep.mubr.bf16.mxu0 %v5136
        %5250 = vmatmul.mubr.bf16.gmra.mxu0 %v5135
        %v5251 = vpop.f32.mrf.mxu0
        %v5252 = vadd.f32 0.0, %v5251
        %v5253 = vpop.f32.mrf.mxu0
        %v5254 = vpop.f32.mrf.mxu0
        %v5255 = vadd.f32 0.0, %v5254
        %v5256 = vpop.f32.mrf.mxu0
        %5257 = vmatprep.mubr.bf16.mxu0 %v5138
        %5258 = vmatmul.mubr.bf16.gmra.mxu0 %v5137
        %v5259 = vpop.f32.mrf.mxu0
        %v5260 = vadd.f32 0.0, %v5259
        %v5261 = vpop.f32.mrf.mxu0
        %v5262 = vpop.f32.mrf.mxu0
        %v5263 = vadd.f32 0.0, %v5262
        %v5264 = vpop.f32.mrf.mxu0
        %5265 = vmatprep.mubr.bf16.mxu0 %v5140
        %5266 = vmatmul.mubr.bf16.gmra.mxu0 %v5139
        %v5267 = vpop.f32.mrf.mxu0
        %v5268 = vadd.f32 0.0, %v5267
        %v5269 = vpop.f32.mrf.mxu0
        %v5270 = vpop.f32.mrf.mxu0
        %v5271 = vadd.f32 0.0, %v5270
        %v5272 = vpop.f32.mrf.mxu0
        %5273 = vmatprep.mubr.bf16.mxu0 %v5142
        %5274 = vmatmul.mubr.bf16.gmra.mxu0 %v5141
        %v5275 = vpop.f32.mrf.mxu0
        %v5276 = vadd.f32 0.0, %v5275
        %v5277 = vpop.f32.mrf.mxu0
        %v5278 = vpop.f32.mrf.mxu0
        %v5279 = vadd.f32 0.0, %v5278
        %v5280 = vpop.f32.mrf.mxu0
        %5281 = vmatprep.mubr.bf16.mxu0 %v5144
        %5282 = vmatmul.mubr.bf16.gmra.mxu0 %v5143
        %v5283 = vpop.f32.mrf.mxu0
        %v5284 = vadd.f32 0.0, %v5283
        %v5285 = vpop.f32.mrf.mxu0
        %v5286 = vpop.f32.mrf.mxu0
        %v5287 = vadd.f32 0.0, %v5286
        %v5288 = vpop.f32.mrf.mxu0
        %5289 = vdwg.mxu0
        %v5290 = vrcp.pop %v5083
        %v5291 = vrcp.pop %v5086
        %v5292 = vrcp.pop %v5089
        %v5293 = vrcp.pop %v5092
        %v5294 = vrcp.pop %v5095
        %v5295 = vrcp.pop %v5098
        %v5296 = vrcp.pop %v5101
        %v5297 = vrcp.pop %v5104
        %v5298 = vrcp.pop %v5107
        %v5299 = vrcp.pop %v5110
        %v5300 = vrcp.pop %v5113
        %v5301 = vrcp.pop %v5116
        %v5302 = vrcp.pop %v5119
        %v5303 = vrcp.pop %v5122
        %v5304 = vrcp.pop %v5125
        %v5305 = vrcp.pop %v5128
        %v5306 = vmul.f32 %v5228, %v5290
        %v5307 = vmul.f32 %v5231, %v5291
        %v5308 = vmul.f32 %v5236, %v5292
        %v5309 = vmul.f32 %v5239, %v5293
        %v5310 = vmul.f32 %v5244, %v5294
        %v5311 = vmul.f32 %v5247, %v5295
        %v5312 = vmul.f32 %v5252, %v5296
        %v5313 = vmul.f32 %v5255, %v5297
        %v5314 = vmul.f32 %v5260, %v5298
        %v5315 = vmul.f32 %v5263, %v5299
        %v5316 = vmul.f32 %v5268, %v5300
        %v5317 = vmul.f32 %v5271, %v5301
        %v5318 = vmul.f32 %v5276, %v5302
        %v5319 = vmul.f32 %v5279, %v5303
        %v5320 = vmul.f32 %v5284, %v5304
        %v5321 = vmul.f32 %v5287, %v5305
        %5322 = vrot.lane.b32.xlu0 %v1663, 88
        %v5323 = vpop.permute.xlu0 %5322
        %v5325 = vadd.f32 %v5306, %v5323
        %v5326 = vadd.f32 %v5307, %v5323
        %v5327 = vadd.f32 %v5308, %v5323
        %v5328 = vadd.f32 %v5309, %v5323
        %v5329 = vadd.f32 %v5310, %v5323
        %v5330 = vadd.f32 %v5311, %v5323
        %v5331 = vadd.f32 %v5312, %v5323
        %v5332 = vadd.f32 %v5313, %v5323
        %v5333 = vadd.f32 %v5314, %v5323
        %v5334 = vadd.f32 %v5315, %v5323
        %v5335 = vadd.f32 %v5316, %v5323
        %v5336 = vadd.f32 %v5317, %v5323
        %v5337 = vadd.f32 %v5318, %v5323
        %v5338 = vadd.f32 %v5319, %v5323
        %v5339 = vadd.f32 %v5320, %v5323
        %v5340 = vadd.f32 %v5321, %v5323
        %vm5341 = vcmp.ge.f32.partialorder %v5325, 0.0
        %vm5342 = vcmp.ge.f32.partialorder %v5326, 0.0
        %vm5343 = vcmp.ge.f32.partialorder %v5327, 0.0
        %vm5344 = vcmp.ge.f32.partialorder %v5328, 0.0
        %vm5345 = vcmp.ge.f32.partialorder %v5329, 0.0
        %vm5346 = vcmp.ge.f32.partialorder %v5330, 0.0
        %vm5347 = vcmp.ge.f32.partialorder %v5331, 0.0
        %vm5348 = vcmp.ge.f32.partialorder %v5332, 0.0
        %vm5349 = vcmp.ge.f32.partialorder %v5333, 0.0
        %vm5350 = vcmp.ge.f32.partialorder %v5334, 0.0
        %vm5351 = vcmp.ge.f32.partialorder %v5335, 0.0
        %vm5352 = vcmp.ge.f32.partialorder %v5336, 0.0
        %vm5353 = vcmp.ge.f32.partialorder %v5337, 0.0
        %vm5354 = vcmp.ge.f32.partialorder %v5338, 0.0
        %vm5355 = vcmp.ge.f32.partialorder %v5339, 0.0
        %vm5356 = vcmp.ge.f32.partialorder %v5340, 0.0
        %v5357 = vmul.f32 %v5325, 0.01
        %v5358 = vmul.f32 %v5326, 0.01
        %v5359 = vmul.f32 %v5327, 0.01
        %v5360 = vmul.f32 %v5328, 0.01
        %v5361 = vmul.f32 %v5329, 0.01
        %v5362 = vmul.f32 %v5330, 0.01
        %v5363 = vmul.f32 %v5331, 0.01
        %v5364 = vmul.f32 %v5332, 0.01
        %v5365 = vmul.f32 %v5333, 0.01
        %v5366 = vmul.f32 %v5334, 0.01
        %v5367 = vmul.f32 %v5335, 0.01
        %v5368 = vmul.f32 %v5336, 0.01
        %v5369 = vmul.f32 %v5337, 0.01
        %v5370 = vmul.f32 %v5338, 0.01
        %v5371 = vmul.f32 %v5339, 0.01
        %v5372 = vmul.f32 %v5340, 0.01
        %v5373 = vsel %vm5341, %v5325, %v5357
        %v5374 = vsel %vm5342, %v5326, %v5358
        %v5375 = vsel %vm5343, %v5327, %v5359
        %v5376 = vsel %vm5344, %v5328, %v5360
        %v5377 = vsel %vm5345, %v5329, %v5361
        %v5378 = vsel %vm5346, %v5330, %v5362
        %v5379 = vsel %vm5347, %v5331, %v5363
        %v5380 = vsel %vm5348, %v5332, %v5364
        %v5381 = vsel %vm5349, %v5333, %v5365
        %v5382 = vsel %vm5350, %v5334, %v5366
        %v5383 = vsel %vm5351, %v5335, %v5367
        %v5384 = vsel %vm5352, %v5336, %v5368
        %v5385 = vsel %vm5353, %v5337, %v5369
        %v5386 = vsel %vm5354, %v5338, %v5370
        %v5387 = vsel %vm5355, %v5339, %v5371
        %v5388 = vsel %vm5356, %v5340, %v5372
        %v5389 = vtanh.pop %v5373
        %v5390 = vtanh.pop %v5374
        %v5391 = vtanh.pop %v5375
        %v5392 = vtanh.pop %v5376
        %v5393 = vtanh.pop %v5377
        %v5394 = vtanh.pop %v5378
        %v5395 = vtanh.pop %v5379
        %v5396 = vtanh.pop %v5380
        %v5397 = vtanh.pop %v5381
        %v5398 = vtanh.pop %v5382
        %v5399 = vtanh.pop %v5383
        %v5400 = vtanh.pop %v5384
        %v5401 = vtanh.pop %v5385
        %v5402 = vtanh.pop %v5386
        %v5403 = vtanh.pop %v5387
        %v5404 = vtanh.pop %v5388
        %5405 = vset.pattern.permute.xlu0 6
        %5406 = vperm.xlu0 %5405, %v783
        %v5407 = vpop.permute.xlu0 %5406
        %5409 = vset.pattern.permute.xlu0 6
        %5410 = vperm.xlu0 %5409, %v784
        %v5411 = vpop.permute.xlu0 %5410
        %5413 = vset.pattern.permute.xlu0 6
        %5414 = vperm.xlu0 %5413, %v785
        %v5415 = vpop.permute.xlu0 %5414
        %5417 = vset.pattern.permute.xlu0 6
        %5418 = vperm.xlu0 %5417, %v786
        %v5419 = vpop.permute.xlu0 %5418
        %5421 = vset.pattern.permute.xlu0 6
        %5422 = vperm.xlu0 %5421, %v787
        %v5423 = vpop.permute.xlu0 %5422
        %5425 = vset.pattern.permute.xlu0 6
        %5426 = vperm.xlu0 %5425, %v788
        %v5427 = vpop.permute.xlu0 %5426
        %5429 = vset.pattern.permute.xlu0 6
        %5430 = vperm.xlu0 %5429, %v789
        %v5431 = vpop.permute.xlu0 %5430
        %5433 = vset.pattern.permute.xlu0 6
        %5434 = vperm.xlu0 %5433, %v790
        %v5435 = vpop.permute.xlu0 %5434
        %5437 = vset.pattern.permute.xlu0 6
        %5438 = vperm.xlu0 %5437, %v791
        %v5439 = vpop.permute.xlu0 %5438
        %5441 = vset.pattern.permute.xlu0 6
        %5442 = vperm.xlu0 %5441, %v792
        %v5443 = vpop.permute.xlu0 %5442
        %5445 = vset.pattern.permute.xlu0 6
        %5446 = vperm.xlu0 %5445, %v793
        %v5447 = vpop.permute.xlu0 %5446
        %5449 = vset.pattern.permute.xlu0 6
        %5450 = vperm.xlu0 %5449, %v794
        %v5451 = vpop.permute.xlu0 %5450
        %5453 = vset.pattern.permute.xlu0 6
        %5454 = vperm.xlu0 %5453, %v795
        %v5455 = vpop.permute.xlu0 %5454
        %5457 = vset.pattern.permute.xlu0 6
        %5458 = vperm.xlu0 %5457, %v796
        %v5459 = vpop.permute.xlu0 %5458
        %5461 = vset.pattern.permute.xlu0 6
        %5462 = vperm.xlu0 %5461, %v797
        %v5463 = vpop.permute.xlu0 %5462
        %5465 = vset.pattern.permute.xlu0 6
        %5466 = vperm.xlu0 %5465, %v798
        %v5467 = vpop.permute.xlu0 %5466
        %v5469 = vlaneseq
        %v5470 = vshrl.u32 %v5469, 7
        %v5471 = vsub.s32 6, %v5470
        %v5472 = vrot.slane %v799, %v5471
        %v5473 = vlaneseq
        %v5474 = vshrl.u32 %v5473, 7
        %v5475 = vsub.s32 6, %v5474
        %v5476 = vrot.slane %v800, %v5475
        %v5477 = vadd.f32 %v5407, %v5472
        %v5478 = vadd.f32 %v5407, %v5476
        %v5479 = vadd.f32 %v5411, %v5472
        %v5480 = vadd.f32 %v5411, %v5476
        %v5481 = vadd.f32 %v5415, %v5472
        %v5482 = vadd.f32 %v5415, %v5476
        %v5483 = vadd.f32 %v5419, %v5472
        %v5484 = vadd.f32 %v5419, %v5476
        %v5485 = vadd.f32 %v5423, %v5472
        %v5486 = vadd.f32 %v5423, %v5476
        %v5487 = vadd.f32 %v5427, %v5472
        %v5488 = vadd.f32 %v5427, %v5476
        %v5489 = vadd.f32 %v5431, %v5472
        %v5490 = vadd.f32 %v5431, %v5476
        %v5491 = vadd.f32 %v5435, %v5472
        %v5492 = vadd.f32 %v5435, %v5476
        %v5493 = vadd.f32 %v5439, %v5472
        %v5494 = vadd.f32 %v5439, %v5476
        %v5495 = vadd.f32 %v5443, %v5472
        %v5496 = vadd.f32 %v5443, %v5476
        %v5497 = vadd.f32 %v5447, %v5472
        %v5498 = vadd.f32 %v5447, %v5476
        %v5499 = vadd.f32 %v5451, %v5472
        %v5500 = vadd.f32 %v5451, %v5476
        %v5501 = vadd.f32 %v5455, %v5472
        %v5502 = vadd.f32 %v5455, %v5476
        %v5503 = vadd.f32 %v5459, %v5472
        %v5504 = vadd.f32 %v5459, %v5476
        %v5505 = vadd.f32 %v5463, %v5472
        %v5506 = vadd.f32 %v5463, %v5476
        %v5507 = vadd.f32 %v5467, %v5472
        %v5508 = vadd.f32 %v5467, %v5476
        %vm5509 = vcmp.ge.f32.partialorder %v5477, 0.0
        %vm5510 = vcmp.ge.f32.partialorder %v5478, 0.0
        %vm5511 = vcmp.ge.f32.partialorder %v5479, 0.0
        %vm5512 = vcmp.ge.f32.partialorder %v5480, 0.0
        %vm5513 = vcmp.ge.f32.partialorder %v5481, 0.0
        %vm5514 = vcmp.ge.f32.partialorder %v5482, 0.0
        %vm5515 = vcmp.ge.f32.partialorder %v5483, 0.0
        %vm5516 = vcmp.ge.f32.partialorder %v5484, 0.0
        %vm5517 = vcmp.ge.f32.partialorder %v5485, 0.0
        %vm5518 = vcmp.ge.f32.partialorder %v5486, 0.0
        %vm5519 = vcmp.ge.f32.partialorder %v5487, 0.0
        %vm5520 = vcmp.ge.f32.partialorder %v5488, 0.0
        %vm5521 = vcmp.ge.f32.partialorder %v5489, 0.0
        %vm5522 = vcmp.ge.f32.partialorder %v5490, 0.0
        %vm5523 = vcmp.ge.f32.partialorder %v5491, 0.0
        %vm5524 = vcmp.ge.f32.partialorder %v5492, 0.0
        %vm5525 = vcmp.ge.f32.partialorder %v5493, 0.0
        %vm5526 = vcmp.ge.f32.partialorder %v5494, 0.0
        %vm5527 = vcmp.ge.f32.partialorder %v5495, 0.0
        %vm5528 = vcmp.ge.f32.partialorder %v5496, 0.0
        %vm5529 = vcmp.ge.f32.partialorder %v5497, 0.0
        %vm5530 = vcmp.ge.f32.partialorder %v5498, 0.0
        %vm5531 = vcmp.ge.f32.partialorder %v5499, 0.0
        %vm5532 = vcmp.ge.f32.partialorder %v5500, 0.0
        %vm5533 = vcmp.ge.f32.partialorder %v5501, 0.0
        %vm5534 = vcmp.ge.f32.partialorder %v5502, 0.0
        %vm5535 = vcmp.ge.f32.partialorder %v5503, 0.0
        %vm5536 = vcmp.ge.f32.partialorder %v5504, 0.0
        %vm5537 = vcmp.ge.f32.partialorder %v5505, 0.0
        %vm5538 = vcmp.ge.f32.partialorder %v5506, 0.0
        %vm5539 = vcmp.ge.f32.partialorder %v5507, 0.0
        %vm5540 = vcmp.ge.f32.partialorder %v5508, 0.0
        %v5541 = vmul.f32 %v5477, 0.2
        %v5542 = vmul.f32 %v5478, 0.2
        %v5543 = vmul.f32 %v5479, 0.2
        %v5544 = vmul.f32 %v5480, 0.2
        %v5545 = vmul.f32 %v5481, 0.2
        %v5546 = vmul.f32 %v5482, 0.2
        %v5547 = vmul.f32 %v5483, 0.2
        %v5548 = vmul.f32 %v5484, 0.2
        %v5549 = vmul.f32 %v5485, 0.2
        %v5550 = vmul.f32 %v5486, 0.2
        %v5551 = vmul.f32 %v5487, 0.2
        %v5552 = vmul.f32 %v5488, 0.2
        %v5553 = vmul.f32 %v5489, 0.2
        %v5554 = vmul.f32 %v5490, 0.2
        %v5555 = vmul.f32 %v5491, 0.2
        %v5556 = vmul.f32 %v5492, 0.2
        %v5557 = vmul.f32 %v5493, 0.2
        %v5558 = vmul.f32 %v5494, 0.2
        %v5559 = vmul.f32 %v5495, 0.2
        %v5560 = vmul.f32 %v5496, 0.2
        %v5561 = vmul.f32 %v5497, 0.2
        %v5562 = vmul.f32 %v5498, 0.2
        %v5563 = vmul.f32 %v5499, 0.2
        %v5564 = vmul.f32 %v5500, 0.2
        %v5565 = vmul.f32 %v5501, 0.2
        %v5566 = vmul.f32 %v5502, 0.2
        %v5567 = vmul.f32 %v5503, 0.2
        %v5568 = vmul.f32 %v5504, 0.2
        %v5569 = vmul.f32 %v5505, 0.2
        %v5570 = vmul.f32 %v5506, 0.2
        %v5571 = vmul.f32 %v5507, 0.2
        %v5572 = vmul.f32 %v5508, 0.2
        %v5573 = vsel %vm5509, %v5477, %v5541
        %v5574 = vsel %vm5510, %v5478, %v5542
        %v5575 = vsel %vm5511, %v5479, %v5543
        %v5576 = vsel %vm5512, %v5480, %v5544
        %v5577 = vsel %vm5513, %v5481, %v5545
        %v5578 = vsel %vm5514, %v5482, %v5546
        %v5579 = vsel %vm5515, %v5483, %v5547
        %v5580 = vsel %vm5516, %v5484, %v5548
        %v5581 = vsel %vm5517, %v5485, %v5549
        %v5582 = vsel %vm5518, %v5486, %v5550
        %v5583 = vsel %vm5519, %v5487, %v5551
        %v5584 = vsel %vm5520, %v5488, %v5552
        %v5585 = vsel %vm5521, %v5489, %v5553
        %v5586 = vsel %vm5522, %v5490, %v5554
        %v5587 = vsel %vm5523, %v5491, %v5555
        %v5588 = vsel %vm5524, %v5492, %v5556
        %v5589 = vsel %vm5525, %v5493, %v5557
        %v5590 = vsel %vm5526, %v5494, %v5558
        %v5591 = vsel %vm5527, %v5495, %v5559
        %v5592 = vsel %vm5528, %v5496, %v5560
        %v5593 = vsel %vm5529, %v5497, %v5561
        %v5594 = vsel %vm5530, %v5498, %v5562
        %v5595 = vsel %vm5531, %v5499, %v5563
        %v5596 = vsel %vm5532, %v5500, %v5564
        %v5597 = vsel %vm5533, %v5501, %v5565
        %v5598 = vsel %vm5534, %v5502, %v5566
        %v5599 = vsel %vm5535, %v5503, %v5567
        %v5600 = vsel %vm5536, %v5504, %v5568
        %v5601 = vsel %vm5537, %v5505, %v5569
        %v5602 = vsel %vm5538, %v5506, %v5570
        %v5603 = vsel %vm5539, %v5507, %v5571
        %v5604 = vsel %vm5540, %v5508, %v5572
        %v5605 = vsel %vm1098, %v5573, -1e+30
        %v5606 = vsel %vm1099, %v5574, -1e+30
        %v5607 = vsel %vm1100, %v5575, -1e+30
        %v5608 = vsel %vm1101, %v5576, -1e+30
        %v5609 = vsel %vm1102, %v5577, -1e+30
        %v5610 = vsel %vm1103, %v5578, -1e+30
        %v5611 = vsel %vm1104, %v5579, -1e+30
        %v5612 = vsel %vm1105, %v5580, -1e+30
        %v5613 = vsel %vm1106, %v5581, -1e+30
        %v5614 = vsel %vm1107, %v5582, -1e+30
        %v5615 = vsel %vm1108, %v5583, -1e+30
        %v5616 = vsel %vm1109, %v5584, -1e+30
        %v5617 = vsel %vm1110, %v5585, -1e+30
        %v5618 = vsel %vm1111, %v5586, -1e+30
        %v5619 = vsel %vm1112, %v5587, -1e+30
        %v5620 = vsel %vm1113, %v5588, -1e+30
        %v5621 = vsel %vm1114, %v5589, -1e+30
        %v5622 = vsel %vm1115, %v5590, -1e+30
        %v5623 = vsel %vm1116, %v5591, -1e+30
        %v5624 = vsel %vm1117, %v5592, -1e+30
        %v5625 = vsel %vm1118, %v5593, -1e+30
        %v5626 = vsel %vm1119, %v5594, -1e+30
        %v5627 = vsel %vm1120, %v5595, -1e+30
        %v5628 = vsel %vm1121, %v5596, -1e+30
        %v5629 = vsel %vm1122, %v5597, -1e+30
        %v5630 = vsel %vm1123, %v5598, -1e+30
        %v5631 = vsel %vm1124, %v5599, -1e+30
        %v5632 = vsel %vm1125, %v5600, -1e+30
        %v5633 = vsel %vm1126, %v5601, -1e+30
        %v5634 = vsel %vm1127, %v5602, -1e+30
        %v5635 = vsel %vm1128, %v5603, -1e+30
        %v5636 = vsel %vm1129, %v5604, -1e+30
        %v5637 = vmax.f32 %v5605, %v5606
        %5638 = vmax.xlane.f32.xlu0 %v5637
        %v5639 = vpop.xlane.xlu0 %5638
        %v5640 = vmax.f32 %v5607, %v5608
        %5641 = vmax.xlane.f32.xlu0 %v5640
        %v5642 = vpop.xlane.xlu0 %5641
        %v5643 = vmax.f32 %v5609, %v5610
        %5644 = vmax.xlane.f32.xlu0 %v5643
        %v5645 = vpop.xlane.xlu0 %5644
        %v5646 = vmax.f32 %v5611, %v5612
        %5647 = vmax.xlane.f32.xlu0 %v5646
        %v5648 = vpop.xlane.xlu0 %5647
        %v5649 = vmax.f32 %v5613, %v5614
        %5650 = vmax.xlane.f32.xlu0 %v5649
        %v5651 = vpop.xlane.xlu0 %5650
        %v5652 = vmax.f32 %v5615, %v5616
        %5653 = vmax.xlane.f32.xlu0 %v5652
        %v5654 = vpop.xlane.xlu0 %5653
        %v5655 = vmax.f32 %v5617, %v5618
        %5656 = vmax.xlane.f32.xlu0 %v5655
        %v5657 = vpop.xlane.xlu0 %5656
        %v5658 = vmax.f32 %v5619, %v5620
        %5659 = vmax.xlane.f32.xlu0 %v5658
        %v5660 = vpop.xlane.xlu0 %5659
        %v5661 = vmax.f32 %v5621, %v5622
        %5662 = vmax.xlane.f32.xlu0 %v5661
        %v5663 = vpop.xlane.xlu0 %5662
        %v5664 = vmax.f32 %v5623, %v5624
        %5665 = vmax.xlane.f32.xlu0 %v5664
        %v5666 = vpop.xlane.xlu0 %5665
        %v5667 = vmax.f32 %v5625, %v5626
        %5668 = vmax.xlane.f32.xlu0 %v5667
        %v5669 = vpop.xlane.xlu0 %5668
        %v5670 = vmax.f32 %v5627, %v5628
        %5671 = vmax.xlane.f32.xlu0 %v5670
        %v5672 = vpop.xlane.xlu0 %5671
        %v5673 = vmax.f32 %v5629, %v5630
        %5674 = vmax.xlane.f32.xlu0 %v5673
        %v5675 = vpop.xlane.xlu0 %5674
        %v5676 = vmax.f32 %v5631, %v5632
        %5677 = vmax.xlane.f32.xlu0 %v5676
        %v5678 = vpop.xlane.xlu0 %5677
        %v5679 = vmax.f32 %v5633, %v5634
        %5680 = vmax.xlane.f32.xlu0 %v5679
        %v5681 = vpop.xlane.xlu0 %5680
        %v5682 = vmax.f32 %v5635, %v5636
        %5683 = vmax.xlane.f32.xlu0 %v5682
        %v5684 = vpop.xlane.xlu0 %5683
        %v5685 = vsub.f32 %v5605, %v5639
        %v5686 = vsub.f32 %v5606, %v5639
        %v5687 = vsub.f32 %v5607, %v5642
        %v5688 = vsub.f32 %v5608, %v5642
        %v5689 = vsub.f32 %v5609, %v5645
        %v5690 = vsub.f32 %v5610, %v5645
        %v5691 = vsub.f32 %v5611, %v5648
        %v5692 = vsub.f32 %v5612, %v5648
        %v5693 = vsub.f32 %v5613, %v5651
        %v5694 = vsub.f32 %v5614, %v5651
        %v5695 = vsub.f32 %v5615, %v5654
        %v5696 = vsub.f32 %v5616, %v5654
        %v5697 = vsub.f32 %v5617, %v5657
        %v5698 = vsub.f32 %v5618, %v5657
        %v5699 = vsub.f32 %v5619, %v5660
        %v5700 = vsub.f32 %v5620, %v5660
        %v5701 = vsub.f32 %v5621, %v5663
        %v5702 = vsub.f32 %v5622, %v5663
        %v5703 = vsub.f32 %v5623, %v5666
        %v5704 = vsub.f32 %v5624, %v5666
        %v5705 = vsub.f32 %v5625, %v5669
        %v5706 = vsub.f32 %v5626, %v5669
        %v5707 = vsub.f32 %v5627, %v5672
        %v5708 = vsub.f32 %v5628, %v5672
        %v5709 = vsub.f32 %v5629, %v5675
        %v5710 = vsub.f32 %v5630, %v5675
        %v5711 = vsub.f32 %v5631, %v5678
        %v5712 = vsub.f32 %v5632, %v5678
        %v5713 = vsub.f32 %v5633, %v5681
        %v5714 = vsub.f32 %v5634, %v5681
        %v5715 = vsub.f32 %v5635, %v5684
        %v5716 = vsub.f32 %v5636, %v5684
        %v5717 = vmul.f32 %v5685, 1.442695
        %v5718 = vpow.pop %v5717
        %v5719 = vmul.f32 %v5686, 1.442695
        %v5720 = vpow.pop %v5719
        %v5721 = vmul.f32 %v5687, 1.442695
        %v5722 = vpow.pop %v5721
        %v5723 = vmul.f32 %v5688, 1.442695
        %v5724 = vpow.pop %v5723
        %v5725 = vmul.f32 %v5689, 1.442695
        %v5726 = vpow.pop %v5725
        %v5727 = vmul.f32 %v5690, 1.442695
        %v5728 = vpow.pop %v5727
        %v5729 = vmul.f32 %v5691, 1.442695
        %v5730 = vpow.pop %v5729
        %v5731 = vmul.f32 %v5692, 1.442695
        %v5732 = vpow.pop %v5731
        %v5733 = vmul.f32 %v5693, 1.442695
        %v5734 = vpow.pop %v5733
        %v5735 = vmul.f32 %v5694, 1.442695
        %v5736 = vpow.pop %v5735
        %v5737 = vmul.f32 %v5695, 1.442695
        %v5738 = vpow.pop %v5737
        %v5739 = vmul.f32 %v5696, 1.442695
        %v5740 = vpow.pop %v5739
        %v5741 = vmul.f32 %v5697, 1.442695
        %v5742 = vpow.pop %v5741
        %v5743 = vmul.f32 %v5698, 1.442695
        %v5744 = vpow.pop %v5743
        %v5745 = vmul.f32 %v5699, 1.442695
        %v5746 = vpow.pop %v5745
        %v5747 = vmul.f32 %v5700, 1.442695
        %v5748 = vpow.pop %v5747
        %v5749 = vmul.f32 %v5701, 1.442695
        %v5750 = vpow.pop %v5749
        %v5751 = vmul.f32 %v5702, 1.442695
        %v5752 = vpow.pop %v5751
        %v5753 = vmul.f32 %v5703, 1.442695
        %v5754 = vpow.pop %v5753
        %v5755 = vmul.f32 %v5704, 1.442695
        %v5756 = vpow.pop %v5755
        %v5757 = vmul.f32 %v5705, 1.442695
        %v5758 = vpow.pop %v5757
        %v5759 = vmul.f32 %v5706, 1.442695
        %v5760 = vpow.pop %v5759
        %v5761 = vmul.f32 %v5707, 1.442695
        %v5762 = vpow.pop %v5761
        %v5763 = vmul.f32 %v5708, 1.442695
        %v5764 = vpow.pop %v5763
        %v5765 = vmul.f32 %v5709, 1.442695
        %v5766 = vpow.pop %v5765
        %v5767 = vmul.f32 %v5710, 1.442695
        %v5768 = vpow.pop %v5767
        %v5769 = vmul.f32 %v5711, 1.442695
        %v5770 = vpow.pop %v5769
        %v5771 = vmul.f32 %v5712, 1.442695
        %v5772 = vpow.pop %v5771
        %v5773 = vmul.f32 %v5713, 1.442695
        %v5774 = vpow.pop %v5773
        %v5775 = vmul.f32 %v5714, 1.442695
        %v5776 = vpow.pop %v5775
        %v5777 = vmul.f32 %v5715, 1.442695
        %v5778 = vpow.pop %v5777
        %v5779 = vmul.f32 %v5716, 1.442695
        %v5780 = vpow.pop %v5779
        %v5781 = vmul.f32 %v1306, %v5718
        %v5782 = vmul.f32 %v1307, %v5720
        %v5783 = vmul.f32 %v1308, %v5722
        %v5784 = vmul.f32 %v1309, %v5724
        %v5785 = vmul.f32 %v1310, %v5726
        %v5786 = vmul.f32 %v1311, %v5728
        %v5787 = vmul.f32 %v1312, %v5730
        %v5788 = vmul.f32 %v1313, %v5732
        %v5789 = vmul.f32 %v1314, %v5734
        %v5790 = vmul.f32 %v1315, %v5736
        %v5791 = vmul.f32 %v1316, %v5738
        %v5792 = vmul.f32 %v1317, %v5740
        %v5793 = vmul.f32 %v1318, %v5742
        %v5794 = vmul.f32 %v1319, %v5744
        %v5795 = vmul.f32 %v1320, %v5746
        %v5796 = vmul.f32 %v1321, %v5748
        %v5797 = vmul.f32 %v1322, %v5750
        %v5798 = vmul.f32 %v1323, %v5752
        %v5799 = vmul.f32 %v1324, %v5754
        %v5800 = vmul.f32 %v1325, %v5756
        %v5801 = vmul.f32 %v1326, %v5758
        %v5802 = vmul.f32 %v1327, %v5760
        %v5803 = vmul.f32 %v1328, %v5762
        %v5804 = vmul.f32 %v1329, %v5764
        %v5805 = vmul.f32 %v1330, %v5766
        %v5806 = vmul.f32 %v1331, %v5768
        %v5807 = vmul.f32 %v1332, %v5770
        %v5808 = vmul.f32 %v1333, %v5772
        %v5809 = vmul.f32 %v1334, %v5774
        %v5810 = vmul.f32 %v1335, %v5776
        %v5811 = vmul.f32 %v1336, %v5778
        %v5812 = vmul.f32 %v1337, %v5780
        %v5813 = vadd.f32 %v5781, %v5782
        %5814 = vadd.xlane.f32.xlu0 %v5813
        %v5815 = vpop.xlane.xlu0 %5814
        %v5816 = vadd.f32 %v5783, %v5784
        %5817 = vadd.xlane.f32.xlu0 %v5816
        %v5818 = vpop.xlane.xlu0 %5817
        %v5819 = vadd.f32 %v5785, %v5786
        %5820 = vadd.xlane.f32.xlu0 %v5819
        %v5821 = vpop.xlane.xlu0 %5820
        %v5822 = vadd.f32 %v5787, %v5788
        %5823 = vadd.xlane.f32.xlu0 %v5822
        %v5824 = vpop.xlane.xlu0 %5823
        %v5825 = vadd.f32 %v5789, %v5790
        %5826 = vadd.xlane.f32.xlu0 %v5825
        %v5827 = vpop.xlane.xlu0 %5826
        %v5828 = vadd.f32 %v5791, %v5792
        %5829 = vadd.xlane.f32.xlu0 %v5828
        %v5830 = vpop.xlane.xlu0 %5829
        %v5831 = vadd.f32 %v5793, %v5794
        %5832 = vadd.xlane.f32.xlu0 %v5831
        %v5833 = vpop.xlane.xlu0 %5832
        %v5834 = vadd.f32 %v5795, %v5796
        %5835 = vadd.xlane.f32.xlu0 %v5834
        %v5836 = vpop.xlane.xlu0 %5835
        %v5837 = vadd.f32 %v5797, %v5798
        %5838 = vadd.xlane.f32.xlu0 %v5837
        %v5839 = vpop.xlane.xlu0 %5838
        %v5840 = vadd.f32 %v5799, %v5800
        %5841 = vadd.xlane.f32.xlu0 %v5840
        %v5842 = vpop.xlane.xlu0 %5841
        %v5843 = vadd.f32 %v5801, %v5802
        %5844 = vadd.xlane.f32.xlu0 %v5843
        %v5845 = vpop.xlane.xlu0 %5844
        %v5846 = vadd.f32 %v5803, %v5804
        %5847 = vadd.xlane.f32.xlu0 %v5846
        %v5848 = vpop.xlane.xlu0 %5847
        %v5849 = vadd.f32 %v5805, %v5806
        %5850 = vadd.xlane.f32.xlu0 %v5849
        %v5851 = vpop.xlane.xlu0 %5850
        %v5852 = vadd.f32 %v5807, %v5808
        %5853 = vadd.xlane.f32.xlu0 %v5852
        %v5854 = vpop.xlane.xlu0 %5853
        %v5855 = vadd.f32 %v5809, %v5810
        %5856 = vadd.xlane.f32.xlu0 %v5855
        %v5857 = vpop.xlane.xlu0 %5856
        %v5858 = vadd.f32 %v5811, %v5812
        %5859 = vadd.xlane.f32.xlu0 %v5858
        %v5860 = vpop.xlane.xlu0 %5859
        %v5861 = vpack.c.bf16 %v5783, %v5781
        %v5862 = vpack.c.bf16 %v5784, %v5782
        %v5863 = vpack.c.bf16 %v5787, %v5785
        %v5864 = vpack.c.bf16 %v5788, %v5786
        %v5865 = vpack.c.bf16 %v5791, %v5789
        %v5866 = vpack.c.bf16 %v5792, %v5790
        %v5867 = vpack.c.bf16 %v5795, %v5793
        %v5868 = vpack.c.bf16 %v5796, %v5794
        %v5869 = vpack.c.bf16 %v5799, %v5797
        %v5870 = vpack.c.bf16 %v5800, %v5798
        %v5871 = vpack.c.bf16 %v5803, %v5801
        %v5872 = vpack.c.bf16 %v5804, %v5802
        %v5873 = vpack.c.bf16 %v5807, %v5805
        %v5874 = vpack.c.bf16 %v5808, %v5806
        %v5875 = vpack.c.bf16 %v5811, %v5809
        %v5876 = vpack.c.bf16 %v5812, %v5810
        %5877 = vrot.lane.b32.xlu0 %v1498, 80
        %v5878 = vpop.permute.xlu0 %5877
        %5879 = vrot.lane.b32.xlu0 %v1499, 80
        %v5880 = vpop.permute.xlu0 %5879
        %5881 = vrot.lane.b32.xlu0 %v1500, 80
        %v5882 = vpop.permute.xlu0 %5881
        %5883 = vrot.lane.b32.xlu0 %v1501, 80
        %v5884 = vpop.permute.xlu0 %5883
        %5885 = vrot.lane.b32.xlu0 %v1502, 80
        %v5886 = vpop.permute.xlu0 %5885
        %5887 = vrot.lane.b32.xlu0 %v1503, 80
        %v5888 = vpop.permute.xlu0 %5887
        %5889 = vrot.lane.b32.xlu0 %v1504, 80
        %v5890 = vpop.permute.xlu0 %5889
        %5891 = vrot.lane.b32.xlu0 %v1505, 80
        %v5892 = vpop.permute.xlu0 %5891
        %5893 = vrot.lane.b32.xlu0 %v1506, 80
        %v5894 = vpop.permute.xlu0 %5893
        %5895 = vrot.lane.b32.xlu0 %v1507, 80
        %v5896 = vpop.permute.xlu0 %5895
        %5897 = vrot.lane.b32.xlu0 %v1508, 80
        %v5898 = vpop.permute.xlu0 %5897
        %5899 = vrot.lane.b32.xlu0 %v1509, 80
        %v5900 = vpop.permute.xlu0 %5899
        %5901 = vrot.lane.b32.xlu0 %v1510, 80
        %v5902 = vpop.permute.xlu0 %5901
        %5903 = vrot.lane.b32.xlu0 %v1511, 80
        %v5904 = vpop.permute.xlu0 %5903
        %5905 = vrot.lane.b32.xlu0 %v1512, 80
        %v5906 = vpop.permute.xlu0 %5905
        %5907 = vrot.lane.b32.xlu0 %v1513, 80
        %v5908 = vpop.permute.xlu0 %5907
        %5925 = vmatprep.subr.bf16.mxu0 0
        %5926 = vmatpush1.bf16.msra.mxu0 %v5892
        %5927 = vmatprep.subr.bf16.mxu0 0
        %5928 = vmatpush1.bf16.msra.mxu0 %v5890
        %5929 = vmatprep.subr.bf16.mxu0 0
        %5930 = vmatpush1.bf16.msra.mxu0 %v5888
        %5931 = vmatprep.subr.bf16.mxu0 0
        %5932 = vmatpush1.bf16.msra.mxu0 %v5886
        %5933 = vmatprep.subr.bf16.mxu0 0
        %5934 = vmatpush1.bf16.msra.mxu0 %v5884
        %5935 = vmatprep.subr.bf16.mxu0 0
        %5936 = vmatpush1.bf16.msra.mxu0 %v5882
        %5937 = vmatprep.subr.bf16.mxu0 0
        %5938 = vmatpush1.bf16.msra.mxu0 %v5880
        %5939 = vmatprep.subr.bf16.mxu0 0
        %5940 = vmatpush1.bf16.msra.mxu0 %v5878
        %5941 = vmatprep.subr.bf16.mxu0 0
        %5942 = vmatpush2.bf16.msra.mxu0 %v5908
        %5943 = vmatprep.subr.bf16.mxu0 0
        %5944 = vmatpush2.bf16.msra.mxu0 %v5906
        %5945 = vmatprep.subr.bf16.mxu0 0
        %5946 = vmatpush2.bf16.msra.mxu0 %v5904
        %5947 = vmatprep.subr.bf16.mxu0 0
        %5948 = vmatpush2.bf16.msra.mxu0 %v5902
        %5949 = vmatprep.subr.bf16.mxu0 0
        %5950 = vmatpush2.bf16.msra.mxu0 %v5900
        %5951 = vmatprep.subr.bf16.mxu0 0
        %5952 = vmatpush2.bf16.msra.mxu0 %v5898
        %5953 = vmatprep.subr.bf16.mxu0 0
        %5954 = vmatpush2.bf16.msra.mxu0 %v5896
        %5955 = vmatprep.subr.bf16.mxu0 0
        %5956 = vmatpush2.bf16.msra.mxu0 %v5894
        %5957 = vmatprep.mubr.bf16.mxu0 %v5862
        %5958 = vmatmul.mubr.bf16.gmra.mxu0 %v5861
        %v5959 = vpop.f32.mrf.mxu0
        %v5960 = vadd.f32 0.0, %v5959
        %v5961 = vpop.f32.mrf.mxu0
        %v5962 = vpop.f32.mrf.mxu0
        %v5963 = vadd.f32 0.0, %v5962
        %v5964 = vpop.f32.mrf.mxu0
        %5965 = vmatprep.mubr.bf16.mxu0 %v5864
        %5966 = vmatmul.mubr.bf16.gmra.mxu0 %v5863
        %v5967 = vpop.f32.mrf.mxu0
        %v5968 = vadd.f32 0.0, %v5967
        %v5969 = vpop.f32.mrf.mxu0
        %v5970 = vpop.f32.mrf.mxu0
        %v5971 = vadd.f32 0.0, %v5970
        %v5972 = vpop.f32.mrf.mxu0
        %5973 = vmatprep.mubr.bf16.mxu0 %v5866
        %5974 = vmatmul.mubr.bf16.gmra.mxu0 %v5865
        %v5975 = vpop.f32.mrf.mxu0
        %v5976 = vadd.f32 0.0, %v5975
        %v5977 = vpop.f32.mrf.mxu0
        %v5978 = vpop.f32.mrf.mxu0
        %v5979 = vadd.f32 0.0, %v5978
        %v5980 = vpop.f32.mrf.mxu0
        %5981 = vmatprep.mubr.bf16.mxu0 %v5868
        %5982 = vmatmul.mubr.bf16.gmra.mxu0 %v5867
        %v5983 = vpop.f32.mrf.mxu0
        %v5984 = vadd.f32 0.0, %v5983
        %v5985 = vpop.f32.mrf.mxu0
        %v5986 = vpop.f32.mrf.mxu0
        %v5987 = vadd.f32 0.0, %v5986
        %v5988 = vpop.f32.mrf.mxu0
        %5989 = vmatprep.mubr.bf16.mxu0 %v5870
        %5990 = vmatmul.mubr.bf16.gmra.mxu0 %v5869
        %v5991 = vpop.f32.mrf.mxu0
        %v5992 = vadd.f32 0.0, %v5991
        %v5993 = vpop.f32.mrf.mxu0
        %v5994 = vpop.f32.mrf.mxu0
        %v5995 = vadd.f32 0.0, %v5994
        %v5996 = vpop.f32.mrf.mxu0
        %5997 = vmatprep.mubr.bf16.mxu0 %v5872
        %5998 = vmatmul.mubr.bf16.gmra.mxu0 %v5871
        %v5999 = vpop.f32.mrf.mxu0
        %v6000 = vadd.f32 0.0, %v5999
        %v6001 = vpop.f32.mrf.mxu0
        %v6002 = vpop.f32.mrf.mxu0
        %v6003 = vadd.f32 0.0, %v6002
        %v6004 = vpop.f32.mrf.mxu0
        %6005 = vmatprep.mubr.bf16.mxu0 %v5874
        %6006 = vmatmul.mubr.bf16.gmra.mxu0 %v5873
        %v6007 = vpop.f32.mrf.mxu0
        %v6008 = vadd.f32 0.0, %v6007
        %v6009 = vpop.f32.mrf.mxu0
        %v6010 = vpop.f32.mrf.mxu0
        %v6011 = vadd.f32 0.0, %v6010
        %v6012 = vpop.f32.mrf.mxu0
        %6013 = vmatprep.mubr.bf16.mxu0 %v5876
        %6014 = vmatmul.mubr.bf16.gmra.mxu0 %v5875
        %v6015 = vpop.f32.mrf.mxu0
        %v6016 = vadd.f32 0.0, %v6015
        %v6017 = vpop.f32.mrf.mxu0
        %v6018 = vpop.f32.mrf.mxu0
        %v6019 = vadd.f32 0.0, %v6018
        %v6020 = vpop.f32.mrf.mxu0
        %6021 = vdwg.mxu0
        %v6022 = vrcp.pop %v5815
        %v6023 = vrcp.pop %v5818
        %v6024 = vrcp.pop %v5821
        %v6025 = vrcp.pop %v5824
        %v6026 = vrcp.pop %v5827
        %v6027 = vrcp.pop %v5830
        %v6028 = vrcp.pop %v5833
        %v6029 = vrcp.pop %v5836
        %v6030 = vrcp.pop %v5839
        %v6031 = vrcp.pop %v5842
        %v6032 = vrcp.pop %v5845
        %v6033 = vrcp.pop %v5848
        %v6034 = vrcp.pop %v5851
        %v6035 = vrcp.pop %v5854
        %v6036 = vrcp.pop %v5857
        %v6037 = vrcp.pop %v5860
        %v6038 = vmul.f32 %v5960, %v6022
        %v6039 = vmul.f32 %v5963, %v6023
        %v6040 = vmul.f32 %v5968, %v6024
        %v6041 = vmul.f32 %v5971, %v6025
        %v6042 = vmul.f32 %v5976, %v6026
        %v6043 = vmul.f32 %v5979, %v6027
        %v6044 = vmul.f32 %v5984, %v6028
        %v6045 = vmul.f32 %v5987, %v6029
        %v6046 = vmul.f32 %v5992, %v6030
        %v6047 = vmul.f32 %v5995, %v6031
        %v6048 = vmul.f32 %v6000, %v6032
        %v6049 = vmul.f32 %v6003, %v6033
        %v6050 = vmul.f32 %v6008, %v6034
        %v6051 = vmul.f32 %v6011, %v6035
        %v6052 = vmul.f32 %v6016, %v6036
        %v6053 = vmul.f32 %v6019, %v6037
        %6054 = vrot.lane.b32.xlu0 %v1663, 80
        %v6055 = vpop.permute.xlu0 %6054
        %v6057 = vadd.f32 %v6038, %v6055
        %v6058 = vadd.f32 %v6039, %v6055
        %v6059 = vadd.f32 %v6040, %v6055
        %v6060 = vadd.f32 %v6041, %v6055
        %v6061 = vadd.f32 %v6042, %v6055
        %v6062 = vadd.f32 %v6043, %v6055
        %v6063 = vadd.f32 %v6044, %v6055
        %v6064 = vadd.f32 %v6045, %v6055
        %v6065 = vadd.f32 %v6046, %v6055
        %v6066 = vadd.f32 %v6047, %v6055
        %v6067 = vadd.f32 %v6048, %v6055
        %v6068 = vadd.f32 %v6049, %v6055
        %v6069 = vadd.f32 %v6050, %v6055
        %v6070 = vadd.f32 %v6051, %v6055
        %v6071 = vadd.f32 %v6052, %v6055
        %v6072 = vadd.f32 %v6053, %v6055
        %vm6073 = vcmp.ge.f32.partialorder %v6057, 0.0
        %vm6074 = vcmp.ge.f32.partialorder %v6058, 0.0
        %vm6075 = vcmp.ge.f32.partialorder %v6059, 0.0
        %vm6076 = vcmp.ge.f32.partialorder %v6060, 0.0
        %vm6077 = vcmp.ge.f32.partialorder %v6061, 0.0
        %vm6078 = vcmp.ge.f32.partialorder %v6062, 0.0
        %vm6079 = vcmp.ge.f32.partialorder %v6063, 0.0
        %vm6080 = vcmp.ge.f32.partialorder %v6064, 0.0
        %vm6081 = vcmp.ge.f32.partialorder %v6065, 0.0
        %vm6082 = vcmp.ge.f32.partialorder %v6066, 0.0
        %vm6083 = vcmp.ge.f32.partialorder %v6067, 0.0
        %vm6084 = vcmp.ge.f32.partialorder %v6068, 0.0
        %vm6085 = vcmp.ge.f32.partialorder %v6069, 0.0
        %vm6086 = vcmp.ge.f32.partialorder %v6070, 0.0
        %vm6087 = vcmp.ge.f32.partialorder %v6071, 0.0
        %vm6088 = vcmp.ge.f32.partialorder %v6072, 0.0
        %v6089 = vmul.f32 %v6057, 0.01
        %v6090 = vmul.f32 %v6058, 0.01
        %v6091 = vmul.f32 %v6059, 0.01
        %v6092 = vmul.f32 %v6060, 0.01
        %v6093 = vmul.f32 %v6061, 0.01
        %v6094 = vmul.f32 %v6062, 0.01
        %v6095 = vmul.f32 %v6063, 0.01
        %v6096 = vmul.f32 %v6064, 0.01
        %v6097 = vmul.f32 %v6065, 0.01
        %v6098 = vmul.f32 %v6066, 0.01
        %v6099 = vmul.f32 %v6067, 0.01
        %v6100 = vmul.f32 %v6068, 0.01
        %v6101 = vmul.f32 %v6069, 0.01
        %v6102 = vmul.f32 %v6070, 0.01
        %v6103 = vmul.f32 %v6071, 0.01
        %v6104 = vmul.f32 %v6072, 0.01
        %v6105 = vsel %vm6073, %v6057, %v6089
        %v6106 = vsel %vm6074, %v6058, %v6090
        %v6107 = vsel %vm6075, %v6059, %v6091
        %v6108 = vsel %vm6076, %v6060, %v6092
        %v6109 = vsel %vm6077, %v6061, %v6093
        %v6110 = vsel %vm6078, %v6062, %v6094
        %v6111 = vsel %vm6079, %v6063, %v6095
        %v6112 = vsel %vm6080, %v6064, %v6096
        %v6113 = vsel %vm6081, %v6065, %v6097
        %v6114 = vsel %vm6082, %v6066, %v6098
        %v6115 = vsel %vm6083, %v6067, %v6099
        %v6116 = vsel %vm6084, %v6068, %v6100
        %v6117 = vsel %vm6085, %v6069, %v6101
        %v6118 = vsel %vm6086, %v6070, %v6102
        %v6119 = vsel %vm6087, %v6071, %v6103
        %v6120 = vsel %vm6088, %v6072, %v6104
        %v6121 = vtanh.pop %v6105
        %v6122 = vtanh.pop %v6106
        %v6123 = vtanh.pop %v6107
        %v6124 = vtanh.pop %v6108
        %v6125 = vtanh.pop %v6109
        %v6126 = vtanh.pop %v6110
        %v6127 = vtanh.pop %v6111
        %v6128 = vtanh.pop %v6112
        %v6129 = vtanh.pop %v6113
        %v6130 = vtanh.pop %v6114
        %v6131 = vtanh.pop %v6115
        %v6132 = vtanh.pop %v6116
        %v6133 = vtanh.pop %v6117
        %v6134 = vtanh.pop %v6118
        %v6135 = vtanh.pop %v6119
        %v6136 = vtanh.pop %v6120
        %6137 = vset.pattern.permute.xlu0 7
        %6138 = vperm.xlu0 %6137, %v783
        %v6139 = vpop.permute.xlu0 %6138
        %6141 = vset.pattern.permute.xlu0 7
        %6142 = vperm.xlu0 %6141, %v784
        %v6143 = vpop.permute.xlu0 %6142
        %6145 = vset.pattern.permute.xlu0 7
        %6146 = vperm.xlu0 %6145, %v785
        %v6147 = vpop.permute.xlu0 %6146
        %6149 = vset.pattern.permute.xlu0 7
        %6150 = vperm.xlu0 %6149, %v786
        %v6151 = vpop.permute.xlu0 %6150
        %6153 = vset.pattern.permute.xlu0 7
        %6154 = vperm.xlu0 %6153, %v787
        %v6155 = vpop.permute.xlu0 %6154
        %6157 = vset.pattern.permute.xlu0 7
        %6158 = vperm.xlu0 %6157, %v788
        %v6159 = vpop.permute.xlu0 %6158
        %6161 = vset.pattern.permute.xlu0 7
        %6162 = vperm.xlu0 %6161, %v789
        %v6163 = vpop.permute.xlu0 %6162
        %6165 = vset.pattern.permute.xlu0 7
        %6166 = vperm.xlu0 %6165, %v790
        %v6167 = vpop.permute.xlu0 %6166
        %6169 = vset.pattern.permute.xlu0 7
        %6170 = vperm.xlu0 %6169, %v791
        %v6171 = vpop.permute.xlu0 %6170
        %6173 = vset.pattern.permute.xlu0 7
        %6174 = vperm.xlu0 %6173, %v792
        %v6175 = vpop.permute.xlu0 %6174
        %6177 = vset.pattern.permute.xlu0 7
        %6178 = vperm.xlu0 %6177, %v793
        %v6179 = vpop.permute.xlu0 %6178
        %6181 = vset.pattern.permute.xlu0 7
        %6182 = vperm.xlu0 %6181, %v794
        %v6183 = vpop.permute.xlu0 %6182
        %6185 = vset.pattern.permute.xlu0 7
        %6186 = vperm.xlu0 %6185, %v795
        %v6187 = vpop.permute.xlu0 %6186
        %6189 = vset.pattern.permute.xlu0 7
        %6190 = vperm.xlu0 %6189, %v796
        %v6191 = vpop.permute.xlu0 %6190
        %6193 = vset.pattern.permute.xlu0 7
        %6194 = vperm.xlu0 %6193, %v797
        %v6195 = vpop.permute.xlu0 %6194
        %6197 = vset.pattern.permute.xlu0 7
        %6198 = vperm.xlu0 %6197, %v798
        %v6199 = vpop.permute.xlu0 %6198
        %v6201 = vlaneseq
        %v6202 = vshrl.u32 %v6201, 7
        %v6203 = vsub.s32 7, %v6202
        %v6204 = vrot.slane %v799, %v6203
        %v6205 = vlaneseq
        %v6206 = vshrl.u32 %v6205, 7
        %v6207 = vsub.s32 7, %v6206
        %v6208 = vrot.slane %v800, %v6207
        %v6209 = vadd.f32 %v6139, %v6204
        %v6210 = vadd.f32 %v6139, %v6208
        %v6211 = vadd.f32 %v6143, %v6204
        %v6212 = vadd.f32 %v6143, %v6208
        %v6213 = vadd.f32 %v6147, %v6204
        %v6214 = vadd.f32 %v6147, %v6208
        %v6215 = vadd.f32 %v6151, %v6204
        %v6216 = vadd.f32 %v6151, %v6208
        %v6217 = vadd.f32 %v6155, %v6204
        %v6218 = vadd.f32 %v6155, %v6208
        %v6219 = vadd.f32 %v6159, %v6204
        %v6220 = vadd.f32 %v6159, %v6208
        %v6221 = vadd.f32 %v6163, %v6204
        %v6222 = vadd.f32 %v6163, %v6208
        %v6223 = vadd.f32 %v6167, %v6204
        %v6224 = vadd.f32 %v6167, %v6208
        %v6225 = vadd.f32 %v6171, %v6204
        %v6226 = vadd.f32 %v6171, %v6208
        %v6227 = vadd.f32 %v6175, %v6204
        %v6228 = vadd.f32 %v6175, %v6208
        %v6229 = vadd.f32 %v6179, %v6204
        %v6230 = vadd.f32 %v6179, %v6208
        %v6231 = vadd.f32 %v6183, %v6204
        %v6232 = vadd.f32 %v6183, %v6208
        %v6233 = vadd.f32 %v6187, %v6204
        %v6234 = vadd.f32 %v6187, %v6208
        %v6235 = vadd.f32 %v6191, %v6204
        %v6236 = vadd.f32 %v6191, %v6208
        %v6237 = vadd.f32 %v6195, %v6204
        %v6238 = vadd.f32 %v6195, %v6208
        %v6239 = vadd.f32 %v6199, %v6204
        %v6240 = vadd.f32 %v6199, %v6208
        %vm6241 = vcmp.ge.f32.partialorder %v6209, 0.0
        %vm6242 = vcmp.ge.f32.partialorder %v6210, 0.0
        %vm6243 = vcmp.ge.f32.partialorder %v6211, 0.0
        %vm6244 = vcmp.ge.f32.partialorder %v6212, 0.0
        %vm6245 = vcmp.ge.f32.partialorder %v6213, 0.0
        %vm6246 = vcmp.ge.f32.partialorder %v6214, 0.0
        %vm6247 = vcmp.ge.f32.partialorder %v6215, 0.0
        %vm6248 = vcmp.ge.f32.partialorder %v6216, 0.0
        %vm6249 = vcmp.ge.f32.partialorder %v6217, 0.0
        %vm6250 = vcmp.ge.f32.partialorder %v6218, 0.0
        %vm6251 = vcmp.ge.f32.partialorder %v6219, 0.0
        %vm6252 = vcmp.ge.f32.partialorder %v6220, 0.0
        %vm6253 = vcmp.ge.f32.partialorder %v6221, 0.0
        %vm6254 = vcmp.ge.f32.partialorder %v6222, 0.0
        %vm6255 = vcmp.ge.f32.partialorder %v6223, 0.0
        %vm6256 = vcmp.ge.f32.partialorder %v6224, 0.0
        %vm6257 = vcmp.ge.f32.partialorder %v6225, 0.0
        %vm6258 = vcmp.ge.f32.partialorder %v6226, 0.0
        %vm6259 = vcmp.ge.f32.partialorder %v6227, 0.0
        %vm6260 = vcmp.ge.f32.partialorder %v6228, 0.0
        %vm6261 = vcmp.ge.f32.partialorder %v6229, 0.0
        %vm6262 = vcmp.ge.f32.partialorder %v6230, 0.0
        %vm6263 = vcmp.ge.f32.partialorder %v6231, 0.0
        %vm6264 = vcmp.ge.f32.partialorder %v6232, 0.0
        %vm6265 = vcmp.ge.f32.partialorder %v6233, 0.0
        %vm6266 = vcmp.ge.f32.partialorder %v6234, 0.0
        %vm6267 = vcmp.ge.f32.partialorder %v6235, 0.0
        %vm6268 = vcmp.ge.f32.partialorder %v6236, 0.0
        %vm6269 = vcmp.ge.f32.partialorder %v6237, 0.0
        %vm6270 = vcmp.ge.f32.partialorder %v6238, 0.0
        %vm6271 = vcmp.ge.f32.partialorder %v6239, 0.0
        %vm6272 = vcmp.ge.f32.partialorder %v6240, 0.0
        %v6273 = vmul.f32 %v6209, 0.2
        %v6274 = vmul.f32 %v6210, 0.2
        %v6275 = vmul.f32 %v6211, 0.2
        %v6276 = vmul.f32 %v6212, 0.2
        %v6277 = vmul.f32 %v6213, 0.2
        %v6278 = vmul.f32 %v6214, 0.2
        %v6279 = vmul.f32 %v6215, 0.2
        %v6280 = vmul.f32 %v6216, 0.2
        %v6281 = vmul.f32 %v6217, 0.2
        %v6282 = vmul.f32 %v6218, 0.2
        %v6283 = vmul.f32 %v6219, 0.2
        %v6284 = vmul.f32 %v6220, 0.2
        %v6285 = vmul.f32 %v6221, 0.2
        %v6286 = vmul.f32 %v6222, 0.2
        %v6287 = vmul.f32 %v6223, 0.2
        %v6288 = vmul.f32 %v6224, 0.2
        %v6289 = vmul.f32 %v6225, 0.2
        %v6290 = vmul.f32 %v6226, 0.2
        %v6291 = vmul.f32 %v6227, 0.2
        %v6292 = vmul.f32 %v6228, 0.2
        %v6293 = vmul.f32 %v6229, 0.2
        %v6294 = vmul.f32 %v6230, 0.2
        %v6295 = vmul.f32 %v6231, 0.2
        %v6296 = vmul.f32 %v6232, 0.2
        %v6297 = vmul.f32 %v6233, 0.2
        %v6298 = vmul.f32 %v6234, 0.2
        %v6299 = vmul.f32 %v6235, 0.2
        %v6300 = vmul.f32 %v6236, 0.2
        %v6301 = vmul.f32 %v6237, 0.2
        %v6302 = vmul.f32 %v6238, 0.2
        %v6303 = vmul.f32 %v6239, 0.2
        %v6304 = vmul.f32 %v6240, 0.2
        %v6305 = vsel %vm6241, %v6209, %v6273
        %v6306 = vsel %vm6242, %v6210, %v6274
        %v6307 = vsel %vm6243, %v6211, %v6275
        %v6308 = vsel %vm6244, %v6212, %v6276
        %v6309 = vsel %vm6245, %v6213, %v6277
        %v6310 = vsel %vm6246, %v6214, %v6278
        %v6311 = vsel %vm6247, %v6215, %v6279
        %v6312 = vsel %vm6248, %v6216, %v6280
        %v6313 = vsel %vm6249, %v6217, %v6281
        %v6314 = vsel %vm6250, %v6218, %v6282
        %v6315 = vsel %vm6251, %v6219, %v6283
        %v6316 = vsel %vm6252, %v6220, %v6284
        %v6317 = vsel %vm6253, %v6221, %v6285
        %v6318 = vsel %vm6254, %v6222, %v6286
        %v6319 = vsel %vm6255, %v6223, %v6287
        %v6320 = vsel %vm6256, %v6224, %v6288
        %v6321 = vsel %vm6257, %v6225, %v6289
        %v6322 = vsel %vm6258, %v6226, %v6290
        %v6323 = vsel %vm6259, %v6227, %v6291
        %v6324 = vsel %vm6260, %v6228, %v6292
        %v6325 = vsel %vm6261, %v6229, %v6293
        %v6326 = vsel %vm6262, %v6230, %v6294
        %v6327 = vsel %vm6263, %v6231, %v6295
        %v6328 = vsel %vm6264, %v6232, %v6296
        %v6329 = vsel %vm6265, %v6233, %v6297
        %v6330 = vsel %vm6266, %v6234, %v6298
        %v6331 = vsel %vm6267, %v6235, %v6299
        %v6332 = vsel %vm6268, %v6236, %v6300
        %v6333 = vsel %vm6269, %v6237, %v6301
        %v6334 = vsel %vm6270, %v6238, %v6302
        %v6335 = vsel %vm6271, %v6239, %v6303
        %v6336 = vsel %vm6272, %v6240, %v6304
        %v6337 = vsel %vm1098, %v6305, -1e+30
        %v6338 = vsel %vm1099, %v6306, -1e+30
        %v6339 = vsel %vm1100, %v6307, -1e+30
        %v6340 = vsel %vm1101, %v6308, -1e+30
        %v6341 = vsel %vm1102, %v6309, -1e+30
        %v6342 = vsel %vm1103, %v6310, -1e+30
        %v6343 = vsel %vm1104, %v6311, -1e+30
        %v6344 = vsel %vm1105, %v6312, -1e+30
        %v6345 = vsel %vm1106, %v6313, -1e+30
        %v6346 = vsel %vm1107, %v6314, -1e+30
        %v6347 = vsel %vm1108, %v6315, -1e+30
        %v6348 = vsel %vm1109, %v6316, -1e+30
        %v6349 = vsel %vm1110, %v6317, -1e+30
        %v6350 = vsel %vm1111, %v6318, -1e+30
        %v6351 = vsel %vm1112, %v6319, -1e+30
        %v6352 = vsel %vm1113, %v6320, -1e+30
        %v6353 = vsel %vm1114, %v6321, -1e+30
        %v6354 = vsel %vm1115, %v6322, -1e+30
        %v6355 = vsel %vm1116, %v6323, -1e+30
        %v6356 = vsel %vm1117, %v6324, -1e+30
        %v6357 = vsel %vm1118, %v6325, -1e+30
        %v6358 = vsel %vm1119, %v6326, -1e+30
        %v6359 = vsel %vm1120, %v6327, -1e+30
        %v6360 = vsel %vm1121, %v6328, -1e+30
        %v6361 = vsel %vm1122, %v6329, -1e+30
        %v6362 = vsel %vm1123, %v6330, -1e+30
        %v6363 = vsel %vm1124, %v6331, -1e+30
        %v6364 = vsel %vm1125, %v6332, -1e+30
        %v6365 = vsel %vm1126, %v6333, -1e+30
        %v6366 = vsel %vm1127, %v6334, -1e+30
        %v6367 = vsel %vm1128, %v6335, -1e+30
        %v6368 = vsel %vm1129, %v6336, -1e+30
        %v6369 = vmax.f32 %v6337, %v6338
        %6370 = vmax.xlane.f32.xlu0 %v6369
        %v6371 = vpop.xlane.xlu0 %6370
        %v6372 = vmax.f32 %v6339, %v6340
        %6373 = vmax.xlane.f32.xlu0 %v6372
        %v6374 = vpop.xlane.xlu0 %6373
        %v6375 = vmax.f32 %v6341, %v6342
        %6376 = vmax.xlane.f32.xlu0 %v6375
        %v6377 = vpop.xlane.xlu0 %6376
        %v6378 = vmax.f32 %v6343, %v6344
        %6379 = vmax.xlane.f32.xlu0 %v6378
        %v6380 = vpop.xlane.xlu0 %6379
        %v6381 = vmax.f32 %v6345, %v6346
        %6382 = vmax.xlane.f32.xlu0 %v6381
        %v6383 = vpop.xlane.xlu0 %6382
        %v6384 = vmax.f32 %v6347, %v6348
        %6385 = vmax.xlane.f32.xlu0 %v6384
        %v6386 = vpop.xlane.xlu0 %6385
        %v6387 = vmax.f32 %v6349, %v6350
        %6388 = vmax.xlane.f32.xlu0 %v6387
        %v6389 = vpop.xlane.xlu0 %6388
        %v6390 = vmax.f32 %v6351, %v6352
        %6391 = vmax.xlane.f32.xlu0 %v6390
        %v6392 = vpop.xlane.xlu0 %6391
        %v6393 = vmax.f32 %v6353, %v6354
        %6394 = vmax.xlane.f32.xlu0 %v6393
        %v6395 = vpop.xlane.xlu0 %6394
        %v6396 = vmax.f32 %v6355, %v6356
        %6397 = vmax.xlane.f32.xlu0 %v6396
        %v6398 = vpop.xlane.xlu0 %6397
        %v6399 = vmax.f32 %v6357, %v6358
        %6400 = vmax.xlane.f32.xlu0 %v6399
        %v6401 = vpop.xlane.xlu0 %6400
        %v6402 = vmax.f32 %v6359, %v6360
        %6403 = vmax.xlane.f32.xlu0 %v6402
        %v6404 = vpop.xlane.xlu0 %6403
        %v6405 = vmax.f32 %v6361, %v6362
        %6406 = vmax.xlane.f32.xlu0 %v6405
        %v6407 = vpop.xlane.xlu0 %6406
        %v6408 = vmax.f32 %v6363, %v6364
        %6409 = vmax.xlane.f32.xlu0 %v6408
        %v6410 = vpop.xlane.xlu0 %6409
        %v6411 = vmax.f32 %v6365, %v6366
        %6412 = vmax.xlane.f32.xlu0 %v6411
        %v6413 = vpop.xlane.xlu0 %6412
        %v6414 = vmax.f32 %v6367, %v6368
        %6415 = vmax.xlane.f32.xlu0 %v6414
        %v6416 = vpop.xlane.xlu0 %6415
        %v6417 = vsub.f32 %v6337, %v6371
        %v6418 = vsub.f32 %v6338, %v6371
        %v6419 = vsub.f32 %v6339, %v6374
        %v6420 = vsub.f32 %v6340, %v6374
        %v6421 = vsub.f32 %v6341, %v6377
        %v6422 = vsub.f32 %v6342, %v6377
        %v6423 = vsub.f32 %v6343, %v6380
        %v6424 = vsub.f32 %v6344, %v6380
        %v6425 = vsub.f32 %v6345, %v6383
        %v6426 = vsub.f32 %v6346, %v6383
        %v6427 = vsub.f32 %v6347, %v6386
        %v6428 = vsub.f32 %v6348, %v6386
        %v6429 = vsub.f32 %v6349, %v6389
        %v6430 = vsub.f32 %v6350, %v6389
        %v6431 = vsub.f32 %v6351, %v6392
        %v6432 = vsub.f32 %v6352, %v6392
        %v6433 = vsub.f32 %v6353, %v6395
        %v6434 = vsub.f32 %v6354, %v6395
        %v6435 = vsub.f32 %v6355, %v6398
        %v6436 = vsub.f32 %v6356, %v6398
        %v6437 = vsub.f32 %v6357, %v6401
        %v6438 = vsub.f32 %v6358, %v6401
        %v6439 = vsub.f32 %v6359, %v6404
        %v6440 = vsub.f32 %v6360, %v6404
        %v6441 = vsub.f32 %v6361, %v6407
        %v6442 = vsub.f32 %v6362, %v6407
        %v6443 = vsub.f32 %v6363, %v6410
        %v6444 = vsub.f32 %v6364, %v6410
        %v6445 = vsub.f32 %v6365, %v6413
        %v6446 = vsub.f32 %v6366, %v6413
        %v6447 = vsub.f32 %v6367, %v6416
        %v6448 = vsub.f32 %v6368, %v6416
        %v6449 = vmul.f32 %v6417, 1.442695
        %v6450 = vpow.pop %v6449
        %v6451 = vmul.f32 %v6418, 1.442695
        %v6452 = vpow.pop %v6451
        %v6453 = vmul.f32 %v6419, 1.442695
        %v6454 = vpow.pop %v6453
        %v6455 = vmul.f32 %v6420, 1.442695
        %v6456 = vpow.pop %v6455
        %v6457 = vmul.f32 %v6421, 1.442695
        %v6458 = vpow.pop %v6457
        %v6459 = vmul.f32 %v6422, 1.442695
        %v6460 = vpow.pop %v6459
        %v6461 = vmul.f32 %v6423, 1.442695
        %v6462 = vpow.pop %v6461
        %v6463 = vmul.f32 %v6424, 1.442695
        %v6464 = vpow.pop %v6463
        %v6465 = vmul.f32 %v6425, 1.442695
        %v6466 = vpow.pop %v6465
        %v6467 = vmul.f32 %v6426, 1.442695
        %v6468 = vpow.pop %v6467
        %v6469 = vmul.f32 %v6427, 1.442695
        %v6470 = vpow.pop %v6469
        %v6471 = vmul.f32 %v6428, 1.442695
        %v6472 = vpow.pop %v6471
        %v6473 = vmul.f32 %v6429, 1.442695
        %v6474 = vpow.pop %v6473
        %v6475 = vmul.f32 %v6430, 1.442695
        %v6476 = vpow.pop %v6475
        %v6477 = vmul.f32 %v6431, 1.442695
        %v6478 = vpow.pop %v6477
        %v6479 = vmul.f32 %v6432, 1.442695
        %v6480 = vpow.pop %v6479
        %v6481 = vmul.f32 %v6433, 1.442695
        %v6482 = vpow.pop %v6481
        %v6483 = vmul.f32 %v6434, 1.442695
        %v6484 = vpow.pop %v6483
        %v6485 = vmul.f32 %v6435, 1.442695
        %v6486 = vpow.pop %v6485
        %v6487 = vmul.f32 %v6436, 1.442695
        %v6488 = vpow.pop %v6487
        %v6489 = vmul.f32 %v6437, 1.442695
        %v6490 = vpow.pop %v6489
        %v6491 = vmul.f32 %v6438, 1.442695
        %v6492 = vpow.pop %v6491
        %v6493 = vmul.f32 %v6439, 1.442695
        %v6494 = vpow.pop %v6493
        %v6495 = vmul.f32 %v6440, 1.442695
        %v6496 = vpow.pop %v6495
        %v6497 = vmul.f32 %v6441, 1.442695
        %v6498 = vpow.pop %v6497
        %v6499 = vmul.f32 %v6442, 1.442695
        %v6500 = vpow.pop %v6499
        %v6501 = vmul.f32 %v6443, 1.442695
        %v6502 = vpow.pop %v6501
        %v6503 = vmul.f32 %v6444, 1.442695
        %v6504 = vpow.pop %v6503
        %v6505 = vmul.f32 %v6445, 1.442695
        %v6506 = vpow.pop %v6505
        %v6507 = vmul.f32 %v6446, 1.442695
        %v6508 = vpow.pop %v6507
        %v6509 = vmul.f32 %v6447, 1.442695
        %v6510 = vpow.pop %v6509
        %v6511 = vmul.f32 %v6448, 1.442695
        %v6512 = vpow.pop %v6511
        %v6513 = vmul.f32 %v1306, %v6450
        %v6514 = vmul.f32 %v1307, %v6452
        %v6515 = vmul.f32 %v1308, %v6454
        %v6516 = vmul.f32 %v1309, %v6456
        %v6517 = vmul.f32 %v1310, %v6458
        %v6518 = vmul.f32 %v1311, %v6460
        %v6519 = vmul.f32 %v1312, %v6462
        %v6520 = vmul.f32 %v1313, %v6464
        %v6521 = vmul.f32 %v1314, %v6466
        %v6522 = vmul.f32 %v1315, %v6468
        %v6523 = vmul.f32 %v1316, %v6470
        %v6524 = vmul.f32 %v1317, %v6472
        %v6525 = vmul.f32 %v1318, %v6474
        %v6526 = vmul.f32 %v1319, %v6476
        %v6527 = vmul.f32 %v1320, %v6478
        %v6528 = vmul.f32 %v1321, %v6480
        %v6529 = vmul.f32 %v1322, %v6482
        %v6530 = vmul.f32 %v1323, %v6484
        %v6531 = vmul.f32 %v1324, %v6486
        %v6532 = vmul.f32 %v1325, %v6488
        %v6533 = vmul.f32 %v1326, %v6490
        %v6534 = vmul.f32 %v1327, %v6492
        %v6535 = vmul.f32 %v1328, %v6494
        %v6536 = vmul.f32 %v1329, %v6496
        %v6537 = vmul.f32 %v1330, %v6498
        %v6538 = vmul.f32 %v1331, %v6500
        %v6539 = vmul.f32 %v1332, %v6502
        %v6540 = vmul.f32 %v1333, %v6504
        %v6541 = vmul.f32 %v1334, %v6506
        %v6542 = vmul.f32 %v1335, %v6508
        %v6543 = vmul.f32 %v1336, %v6510
        %v6544 = vmul.f32 %v1337, %v6512
        %v6545 = vadd.f32 %v6513, %v6514
        %6546 = vadd.xlane.f32.xlu0 %v6545
        %v6547 = vpop.xlane.xlu0 %6546
        %v6548 = vadd.f32 %v6515, %v6516
        %6549 = vadd.xlane.f32.xlu0 %v6548
        %v6550 = vpop.xlane.xlu0 %6549
        %v6551 = vadd.f32 %v6517, %v6518
        %6552 = vadd.xlane.f32.xlu0 %v6551
        %v6553 = vpop.xlane.xlu0 %6552
        %v6554 = vadd.f32 %v6519, %v6520
        %6555 = vadd.xlane.f32.xlu0 %v6554
        %v6556 = vpop.xlane.xlu0 %6555
        %v6557 = vadd.f32 %v6521, %v6522
        %6558 = vadd.xlane.f32.xlu0 %v6557
        %v6559 = vpop.xlane.xlu0 %6558
        %v6560 = vadd.f32 %v6523, %v6524
        %6561 = vadd.xlane.f32.xlu0 %v6560
        %v6562 = vpop.xlane.xlu0 %6561
        %v6563 = vadd.f32 %v6525, %v6526
        %6564 = vadd.xlane.f32.xlu0 %v6563
        %v6565 = vpop.xlane.xlu0 %6564
        %v6566 = vadd.f32 %v6527, %v6528
        %6567 = vadd.xlane.f32.xlu0 %v6566
        %v6568 = vpop.xlane.xlu0 %6567
        %v6569 = vadd.f32 %v6529, %v6530
        %6570 = vadd.xlane.f32.xlu0 %v6569
        %v6571 = vpop.xlane.xlu0 %6570
        %v6572 = vadd.f32 %v6531, %v6532
        %6573 = vadd.xlane.f32.xlu0 %v6572
        %v6574 = vpop.xlane.xlu0 %6573
        %v6575 = vadd.f32 %v6533, %v6534
        %6576 = vadd.xlane.f32.xlu0 %v6575
        %v6577 = vpop.xlane.xlu0 %6576
        %v6578 = vadd.f32 %v6535, %v6536
        %6579 = vadd.xlane.f32.xlu0 %v6578
        %v6580 = vpop.xlane.xlu0 %6579
        %v6581 = vadd.f32 %v6537, %v6538
        %6582 = vadd.xlane.f32.xlu0 %v6581
        %v6583 = vpop.xlane.xlu0 %6582
        %v6584 = vadd.f32 %v6539, %v6540
        %6585 = vadd.xlane.f32.xlu0 %v6584
        %v6586 = vpop.xlane.xlu0 %6585
        %v6587 = vadd.f32 %v6541, %v6542
        %6588 = vadd.xlane.f32.xlu0 %v6587
        %v6589 = vpop.xlane.xlu0 %6588
        %v6590 = vadd.f32 %v6543, %v6544
        %6591 = vadd.xlane.f32.xlu0 %v6590
        %v6592 = vpop.xlane.xlu0 %6591
        %v6593 = vpack.c.bf16 %v6515, %v6513
        %v6594 = vpack.c.bf16 %v6516, %v6514
        %v6595 = vpack.c.bf16 %v6519, %v6517
        %v6596 = vpack.c.bf16 %v6520, %v6518
        %v6597 = vpack.c.bf16 %v6523, %v6521
        %v6598 = vpack.c.bf16 %v6524, %v6522
        %v6599 = vpack.c.bf16 %v6527, %v6525
        %v6600 = vpack.c.bf16 %v6528, %v6526
        %v6601 = vpack.c.bf16 %v6531, %v6529
        %v6602 = vpack.c.bf16 %v6532, %v6530
        %v6603 = vpack.c.bf16 %v6535, %v6533
        %v6604 = vpack.c.bf16 %v6536, %v6534
        %v6605 = vpack.c.bf16 %v6539, %v6537
        %v6606 = vpack.c.bf16 %v6540, %v6538
        %v6607 = vpack.c.bf16 %v6543, %v6541
        %v6608 = vpack.c.bf16 %v6544, %v6542
        %6609 = vrot.lane.b32.xlu0 %v1498, 72
        %v6610 = vpop.permute.xlu0 %6609
        %6611 = vrot.lane.b32.xlu0 %v1499, 72
        %v6612 = vpop.permute.xlu0 %6611
        %6613 = vrot.lane.b32.xlu0 %v1500, 72
        %v6614 = vpop.permute.xlu0 %6613
        %6615 = vrot.lane.b32.xlu0 %v1501, 72
        %v6616 = vpop.permute.xlu0 %6615
        %6617 = vrot.lane.b32.xlu0 %v1502, 72
        %v6618 = vpop.permute.xlu0 %6617
        %6619 = vrot.lane.b32.xlu0 %v1503, 72
        %v6620 = vpop.permute.xlu0 %6619
        %6621 = vrot.lane.b32.xlu0 %v1504, 72
        %v6622 = vpop.permute.xlu0 %6621
        %6623 = vrot.lane.b32.xlu0 %v1505, 72
        %v6624 = vpop.permute.xlu0 %6623
        %6625 = vrot.lane.b32.xlu0 %v1506, 72
        %v6626 = vpop.permute.xlu0 %6625
        %6627 = vrot.lane.b32.xlu0 %v1507, 72
        %v6628 = vpop.permute.xlu0 %6627
        %6629 = vrot.lane.b32.xlu0 %v1508, 72
        %v6630 = vpop.permute.xlu0 %6629
        %6631 = vrot.lane.b32.xlu0 %v1509, 72
        %v6632 = vpop.permute.xlu0 %6631
        %6633 = vrot.lane.b32.xlu0 %v1510, 72
        %v6634 = vpop.permute.xlu0 %6633
        %6635 = vrot.lane.b32.xlu0 %v1511, 72
        %v6636 = vpop.permute.xlu0 %6635
        %6637 = vrot.lane.b32.xlu0 %v1512, 72
        %v6638 = vpop.permute.xlu0 %6637
        %6639 = vrot.lane.b32.xlu0 %v1513, 72
        %v6640 = vpop.permute.xlu0 %6639
        %6657 = vmatprep.subr.bf16.mxu0 0
        %6658 = vmatpush1.bf16.msra.mxu0 %v6624
        %6659 = vmatprep.subr.bf16.mxu0 0
        %6660 = vmatpush1.bf16.msra.mxu0 %v6622
        %6661 = vmatprep.subr.bf16.mxu0 0
        %6662 = vmatpush1.bf16.msra.mxu0 %v6620
        %6663 = vmatprep.subr.bf16.mxu0 0
        %6664 = vmatpush1.bf16.msra.mxu0 %v6618
        %6665 = vmatprep.subr.bf16.mxu0 0
        %6666 = vmatpush1.bf16.msra.mxu0 %v6616
        %6667 = vmatprep.subr.bf16.mxu0 0
        %6668 = vmatpush1.bf16.msra.mxu0 %v6614
        %6669 = vmatprep.subr.bf16.mxu0 0
        %6670 = vmatpush1.bf16.msra.mxu0 %v6612
        %6671 = vmatprep.subr.bf16.mxu0 0
        %6672 = vmatpush1.bf16.msra.mxu0 %v6610
        %6673 = vmatprep.subr.bf16.mxu0 0
        %6674 = vmatpush2.bf16.msra.mxu0 %v6640
        %6675 = vmatprep.subr.bf16.mxu0 0
        %6676 = vmatpush2.bf16.msra.mxu0 %v6638
        %6677 = vmatprep.subr.bf16.mxu0 0
        %6678 = vmatpush2.bf16.msra.mxu0 %v6636
        %6679 = vmatprep.subr.bf16.mxu0 0
        %6680 = vmatpush2.bf16.msra.mxu0 %v6634
        %6681 = vmatprep.subr.bf16.mxu0 0
        %6682 = vmatpush2.bf16.msra.mxu0 %v6632
        %6683 = vmatprep.subr.bf16.mxu0 0
        %6684 = vmatpush2.bf16.msra.mxu0 %v6630
        %6685 = vmatprep.subr.bf16.mxu0 0
        %6686 = vmatpush2.bf16.msra.mxu0 %v6628
        %6687 = vmatprep.subr.bf16.mxu0 0
        %6688 = vmatpush2.bf16.msra.mxu0 %v6626
        %6689 = vmatprep.mubr.bf16.mxu0 %v6594
        %6690 = vmatmul.mubr.bf16.gmra.mxu0 %v6593
        %v6691 = vpop.f32.mrf.mxu0
        %v6692 = vadd.f32 0.0, %v6691
        %v6693 = vpop.f32.mrf.mxu0
        %v6694 = vpop.f32.mrf.mxu0
        %v6695 = vadd.f32 0.0, %v6694
        %v6696 = vpop.f32.mrf.mxu0
        %6697 = vmatprep.mubr.bf16.mxu0 %v6596
        %6698 = vmatmul.mubr.bf16.gmra.mxu0 %v6595
        %v6699 = vpop.f32.mrf.mxu0
        %v6700 = vadd.f32 0.0, %v6699
        %v6701 = vpop.f32.mrf.mxu0
        %v6702 = vpop.f32.mrf.mxu0
        %v6703 = vadd.f32 0.0, %v6702
        %v6704 = vpop.f32.mrf.mxu0
        %6705 = vmatprep.mubr.bf16.mxu0 %v6598
        %6706 = vmatmul.mubr.bf16.gmra.mxu0 %v6597
        %v6707 = vpop.f32.mrf.mxu0
        %v6708 = vadd.f32 0.0, %v6707
        %v6709 = vpop.f32.mrf.mxu0
        %v6710 = vpop.f32.mrf.mxu0
        %v6711 = vadd.f32 0.0, %v6710
        %v6712 = vpop.f32.mrf.mxu0
        %6713 = vmatprep.mubr.bf16.mxu0 %v6600
        %6714 = vmatmul.mubr.bf16.gmra.mxu0 %v6599
        %v6715 = vpop.f32.mrf.mxu0
        %v6716 = vadd.f32 0.0, %v6715
        %v6717 = vpop.f32.mrf.mxu0
        %v6718 = vpop.f32.mrf.mxu0
        %v6719 = vadd.f32 0.0, %v6718
        %v6720 = vpop.f32.mrf.mxu0
        %6721 = vmatprep.mubr.bf16.mxu0 %v6602
        %6722 = vmatmul.mubr.bf16.gmra.mxu0 %v6601
        %v6723 = vpop.f32.mrf.mxu0
        %v6724 = vadd.f32 0.0, %v6723
        %v6725 = vpop.f32.mrf.mxu0
        %v6726 = vpop.f32.mrf.mxu0
        %v6727 = vadd.f32 0.0, %v6726
        %v6728 = vpop.f32.mrf.mxu0
        %6729 = vmatprep.mubr.bf16.mxu0 %v6604
        %6730 = vmatmul.mubr.bf16.gmra.mxu0 %v6603
        %v6731 = vpop.f32.mrf.mxu0
        %v6732 = vadd.f32 0.0, %v6731
        %v6733 = vpop.f32.mrf.mxu0
        %v6734 = vpop.f32.mrf.mxu0
        %v6735 = vadd.f32 0.0, %v6734
        %v6736 = vpop.f32.mrf.mxu0
        %6737 = vmatprep.mubr.bf16.mxu0 %v6606
        %6738 = vmatmul.mubr.bf16.gmra.mxu0 %v6605
        %v6739 = vpop.f32.mrf.mxu0
        %v6740 = vadd.f32 0.0, %v6739
        %v6741 = vpop.f32.mrf.mxu0
        %v6742 = vpop.f32.mrf.mxu0
        %v6743 = vadd.f32 0.0, %v6742
        %v6744 = vpop.f32.mrf.mxu0
        %6745 = vmatprep.mubr.bf16.mxu0 %v6608
        %6746 = vmatmul.mubr.bf16.gmra.mxu0 %v6607
        %v6747 = vpop.f32.mrf.mxu0
        %v6748 = vadd.f32 0.0, %v6747
        %v6749 = vpop.f32.mrf.mxu0
        %v6750 = vpop.f32.mrf.mxu0
        %v6751 = vadd.f32 0.0, %v6750
        %v6752 = vpop.f32.mrf.mxu0
        %6753 = vdwg.mxu0
        %v6754 = vrcp.pop %v6547
        %v6755 = vrcp.pop %v6550
        %v6756 = vrcp.pop %v6553
        %v6757 = vrcp.pop %v6556
        %v6758 = vrcp.pop %v6559
        %v6759 = vrcp.pop %v6562
        %v6760 = vrcp.pop %v6565
        %v6761 = vrcp.pop %v6568
        %v6762 = vrcp.pop %v6571
        %v6763 = vrcp.pop %v6574
        %v6764 = vrcp.pop %v6577
        %v6765 = vrcp.pop %v6580
        %v6766 = vrcp.pop %v6583
        %v6767 = vrcp.pop %v6586
        %v6768 = vrcp.pop %v6589
        %v6769 = vrcp.pop %v6592
        %v6770 = vmul.f32 %v6692, %v6754
        %v6771 = vmul.f32 %v6695, %v6755
        %v6772 = vmul.f32 %v6700, %v6756
        %v6773 = vmul.f32 %v6703, %v6757
        %v6774 = vmul.f32 %v6708, %v6758
        %v6775 = vmul.f32 %v6711, %v6759
        %v6776 = vmul.f32 %v6716, %v6760
        %v6777 = vmul.f32 %v6719, %v6761
        %v6778 = vmul.f32 %v6724, %v6762
        %v6779 = vmul.f32 %v6727, %v6763
        %v6780 = vmul.f32 %v6732, %v6764
        %v6781 = vmul.f32 %v6735, %v6765
        %v6782 = vmul.f32 %v6740, %v6766
        %v6783 = vmul.f32 %v6743, %v6767
        %v6784 = vmul.f32 %v6748, %v6768
        %v6785 = vmul.f32 %v6751, %v6769
        %6786 = vrot.lane.b32.xlu0 %v1663, 72
        %v6787 = vpop.permute.xlu0 %6786
        %v6789 = vadd.f32 %v6770, %v6787
        %v6790 = vadd.f32 %v6771, %v6787
        %v6791 = vadd.f32 %v6772, %v6787
        %v6792 = vadd.f32 %v6773, %v6787
        %v6793 = vadd.f32 %v6774, %v6787
        %v6794 = vadd.f32 %v6775, %v6787
        %v6795 = vadd.f32 %v6776, %v6787
        %v6796 = vadd.f32 %v6777, %v6787
        %v6797 = vadd.f32 %v6778, %v6787
        %v6798 = vadd.f32 %v6779, %v6787
        %v6799 = vadd.f32 %v6780, %v6787
        %v6800 = vadd.f32 %v6781, %v6787
        %v6801 = vadd.f32 %v6782, %v6787
        %v6802 = vadd.f32 %v6783, %v6787
        %v6803 = vadd.f32 %v6784, %v6787
        %v6804 = vadd.f32 %v6785, %v6787
        %vm6805 = vcmp.ge.f32.partialorder %v6789, 0.0
        %vm6806 = vcmp.ge.f32.partialorder %v6790, 0.0
        %vm6807 = vcmp.ge.f32.partialorder %v6791, 0.0
        %vm6808 = vcmp.ge.f32.partialorder %v6792, 0.0
        %vm6809 = vcmp.ge.f32.partialorder %v6793, 0.0
        %vm6810 = vcmp.ge.f32.partialorder %v6794, 0.0
        %vm6811 = vcmp.ge.f32.partialorder %v6795, 0.0
        %vm6812 = vcmp.ge.f32.partialorder %v6796, 0.0
        %vm6813 = vcmp.ge.f32.partialorder %v6797, 0.0
        %vm6814 = vcmp.ge.f32.partialorder %v6798, 0.0
        %vm6815 = vcmp.ge.f32.partialorder %v6799, 0.0
        %vm6816 = vcmp.ge.f32.partialorder %v6800, 0.0
        %vm6817 = vcmp.ge.f32.partialorder %v6801, 0.0
        %vm6818 = vcmp.ge.f32.partialorder %v6802, 0.0
        %vm6819 = vcmp.ge.f32.partialorder %v6803, 0.0
        %vm6820 = vcmp.ge.f32.partialorder %v6804, 0.0
        %v6821 = vmul.f32 %v6789, 0.01
        %v6822 = vmul.f32 %v6790, 0.01
        %v6823 = vmul.f32 %v6791, 0.01
        %v6824 = vmul.f32 %v6792, 0.01
        %v6825 = vmul.f32 %v6793, 0.01
        %v6826 = vmul.f32 %v6794, 0.01
        %v6827 = vmul.f32 %v6795, 0.01
        %v6828 = vmul.f32 %v6796, 0.01
        %v6829 = vmul.f32 %v6797, 0.01
        %v6830 = vmul.f32 %v6798, 0.01
        %v6831 = vmul.f32 %v6799, 0.01
        %v6832 = vmul.f32 %v6800, 0.01
        %v6833 = vmul.f32 %v6801, 0.01
        %v6834 = vmul.f32 %v6802, 0.01
        %v6835 = vmul.f32 %v6803, 0.01
        %v6836 = vmul.f32 %v6804, 0.01
        %v6837 = vsel %vm6805, %v6789, %v6821
        %v6838 = vsel %vm6806, %v6790, %v6822
        %v6839 = vsel %vm6807, %v6791, %v6823
        %v6840 = vsel %vm6808, %v6792, %v6824
        %v6841 = vsel %vm6809, %v6793, %v6825
        %v6842 = vsel %vm6810, %v6794, %v6826
        %v6843 = vsel %vm6811, %v6795, %v6827
        %v6844 = vsel %vm6812, %v6796, %v6828
        %v6845 = vsel %vm6813, %v6797, %v6829
        %v6846 = vsel %vm6814, %v6798, %v6830
        %v6847 = vsel %vm6815, %v6799, %v6831
        %v6848 = vsel %vm6816, %v6800, %v6832
        %v6849 = vsel %vm6817, %v6801, %v6833
        %v6850 = vsel %vm6818, %v6802, %v6834
        %v6851 = vsel %vm6819, %v6803, %v6835
        %v6852 = vsel %vm6820, %v6804, %v6836
        %v6853 = vtanh.pop %v6837
        %v6854 = vtanh.pop %v6838
        %v6855 = vtanh.pop %v6839
        %v6856 = vtanh.pop %v6840
        %v6857 = vtanh.pop %v6841
        %v6858 = vtanh.pop %v6842
        %v6859 = vtanh.pop %v6843
        %v6860 = vtanh.pop %v6844
        %v6861 = vtanh.pop %v6845
        %v6862 = vtanh.pop %v6846
        %v6863 = vtanh.pop %v6847
        %v6864 = vtanh.pop %v6848
        %v6865 = vtanh.pop %v6849
        %v6866 = vtanh.pop %v6850
        %v6867 = vtanh.pop %v6851
        %v6868 = vtanh.pop %v6852
        %6885 = vrot.lane.b32.xlu0 %v1729, 8
        %v6886 = vpop.permute.xlu0 %6885
        %6887 = vrot.lane.b32.xlu0 %v1730, 8
        %v6888 = vpop.permute.xlu0 %6887
        %6889 = vrot.lane.b32.xlu0 %v1731, 8
        %v6890 = vpop.permute.xlu0 %6889
        %6891 = vrot.lane.b32.xlu0 %v1732, 8
        %v6892 = vpop.permute.xlu0 %6891
        %6893 = vrot.lane.b32.xlu0 %v1733, 8
        %v6894 = vpop.permute.xlu0 %6893
        %6895 = vrot.lane.b32.xlu0 %v1734, 8
        %v6896 = vpop.permute.xlu0 %6895
        %6897 = vrot.lane.b32.xlu0 %v1735, 8
        %v6898 = vpop.permute.xlu0 %6897
        %6899 = vrot.lane.b32.xlu0 %v1736, 8
        %v6900 = vpop.permute.xlu0 %6899
        %6901 = vrot.lane.b32.xlu0 %v1737, 8
        %v6902 = vpop.permute.xlu0 %6901
        %6903 = vrot.lane.b32.xlu0 %v1738, 8
        %v6904 = vpop.permute.xlu0 %6903
        %6905 = vrot.lane.b32.xlu0 %v1739, 8
        %v6906 = vpop.permute.xlu0 %6905
        %6907 = vrot.lane.b32.xlu0 %v1740, 8
        %v6908 = vpop.permute.xlu0 %6907
        %6909 = vrot.lane.b32.xlu0 %v1741, 8
        %v6910 = vpop.permute.xlu0 %6909
        %6911 = vrot.lane.b32.xlu0 %v1742, 8
        %v6912 = vpop.permute.xlu0 %6911
        %6913 = vrot.lane.b32.xlu0 %v1743, 8
        %v6914 = vpop.permute.xlu0 %6913
        %6915 = vrot.lane.b32.xlu0 %v1744, 8
        %v6916 = vpop.permute.xlu0 %6915
        %6949 = vrot.lane.b32.xlu0 %v2461, 16
        %v6950 = vpop.permute.xlu0 %6949
        %6951 = vrot.lane.b32.xlu0 %v2462, 16
        %v6952 = vpop.permute.xlu0 %6951
        %6953 = vrot.lane.b32.xlu0 %v2463, 16
        %v6954 = vpop.permute.xlu0 %6953
        %6955 = vrot.lane.b32.xlu0 %v2464, 16
        %v6956 = vpop.permute.xlu0 %6955
        %6957 = vrot.lane.b32.xlu0 %v2465, 16
        %v6958 = vpop.permute.xlu0 %6957
        %6959 = vrot.lane.b32.xlu0 %v2466, 16
        %v6960 = vpop.permute.xlu0 %6959
        %6961 = vrot.lane.b32.xlu0 %v2467, 16
        %v6962 = vpop.permute.xlu0 %6961
        %6963 = vrot.lane.b32.xlu0 %v2468, 16
        %v6964 = vpop.permute.xlu0 %6963
        %6965 = vrot.lane.b32.xlu0 %v2469, 16
        %v6966 = vpop.permute.xlu0 %6965
        %6967 = vrot.lane.b32.xlu0 %v2470, 16
        %v6968 = vpop.permute.xlu0 %6967
        %6969 = vrot.lane.b32.xlu0 %v2471, 16
        %v6970 = vpop.permute.xlu0 %6969
        %6971 = vrot.lane.b32.xlu0 %v2472, 16
        %v6972 = vpop.permute.xlu0 %6971
        %6973 = vrot.lane.b32.xlu0 %v2473, 16
        %v6974 = vpop.permute.xlu0 %6973
        %6975 = vrot.lane.b32.xlu0 %v2474, 16
        %v6976 = vpop.permute.xlu0 %6975
        %6977 = vrot.lane.b32.xlu0 %v2475, 16
        %v6978 = vpop.permute.xlu0 %6977
        %6979 = vrot.lane.b32.xlu0 %v2476, 16
        %v6980 = vpop.permute.xlu0 %6979
        %7013 = vrot.lane.b32.xlu0 %v3193, 24
        %v7014 = vpop.permute.xlu0 %7013
        %7015 = vrot.lane.b32.xlu0 %v3194, 24
        %v7016 = vpop.permute.xlu0 %7015
        %7017 = vrot.lane.b32.xlu0 %v3195, 24
        %v7018 = vpop.permute.xlu0 %7017
        %7019 = vrot.lane.b32.xlu0 %v3196, 24
        %v7020 = vpop.permute.xlu0 %7019
        %7021 = vrot.lane.b32.xlu0 %v3197, 24
        %v7022 = vpop.permute.xlu0 %7021
        %7023 = vrot.lane.b32.xlu0 %v3198, 24
        %v7024 = vpop.permute.xlu0 %7023
        %7025 = vrot.lane.b32.xlu0 %v3199, 24
        %v7026 = vpop.permute.xlu0 %7025
        %7027 = vrot.lane.b32.xlu0 %v3200, 24
        %v7028 = vpop.permute.xlu0 %7027
        %7029 = vrot.lane.b32.xlu0 %v3201, 24
        %v7030 = vpop.permute.xlu0 %7029
        %7031 = vrot.lane.b32.xlu0 %v3202, 24
        %v7032 = vpop.permute.xlu0 %7031
        %7033 = vrot.lane.b32.xlu0 %v3203, 24
        %v7034 = vpop.permute.xlu0 %7033
        %7035 = vrot.lane.b32.xlu0 %v3204, 24
        %v7036 = vpop.permute.xlu0 %7035
        %7037 = vrot.lane.b32.xlu0 %v3205, 24
        %v7038 = vpop.permute.xlu0 %7037
        %7039 = vrot.lane.b32.xlu0 %v3206, 24
        %v7040 = vpop.permute.xlu0 %7039
        %7041 = vrot.lane.b32.xlu0 %v3207, 24
        %v7042 = vpop.permute.xlu0 %7041
        %7043 = vrot.lane.b32.xlu0 %v3208, 24
        %v7044 = vpop.permute.xlu0 %7043
        %7077 = vrot.lane.b32.xlu0 %v3925, 32
        %v7078 = vpop.permute.xlu0 %7077
        %7079 = vrot.lane.b32.xlu0 %v3926, 32
        %v7080 = vpop.permute.xlu0 %7079
        %7081 = vrot.lane.b32.xlu0 %v3927, 32
        %v7082 = vpop.permute.xlu0 %7081
        %7083 = vrot.lane.b32.xlu0 %v3928, 32
        %v7084 = vpop.permute.xlu0 %7083
        %7085 = vrot.lane.b32.xlu0 %v3929, 32
        %v7086 = vpop.permute.xlu0 %7085
        %7087 = vrot.lane.b32.xlu0 %v3930, 32
        %v7088 = vpop.permute.xlu0 %7087
        %7089 = vrot.lane.b32.xlu0 %v3931, 32
        %v7090 = vpop.permute.xlu0 %7089
        %7091 = vrot.lane.b32.xlu0 %v3932, 32
        %v7092 = vpop.permute.xlu0 %7091
        %7093 = vrot.lane.b32.xlu0 %v3933, 32
        %v7094 = vpop.permute.xlu0 %7093
        %7095 = vrot.lane.b32.xlu0 %v3934, 32
        %v7096 = vpop.permute.xlu0 %7095
        %7097 = vrot.lane.b32.xlu0 %v3935, 32
        %v7098 = vpop.permute.xlu0 %7097
        %7099 = vrot.lane.b32.xlu0 %v3936, 32
        %v7100 = vpop.permute.xlu0 %7099
        %7101 = vrot.lane.b32.xlu0 %v3937, 32
        %v7102 = vpop.permute.xlu0 %7101
        %7103 = vrot.lane.b32.xlu0 %v3938, 32
        %v7104 = vpop.permute.xlu0 %7103
        %7105 = vrot.lane.b32.xlu0 %v3939, 32
        %v7106 = vpop.permute.xlu0 %7105
        %7107 = vrot.lane.b32.xlu0 %v3940, 32
        %v7108 = vpop.permute.xlu0 %7107
        %7141 = vrot.lane.b32.xlu0 %v4657, 40
        %v7142 = vpop.permute.xlu0 %7141
        %7143 = vrot.lane.b32.xlu0 %v4658, 40
        %v7144 = vpop.permute.xlu0 %7143
        %7145 = vrot.lane.b32.xlu0 %v4659, 40
        %v7146 = vpop.permute.xlu0 %7145
        %7147 = vrot.lane.b32.xlu0 %v4660, 40
        %v7148 = vpop.permute.xlu0 %7147
        %7149 = vrot.lane.b32.xlu0 %v4661, 40
        %v7150 = vpop.permute.xlu0 %7149
        %7151 = vrot.lane.b32.xlu0 %v4662, 40
        %v7152 = vpop.permute.xlu0 %7151
        %7153 = vrot.lane.b32.xlu0 %v4663, 40
        %v7154 = vpop.permute.xlu0 %7153
        %7155 = vrot.lane.b32.xlu0 %v4664, 40
        %v7156 = vpop.permute.xlu0 %7155
        %7157 = vrot.lane.b32.xlu0 %v4665, 40
        %v7158 = vpop.permute.xlu0 %7157
        %7159 = vrot.lane.b32.xlu0 %v4666, 40
        %v7160 = vpop.permute.xlu0 %7159
        %7161 = vrot.lane.b32.xlu0 %v4667, 40
        %v7162 = vpop.permute.xlu0 %7161
        %7163 = vrot.lane.b32.xlu0 %v4668, 40
        %v7164 = vpop.permute.xlu0 %7163
        %7165 = vrot.lane.b32.xlu0 %v4669, 40
        %v7166 = vpop.permute.xlu0 %7165
        %7167 = vrot.lane.b32.xlu0 %v4670, 40
        %v7168 = vpop.permute.xlu0 %7167
        %7169 = vrot.lane.b32.xlu0 %v4671, 40
        %v7170 = vpop.permute.xlu0 %7169
        %7171 = vrot.lane.b32.xlu0 %v4672, 40
        %v7172 = vpop.permute.xlu0 %7171
        %7205 = vrot.lane.b32.xlu0 %v5389, 48
        %v7206 = vpop.permute.xlu0 %7205
        %7207 = vrot.lane.b32.xlu0 %v5390, 48
        %v7208 = vpop.permute.xlu0 %7207
        %7209 = vrot.lane.b32.xlu0 %v5391, 48
        %v7210 = vpop.permute.xlu0 %7209
        %7211 = vrot.lane.b32.xlu0 %v5392, 48
        %v7212 = vpop.permute.xlu0 %7211
        %7213 = vrot.lane.b32.xlu0 %v5393, 48
        %v7214 = vpop.permute.xlu0 %7213
        %7215 = vrot.lane.b32.xlu0 %v5394, 48
        %v7216 = vpop.permute.xlu0 %7215
        %7217 = vrot.lane.b32.xlu0 %v5395, 48
        %v7218 = vpop.permute.xlu0 %7217
        %7219 = vrot.lane.b32.xlu0 %v5396, 48
        %v7220 = vpop.permute.xlu0 %7219
        %7221 = vrot.lane.b32.xlu0 %v5397, 48
        %v7222 = vpop.permute.xlu0 %7221
        %7223 = vrot.lane.b32.xlu0 %v5398, 48
        %v7224 = vpop.permute.xlu0 %7223
        %7225 = vrot.lane.b32.xlu0 %v5399, 48
        %v7226 = vpop.permute.xlu0 %7225
        %7227 = vrot.lane.b32.xlu0 %v5400, 48
        %v7228 = vpop.permute.xlu0 %7227
        %7229 = vrot.lane.b32.xlu0 %v5401, 48
        %v7230 = vpop.permute.xlu0 %7229
        %7231 = vrot.lane.b32.xlu0 %v5402, 48
        %v7232 = vpop.permute.xlu0 %7231
        %7233 = vrot.lane.b32.xlu0 %v5403, 48
        %v7234 = vpop.permute.xlu0 %7233
        %7235 = vrot.lane.b32.xlu0 %v5404, 48
        %v7236 = vpop.permute.xlu0 %7235
        %7269 = vrot.lane.b32.xlu0 %v6121, 56
        %v7270 = vpop.permute.xlu0 %7269
        %7271 = vrot.lane.b32.xlu0 %v6122, 56
        %v7272 = vpop.permute.xlu0 %7271
        %7273 = vrot.lane.b32.xlu0 %v6123, 56
        %v7274 = vpop.permute.xlu0 %7273
        %7275 = vrot.lane.b32.xlu0 %v6124, 56
        %v7276 = vpop.permute.xlu0 %7275
        %7277 = vrot.lane.b32.xlu0 %v6125, 56
        %v7278 = vpop.permute.xlu0 %7277
        %7279 = vrot.lane.b32.xlu0 %v6126, 56
        %v7280 = vpop.permute.xlu0 %7279
        %7281 = vrot.lane.b32.xlu0 %v6127, 56
        %v7282 = vpop.permute.xlu0 %7281
        %7283 = vrot.lane.b32.xlu0 %v6128, 56
        %v7284 = vpop.permute.xlu0 %7283
        %7285 = vrot.lane.b32.xlu0 %v6129, 56
        %v7286 = vpop.permute.xlu0 %7285
        %7287 = vrot.lane.b32.xlu0 %v6130, 56
        %v7288 = vpop.permute.xlu0 %7287
        %7289 = vrot.lane.b32.xlu0 %v6131, 56
        %v7290 = vpop.permute.xlu0 %7289
        %7291 = vrot.lane.b32.xlu0 %v6132, 56
        %v7292 = vpop.permute.xlu0 %7291
        %7293 = vrot.lane.b32.xlu0 %v6133, 56
        %v7294 = vpop.permute.xlu0 %7293
        %7295 = vrot.lane.b32.xlu0 %v6134, 56
        %v7296 = vpop.permute.xlu0 %7295
        %7297 = vrot.lane.b32.xlu0 %v6135, 56
        %v7298 = vpop.permute.xlu0 %7297
        %7299 = vrot.lane.b32.xlu0 %v6136, 56
        %v7300 = vpop.permute.xlu0 %7299
        %7333 = vrot.lane.b32.xlu0 %v6853, 64
        %v7334 = vpop.permute.xlu0 %7333
        %7335 = vrot.lane.b32.xlu0 %v6854, 64
        %v7336 = vpop.permute.xlu0 %7335
        %7337 = vrot.lane.b32.xlu0 %v6855, 64
        %v7338 = vpop.permute.xlu0 %7337
        %7339 = vrot.lane.b32.xlu0 %v6856, 64
        %v7340 = vpop.permute.xlu0 %7339
        %7341 = vrot.lane.b32.xlu0 %v6857, 64
        %v7342 = vpop.permute.xlu0 %7341
        %7343 = vrot.lane.b32.xlu0 %v6858, 64
        %v7344 = vpop.permute.xlu0 %7343
        %7345 = vrot.lane.b32.xlu0 %v6859, 64
        %v7346 = vpop.permute.xlu0 %7345
        %7347 = vrot.lane.b32.xlu0 %v6860, 64
        %v7348 = vpop.permute.xlu0 %7347
        %7349 = vrot.lane.b32.xlu0 %v6861, 64
        %v7350 = vpop.permute.xlu0 %7349
        %7351 = vrot.lane.b32.xlu0 %v6862, 64
        %v7352 = vpop.permute.xlu0 %7351
        %7353 = vrot.lane.b32.xlu0 %v6863, 64
        %v7354 = vpop.permute.xlu0 %7353
        %7355 = vrot.lane.b32.xlu0 %v6864, 64
        %v7356 = vpop.permute.xlu0 %7355
        %7357 = vrot.lane.b32.xlu0 %v6865, 64
        %v7358 = vpop.permute.xlu0 %7357
        %7359 = vrot.lane.b32.xlu0 %v6866, 64
        %v7360 = vpop.permute.xlu0 %7359
        %7361 = vrot.lane.b32.xlu0 %v6867, 64
        %v7362 = vpop.permute.xlu0 %7361
        %7363 = vrot.lane.b32.xlu0 %v6868, 64
        %v7364 = vpop.permute.xlu0 %7363
        %vm7381 = vcmask 64512
        %v7382 = vsel %vm7381, %v735, %v6886
        %v7383 = vsel %vm7381, %v736, %v6888
        %v7384 = vsel %vm7381, %v737, %v6890
        %v7385 = vsel %vm7381, %v738, %v6892
        %v7386 = vsel %vm7381, %v739, %v6894
        %v7387 = vsel %vm7381, %v740, %v6896
        %v7388 = vsel %vm7381, %v741, %v6898
        %v7389 = vsel %vm7381, %v742, %v6900
        %v7390 = vsel %vm7381, %v743, %v6902
        %v7391 = vsel %vm7381, %v744, %v6904
        %v7392 = vsel %vm7381, %v745, %v6906
        %v7393 = vsel %vm7381, %v746, %v6908
        %v7394 = vsel %vm7381, %v747, %v6910
        %v7395 = vsel %vm7381, %v748, %v6912
        %v7396 = vsel %vm7381, %v749, %v6914
        %v7397 = vsel %vm7381, %v750, %v6916
        %vm7398 = vcmask 130048
        %v7399 = vsel %vm7398, %v7382, %v6950
        %v7400 = vsel %vm7398, %v7383, %v6952
        %v7401 = vsel %vm7398, %v7384, %v6954
        %v7402 = vsel %vm7398, %v7385, %v6956
        %v7403 = vsel %vm7398, %v7386, %v6958
        %v7404 = vsel %vm7398, %v7387, %v6960
        %v7405 = vsel %vm7398, %v7388, %v6962
        %v7406 = vsel %vm7398, %v7389, %v6964
        %v7407 = vsel %vm7398, %v7390, %v6966
        %v7408 = vsel %vm7398, %v7391, %v6968
        %v7409 = vsel %vm7398, %v7392, %v6970
        %v7410 = vsel %vm7398, %v7393, %v6972
        %v7411 = vsel %vm7398, %v7394, %v6974
        %v7412 = vsel %vm7398, %v7395, %v6976
        %v7413 = vsel %vm7398, %v7396, %v6978
        %v7414 = vsel %vm7398, %v7397, %v6980
        %vm7415 = vcmask 195584
        %v7416 = vsel %vm7415, %v7399, %v7014
        %v7417 = vsel %vm7415, %v7400, %v7016
        %v7418 = vsel %vm7415, %v7401, %v7018
        %v7419 = vsel %vm7415, %v7402, %v7020
        %v7420 = vsel %vm7415, %v7403, %v7022
        %v7421 = vsel %vm7415, %v7404, %v7024
        %v7422 = vsel %vm7415, %v7405, %v7026
        %v7423 = vsel %vm7415, %v7406, %v7028
        %v7424 = vsel %vm7415, %v7407, %v7030
        %v7425 = vsel %vm7415, %v7408, %v7032
        %v7426 = vsel %vm7415, %v7409, %v7034
        %v7427 = vsel %vm7415, %v7410, %v7036
        %v7428 = vsel %vm7415, %v7411, %v7038
        %v7429 = vsel %vm7415, %v7412, %v7040
        %v7430 = vsel %vm7415, %v7413, %v7042
        %v7431 = vsel %vm7415, %v7414, %v7044
        %vm7432 = vcmask 261120
        %v7433 = vsel %vm7432, %v7416, %v7078
        %v7434 = vsel %vm7432, %v7417, %v7080
        %v7435 = vsel %vm7432, %v7418, %v7082
        %v7436 = vsel %vm7432, %v7419, %v7084
        %v7437 = vsel %vm7432, %v7420, %v7086
        %v7438 = vsel %vm7432, %v7421, %v7088
        %v7439 = vsel %vm7432, %v7422, %v7090
        %v7440 = vsel %vm7432, %v7423, %v7092
        %v7441 = vsel %vm7432, %v7424, %v7094
        %v7442 = vsel %vm7432, %v7425, %v7096
        %v7443 = vsel %vm7432, %v7426, %v7098
        %v7444 = vsel %vm7432, %v7427, %v7100
        %v7445 = vsel %vm7432, %v7428, %v7102
        %v7446 = vsel %vm7432, %v7429, %v7104
        %v7447 = vsel %vm7432, %v7430, %v7106
        %v7448 = vsel %vm7432, %v7431, %v7108
        %vm7449 = vcmask 326656
        %v7450 = vsel %vm7449, %v7433, %v7142
        %v7451 = vsel %vm7449, %v7434, %v7144
        %v7452 = vsel %vm7449, %v7435, %v7146
        %v7453 = vsel %vm7449, %v7436, %v7148
        %v7454 = vsel %vm7449, %v7437, %v7150
        %v7455 = vsel %vm7449, %v7438, %v7152
        %v7456 = vsel %vm7449, %v7439, %v7154
        %v7457 = vsel %vm7449, %v7440, %v7156
        %v7458 = vsel %vm7449, %v7441, %v7158
        %v7459 = vsel %vm7449, %v7442, %v7160
        %v7460 = vsel %vm7449, %v7443, %v7162
        %v7461 = vsel %vm7449, %v7444, %v7164
        %v7462 = vsel %vm7449, %v7445, %v7166
        %v7463 = vsel %vm7449, %v7446, %v7168
        %v7464 = vsel %vm7449, %v7447, %v7170
        %v7465 = vsel %vm7449, %v7448, %v7172
        %vm7466 = vcmask 392192
        %v7467 = vsel %vm7466, %v7450, %v7206
        %v7468 = vsel %vm7466, %v7451, %v7208
        %v7469 = vsel %vm7466, %v7452, %v7210
        %v7470 = vsel %vm7466, %v7453, %v7212
        %v7471 = vsel %vm7466, %v7454, %v7214
        %v7472 = vsel %vm7466, %v7455, %v7216
        %v7473 = vsel %vm7466, %v7456, %v7218
        %v7474 = vsel %vm7466, %v7457, %v7220
        %v7475 = vsel %vm7466, %v7458, %v7222
        %v7476 = vsel %vm7466, %v7459, %v7224
        %v7477 = vsel %vm7466, %v7460, %v7226
        %v7478 = vsel %vm7466, %v7461, %v7228
        %v7479 = vsel %vm7466, %v7462, %v7230
        %v7480 = vsel %vm7466, %v7463, %v7232
        %v7481 = vsel %vm7466, %v7464, %v7234
        %v7482 = vsel %vm7466, %v7465, %v7236
        %vm7483 = vcmask 457728
        %v7484 = vsel %vm7483, %v7467, %v7270
        %v7485 = vsel %vm7483, %v7468, %v7272
        %v7486 = vsel %vm7483, %v7469, %v7274
        %v7487 = vsel %vm7483, %v7470, %v7276
        %v7488 = vsel %vm7483, %v7471, %v7278
        %v7489 = vsel %vm7483, %v7472, %v7280
        %v7490 = vsel %vm7483, %v7473, %v7282
        %v7491 = vsel %vm7483, %v7474, %v7284
        %v7492 = vsel %vm7483, %v7475, %v7286
        %v7493 = vsel %vm7483, %v7476, %v7288
        %v7494 = vsel %vm7483, %v7477, %v7290
        %v7495 = vsel %vm7483, %v7478, %v7292
        %v7496 = vsel %vm7483, %v7479, %v7294
        %v7497 = vsel %vm7483, %v7480, %v7296
        %v7498 = vsel %vm7483, %v7481, %v7298
        %v7499 = vsel %vm7483, %v7482, %v7300
        %vm7500 = vcmask 523264
        %v7501 = vsel %vm7500, %v7484, %v7334
        %v7502 = vsel %vm7500, %v7485, %v7336
        %v7503 = vsel %vm7500, %v7486, %v7338
        %v7504 = vsel %vm7500, %v7487, %v7340
        %v7505 = vsel %vm7500, %v7488, %v7342
        %v7506 = vsel %vm7500, %v7489, %v7344
        %v7507 = vsel %vm7500, %v7490, %v7346
        %v7508 = vsel %vm7500, %v7491, %v7348
        %v7509 = vsel %vm7500, %v7492, %v7350
        %v7510 = vsel %vm7500, %v7493, %v7352
        %v7511 = vsel %vm7500, %v7494, %v7354
        %v7512 = vsel %vm7500, %v7495, %v7356
        %v7513 = vsel %vm7500, %v7496, %v7358
        %v7514 = vsel %vm7500, %v7497, %v7360
        %v7515 = vsel %vm7500, %v7498, %v7362
        %v7516 = vsel %vm7500, %v7499, %v7364
        %vm7517 = vcmask 588800
        %v7518 = vsel %vm7517, %v7501, 0.0
        %v7519 = vsel %vm7517, %v7502, 0.0
        %v7520 = vsel %vm7517, %v7503, 0.0
        %v7521 = vsel %vm7517, %v7504, 0.0
        %v7522 = vsel %vm7517, %v7505, 0.0
        %v7523 = vsel %vm7517, %v7506, 0.0
        %v7524 = vsel %vm7517, %v7507, 0.0
        %v7525 = vsel %vm7517, %v7508, 0.0
        %v7526 = vsel %vm7517, %v7509, 0.0
        %v7527 = vsel %vm7517, %v7510, 0.0
        %v7528 = vsel %vm7517, %v7511, 0.0
        %v7529 = vsel %vm7517, %v7512, 0.0
        %v7530 = vsel %vm7517, %v7513, 0.0
        %v7531 = vsel %vm7517, %v7514, 0.0
        %v7532 = vsel %vm7517, %v7515, 0.0
        %v7533 = vsel %vm7517, %v7516, 0.0
        %7534 = vst [vmem:[%s351] sm:$0xff] %v7518
        %7535 = vst [vmem:[%s351 + $0x8] sm:$0xff] %v7519
        %7536 = vst [vmem:[%s351 + $0x10] sm:$0xff] %v7520
        %7537 = vst [vmem:[%s351 + $0x18] sm:$0xff] %v7521
        %7538 = vst [vmem:[%s351 + $0x20] sm:$0xff] %v7522
        %7539 = vst [vmem:[%s351 + $0x28] sm:$0xff] %v7523
        %7540 = vst [vmem:[%s351 + $0x30] sm:$0xff] %v7524
        %7541 = vst [vmem:[%s351 + $0x38] sm:$0xff] %v7525
        %7542 = vst [vmem:[%s351 + $0x40] sm:$0xff] %v7526
        %7543 = vst [vmem:[%s351 + $0x48] sm:$0xff] %v7527
        %7544 = vst [vmem:[%s351 + $0x50] sm:$0xff] %v7528
        %7545 = vst [vmem:[%s351 + $0x58] sm:$0xff] %v7529
        %7546 = vst [vmem:[%s351 + $0x60] sm:$0xff] %v7530
        %7547 = vst [vmem:[%s351 + $0x68] sm:$0xff] %v7531
        %7548 = vst [vmem:[%s351 + $0x70] sm:$0xff] %v7532
        %7549 = vst [vmem:[%s351 + $0x78] sm:$0xff] %v7533
        %s7550 = sand.u32 %s218, 1
        %s7551 = scalar_lea.sflag [#allocation3], %s7550
        %s7552 = sand.u32 %s218, 1
        %s7553 = smul.addr %s7552, 128
        %s7554 = scalar_lea.vmem [#allocation2], %s7553
        // Predicated region
        $region53: #{tpu_custom_call.1} parent=51 // pred_check
          %p7555 = pneg %p228
        $region54: #{tpu_custom_call.1} parent=51 // pred_check_branch
          %7557 = sbr.rel (%p7555) target = $region56
        $region55: #{tpu_custom_call.1} parent=51 // pred_region
          %s7558 = smul.u32 16, %s22
          %s7560 = ssub.s32 2048, 2048
          %7561 = vsyncadd %s7551, %s7560
          %s7562 = smul.addr %s7558, 128
          %s7563 = scalar_lea.hbm %s8, %s7562
          %s7564 = sshll.u32 %s7554, 4
          %s7565 = int_to_ptr.vmem [resolvable:$true] %s7564
          %7570 = dma.vmem_to_hbm [thread:$0]  %s7565, 2048, %s7563, %s7551, 128, 128, 8
        $region56: #{tpu_custom_call.1} parent=51 // pred_fallthru
          _
      $region52: #{tpu_custom_call.1} parent=5 // pred_fallthru
        _
      %p7571 = scmp.le.s32.totalorder 2, %s17
      // Predicated region
      $region57: #{tpu_custom_call.1} parent=5 // pred_check
        %p7572 = pneg %p7571
      $region58: #{tpu_custom_call.1} parent=5 // pred_check_branch
        %7574 = sbr.rel (%p7572) target = $region60
      $region59: #{tpu_custom_call.1} parent=5 // pred_region
        %s7575 = ssub.s32 %s17, 2
        // Predicated region
        $region61: #{tpu_custom_call.1} parent=59 // pred_check
          %p7576 = pneg %p234
        $region62: #{tpu_custom_call.1} parent=59 // pred_check_branch
          %7578 = sbr.rel (%p7576) target = $region64
        $region63: #{tpu_custom_call.1} parent=59 // pred_region
          %s7579 = sand.u32 %s219, 1
          %s7580 = scalar_lea.sflag [#allocation3], %s7579
          %s7581 = sand.u32 %s219, 1
          %s7582 = smul.addr %s7581, 128
          %s7583 = scalar_lea.vmem [#allocation2], %s7582
          %7584 = dma.done %s7580, 2048
        $region64: #{tpu_custom_call.1} parent=59 // pred_fallthru
          _
      $region60: #{tpu_custom_call.1} parent=5 // pred_fallthru
        _
    $region6: #{tpu_custom_call.1} parent=1 // loop_footer
      %s21 = sadd.s32 1, %s17
    $region7: #{tpu_custom_call.1} parent=1 // loop_footer_branch
      %16 = sbr.rel target = $region3
    $region8: #{tpu_custom_call.1} parent=1 // loop_exit
      _
    %7585 = vsyncpa [#allocation3], 1
    %s7586 = scalar_lea.sflag [#allocation3], 1
    %7587 = vsyncpa %s7586, 1

</llo_original>
